<compile_context>
chip_gen: v7x
topology: tpu7x:2x2x1
jax: 0.10.0
libtpu: 0.0.40
codegen_flags: <defaults>
</compile_context>

<pallas_src>
import functools
import math

import jax
import jax.numpy as jnp
from jax.experimental import pallas as pl
from jax.experimental.pallas import tpu as pltpu


# ----------------------------------------------------------------------------
# In-kernel helpers
# ----------------------------------------------------------------------------
def _ln(x, g, b, eps):
    mu = jnp.mean(x, axis=-1, keepdims=True)
    xc = x - mu
    var = jnp.mean(xc * xc, axis=-1, keepdims=True)
    return xc * jax.lax.rsqrt(var + eps) * g + b


def _layer_body(x, bias, l, n_head, eps,
                wqkv_ref, bqkv_ref, wo_ref, bo_ref,
                ln1g_ref, ln1b_ref, w1_ref, b1_ref, w2_ref, b2_ref,
                ln2g_ref, ln2b_ref):
    """One post-norm transformer encoder layer (relu FFN) on flat rows.

    x:    [R, D] f32 residual stream (R = batch * seq, all sequences stacked)
    bias: [R, R] f32 additive attention bias (block-diagonal [+ causal/pad])
    """
    R, D = x.shape
    dh = D // n_head
    scale = 1.0 / math.sqrt(dh)

    xb = x.astype(jnp.bfloat16)
    # fused QKV projection over ALL rows at once (bf16 MXU, f32 accumulate)
    qkv = (jnp.dot(xb, wqkv_ref[l], preferred_element_type=jnp.float32)
           + bqkv_ref[l])                               # [R, 3D] f32

    dims = (((1,), (1,)), ((), ()))                     # contract last dims
    attn = jnp.zeros((R, D), jnp.float32)
    for hd in range(n_head):                            # static, unrolled
        lo = hd * dh
        qh = (qkv[:, lo:lo + dh] * scale).astype(jnp.bfloat16)
        kh = qkv[:, D + lo:D + lo + dh].astype(jnp.bfloat16)
        vh = qkv[:, 2 * D + lo:2 * D + lo + dh].astype(jnp.bfloat16)
        s = jax.lax.dot_general(qh, kh, dims,
                                preferred_element_type=jnp.float32) + bias
        m = jnp.max(s, axis=-1, keepdims=True)
        p = jnp.exp(s - m)
        p = p * pl.reciprocal(jnp.sum(p, axis=-1, keepdims=True), approx=True)
        oh = jnp.dot(p.astype(jnp.bfloat16), vh,
                     preferred_element_type=jnp.float32)
        # concat-free output projection: sum_h (p_h @ v_h) @ Wo[h]
        attn = attn + jnp.dot(oh.astype(jnp.bfloat16), wo_ref[l, hd],
                              preferred_element_type=jnp.float32)
    attn = attn + bo_ref[l]

    h1 = _ln(x + attn, ln1g_ref[l], ln1b_ref[l], eps)
    f = (jnp.dot(h1.astype(jnp.bfloat16), w1_ref[l],
                 preferred_element_type=jnp.float32) + b1_ref[l])
    f = jnp.maximum(f, 0.0)
    f = (jnp.dot(f.astype(jnp.bfloat16), w2_ref[l],
                 preferred_element_type=jnp.float32) + b2_ref[l])
    return _ln(h1 + f, ln2g_ref[l], ln2b_ref[l], eps)


# ----------------------------------------------------------------------------
# Fused encoder stack kernel: L layers + first-token pool + mu + grouped VQ
# ----------------------------------------------------------------------------
def _encoder_stack_kernel(x_ref, bias_ref,
                          wqkv_ref, bqkv_ref, wo_ref, bo_ref,
                          ln1g_ref, ln1b_ref, w1_ref, b1_ref, w2_ref, b2_ref,
                          ln2g_ref, ln2b_ref,
                          wmu_ref, bmu_ref, cb_ref, c2_ref,
                          mu_ref, q_ref,
                          *, n_layer, n_head, n_seq, seq_len,
                          n_groups, n_codes, eps):
    x = x_ref[...]                                      # [N*S, D] f32
    bias = bias_ref[...]                                # [N*S, N*S] f32
    for l in range(n_layer):                            # static, unrolled
        x = _layer_body(x, bias, l, n_head, eps,
                        wqkv_ref, bqkv_ref, wo_ref, bo_ref,
                        ln1g_ref, ln1b_ref, w1_ref, b1_ref, w2_ref, b2_ref,
                        ln2g_ref, ln2b_ref)

    # TODO(synk): first-timestep pooling assumed (TransformerEncoderQ source
    # not provided; could be mean-pool or last-token).
    NS = x.shape[0]
    r = jax.lax.broadcasted_iota(jnp.int32, (n_seq, NS), 0)
    c = jax.lax.broadcasted_iota(jnp.int32, (n_seq, NS), 1)
    sel = (c == r * seq_len).astype(jnp.float32)        # [N, N*S] selector
    pooled = jnp.dot(sel, x, preferred_element_type=jnp.float32)   # [N, D]

    mu = (jnp.dot(pooled, wmu_ref[...], preferred_element_type=jnp.float32)
          + bmu_ref[...])                               # [N, dl] f32
    mu_ref[...] = mu

    # grouped vector quantization
    dl = mu.shape[1]
    dg = dl // n_groups
    cb = cb_ref[...]                                    # [Cpad, dg] f32
    c2 = c2_ref[...]                                    # [1, Cpad] f32 (||c||^2)
    dims = (((1,), (1,)), ((), ()))
    q_groups = []
    for g in range(n_groups):                           # static, unrolled
        z = mu[:, g * dg:(g + 1) * dg]                  # [N, dg]
        # z^2 term dropped: it does not affect the argmin
        dist = c2 - 2.0 * jax.lax.dot_general(z, cb, dims,
                                              preferred_element_type=jnp.float32)
        col = jax.lax.broadcasted_iota(jnp.int32, dist.shape, 1)
        dist = jnp.where(col < n_codes, dist, 1e30)     # mask padded codes
        dmin = jnp.min(dist, axis=-1, keepdims=True)
        colf = col.astype(jnp.float32)
        cand = jnp.where(dist <= dmin, colf, float(dist.shape[1]))
        idx = jnp.min(cand, axis=-1, keepdims=True)     # first-occurrence argmin
        onehot = (colf == idx).astype(jnp.float32)
        q_groups.append(jnp.dot(onehot, cb, preferred_element_type=jnp.float32))
    q_ref[...] = jnp.concatenate(q_groups, axis=-1)     # [N, dl]


# ----------------------------------------------------------------------------
# Fused decoder stack kernel: per-layer seg conditioning + L layers + out proj
# ----------------------------------------------------------------------------
def _decoder_stack_kernel(x_ref, seg_ref, bias_ref,
                          wseg_ref, bseg_ref,
                          wqkv_ref, bqkv_ref, wo_ref, bo_ref,
                          ln1g_ref, ln1b_ref, w1_ref, b1_ref, w2_ref, b2_ref,
                          ln2g_ref, ln2b_ref,
                          wout_ref, bout_ref,
                          logits_ref,
                          *, n_layer, n_head, eps):
    x = x_ref[...]                                      # [B*T, D] f32
    seg = seg_ref[...].astype(jnp.bfloat16)             # [B*T, dl]
    bias = bias_ref[...]                                # [B*T, B*T] f32
    for l in range(n_layer):                            # static, unrolled
        # "in-attention" segment conditioning: added to the layer input
        x = x + (jnp.dot(seg, wseg_ref[l], preferred_element_type=jnp.float32)
                 + bseg_ref[l])
        x = _layer_body(x, bias, l, n_head, eps,
                        wqkv_ref, bqkv_ref, wo_ref, bo_ref,
                        ln1g_ref, ln1b_ref, w1_ref, b1_ref, w2_ref, b2_ref,
                        ln2g_ref, ln2b_ref)
    # fused lane-dense output projection (n_token padded to 128 lanes)
    logits_ref[...] = (jnp.dot(x.astype(jnp.bfloat16), wout_ref[...],
                               preferred_element_type=jnp.float32)
                       + bout_ref[...])


# ----------------------------------------------------------------------------
# pallas_call wrappers (single grid step, full-array blocks, everything VMEM)
# ----------------------------------------------------------------------------
def _full_spec(arr):
    zeros = (0,) * arr.ndim
    return pl.BlockSpec(arr.shape, lambda i, _z=zeros: _z)


_VMEM_LIMIT = 64 * 1024 * 1024     # safe on v5e/v6e (128 MiB) and v7x (64 MiB)


def encoder_stack(x_flat, bias, ep, wmu, bmu, cb, c2, *, n_layer, n_head,
                  n_seq, seq_len, n_groups, n_codes, eps=1e-5):
    dl = wmu.shape[1]
    inputs = [x_flat, bias, ep["wqkv"], ep["bqkv"], ep["wo"], ep["bo"],
              ep["ln1_g"], ep["ln1_b"], ep["w1"], ep["b1"], ep["w2"], ep["b2"],
              ep["ln2_g"], ep["ln2_b"], wmu, bmu, cb, c2]
    return pl.pallas_call(
        functools.partial(_encoder_stack_kernel, n_layer=n_layer,
                          n_head=n_head, n_seq=n_seq, seq_len=seq_len,
                          n_groups=n_groups, n_codes=n_codes, eps=eps),
        out_shape=(jax.ShapeDtypeStruct((n_seq, dl), jnp.float32),
                   jax.ShapeDtypeStruct((n_seq, dl), jnp.float32)),
        grid=(1,),
        in_specs=[_full_spec(a) for a in inputs],
        out_specs=(pl.BlockSpec((n_seq, dl), lambda i: (0, 0)),
                   pl.BlockSpec((n_seq, dl), lambda i: (0, 0))),
        compiler_params=pltpu.CompilerParams(
            dimension_semantics=("arbitrary",),
            vmem_limit_bytes=_VMEM_LIMIT),
    )(*inputs)


def decoder_stack(x_flat, seg_flat, bias, dp, wout, bout, *, n_layer, n_head,
                  eps=1e-5):
    BT = x_flat.shape[0]
    npad = wout.shape[1]
    inputs = [x_flat, seg_flat, bias, dp["wseg"], dp["bseg"],
              dp["wqkv"], dp["bqkv"], dp["wo"], dp["bo"],
              dp["ln1_g"], dp["ln1_b"], dp["w1"], dp["b1"], dp["w2"], dp["b2"],
              dp["ln2_g"], dp["ln2_b"], wout, bout]
    return pl.pallas_call(
        functools.partial(_decoder_stack_kernel, n_layer=n_layer,
                          n_head=n_head, eps=eps),
        out_shape=jax.ShapeDtypeStruct((BT, npad), jnp.float32),
        grid=(1,),
        in_specs=[_full_spec(a) for a in inputs],
        out_specs=pl.BlockSpec((BT, npad), lambda i: (0, 0)),
        compiler_params=pltpu.CompilerParams(
            dimension_semantics=("arbitrary",),
            vmem_limit_bytes=_VMEM_LIMIT),
    )(*inputs)


# ----------------------------------------------------------------------------
# Parameter init (deterministic, synthetic; stacked [L, ...] weights, bf16)
# ----------------------------------------------------------------------------
def _w(key, shape, scale=0.02, dtype=jnp.bfloat16):
    return (scale * jax.random.normal(key, shape, jnp.float32)).astype(dtype)


def stack_init(key, n_layer, d, dff, n_head):
    dh = d // n_head
    ks = jax.random.split(key, 4)
    return {
        "wqkv": _w(ks[0], (n_layer, d, 3 * d)),
        "bqkv": jnp.zeros((n_layer, 1, 3 * d), jnp.float32),
        "wo": _w(ks[1], (n_layer, n_head, dh, d)),          # head-major
        "bo": jnp.zeros((n_layer, 1, d), jnp.float32),
        "ln1_g": jnp.ones((n_layer, 1, d), jnp.float32),
        "ln1_b": jnp.zeros((n_layer, 1, d), jnp.float32),
        "w1": _w(ks[2], (n_layer, d, dff)),
        "b1": jnp.zeros((n_layer, 1, dff), jnp.float32),
        "w2": _w(ks[3], (n_layer, dff, d)),
        "b2": jnp.zeros((n_layer, 1, d), jnp.float32),
        "ln2_g": jnp.ones((n_layer, 1, d), jnp.float32),
        "ln2_b": jnp.zeros((n_layer, 1, d), jnp.float32),
    }


def init_vqvae_params(key, cfg):
    ks = jax.random.split(key, 8)
    d_enc, d_dec = cfg["enc_d_model"], cfg["dec_d_model"]
    dl, G = cfg["d_vae_latent"], cfg["n_groups"]
    dg = dl // G
    p = {}
    p["token_emb"] = 0.02 * jax.random.normal(
        ks[0], (cfg["n_token"], cfg["d_embed"]), jnp.float32)
    p["enc"] = stack_init(ks[1], cfg["enc_n_layer"], d_enc, cfg["enc_d_ff"],
                          cfg["enc_n_head"])
    # mu projection + latent stay f32 (precision of the VQ latent)
    p["enc_mu"] = {"w": _w(ks[2], (d_enc, dl), dtype=jnp.float32),
                   "b": jnp.zeros((1, dl), jnp.float32)}
    cpad = ((cfg["n_codes"] + 127) // 128) * 128
    cb = 0.5 * jax.random.normal(ks[3], (cfg["n_codes"], dg), jnp.float32)
    cb_pad = jnp.zeros((cpad, dg), jnp.float32).at[:cfg["n_codes"]].set(cb)
    p["codebook_pad"] = cb_pad
    p["codebook_sq"] = jnp.sum(cb_pad * cb_pad, axis=-1, keepdims=True).T   # [1, Cpad]
    p["dec"] = stack_init(ks[4], cfg["dec_n_layer"], d_dec, cfg["dec_d_ff"],
                          cfg["dec_n_head"])
    p["dec"]["wseg"] = _w(ks[5], (cfg["dec_n_layer"], dl, d_dec))
    p["dec"]["bseg"] = jnp.zeros((cfg["dec_n_layer"], 1, d_dec), jnp.float32)
    npad = ((cfg["n_token"] + 127) // 128) * 128
    wop = 0.02 * jax.random.normal(ks[6], (d_dec, cfg["n_token"]), jnp.float32)
    p["dec_out_proj"] = {
        "w": jnp.zeros((d_dec, npad), jnp.float32)
                .at[:, :cfg["n_token"]].set(wop).astype(jnp.bfloat16),
        "b": jnp.zeros((1, npad), jnp.float32),
    }
    return p


# ----------------------------------------------------------------------------
# Model glue (embedding gather, PE, biases, segment assignment) in plain JAX
# ----------------------------------------------------------------------------
def sinusoidal_pe(seq_len, d):
    pos = jnp.arange(seq_len, dtype=jnp.float32)[:, None]
    i = jnp.arange(0, d, 2, dtype=jnp.float32)[None, :]
    div = jnp.exp(-math.log(10000.0) * i / d)
    pe = jnp.zeros((seq_len, d), jnp.float32)
    pe = pe.at[:, 0::2].set(jnp.sin(pos * div))
    pe = pe.at[:, 1::2].set(jnp.cos(pos * div))
    return pe                                            # [S, d]


def vqvae_forward(params, cfg, enc_inp, dec_inp, dec_inp_seq_pos,
                  padding_mask=None):
    d_model = cfg["enc_d_model"]
    dl = cfg["d_vae_latent"]
    enc_T, enc_bt, enc_nseq = enc_inp.shape
    dec_T, dec_bt = dec_inp.shape
    N = enc_bt * enc_nseq
    emb_scale = math.sqrt(d_model)

    # token embedding (gather) + sinusoidal PE; flatten to row-major [B*S, D]
    enc_tok = jnp.take(params["token_emb"], enc_inp, axis=0) * emb_scale
    enc_x = enc_tok.reshape(enc_T, N, d_model) + sinusoidal_pe(enc_T, cfg["d_embed"])[:, None, :]
    enc_flat = enc_x.transpose(1, 0, 2).reshape(N * enc_T, d_model)

    dec_tok = jnp.take(params["token_emb"], dec_inp, axis=0) * emb_scale
    dec_x = dec_tok + sinusoidal_pe(dec_T, cfg["d_embed"])[:, None, :]
    dec_flat = dec_x.transpose(1, 0, 2).reshape(dec_bt * dec_T, d_model)

    # encoder additive attention bias: block-diagonal over sequences (+padding)
    enc_seq_id = jnp.repeat(jnp.arange(N), enc_T)
    enc_allow = enc_seq_id[:, None] == enc_seq_id[None, :]
    if padding_mask is not None:                         # True = padded key
        pm = padding_mask.reshape(N, enc_T).astype(bool).reshape(-1)
        enc_allow = enc_allow & jnp.logical_not(pm)[None, :]
    enc_bias = jnp.where(enc_allow, 0.0, -1e9).astype(jnp.float32)

    # ---- encoder stack (+ pooling + mu + grouped VQ) : one fused kernel
    mu, q = encoder_stack(
        enc_flat, enc_bias, params["enc"],
        params["enc_mu"]["w"], params["enc_mu"]["b"],
        params["codebook_pad"], params["codebook_sq"],
        n_layer=cfg["enc_n_layer"], n_head=cfg["enc_n_head"],
        n_seq=N, seq_len=enc_T,
        n_groups=cfg["n_groups"], n_codes=cfg["n_codes"])

    # standard codebook + commitment loss with stop-gradient split
    diff = (jnp.mean((jax.lax.stop_gradient(mu) - q) ** 2)
            + 0.25 * jnp.mean((mu - jax.lax.stop_gradient(q)) ** 2))
    z = mu + jax.lax.stop_gradient(q - mu)               # straight-through
    encoder_out = {"z": z, "diff": diff}

    # ---- decoder segment conditioning:
    # dec_seg_emb[t, n] = latent[n, seg] for dec_inp_seq_pos[n, seg] <= t < [n, seg+1]
    latent = z.reshape(enc_bt, enc_nseq, dl)
    t = jnp.arange(dec_T)

    def per_batch(bounds, lat_b):
        seg = jnp.searchsorted(bounds, t, side="right") - 1
        valid = (seg >= 0) & (seg < enc_nseq)
        segc = jnp.clip(seg, 0, enc_nseq - 1)
        return jnp.where(valid[:, None], lat_b[segc], 0.0)

    dec_seg = jax.vmap(per_batch)(dec_inp_seq_pos, latent)        # [B, T, dl]
    dec_seg_flat = dec_seg.reshape(dec_bt * dec_T, dl)

    # decoder additive attention bias: block-diagonal + causal
    dec_seq_id = jnp.repeat(jnp.arange(dec_bt), dec_T)
    ridx = jnp.arange(dec_bt * dec_T)
    dec_allow = ((dec_seq_id[:, None] == dec_seq_id[None, :])
                 & (ridx[:, None] >= ridx[None, :]))
    dec_bias = jnp.where(dec_allow, 0.0, -1e9).astype(jnp.float32)

    # ---- decoder stack (+ seg conditioning + out projection) : one fused kernel
    logits_pad = decoder_stack(
        dec_flat, dec_seg_flat, dec_bias, params["dec"],
        params["dec_out_proj"]["w"], params["dec_out_proj"]["b"],
        n_layer=cfg["dec_n_layer"], n_head=cfg["dec_n_head"])      # [B*T, Npad]

    logits = logits_pad.reshape(dec_bt, dec_T, -1)[:, :, :cfg["n_token"]]
    dec_logits = logits.transpose(1, 0, 2)               # [T, B, n_token]
    return mu, encoder_out, dec_logits


# ----------------------------------------------------------------------------
if __name__ == "__main__":
    cfg = dict(
        enc_n_layer=2, enc_n_head=4, enc_d_model=32, enc_d_ff=64,
        dec_n_layer=2, dec_n_head=4, dec_d_model=32, dec_d_ff=64,
        d_vae_latent=32, d_embed=32, n_token=40,
        n_codes=16, n_groups=4,
    )

    key = jax.random.PRNGKey(0)
    k_param, k_enc, k_dec = jax.random.split(key, 3)
    params = init_vqvae_params(k_param, cfg)

    ENC_T, BT, NSEQ = 8, 2, 3
    DEC_T = 12
    enc_inp = jax.random.randint(k_enc, (ENC_T, BT, NSEQ), 0, cfg["n_token"],
                                 dtype=jnp.int32)
    dec_inp = jax.random.randint(k_dec, (DEC_T, BT), 0, cfg["n_token"],
                                 dtype=jnp.int32)
    dec_inp_seq_pos = jnp.array([[0, 4, 8, 12],
                                 [0, 5, 9, 12]], dtype=jnp.int32)

    fwd = jax.jit(lambda prm, a, b, c: vqvae_forward(prm, cfg, a, b, c,
                                                     padding_mask=None))
    mu, encoder_out, dec_logits = fwd(params, enc_inp, dec_inp, dec_inp_seq_pos)

    jax.block_until_ready((mu, encoder_out["z"], encoder_out["diff"], dec_logits))
    assert mu.shape == (BT * NSEQ, cfg["d_vae_latent"])
    assert encoder_out["z"].shape == (BT * NSEQ, cfg["d_vae_latent"])
    assert dec_logits.shape == (DEC_T, BT, cfg["n_token"])
    assert bool(jnp.all(jnp.isfinite(dec_logits)))
    print("KERNEL_OK")
</pallas_src>

<mosaic_0001>
module attributes {stable_mosaic.version = 11 : i64} {
  func.func @_encoder_stack_kernel(%arg0: i32, %arg1: memref<48x32xf32, #tpu.memory_space<vmem>>, %arg2: memref<48x48xf32, #tpu.memory_space<vmem>>, %arg3: memref<2x32x96xbf16, #tpu.memory_space<vmem>>, %arg4: memref<2x1x96xf32, #tpu.memory_space<vmem>>, %arg5: memref<2x4x8x32xbf16, #tpu.memory_space<vmem>>, %arg6: memref<2x1x32xf32, #tpu.memory_space<vmem>>, %arg7: memref<2x1x32xf32, #tpu.memory_space<vmem>>, %arg8: memref<2x1x32xf32, #tpu.memory_space<vmem>>, %arg9: memref<2x32x64xbf16, #tpu.memory_space<vmem>>, %arg10: memref<2x1x64xf32, #tpu.memory_space<vmem>>, %arg11: memref<2x64x32xbf16, #tpu.memory_space<vmem>>, %arg12: memref<2x1x32xf32, #tpu.memory_space<vmem>>, %arg13: memref<2x1x32xf32, #tpu.memory_space<vmem>>, %arg14: memref<2x1x32xf32, #tpu.memory_space<vmem>>, %arg15: memref<32x32xf32, #tpu.memory_space<vmem>>, %arg16: memref<1x32xf32, #tpu.memory_space<vmem>>, %arg17: memref<128x8xf32, #tpu.memory_space<vmem>>, %arg18: memref<1x128xf32, #tpu.memory_space<vmem>>, %arg19: memref<6x32xf32, #tpu.memory_space<vmem>>, %arg20: memref<6x32xf32, #tpu.memory_space<vmem>>) attributes {dimension_semantics = [#tpu.dimension_semantics<arbitrary>], iteration_bounds = array<i64: 1>, scalar_prefetch = 0 : i64, scratch_operands = 0 : i64, tpu.core_type = #tpu.core_type<tc>, window_params = [{pipeline_mode = #tpu.pipeline_mode<synchronous>, transform_indices = @transform_0, window_bounds = array<i64: 48, 32>}, {pipeline_mode = #tpu.pipeline_mode<synchronous>, transform_indices = @transform_1, window_bounds = array<i64: 48, 48>}, {pipeline_mode = #tpu.pipeline_mode<synchronous>, transform_indices = @transform_2, window_bounds = array<i64: 2, 32, 96>}, {pipeline_mode = #tpu.pipeline_mode<synchronous>, transform_indices = @transform_3, window_bounds = array<i64: 2, 1, 96>}, {pipeline_mode = #tpu.pipeline_mode<synchronous>, transform_indices = @transform_4, window_bounds = array<i64: 2, 4, 8, 32>}, {pipeline_mode = #tpu.pipeline_mode<synchronous>, transform_indices = @transform_5, window_bounds = array<i64: 2, 1, 32>}, {pipeline_mode = #tpu.pipeline_mode<synchronous>, transform_indices = @transform_6, window_bounds = array<i64: 2, 1, 32>}, {pipeline_mode = #tpu.pipeline_mode<synchronous>, transform_indices = @transform_7, window_bounds = array<i64: 2, 1, 32>}, {pipeline_mode = #tpu.pipeline_mode<synchronous>, transform_indices = @transform_8, window_bounds = array<i64: 2, 32, 64>}, {pipeline_mode = #tpu.pipeline_mode<synchronous>, transform_indices = @transform_9, window_bounds = array<i64: 2, 1, 64>}, {pipeline_mode = #tpu.pipeline_mode<synchronous>, transform_indices = @transform_10, window_bounds = array<i64: 2, 64, 32>}, {pipeline_mode = #tpu.pipeline_mode<synchronous>, transform_indices = @transform_11, window_bounds = array<i64: 2, 1, 32>}, {pipeline_mode = #tpu.pipeline_mode<synchronous>, transform_indices = @transform_12, window_bounds = array<i64: 2, 1, 32>}, {pipeline_mode = #tpu.pipeline_mode<synchronous>, transform_indices = @transform_13, window_bounds = array<i64: 2, 1, 32>}, {pipeline_mode = #tpu.pipeline_mode<synchronous>, transform_indices = @transform_14, window_bounds = array<i64: 32, 32>}, {pipeline_mode = #tpu.pipeline_mode<synchronous>, transform_indices = @transform_15, window_bounds = array<i64: 1, 32>}, {pipeline_mode = #tpu.pipeline_mode<synchronous>, transform_indices = @transform_16, window_bounds = array<i64: 128, 8>}, {pipeline_mode = #tpu.pipeline_mode<synchronous>, transform_indices = @transform_17, window_bounds = array<i64: 1, 128>}, {pipeline_mode = #tpu.pipeline_mode<synchronous>, transform_indices = @transform_18, window_bounds = array<i64: 6, 32>}, {pipeline_mode = #tpu.pipeline_mode<synchronous>, transform_indices = @transform_19, window_bounds = array<i64: 6, 32>}]} {
    %c0 = arith.constant 0 : index
    %c0_0 = arith.constant 0 : index
    %0 = vector.load %arg1[%c0, %c0_0] : memref<48x32xf32, #tpu.memory_space<vmem>>, vector<48x32xf32>
    %c0_1 = arith.constant 0 : index
    %c0_2 = arith.constant 0 : index
    %1 = vector.load %arg2[%c0_1, %c0_2] : memref<48x48xf32, #tpu.memory_space<vmem>>, vector<48x48xf32>
    %2 = arith.truncf %0 : vector<48x32xf32> to vector<48x32xbf16>
    %c0_3 = arith.constant 0 : index
    %c0_4 = arith.constant 0 : index
    %c0_5 = arith.constant 0 : index
    %3 = vector.load %arg3[%c0_3, %c0_4, %c0_5] : memref<2x32x96xbf16, #tpu.memory_space<vmem>>, vector<1x32x96xbf16>
    %4 = vector.shape_cast %3 : vector<1x32x96xbf16> to vector<32x96xbf16>
    %cst = arith.constant dense<0.000000e+00> : vector<48x96xf32>
    %5 = tpu.matmul %2, %4, %cst {dimension_numbers = #tpu.dot_dimension_numbers<[1], [0], [0], [1], [0, 0, 1, 1], [], []>} : vector<48x32xbf16>, vector<32x96xbf16>, vector<48x96xf32> -> vector<48x96xf32>
    %c0_6 = arith.constant 0 : index
    %c0_7 = arith.constant 0 : index
    %c0_8 = arith.constant 0 : index
    %6 = vector.load %arg4[%c0_6, %c0_7, %c0_8] : memref<2x1x96xf32, #tpu.memory_space<vmem>>, vector<1x1x96xf32>
    %7 = vector.shape_cast %6 : vector<1x1x96xf32> to vector<1x96xf32>
    %8 = vector.broadcast %7 : vector<1x96xf32> to vector<48x96xf32>
    %9 = arith.addf %5, %8 : vector<48x96xf32>
    %cst_9 = arith.constant 0.000000e+00 : f32
    %10 = vector.broadcast %cst_9 : f32 to vector<48x32xf32>
    %11 = vector.extract_strided_slice %9 {offsets = [0, 0], sizes = [48, 8], strides = [1, 1]} : vector<48x96xf32> to vector<48x8xf32>
    %cst_10 = arith.constant 0.353553385 : f32
    %12 = vector.broadcast %cst_10 : f32 to vector<48x8xf32>
    %13 = arith.mulf %11, %12 : vector<48x8xf32>
    %14 = arith.truncf %13 : vector<48x8xf32> to vector<48x8xbf16>
    %15 = vector.extract_strided_slice %9 {offsets = [0, 32], sizes = [48, 8], strides = [1, 1]} : vector<48x96xf32> to vector<48x8xf32>
    %16 = arith.truncf %15 : vector<48x8xf32> to vector<48x8xbf16>
    %17 = vector.extract_strided_slice %9 {offsets = [0, 64], sizes = [48, 8], strides = [1, 1]} : vector<48x96xf32> to vector<48x8xf32>
    %18 = arith.truncf %17 : vector<48x8xf32> to vector<48x8xbf16>
    %cst_11 = arith.constant dense<0.000000e+00> : vector<48x48xf32>
    %19 = tpu.matmul %14, %16, %cst_11 {dimension_numbers = #tpu.dot_dimension_numbers<[1], [1], [0], [0], [0, 0, 1, 0], [], []>} : vector<48x8xbf16>, vector<48x8xbf16>, vector<48x48xf32> -> vector<48x48xf32>
    %20 = arith.addf %19, %1 : vector<48x48xf32>
    %cst_12 = arith.constant dense<0xFF800000> : vector<48xf32>
    %21 = vector.multi_reduction <maximumf>, %20, %cst_12 [1] : vector<48x48xf32> to vector<48xf32>
    %22 = vector.shape_cast %21 : vector<48xf32> to vector<48x1xf32>
    %23 = vector.broadcast %22 : vector<48x1xf32> to vector<48x48xf32>
    %24 = arith.subf %20, %23 : vector<48x48xf32>
    %25 = math.exp %24 : vector<48x48xf32>
    %cst_13 = arith.constant dense<0.000000e+00> : vector<48xf32>
    %26 = vector.multi_reduction <add>, %25, %cst_13 [1] : vector<48x48xf32> to vector<48xf32>
    %27 = vector.shape_cast %26 : vector<48xf32> to vector<48x1xf32>
    %28 = tpu.reciprocal %27 {approx = true} : vector<48x1xf32> -> vector<48x1xf32>
    %29 = vector.broadcast %28 : vector<48x1xf32> to vector<48x48xf32>
    %30 = arith.mulf %25, %29 : vector<48x48xf32>
    %31 = arith.truncf %30 : vector<48x48xf32> to vector<48x48xbf16>
    %cst_14 = arith.constant dense<0.000000e+00> : vector<48x8xf32>
    %32 = tpu.matmul %31, %18, %cst_14 {dimension_numbers = #tpu.dot_dimension_numbers<[1], [0], [0], [1], [0, 0, 1, 1], [], []>} : vector<48x48xbf16>, vector<48x8xbf16>, vector<48x8xf32> -> vector<48x8xf32>
    %33 = arith.truncf %32 : vector<48x8xf32> to vector<48x8xbf16>
    %c0_15 = arith.constant 0 : index
    %c0_16 = arith.constant 0 : index
    %c0_17 = arith.constant 0 : index
    %c0_18 = arith.constant 0 : index
    %34 = vector.load %arg5[%c0_15, %c0_16, %c0_17, %c0_18] : memref<2x4x8x32xbf16, #tpu.memory_space<vmem>>, vector<1x1x8x32xbf16>
    %35 = vector.shape_cast %34 : vector<1x1x8x32xbf16> to vector<8x32xbf16>
    %cst_19 = arith.constant dense<0.000000e+00> : vector<48x32xf32>
    %36 = tpu.matmul %33, %35, %cst_19 {dimension_numbers = #tpu.dot_dimension_numbers<[1], [0], [0], [1], [0, 0, 1, 1], [], []>} : vector<48x8xbf16>, vector<8x32xbf16>, vector<48x32xf32> -> vector<48x32xf32>
    %37 = arith.addf %10, %36 : vector<48x32xf32>
    %38 = vector.extract_strided_slice %9 {offsets = [0, 8], sizes = [48, 8], strides = [1, 1]} : vector<48x96xf32> to vector<48x8xf32>
    %cst_20 = arith.constant 0.353553385 : f32
    %39 = vector.broadcast %cst_20 : f32 to vector<48x8xf32>
    %40 = arith.mulf %38, %39 : vector<48x8xf32>
    %41 = arith.truncf %40 : vector<48x8xf32> to vector<48x8xbf16>
    %42 = vector.extract_strided_slice %9 {offsets = [0, 40], sizes = [48, 8], strides = [1, 1]} : vector<48x96xf32> to vector<48x8xf32>
    %43 = arith.truncf %42 : vector<48x8xf32> to vector<48x8xbf16>
    %44 = vector.extract_strided_slice %9 {offsets = [0, 72], sizes = [48, 8], strides = [1, 1]} : vector<48x96xf32> to vector<48x8xf32>
    %45 = arith.truncf %44 : vector<48x8xf32> to vector<48x8xbf16>
    %cst_21 = arith.constant dense<0.000000e+00> : vector<48x48xf32>
    %46 = tpu.matmul %41, %43, %cst_21 {dimension_numbers = #tpu.dot_dimension_numbers<[1], [1], [0], [0], [0, 0, 1, 0], [], []>} : vector<48x8xbf16>, vector<48x8xbf16>, vector<48x48xf32> -> vector<48x48xf32>
    %47 = arith.addf %46, %1 : vector<48x48xf32>
    %cst_22 = arith.constant dense<0xFF800000> : vector<48xf32>
    %48 = vector.multi_reduction <maximumf>, %47, %cst_22 [1] : vector<48x48xf32> to vector<48xf32>
    %49 = vector.shape_cast %48 : vector<48xf32> to vector<48x1xf32>
    %50 = vector.broadcast %49 : vector<48x1xf32> to vector<48x48xf32>
    %51 = arith.subf %47, %50 : vector<48x48xf32>
    %52 = math.exp %51 : vector<48x48xf32>
    %cst_23 = arith.constant dense<0.000000e+00> : vector<48xf32>
    %53 = vector.multi_reduction <add>, %52, %cst_23 [1] : vector<48x48xf32> to vector<48xf32>
    %54 = vector.shape_cast %53 : vector<48xf32> to vector<48x1xf32>
    %55 = tpu.reciprocal %54 {approx = true} : vector<48x1xf32> -> vector<48x1xf32>
    %56 = vector.broadcast %55 : vector<48x1xf32> to vector<48x48xf32>
    %57 = arith.mulf %52, %56 : vector<48x48xf32>
    %58 = arith.truncf %57 : vector<48x48xf32> to vector<48x48xbf16>
    %cst_24 = arith.constant dense<0.000000e+00> : vector<48x8xf32>
    %59 = tpu.matmul %58, %45, %cst_24 {dimension_numbers = #tpu.dot_dimension_numbers<[1], [0], [0], [1], [0, 0, 1, 1], [], []>} : vector<48x48xbf16>, vector<48x8xbf16>, vector<48x8xf32> -> vector<48x8xf32>
    %60 = arith.truncf %59 : vector<48x8xf32> to vector<48x8xbf16>
    %c0_25 = arith.constant 0 : index
    %c1 = arith.constant 1 : index
    %c0_26 = arith.constant 0 : index
    %c0_27 = arith.constant 0 : index
    %61 = vector.load %arg5[%c0_25, %c1, %c0_26, %c0_27] : memref<2x4x8x32xbf16, #tpu.memory_space<vmem>>, vector<1x1x8x32xbf16>
    %62 = vector.shape_cast %61 : vector<1x1x8x32xbf16> to vector<8x32xbf16>
    %cst_28 = arith.constant dense<0.000000e+00> : vector<48x32xf32>
    %63 = tpu.matmul %60, %62, %cst_28 {dimension_numbers = #tpu.dot_dimension_numbers<[1], [0], [0], [1], [0, 0, 1, 1], [], []>} : vector<48x8xbf16>, vector<8x32xbf16>, vector<48x32xf32> -> vector<48x32xf32>
    %64 = arith.addf %37, %63 : vector<48x32xf32>
    %65 = vector.extract_strided_slice %9 {offsets = [0, 16], sizes = [48, 8], strides = [1, 1]} : vector<48x96xf32> to vector<48x8xf32>
    %cst_29 = arith.constant 0.353553385 : f32
    %66 = vector.broadcast %cst_29 : f32 to vector<48x8xf32>
    %67 = arith.mulf %65, %66 : vector<48x8xf32>
    %68 = arith.truncf %67 : vector<48x8xf32> to vector<48x8xbf16>
    %69 = vector.extract_strided_slice %9 {offsets = [0, 48], sizes = [48, 8], strides = [1, 1]} : vector<48x96xf32> to vector<48x8xf32>
    %70 = arith.truncf %69 : vector<48x8xf32> to vector<48x8xbf16>
    %71 = vector.extract_strided_slice %9 {offsets = [0, 80], sizes = [48, 8], strides = [1, 1]} : vector<48x96xf32> to vector<48x8xf32>
    %72 = arith.truncf %71 : vector<48x8xf32> to vector<48x8xbf16>
    %cst_30 = arith.constant dense<0.000000e+00> : vector<48x48xf32>
    %73 = tpu.matmul %68, %70, %cst_30 {dimension_numbers = #tpu.dot_dimension_numbers<[1], [1], [0], [0], [0, 0, 1, 0], [], []>} : vector<48x8xbf16>, vector<48x8xbf16>, vector<48x48xf32> -> vector<48x48xf32>
    %74 = arith.addf %73, %1 : vector<48x48xf32>
    %cst_31 = arith.constant dense<0xFF800000> : vector<48xf32>
    %75 = vector.multi_reduction <maximumf>, %74, %cst_31 [1] : vector<48x48xf32> to vector<48xf32>
    %76 = vector.shape_cast %75 : vector<48xf32> to vector<48x1xf32>
    %77 = vector.broadcast %76 : vector<48x1xf32> to vector<48x48xf32>
    %78 = arith.subf %74, %77 : vector<48x48xf32>
    %79 = math.exp %78 : vector<48x48xf32>
    %cst_32 = arith.constant dense<0.000000e+00> : vector<48xf32>
    %80 = vector.multi_reduction <add>, %79, %cst_32 [1] : vector<48x48xf32> to vector<48xf32>
    %81 = vector.shape_cast %80 : vector<48xf32> to vector<48x1xf32>
    %82 = tpu.reciprocal %81 {approx = true} : vector<48x1xf32> -> vector<48x1xf32>
    %83 = vector.broadcast %82 : vector<48x1xf32> to vector<48x48xf32>
    %84 = arith.mulf %79, %83 : vector<48x48xf32>
    %85 = arith.truncf %84 : vector<48x48xf32> to vector<48x48xbf16>
    %cst_33 = arith.constant dense<0.000000e+00> : vector<48x8xf32>
    %86 = tpu.matmul %85, %72, %cst_33 {dimension_numbers = #tpu.dot_dimension_numbers<[1], [0], [0], [1], [0, 0, 1, 1], [], []>} : vector<48x48xbf16>, vector<48x8xbf16>, vector<48x8xf32> -> vector<48x8xf32>
    %87 = arith.truncf %86 : vector<48x8xf32> to vector<48x8xbf16>
    %c0_34 = arith.constant 0 : index
    %c2 = arith.constant 2 : index
    %c0_35 = arith.constant 0 : index
    %c0_36 = arith.constant 0 : index
    %88 = vector.load %arg5[%c0_34, %c2, %c0_35, %c0_36] : memref<2x4x8x32xbf16, #tpu.memory_space<vmem>>, vector<1x1x8x32xbf16>
    %89 = vector.shape_cast %88 : vector<1x1x8x32xbf16> to vector<8x32xbf16>
    %cst_37 = arith.constant dense<0.000000e+00> : vector<48x32xf32>
    %90 = tpu.matmul %87, %89, %cst_37 {dimension_numbers = #tpu.dot_dimension_numbers<[1], [0], [0], [1], [0, 0, 1, 1], [], []>} : vector<48x8xbf16>, vector<8x32xbf16>, vector<48x32xf32> -> vector<48x32xf32>
    %91 = arith.addf %64, %90 : vector<48x32xf32>
    %92 = vector.extract_strided_slice %9 {offsets = [0, 24], sizes = [48, 8], strides = [1, 1]} : vector<48x96xf32> to vector<48x8xf32>
    %cst_38 = arith.constant 0.353553385 : f32
    %93 = vector.broadcast %cst_38 : f32 to vector<48x8xf32>
    %94 = arith.mulf %92, %93 : vector<48x8xf32>
    %95 = arith.truncf %94 : vector<48x8xf32> to vector<48x8xbf16>
    %96 = vector.extract_strided_slice %9 {offsets = [0, 56], sizes = [48, 8], strides = [1, 1]} : vector<48x96xf32> to vector<48x8xf32>
    %97 = arith.truncf %96 : vector<48x8xf32> to vector<48x8xbf16>
    %98 = vector.extract_strided_slice %9 {offsets = [0, 88], sizes = [48, 8], strides = [1, 1]} : vector<48x96xf32> to vector<48x8xf32>
    %99 = arith.truncf %98 : vector<48x8xf32> to vector<48x8xbf16>
    %cst_39 = arith.constant dense<0.000000e+00> : vector<48x48xf32>
    %100 = tpu.matmul %95, %97, %cst_39 {dimension_numbers = #tpu.dot_dimension_numbers<[1], [1], [0], [0], [0, 0, 1, 0], [], []>} : vector<48x8xbf16>, vector<48x8xbf16>, vector<48x48xf32> -> vector<48x48xf32>
    %101 = arith.addf %100, %1 : vector<48x48xf32>
    %cst_40 = arith.constant dense<0xFF800000> : vector<48xf32>
    %102 = vector.multi_reduction <maximumf>, %101, %cst_40 [1] : vector<48x48xf32> to vector<48xf32>
    %103 = vector.shape_cast %102 : vector<48xf32> to vector<48x1xf32>
    %104 = vector.broadcast %103 : vector<48x1xf32> to vector<48x48xf32>
    %105 = arith.subf %101, %104 : vector<48x48xf32>
    %106 = math.exp %105 : vector<48x48xf32>
    %cst_41 = arith.constant dense<0.000000e+00> : vector<48xf32>
    %107 = vector.multi_reduction <add>, %106, %cst_41 [1] : vector<48x48xf32> to vector<48xf32>
    %108 = vector.shape_cast %107 : vector<48xf32> to vector<48x1xf32>
    %109 = tpu.reciprocal %108 {approx = true} : vector<48x1xf32> -> vector<48x1xf32>
    %110 = vector.broadcast %109 : vector<48x1xf32> to vector<48x48xf32>
    %111 = arith.mulf %106, %110 : vector<48x48xf32>
    %112 = arith.truncf %111 : vector<48x48xf32> to vector<48x48xbf16>
    %cst_42 = arith.constant dense<0.000000e+00> : vector<48x8xf32>
    %113 = tpu.matmul %112, %99, %cst_42 {dimension_numbers = #tpu.dot_dimension_numbers<[1], [0], [0], [1], [0, 0, 1, 1], [], []>} : vector<48x48xbf16>, vector<48x8xbf16>, vector<48x8xf32> -> vector<48x8xf32>
    %114 = arith.truncf %113 : vector<48x8xf32> to vector<48x8xbf16>
    %c0_43 = arith.constant 0 : index
    %c3 = arith.constant 3 : index
    %c0_44 = arith.constant 0 : index
    %c0_45 = arith.constant 0 : index
    %115 = vector.load %arg5[%c0_43, %c3, %c0_44, %c0_45] : memref<2x4x8x32xbf16, #tpu.memory_space<vmem>>, vector<1x1x8x32xbf16>
    %116 = vector.shape_cast %115 : vector<1x1x8x32xbf16> to vector<8x32xbf16>
    %cst_46 = arith.constant dense<0.000000e+00> : vector<48x32xf32>
    %117 = tpu.matmul %114, %116, %cst_46 {dimension_numbers = #tpu.dot_dimension_numbers<[1], [0], [0], [1], [0, 0, 1, 1], [], []>} : vector<48x8xbf16>, vector<8x32xbf16>, vector<48x32xf32> -> vector<48x32xf32>
    %118 = arith.addf %91, %117 : vector<48x32xf32>
    %c0_47 = arith.constant 0 : index
    %c0_48 = arith.constant 0 : index
    %c0_49 = arith.constant 0 : index
    %119 = vector.load %arg6[%c0_47, %c0_48, %c0_49] : memref<2x1x32xf32, #tpu.memory_space<vmem>>, vector<1x1x32xf32>
    %120 = vector.shape_cast %119 : vector<1x1x32xf32> to vector<1x32xf32>
    %121 = vector.broadcast %120 : vector<1x32xf32> to vector<48x32xf32>
    %122 = arith.addf %118, %121 : vector<48x32xf32>
    %123 = arith.addf %0, %122 : vector<48x32xf32>
    %c0_50 = arith.constant 0 : index
    %c0_51 = arith.constant 0 : index
    %c0_52 = arith.constant 0 : index
    %124 = vector.load %arg7[%c0_50, %c0_51, %c0_52] : memref<2x1x32xf32, #tpu.memory_space<vmem>>, vector<1x1x32xf32>
    %125 = vector.shape_cast %124 : vector<1x1x32xf32> to vector<1x32xf32>
    %c0_53 = arith.constant 0 : index
    %c0_54 = arith.constant 0 : index
    %c0_55 = arith.constant 0 : index
    %126 = vector.load %arg8[%c0_53, %c0_54, %c0_55] : memref<2x1x32xf32, #tpu.memory_space<vmem>>, vector<1x1x32xf32>
    %127 = vector.shape_cast %126 : vector<1x1x32xf32> to vector<1x32xf32>
    %cst_56 = arith.constant dense<0.000000e+00> : vector<48xf32>
    %128 = vector.multi_reduction <add>, %123, %cst_56 [1] : vector<48x32xf32> to vector<48xf32>
    %129 = vector.shape_cast %128 : vector<48xf32> to vector<48x1xf32>
    %cst_57 = arith.constant 3.200000e+01 : f32
    %130 = vector.broadcast %cst_57 : f32 to vector<48x1xf32>
    %131 = arith.divf %129, %130 : vector<48x1xf32>
    %132 = vector.broadcast %131 : vector<48x1xf32> to vector<48x32xf32>
    %133 = arith.subf %123, %132 : vector<48x32xf32>
    %134 = arith.mulf %133, %133 : vector<48x32xf32>
    %cst_58 = arith.constant dense<0.000000e+00> : vector<48xf32>
    %135 = vector.multi_reduction <add>, %134, %cst_58 [1] : vector<48x32xf32> to vector<48xf32>
    %136 = vector.shape_cast %135 : vector<48xf32> to vector<48x1xf32>
    %cst_59 = arith.constant 3.200000e+01 : f32
    %137 = vector.broadcast %cst_59 : f32 to vector<48x1xf32>
    %138 = arith.divf %136, %137 : vector<48x1xf32>
    %cst_60 = arith.constant 9.99999974E-6 : f32
    %139 = vector.broadcast %cst_60 : f32 to vector<48x1xf32>
    %140 = arith.addf %138, %139 : vector<48x1xf32>
    %141 = math.rsqrt %140 : vector<48x1xf32>
    %142 = vector.broadcast %141 : vector<48x1xf32> to vector<48x32xf32>
    %143 = arith.mulf %133, %142 : vector<48x32xf32>
    %144 = vector.broadcast %125 : vector<1x32xf32> to vector<48x32xf32>
    %145 = arith.mulf %143, %144 : vector<48x32xf32>
    %146 = vector.broadcast %127 : vector<1x32xf32> to vector<48x32xf32>
    %147 = arith.addf %145, %146 : vector<48x32xf32>
    %148 = arith.truncf %147 : vector<48x32xf32> to vector<48x32xbf16>
    %c0_61 = arith.constant 0 : index
    %c0_62 = arith.constant 0 : index
    %c0_63 = arith.constant 0 : index
    %149 = vector.load %arg9[%c0_61, %c0_62, %c0_63] : memref<2x32x64xbf16, #tpu.memory_space<vmem>>, vector<1x32x64xbf16>
    %150 = vector.shape_cast %149 : vector<1x32x64xbf16> to vector<32x64xbf16>
    %cst_64 = arith.constant dense<0.000000e+00> : vector<48x64xf32>
    %151 = tpu.matmul %148, %150, %cst_64 {dimension_numbers = #tpu.dot_dimension_numbers<[1], [0], [0], [1], [0, 0, 1, 1], [], []>} : vector<48x32xbf16>, vector<32x64xbf16>, vector<48x64xf32> -> vector<48x64xf32>
    %c0_65 = arith.constant 0 : index
    %c0_66 = arith.constant 0 : index
    %c0_67 = arith.constant 0 : index
    %152 = vector.load %arg10[%c0_65, %c0_66, %c0_67] : memref<2x1x64xf32, #tpu.memory_space<vmem>>, vector<1x1x64xf32>
    %153 = vector.shape_cast %152 : vector<1x1x64xf32> to vector<1x64xf32>
    %154 = vector.broadcast %153 : vector<1x64xf32> to vector<48x64xf32>
    %155 = arith.addf %151, %154 : vector<48x64xf32>
    %cst_68 = arith.constant 0.000000e+00 : f32
    %156 = vector.broadcast %cst_68 : f32 to vector<48x64xf32>
    %157 = arith.maximumf %155, %156 : vector<48x64xf32>
    %158 = arith.truncf %157 : vector<48x64xf32> to vector<48x64xbf16>
    %c0_69 = arith.constant 0 : index
    %c0_70 = arith.constant 0 : index
    %c0_71 = arith.constant 0 : index
    %159 = vector.load %arg11[%c0_69, %c0_70, %c0_71] : memref<2x64x32xbf16, #tpu.memory_space<vmem>>, vector<1x64x32xbf16>
    %160 = vector.shape_cast %159 : vector<1x64x32xbf16> to vector<64x32xbf16>
    %cst_72 = arith.constant dense<0.000000e+00> : vector<48x32xf32>
    %161 = tpu.matmul %158, %160, %cst_72 {dimension_numbers = #tpu.dot_dimension_numbers<[1], [0], [0], [1], [0, 0, 1, 1], [], []>} : vector<48x64xbf16>, vector<64x32xbf16>, vector<48x32xf32> -> vector<48x32xf32>
    %c0_73 = arith.constant 0 : index
    %c0_74 = arith.constant 0 : index
    %c0_75 = arith.constant 0 : index
    %162 = vector.load %arg12[%c0_73, %c0_74, %c0_75] : memref<2x1x32xf32, #tpu.memory_space<vmem>>, vector<1x1x32xf32>
    %163 = vector.shape_cast %162 : vector<1x1x32xf32> to vector<1x32xf32>
    %164 = vector.broadcast %163 : vector<1x32xf32> to vector<48x32xf32>
    %165 = arith.addf %161, %164 : vector<48x32xf32>
    %166 = arith.addf %147, %165 : vector<48x32xf32>
    %c0_76 = arith.constant 0 : index
    %c0_77 = arith.constant 0 : index
    %c0_78 = arith.constant 0 : index
    %167 = vector.load %arg13[%c0_76, %c0_77, %c0_78] : memref<2x1x32xf32, #tpu.memory_space<vmem>>, vector<1x1x32xf32>
    %168 = vector.shape_cast %167 : vector<1x1x32xf32> to vector<1x32xf32>
    %c0_79 = arith.constant 0 : index
    %c0_80 = arith.constant 0 : index
    %c0_81 = arith.constant 0 : index
    %169 = vector.load %arg14[%c0_79, %c0_80, %c0_81] : memref<2x1x32xf32, #tpu.memory_space<vmem>>, vector<1x1x32xf32>
    %170 = vector.shape_cast %169 : vector<1x1x32xf32> to vector<1x32xf32>
    %cst_82 = arith.constant dense<0.000000e+00> : vector<48xf32>
    %171 = vector.multi_reduction <add>, %166, %cst_82 [1] : vector<48x32xf32> to vector<48xf32>
    %172 = vector.shape_cast %171 : vector<48xf32> to vector<48x1xf32>
    %cst_83 = arith.constant 3.200000e+01 : f32
    %173 = vector.broadcast %cst_83 : f32 to vector<48x1xf32>
    %174 = arith.divf %172, %173 : vector<48x1xf32>
    %175 = vector.broadcast %174 : vector<48x1xf32> to vector<48x32xf32>
    %176 = arith.subf %166, %175 : vector<48x32xf32>
    %177 = arith.mulf %176, %176 : vector<48x32xf32>
    %cst_84 = arith.constant dense<0.000000e+00> : vector<48xf32>
    %178 = vector.multi_reduction <add>, %177, %cst_84 [1] : vector<48x32xf32> to vector<48xf32>
    %179 = vector.shape_cast %178 : vector<48xf32> to vector<48x1xf32>
    %cst_85 = arith.constant 3.200000e+01 : f32
    %180 = vector.broadcast %cst_85 : f32 to vector<48x1xf32>
    %181 = arith.divf %179, %180 : vector<48x1xf32>
    %cst_86 = arith.constant 9.99999974E-6 : f32
    %182 = vector.broadcast %cst_86 : f32 to vector<48x1xf32>
    %183 = arith.addf %181, %182 : vector<48x1xf32>
    %184 = math.rsqrt %183 : vector<48x1xf32>
    %185 = vector.broadcast %184 : vector<48x1xf32> to vector<48x32xf32>
    %186 = arith.mulf %176, %185 : vector<48x32xf32>
    %187 = vector.broadcast %168 : vector<1x32xf32> to vector<48x32xf32>
    %188 = arith.mulf %186, %187 : vector<48x32xf32>
    %189 = vector.broadcast %170 : vector<1x32xf32> to vector<48x32xf32>
    %190 = arith.addf %188, %189 : vector<48x32xf32>
    %191 = arith.truncf %190 : vector<48x32xf32> to vector<48x32xbf16>
    %c1_87 = arith.constant 1 : index
    %c0_88 = arith.constant 0 : index
    %c0_89 = arith.constant 0 : index
    %192 = vector.load %arg3[%c1_87, %c0_88, %c0_89] : memref<2x32x96xbf16, #tpu.memory_space<vmem>>, vector<1x32x96xbf16>
    %193 = vector.shape_cast %192 : vector<1x32x96xbf16> to vector<32x96xbf16>
    %cst_90 = arith.constant dense<0.000000e+00> : vector<48x96xf32>
    %194 = tpu.matmul %191, %193, %cst_90 {dimension_numbers = #tpu.dot_dimension_numbers<[1], [0], [0], [1], [0, 0, 1, 1], [], []>} : vector<48x32xbf16>, vector<32x96xbf16>, vector<48x96xf32> -> vector<48x96xf32>
    %c1_91 = arith.constant 1 : index
    %c0_92 = arith.constant 0 : index
    %c0_93 = arith.constant 0 : index
    %195 = vector.load %arg4[%c1_91, %c0_92, %c0_93] : memref<2x1x96xf32, #tpu.memory_space<vmem>>, vector<1x1x96xf32>
    %196 = vector.shape_cast %195 : vector<1x1x96xf32> to vector<1x96xf32>
    %197 = vector.broadcast %196 : vector<1x96xf32> to vector<48x96xf32>
    %198 = arith.addf %194, %197 : vector<48x96xf32>
    %cst_94 = arith.constant 0.000000e+00 : f32
    %199 = vector.broadcast %cst_94 : f32 to vector<48x32xf32>
    %200 = vector.extract_strided_slice %198 {offsets = [0, 0], sizes = [48, 8], strides = [1, 1]} : vector<48x96xf32> to vector<48x8xf32>
    %cst_95 = arith.constant 0.353553385 : f32
    %201 = vector.broadcast %cst_95 : f32 to vector<48x8xf32>
    %202 = arith.mulf %200, %201 : vector<48x8xf32>
    %203 = arith.truncf %202 : vector<48x8xf32> to vector<48x8xbf16>
    %204 = vector.extract_strided_slice %198 {offsets = [0, 32], sizes = [48, 8], strides = [1, 1]} : vector<48x96xf32> to vector<48x8xf32>
    %205 = arith.truncf %204 : vector<48x8xf32> to vector<48x8xbf16>
    %206 = vector.extract_strided_slice %198 {offsets = [0, 64], sizes = [48, 8], strides = [1, 1]} : vector<48x96xf32> to vector<48x8xf32>
    %207 = arith.truncf %206 : vector<48x8xf32> to vector<48x8xbf16>
    %cst_96 = arith.constant dense<0.000000e+00> : vector<48x48xf32>
    %208 = tpu.matmul %203, %205, %cst_96 {dimension_numbers = #tpu.dot_dimension_numbers<[1], [1], [0], [0], [0, 0, 1, 0], [], []>} : vector<48x8xbf16>, vector<48x8xbf16>, vector<48x48xf32> -> vector<48x48xf32>
    %209 = arith.addf %208, %1 : vector<48x48xf32>
    %cst_97 = arith.constant dense<0xFF800000> : vector<48xf32>
    %210 = vector.multi_reduction <maximumf>, %209, %cst_97 [1] : vector<48x48xf32> to vector<48xf32>
    %211 = vector.shape_cast %210 : vector<48xf32> to vector<48x1xf32>
    %212 = vector.broadcast %211 : vector<48x1xf32> to vector<48x48xf32>
    %213 = arith.subf %209, %212 : vector<48x48xf32>
    %214 = math.exp %213 : vector<48x48xf32>
    %cst_98 = arith.constant dense<0.000000e+00> : vector<48xf32>
    %215 = vector.multi_reduction <add>, %214, %cst_98 [1] : vector<48x48xf32> to vector<48xf32>
    %216 = vector.shape_cast %215 : vector<48xf32> to vector<48x1xf32>
    %217 = tpu.reciprocal %216 {approx = true} : vector<48x1xf32> -> vector<48x1xf32>
    %218 = vector.broadcast %217 : vector<48x1xf32> to vector<48x48xf32>
    %219 = arith.mulf %214, %218 : vector<48x48xf32>
    %220 = arith.truncf %219 : vector<48x48xf32> to vector<48x48xbf16>
    %cst_99 = arith.constant dense<0.000000e+00> : vector<48x8xf32>
    %221 = tpu.matmul %220, %207, %cst_99 {dimension_numbers = #tpu.dot_dimension_numbers<[1], [0], [0], [1], [0, 0, 1, 1], [], []>} : vector<48x48xbf16>, vector<48x8xbf16>, vector<48x8xf32> -> vector<48x8xf32>
    %222 = arith.truncf %221 : vector<48x8xf32> to vector<48x8xbf16>
    %c1_100 = arith.constant 1 : index
    %c0_101 = arith.constant 0 : index
    %c0_102 = arith.constant 0 : index
    %c0_103 = arith.constant 0 : index
    %223 = vector.load %arg5[%c1_100, %c0_101, %c0_102, %c0_103] : memref<2x4x8x32xbf16, #tpu.memory_space<vmem>>, vector<1x1x8x32xbf16>
    %224 = vector.shape_cast %223 : vector<1x1x8x32xbf16> to vector<8x32xbf16>
    %cst_104 = arith.constant dense<0.000000e+00> : vector<48x32xf32>
    %225 = tpu.matmul %222, %224, %cst_104 {dimension_numbers = #tpu.dot_dimension_numbers<[1], [0], [0], [1], [0, 0, 1, 1], [], []>} : vector<48x8xbf16>, vector<8x32xbf16>, vector<48x32xf32> -> vector<48x32xf32>
    %226 = arith.addf %199, %225 : vector<48x32xf32>
    %227 = vector.extract_strided_slice %198 {offsets = [0, 8], sizes = [48, 8], strides = [1, 1]} : vector<48x96xf32> to vector<48x8xf32>
    %cst_105 = arith.constant 0.353553385 : f32
    %228 = vector.broadcast %cst_105 : f32 to vector<48x8xf32>
    %229 = arith.mulf %227, %228 : vector<48x8xf32>
    %230 = arith.truncf %229 : vector<48x8xf32> to vector<48x8xbf16>
    %231 = vector.extract_strided_slice %198 {offsets = [0, 40], sizes = [48, 8], strides = [1, 1]} : vector<48x96xf32> to vector<48x8xf32>
    %232 = arith.truncf %231 : vector<48x8xf32> to vector<48x8xbf16>
    %233 = vector.extract_strided_slice %198 {offsets = [0, 72], sizes = [48, 8], strides = [1, 1]} : vector<48x96xf32> to vector<48x8xf32>
    %234 = arith.truncf %233 : vector<48x8xf32> to vector<48x8xbf16>
    %cst_106 = arith.constant dense<0.000000e+00> : vector<48x48xf32>
    %235 = tpu.matmul %230, %232, %cst_106 {dimension_numbers = #tpu.dot_dimension_numbers<[1], [1], [0], [0], [0, 0, 1, 0], [], []>} : vector<48x8xbf16>, vector<48x8xbf16>, vector<48x48xf32> -> vector<48x48xf32>
    %236 = arith.addf %235, %1 : vector<48x48xf32>
    %cst_107 = arith.constant dense<0xFF800000> : vector<48xf32>
    %237 = vector.multi_reduction <maximumf>, %236, %cst_107 [1] : vector<48x48xf32> to vector<48xf32>
    %238 = vector.shape_cast %237 : vector<48xf32> to vector<48x1xf32>
    %239 = vector.broadcast %238 : vector<48x1xf32> to vector<48x48xf32>
    %240 = arith.subf %236, %239 : vector<48x48xf32>
    %241 = math.exp %240 : vector<48x48xf32>
    %cst_108 = arith.constant dense<0.000000e+00> : vector<48xf32>
    %242 = vector.multi_reduction <add>, %241, %cst_108 [1] : vector<48x48xf32> to vector<48xf32>
    %243 = vector.shape_cast %242 : vector<48xf32> to vector<48x1xf32>
    %244 = tpu.reciprocal %243 {approx = true} : vector<48x1xf32> -> vector<48x1xf32>
    %245 = vector.broadcast %244 : vector<48x1xf32> to vector<48x48xf32>
    %246 = arith.mulf %241, %245 : vector<48x48xf32>
    %247 = arith.truncf %246 : vector<48x48xf32> to vector<48x48xbf16>
    %cst_109 = arith.constant dense<0.000000e+00> : vector<48x8xf32>
    %248 = tpu.matmul %247, %234, %cst_109 {dimension_numbers = #tpu.dot_dimension_numbers<[1], [0], [0], [1], [0, 0, 1, 1], [], []>} : vector<48x48xbf16>, vector<48x8xbf16>, vector<48x8xf32> -> vector<48x8xf32>
    %249 = arith.truncf %248 : vector<48x8xf32> to vector<48x8xbf16>
    %c1_110 = arith.constant 1 : index
    %c1_111 = arith.constant 1 : index
    %c0_112 = arith.constant 0 : index
    %c0_113 = arith.constant 0 : index
    %250 = vector.load %arg5[%c1_110, %c1_111, %c0_112, %c0_113] : memref<2x4x8x32xbf16, #tpu.memory_space<vmem>>, vector<1x1x8x32xbf16>
    %251 = vector.shape_cast %250 : vector<1x1x8x32xbf16> to vector<8x32xbf16>
    %cst_114 = arith.constant dense<0.000000e+00> : vector<48x32xf32>
    %252 = tpu.matmul %249, %251, %cst_114 {dimension_numbers = #tpu.dot_dimension_numbers<[1], [0], [0], [1], [0, 0, 1, 1], [], []>} : vector<48x8xbf16>, vector<8x32xbf16>, vector<48x32xf32> -> vector<48x32xf32>
    %253 = arith.addf %226, %252 : vector<48x32xf32>
    %254 = vector.extract_strided_slice %198 {offsets = [0, 16], sizes = [48, 8], strides = [1, 1]} : vector<48x96xf32> to vector<48x8xf32>
    %cst_115 = arith.constant 0.353553385 : f32
    %255 = vector.broadcast %cst_115 : f32 to vector<48x8xf32>
    %256 = arith.mulf %254, %255 : vector<48x8xf32>
    %257 = arith.truncf %256 : vector<48x8xf32> to vector<48x8xbf16>
    %258 = vector.extract_strided_slice %198 {offsets = [0, 48], sizes = [48, 8], strides = [1, 1]} : vector<48x96xf32> to vector<48x8xf32>
    %259 = arith.truncf %258 : vector<48x8xf32> to vector<48x8xbf16>
    %260 = vector.extract_strided_slice %198 {offsets = [0, 80], sizes = [48, 8], strides = [1, 1]} : vector<48x96xf32> to vector<48x8xf32>
    %261 = arith.truncf %260 : vector<48x8xf32> to vector<48x8xbf16>
    %cst_116 = arith.constant dense<0.000000e+00> : vector<48x48xf32>
    %262 = tpu.matmul %257, %259, %cst_116 {dimension_numbers = #tpu.dot_dimension_numbers<[1], [1], [0], [0], [0, 0, 1, 0], [], []>} : vector<48x8xbf16>, vector<48x8xbf16>, vector<48x48xf32> -> vector<48x48xf32>
    %263 = arith.addf %262, %1 : vector<48x48xf32>
    %cst_117 = arith.constant dense<0xFF800000> : vector<48xf32>
    %264 = vector.multi_reduction <maximumf>, %263, %cst_117 [1] : vector<48x48xf32> to vector<48xf32>
    %265 = vector.shape_cast %264 : vector<48xf32> to vector<48x1xf32>
    %266 = vector.broadcast %265 : vector<48x1xf32> to vector<48x48xf32>
    %267 = arith.subf %263, %266 : vector<48x48xf32>
    %268 = math.exp %267 : vector<48x48xf32>
    %cst_118 = arith.constant dense<0.000000e+00> : vector<48xf32>
    %269 = vector.multi_reduction <add>, %268, %cst_118 [1] : vector<48x48xf32> to vector<48xf32>
    %270 = vector.shape_cast %269 : vector<48xf32> to vector<48x1xf32>
    %271 = tpu.reciprocal %270 {approx = true} : vector<48x1xf32> -> vector<48x1xf32>
    %272 = vector.broadcast %271 : vector<48x1xf32> to vector<48x48xf32>
    %273 = arith.mulf %268, %272 : vector<48x48xf32>
    %274 = arith.truncf %273 : vector<48x48xf32> to vector<48x48xbf16>
    %cst_119 = arith.constant dense<0.000000e+00> : vector<48x8xf32>
    %275 = tpu.matmul %274, %261, %cst_119 {dimension_numbers = #tpu.dot_dimension_numbers<[1], [0], [0], [1], [0, 0, 1, 1], [], []>} : vector<48x48xbf16>, vector<48x8xbf16>, vector<48x8xf32> -> vector<48x8xf32>
    %276 = arith.truncf %275 : vector<48x8xf32> to vector<48x8xbf16>
    %c1_120 = arith.constant 1 : index
    %c2_121 = arith.constant 2 : index
    %c0_122 = arith.constant 0 : index
    %c0_123 = arith.constant 0 : index
    %277 = vector.load %arg5[%c1_120, %c2_121, %c0_122, %c0_123] : memref<2x4x8x32xbf16, #tpu.memory_space<vmem>>, vector<1x1x8x32xbf16>
    %278 = vector.shape_cast %277 : vector<1x1x8x32xbf16> to vector<8x32xbf16>
    %cst_124 = arith.constant dense<0.000000e+00> : vector<48x32xf32>
    %279 = tpu.matmul %276, %278, %cst_124 {dimension_numbers = #tpu.dot_dimension_numbers<[1], [0], [0], [1], [0, 0, 1, 1], [], []>} : vector<48x8xbf16>, vector<8x32xbf16>, vector<48x32xf32> -> vector<48x32xf32>
    %280 = arith.addf %253, %279 : vector<48x32xf32>
    %281 = vector.extract_strided_slice %198 {offsets = [0, 24], sizes = [48, 8], strides = [1, 1]} : vector<48x96xf32> to vector<48x8xf32>
    %cst_125 = arith.constant 0.353553385 : f32
    %282 = vector.broadcast %cst_125 : f32 to vector<48x8xf32>
    %283 = arith.mulf %281, %282 : vector<48x8xf32>
    %284 = arith.truncf %283 : vector<48x8xf32> to vector<48x8xbf16>
    %285 = vector.extract_strided_slice %198 {offsets = [0, 56], sizes = [48, 8], strides = [1, 1]} : vector<48x96xf32> to vector<48x8xf32>
    %286 = arith.truncf %285 : vector<48x8xf32> to vector<48x8xbf16>
    %287 = vector.extract_strided_slice %198 {offsets = [0, 88], sizes = [48, 8], strides = [1, 1]} : vector<48x96xf32> to vector<48x8xf32>
    %288 = arith.truncf %287 : vector<48x8xf32> to vector<48x8xbf16>
    %cst_126 = arith.constant dense<0.000000e+00> : vector<48x48xf32>
    %289 = tpu.matmul %284, %286, %cst_126 {dimension_numbers = #tpu.dot_dimension_numbers<[1], [1], [0], [0], [0, 0, 1, 0], [], []>} : vector<48x8xbf16>, vector<48x8xbf16>, vector<48x48xf32> -> vector<48x48xf32>
    %290 = arith.addf %289, %1 : vector<48x48xf32>
    %cst_127 = arith.constant dense<0xFF800000> : vector<48xf32>
    %291 = vector.multi_reduction <maximumf>, %290, %cst_127 [1] : vector<48x48xf32> to vector<48xf32>
    %292 = vector.shape_cast %291 : vector<48xf32> to vector<48x1xf32>
    %293 = vector.broadcast %292 : vector<48x1xf32> to vector<48x48xf32>
    %294 = arith.subf %290, %293 : vector<48x48xf32>
    %295 = math.exp %294 : vector<48x48xf32>
    %cst_128 = arith.constant dense<0.000000e+00> : vector<48xf32>
    %296 = vector.multi_reduction <add>, %295, %cst_128 [1] : vector<48x48xf32> to vector<48xf32>
    %297 = vector.shape_cast %296 : vector<48xf32> to vector<48x1xf32>
    %298 = tpu.reciprocal %297 {approx = true} : vector<48x1xf32> -> vector<48x1xf32>
    %299 = vector.broadcast %298 : vector<48x1xf32> to vector<48x48xf32>
    %300 = arith.mulf %295, %299 : vector<48x48xf32>
    %301 = arith.truncf %300 : vector<48x48xf32> to vector<48x48xbf16>
    %cst_129 = arith.constant dense<0.000000e+00> : vector<48x8xf32>
    %302 = tpu.matmul %301, %288, %cst_129 {dimension_numbers = #tpu.dot_dimension_numbers<[1], [0], [0], [1], [0, 0, 1, 1], [], []>} : vector<48x48xbf16>, vector<48x8xbf16>, vector<48x8xf32> -> vector<48x8xf32>
    %303 = arith.truncf %302 : vector<48x8xf32> to vector<48x8xbf16>
    %c1_130 = arith.constant 1 : index
    %c3_131 = arith.constant 3 : index
    %c0_132 = arith.constant 0 : index
    %c0_133 = arith.constant 0 : index
    %304 = vector.load %arg5[%c1_130, %c3_131, %c0_132, %c0_133] : memref<2x4x8x32xbf16, #tpu.memory_space<vmem>>, vector<1x1x8x32xbf16>
    %305 = vector.shape_cast %304 : vector<1x1x8x32xbf16> to vector<8x32xbf16>
    %cst_134 = arith.constant dense<0.000000e+00> : vector<48x32xf32>
    %306 = tpu.matmul %303, %305, %cst_134 {dimension_numbers = #tpu.dot_dimension_numbers<[1], [0], [0], [1], [0, 0, 1, 1], [], []>} : vector<48x8xbf16>, vector<8x32xbf16>, vector<48x32xf32> -> vector<48x32xf32>
    %307 = arith.addf %280, %306 : vector<48x32xf32>
    %c1_135 = arith.constant 1 : index
    %c0_136 = arith.constant 0 : index
    %c0_137 = arith.constant 0 : index
    %308 = vector.load %arg6[%c1_135, %c0_136, %c0_137] : memref<2x1x32xf32, #tpu.memory_space<vmem>>, vector<1x1x32xf32>
    %309 = vector.shape_cast %308 : vector<1x1x32xf32> to vector<1x32xf32>
    %310 = vector.broadcast %309 : vector<1x32xf32> to vector<48x32xf32>
    %311 = arith.addf %307, %310 : vector<48x32xf32>
    %312 = arith.addf %190, %311 : vector<48x32xf32>
    %c1_138 = arith.constant 1 : index
    %c0_139 = arith.constant 0 : index
    %c0_140 = arith.constant 0 : index
    %313 = vector.load %arg7[%c1_138, %c0_139, %c0_140] : memref<2x1x32xf32, #tpu.memory_space<vmem>>, vector<1x1x32xf32>
    %314 = vector.shape_cast %313 : vector<1x1x32xf32> to vector<1x32xf32>
    %c1_141 = arith.constant 1 : index
    %c0_142 = arith.constant 0 : index
    %c0_143 = arith.constant 0 : index
    %315 = vector.load %arg8[%c1_141, %c0_142, %c0_143] : memref<2x1x32xf32, #tpu.memory_space<vmem>>, vector<1x1x32xf32>
    %316 = vector.shape_cast %315 : vector<1x1x32xf32> to vector<1x32xf32>
    %cst_144 = arith.constant dense<0.000000e+00> : vector<48xf32>
    %317 = vector.multi_reduction <add>, %312, %cst_144 [1] : vector<48x32xf32> to vector<48xf32>
    %318 = vector.shape_cast %317 : vector<48xf32> to vector<48x1xf32>
    %cst_145 = arith.constant 3.200000e+01 : f32
    %319 = vector.broadcast %cst_145 : f32 to vector<48x1xf32>
    %320 = arith.divf %318, %319 : vector<48x1xf32>
    %321 = vector.broadcast %320 : vector<48x1xf32> to vector<48x32xf32>
    %322 = arith.subf %312, %321 : vector<48x32xf32>
    %323 = arith.mulf %322, %322 : vector<48x32xf32>
    %cst_146 = arith.constant dense<0.000000e+00> : vector<48xf32>
    %324 = vector.multi_reduction <add>, %323, %cst_146 [1] : vector<48x32xf32> to vector<48xf32>
    %325 = vector.shape_cast %324 : vector<48xf32> to vector<48x1xf32>
    %cst_147 = arith.constant 3.200000e+01 : f32
    %326 = vector.broadcast %cst_147 : f32 to vector<48x1xf32>
    %327 = arith.divf %325, %326 : vector<48x1xf32>
    %cst_148 = arith.constant 9.99999974E-6 : f32
    %328 = vector.broadcast %cst_148 : f32 to vector<48x1xf32>
    %329 = arith.addf %327, %328 : vector<48x1xf32>
    %330 = math.rsqrt %329 : vector<48x1xf32>
    %331 = vector.broadcast %330 : vector<48x1xf32> to vector<48x32xf32>
    %332 = arith.mulf %322, %331 : vector<48x32xf32>
    %333 = vector.broadcast %314 : vector<1x32xf32> to vector<48x32xf32>
    %334 = arith.mulf %332, %333 : vector<48x32xf32>
    %335 = vector.broadcast %316 : vector<1x32xf32> to vector<48x32xf32>
    %336 = arith.addf %334, %335 : vector<48x32xf32>
    %337 = arith.truncf %336 : vector<48x32xf32> to vector<48x32xbf16>
    %c1_149 = arith.constant 1 : index
    %c0_150 = arith.constant 0 : index
    %c0_151 = arith.constant 0 : index
    %338 = vector.load %arg9[%c1_149, %c0_150, %c0_151] : memref<2x32x64xbf16, #tpu.memory_space<vmem>>, vector<1x32x64xbf16>
    %339 = vector.shape_cast %338 : vector<1x32x64xbf16> to vector<32x64xbf16>
    %cst_152 = arith.constant dense<0.000000e+00> : vector<48x64xf32>
    %340 = tpu.matmul %337, %339, %cst_152 {dimension_numbers = #tpu.dot_dimension_numbers<[1], [0], [0], [1], [0, 0, 1, 1], [], []>} : vector<48x32xbf16>, vector<32x64xbf16>, vector<48x64xf32> -> vector<48x64xf32>
    %c1_153 = arith.constant 1 : index
    %c0_154 = arith.constant 0 : index
    %c0_155 = arith.constant 0 : index
    %341 = vector.load %arg10[%c1_153, %c0_154, %c0_155] : memref<2x1x64xf32, #tpu.memory_space<vmem>>, vector<1x1x64xf32>
    %342 = vector.shape_cast %341 : vector<1x1x64xf32> to vector<1x64xf32>
    %343 = vector.broadcast %342 : vector<1x64xf32> to vector<48x64xf32>
    %344 = arith.addf %340, %343 : vector<48x64xf32>
    %cst_156 = arith.constant 0.000000e+00 : f32
    %345 = vector.broadcast %cst_156 : f32 to vector<48x64xf32>
    %346 = arith.maximumf %344, %345 : vector<48x64xf32>
    %347 = arith.truncf %346 : vector<48x64xf32> to vector<48x64xbf16>
    %c1_157 = arith.constant 1 : index
    %c0_158 = arith.constant 0 : index
    %c0_159 = arith.constant 0 : index
    %348 = vector.load %arg11[%c1_157, %c0_158, %c0_159] : memref<2x64x32xbf16, #tpu.memory_space<vmem>>, vector<1x64x32xbf16>
    %349 = vector.shape_cast %348 : vector<1x64x32xbf16> to vector<64x32xbf16>
    %cst_160 = arith.constant dense<0.000000e+00> : vector<48x32xf32>
    %350 = tpu.matmul %347, %349, %cst_160 {dimension_numbers = #tpu.dot_dimension_numbers<[1], [0], [0], [1], [0, 0, 1, 1], [], []>} : vector<48x64xbf16>, vector<64x32xbf16>, vector<48x32xf32> -> vector<48x32xf32>
    %c1_161 = arith.constant 1 : index
    %c0_162 = arith.constant 0 : index
    %c0_163 = arith.constant 0 : index
    %351 = vector.load %arg12[%c1_161, %c0_162, %c0_163] : memref<2x1x32xf32, #tpu.memory_space<vmem>>, vector<1x1x32xf32>
    %352 = vector.shape_cast %351 : vector<1x1x32xf32> to vector<1x32xf32>
    %353 = vector.broadcast %352 : vector<1x32xf32> to vector<48x32xf32>
    %354 = arith.addf %350, %353 : vector<48x32xf32>
    %355 = arith.addf %336, %354 : vector<48x32xf32>
    %c1_164 = arith.constant 1 : index
    %c0_165 = arith.constant 0 : index
    %c0_166 = arith.constant 0 : index
    %356 = vector.load %arg13[%c1_164, %c0_165, %c0_166] : memref<2x1x32xf32, #tpu.memory_space<vmem>>, vector<1x1x32xf32>
    %357 = vector.shape_cast %356 : vector<1x1x32xf32> to vector<1x32xf32>
    %c1_167 = arith.constant 1 : index
    %c0_168 = arith.constant 0 : index
    %c0_169 = arith.constant 0 : index
    %358 = vector.load %arg14[%c1_167, %c0_168, %c0_169] : memref<2x1x32xf32, #tpu.memory_space<vmem>>, vector<1x1x32xf32>
    %359 = vector.shape_cast %358 : vector<1x1x32xf32> to vector<1x32xf32>
    %cst_170 = arith.constant dense<0.000000e+00> : vector<48xf32>
    %360 = vector.multi_reduction <add>, %355, %cst_170 [1] : vector<48x32xf32> to vector<48xf32>
    %361 = vector.shape_cast %360 : vector<48xf32> to vector<48x1xf32>
    %cst_171 = arith.constant 3.200000e+01 : f32
    %362 = vector.broadcast %cst_171 : f32 to vector<48x1xf32>
    %363 = arith.divf %361, %362 : vector<48x1xf32>
    %364 = vector.broadcast %363 : vector<48x1xf32> to vector<48x32xf32>
    %365 = arith.subf %355, %364 : vector<48x32xf32>
    %366 = arith.mulf %365, %365 : vector<48x32xf32>
    %cst_172 = arith.constant dense<0.000000e+00> : vector<48xf32>
    %367 = vector.multi_reduction <add>, %366, %cst_172 [1] : vector<48x32xf32> to vector<48xf32>
    %368 = vector.shape_cast %367 : vector<48xf32> to vector<48x1xf32>
    %cst_173 = arith.constant 3.200000e+01 : f32
    %369 = vector.broadcast %cst_173 : f32 to vector<48x1xf32>
    %370 = arith.divf %368, %369 : vector<48x1xf32>
    %cst_174 = arith.constant 9.99999974E-6 : f32
    %371 = vector.broadcast %cst_174 : f32 to vector<48x1xf32>
    %372 = arith.addf %370, %371 : vector<48x1xf32>
    %373 = math.rsqrt %372 : vector<48x1xf32>
    %374 = vector.broadcast %373 : vector<48x1xf32> to vector<48x32xf32>
    %375 = arith.mulf %365, %374 : vector<48x32xf32>
    %376 = vector.broadcast %357 : vector<1x32xf32> to vector<48x32xf32>
    %377 = arith.mulf %375, %376 : vector<48x32xf32>
    %378 = vector.broadcast %359 : vector<1x32xf32> to vector<48x32xf32>
    %379 = arith.addf %377, %378 : vector<48x32xf32>
    %380 = tpu.iota {dimensions = array<i32: 0>} : vector<6x48xi32>
    %381 = tpu.iota {dimensions = array<i32: 1>} : vector<6x48xi32>
    %c8_i32 = arith.constant 8 : i32
    %382 = vector.broadcast %c8_i32 : i32 to vector<6x48xi32>
    %383 = arith.muli %380, %382 : vector<6x48xi32>
    %384 = arith.cmpi eq, %381, %383 : vector<6x48xi32>
    %385 = arith.extui %384 : vector<6x48xi1> to vector<6x48xi32>
    %386 = arith.sitofp %385 : vector<6x48xi32> to vector<6x48xf32>
    %cst_175 = arith.constant dense<0.000000e+00> : vector<6x32xf32>
    %387 = tpu.matmul %386, %379, %cst_175 {dimension_numbers = #tpu.dot_dimension_numbers<[1], [0], [0], [1], [0, 0, 1, 1], [], []>} : vector<6x48xf32>, vector<48x32xf32>, vector<6x32xf32> -> vector<6x32xf32>
    %c0_176 = arith.constant 0 : index
    %c0_177 = arith.constant 0 : index
    %388 = vector.load %arg15[%c0_176, %c0_177] : memref<32x32xf32, #tpu.memory_space<vmem>>, vector<32x32xf32>
    %cst_178 = arith.constant dense<0.000000e+00> : vector<6x32xf32>
    %389 = tpu.matmul %387, %388, %cst_178 {dimension_numbers = #tpu.dot_dimension_numbers<[1], [0], [0], [1], [0, 0, 1, 1], [], []>} : vector<6x32xf32>, vector<32x32xf32>, vector<6x32xf32> -> vector<6x32xf32>
    %c0_179 = arith.constant 0 : index
    %c0_180 = arith.constant 0 : index
    %390 = vector.load %arg16[%c0_179, %c0_180] : memref<1x32xf32, #tpu.memory_space<vmem>>, vector<1x32xf32>
    %391 = vector.broadcast %390 : vector<1x32xf32> to vector<6x32xf32>
    %392 = arith.addf %389, %391 : vector<6x32xf32>
    %c0_181 = arith.constant 0 : index
    %c0_182 = arith.constant 0 : index
    %393 = vector.load %arg19[%c0_181, %c0_182] : memref<6x32xf32, #tpu.memory_space<vmem>>, vector<6x32xf32>
    tpu.vector_store %arg19[%c0_181, %c0_182], %392 {strides = array<i32>} : memref<6x32xf32, #tpu.memory_space<vmem>>, vector<6x32xf32>,
    %c0_183 = arith.constant 0 : index
    %c0_184 = arith.constant 0 : index
    %394 = vector.load %arg17[%c0_183, %c0_184] : memref<128x8xf32, #tpu.memory_space<vmem>>, vector<128x8xf32>
    %c0_185 = arith.constant 0 : index
    %c0_186 = arith.constant 0 : index
    %395 = vector.load %arg18[%c0_185, %c0_186] : memref<1x128xf32, #tpu.memory_space<vmem>>, vector<1x128xf32>
    %396 = vector.extract_strided_slice %392 {offsets = [0, 0], sizes = [6, 8], strides = [1, 1]} : vector<6x32xf32> to vector<6x8xf32>
    %cst_187 = arith.constant dense<0.000000e+00> : vector<6x128xf32>
    %397 = tpu.matmul %396, %394, %cst_187 {dimension_numbers = #tpu.dot_dimension_numbers<[1], [1], [0], [0], [0, 0, 1, 0], [], []>} : vector<6x8xf32>, vector<128x8xf32>, vector<6x128xf32> -> vector<6x128xf32>
    %cst_188 = arith.constant 2.000000e+00 : f32
    %398 = vector.broadcast %cst_188 : f32 to vector<6x128xf32>
    %399 = arith.mulf %398, %397 : vector<6x128xf32>
    %400 = vector.broadcast %395 : vector<1x128xf32> to vector<6x128xf32>
    %401 = arith.subf %400, %399 : vector<6x128xf32>
    %402 = tpu.iota {dimensions = array<i32: 1>} : vector<6x128xi32>
    %c16_i32 = arith.constant 16 : i32
    %403 = vector.broadcast %c16_i32 : i32 to vector<6x128xi32>
    %404 = arith.cmpi slt, %402, %403 : vector<6x128xi32>
    %cst_189 = arith.constant 1.000000e+30 : f32
    %405 = vector.broadcast %cst_189 : f32 to vector<6x128xf32>
    %406 = arith.select %404, %401, %405 : vector<6x128xi1>, vector<6x128xf32>
    %cst_190 = arith.constant dense<0x7F800000> : vector<6xf32>
    %407 = vector.multi_reduction <minimumf>, %406, %cst_190 [1] : vector<6x128xf32> to vector<6xf32>
    %408 = vector.shape_cast %407 : vector<6xf32> to vector<6x1xf32>
    %409 = arith.sitofp %402 : vector<6x128xi32> to vector<6x128xf32>
    %410 = vector.broadcast %408 : vector<6x1xf32> to vector<6x128xf32>
    %411 = arith.cmpf ole, %406, %410 : vector<6x128xf32>
    %cst_191 = arith.constant 1.280000e+02 : f32
    %412 = vector.broadcast %cst_191 : f32 to vector<6x128xf32>
    %413 = arith.select %411, %409, %412 : vector<6x128xi1>, vector<6x128xf32>
    %cst_192 = arith.constant dense<0x7F800000> : vector<6xf32>
    %414 = vector.multi_reduction <minimumf>, %413, %cst_192 [1] : vector<6x128xf32> to vector<6xf32>
    %415 = vector.shape_cast %414 : vector<6xf32> to vector<6x1xf32>
    %416 = vector.broadcast %415 : vector<6x1xf32> to vector<6x128xf32>
    %417 = arith.cmpf oeq, %409, %416 : vector<6x128xf32>
    %418 = arith.extui %417 : vector<6x128xi1> to vector<6x128xi32>
    %419 = arith.sitofp %418 : vector<6x128xi32> to vector<6x128xf32>
    %cst_193 = arith.constant dense<0.000000e+00> : vector<6x8xf32>
    %420 = tpu.matmul %419, %394, %cst_193 {dimension_numbers = #tpu.dot_dimension_numbers<[1], [0], [0], [1], [0, 0, 1, 1], [], []>} : vector<6x128xf32>, vector<128x8xf32>, vector<6x8xf32> -> vector<6x8xf32>
    %421 = vector.extract_strided_slice %392 {offsets = [0, 8], sizes = [6, 8], strides = [1, 1]} : vector<6x32xf32> to vector<6x8xf32>
    %cst_194 = arith.constant dense<0.000000e+00> : vector<6x128xf32>
    %422 = tpu.matmul %421, %394, %cst_194 {dimension_numbers = #tpu.dot_dimension_numbers<[1], [1], [0], [0], [0, 0, 1, 0], [], []>} : vector<6x8xf32>, vector<128x8xf32>, vector<6x128xf32> -> vector<6x128xf32>
    %cst_195 = arith.constant 2.000000e+00 : f32
    %423 = vector.broadcast %cst_195 : f32 to vector<6x128xf32>
    %424 = arith.mulf %423, %422 : vector<6x128xf32>
    %425 = vector.broadcast %395 : vector<1x128xf32> to vector<6x128xf32>
    %426 = arith.subf %425, %424 : vector<6x128xf32>
    %427 = tpu.iota {dimensions = array<i32: 1>} : vector<6x128xi32>
    %c16_i32_196 = arith.constant 16 : i32
    %428 = vector.broadcast %c16_i32_196 : i32 to vector<6x128xi32>
    %429 = arith.cmpi slt, %427, %428 : vector<6x128xi32>
    %cst_197 = arith.constant 1.000000e+30 : f32
    %430 = vector.broadcast %cst_197 : f32 to vector<6x128xf32>
    %431 = arith.select %429, %426, %430 : vector<6x128xi1>, vector<6x128xf32>
    %cst_198 = arith.constant dense<0x7F800000> : vector<6xf32>
    %432 = vector.multi_reduction <minimumf>, %431, %cst_198 [1] : vector<6x128xf32> to vector<6xf32>
    %433 = vector.shape_cast %432 : vector<6xf32> to vector<6x1xf32>
    %434 = arith.sitofp %427 : vector<6x128xi32> to vector<6x128xf32>
    %435 = vector.broadcast %433 : vector<6x1xf32> to vector<6x128xf32>
    %436 = arith.cmpf ole, %431, %435 : vector<6x128xf32>
    %cst_199 = arith.constant 1.280000e+02 : f32
    %437 = vector.broadcast %cst_199 : f32 to vector<6x128xf32>
    %438 = arith.select %436, %434, %437 : vector<6x128xi1>, vector<6x128xf32>
    %cst_200 = arith.constant dense<0x7F800000> : vector<6xf32>
    %439 = vector.multi_reduction <minimumf>, %438, %cst_200 [1] : vector<6x128xf32> to vector<6xf32>
    %440 = vector.shape_cast %439 : vector<6xf32> to vector<6x1xf32>
    %441 = vector.broadcast %440 : vector<6x1xf32> to vector<6x128xf32>
    %442 = arith.cmpf oeq, %434, %441 : vector<6x128xf32>
    %443 = arith.extui %442 : vector<6x128xi1> to vector<6x128xi32>
    %444 = arith.sitofp %443 : vector<6x128xi32> to vector<6x128xf32>
    %cst_201 = arith.constant dense<0.000000e+00> : vector<6x8xf32>
    %445 = tpu.matmul %444, %394, %cst_201 {dimension_numbers = #tpu.dot_dimension_numbers<[1], [0], [0], [1], [0, 0, 1, 1], [], []>} : vector<6x128xf32>, vector<128x8xf32>, vector<6x8xf32> -> vector<6x8xf32>
    %446 = vector.extract_strided_slice %392 {offsets = [0, 16], sizes = [6, 8], strides = [1, 1]} : vector<6x32xf32> to vector<6x8xf32>
    %cst_202 = arith.constant dense<0.000000e+00> : vector<6x128xf32>
    %447 = tpu.matmul %446, %394, %cst_202 {dimension_numbers = #tpu.dot_dimension_numbers<[1], [1], [0], [0], [0, 0, 1, 0], [], []>} : vector<6x8xf32>, vector<128x8xf32>, vector<6x128xf32> -> vector<6x128xf32>
    %cst_203 = arith.constant 2.000000e+00 : f32
    %448 = vector.broadcast %cst_203 : f32 to vector<6x128xf32>
    %449 = arith.mulf %448, %447 : vector<6x128xf32>
    %450 = vector.broadcast %395 : vector<1x128xf32> to vector<6x128xf32>
    %451 = arith.subf %450, %449 : vector<6x128xf32>
    %452 = tpu.iota {dimensions = array<i32: 1>} : vector<6x128xi32>
    %c16_i32_204 = arith.constant 16 : i32
    %453 = vector.broadcast %c16_i32_204 : i32 to vector<6x128xi32>
    %454 = arith.cmpi slt, %452, %453 : vector<6x128xi32>
    %cst_205 = arith.constant 1.000000e+30 : f32
    %455 = vector.broadcast %cst_205 : f32 to vector<6x128xf32>
    %456 = arith.select %454, %451, %455 : vector<6x128xi1>, vector<6x128xf32>
    %cst_206 = arith.constant dense<0x7F800000> : vector<6xf32>
    %457 = vector.multi_reduction <minimumf>, %456, %cst_206 [1] : vector<6x128xf32> to vector<6xf32>
    %458 = vector.shape_cast %457 : vector<6xf32> to vector<6x1xf32>
    %459 = arith.sitofp %452 : vector<6x128xi32> to vector<6x128xf32>
    %460 = vector.broadcast %458 : vector<6x1xf32> to vector<6x128xf32>
    %461 = arith.cmpf ole, %456, %460 : vector<6x128xf32>
    %cst_207 = arith.constant 1.280000e+02 : f32
    %462 = vector.broadcast %cst_207 : f32 to vector<6x128xf32>
    %463 = arith.select %461, %459, %462 : vector<6x128xi1>, vector<6x128xf32>
    %cst_208 = arith.constant dense<0x7F800000> : vector<6xf32>
    %464 = vector.multi_reduction <minimumf>, %463, %cst_208 [1] : vector<6x128xf32> to vector<6xf32>
    %465 = vector.shape_cast %464 : vector<6xf32> to vector<6x1xf32>
    %466 = vector.broadcast %465 : vector<6x1xf32> to vector<6x128xf32>
    %467 = arith.cmpf oeq, %459, %466 : vector<6x128xf32>
    %468 = arith.extui %467 : vector<6x128xi1> to vector<6x128xi32>
    %469 = arith.sitofp %468 : vector<6x128xi32> to vector<6x128xf32>
    %cst_209 = arith.constant dense<0.000000e+00> : vector<6x8xf32>
    %470 = tpu.matmul %469, %394, %cst_209 {dimension_numbers = #tpu.dot_dimension_numbers<[1], [0], [0], [1], [0, 0, 1, 1], [], []>} : vector<6x128xf32>, vector<128x8xf32>, vector<6x8xf32> -> vector<6x8xf32>
    %471 = vector.extract_strided_slice %392 {offsets = [0, 24], sizes = [6, 8], strides = [1, 1]} : vector<6x32xf32> to vector<6x8xf32>
    %cst_210 = arith.constant dense<0.000000e+00> : vector<6x128xf32>
    %472 = tpu.matmul %471, %394, %cst_210 {dimension_numbers = #tpu.dot_dimension_numbers<[1], [1], [0], [0], [0, 0, 1, 0], [], []>} : vector<6x8xf32>, vector<128x8xf32>, vector<6x128xf32> -> vector<6x128xf32>
    %cst_211 = arith.constant 2.000000e+00 : f32
    %473 = vector.broadcast %cst_211 : f32 to vector<6x128xf32>
    %474 = arith.mulf %473, %472 : vector<6x128xf32>
    %475 = vector.broadcast %395 : vector<1x128xf32> to vector<6x128xf32>
    %476 = arith.subf %475, %474 : vector<6x128xf32>
    %477 = tpu.iota {dimensions = array<i32: 1>} : vector<6x128xi32>
    %c16_i32_212 = arith.constant 16 : i32
    %478 = vector.broadcast %c16_i32_212 : i32 to vector<6x128xi32>
    %479 = arith.cmpi slt, %477, %478 : vector<6x128xi32>
    %cst_213 = arith.constant 1.000000e+30 : f32
    %480 = vector.broadcast %cst_213 : f32 to vector<6x128xf32>
    %481 = arith.select %479, %476, %480 : vector<6x128xi1>, vector<6x128xf32>
    %cst_214 = arith.constant dense<0x7F800000> : vector<6xf32>
    %482 = vector.multi_reduction <minimumf>, %481, %cst_214 [1] : vector<6x128xf32> to vector<6xf32>
    %483 = vector.shape_cast %482 : vector<6xf32> to vector<6x1xf32>
    %484 = arith.sitofp %477 : vector<6x128xi32> to vector<6x128xf32>
    %485 = vector.broadcast %483 : vector<6x1xf32> to vector<6x128xf32>
    %486 = arith.cmpf ole, %481, %485 : vector<6x128xf32>
    %cst_215 = arith.constant 1.280000e+02 : f32
    %487 = vector.broadcast %cst_215 : f32 to vector<6x128xf32>
    %488 = arith.select %486, %484, %487 : vector<6x128xi1>, vector<6x128xf32>
    %cst_216 = arith.constant dense<0x7F800000> : vector<6xf32>
    %489 = vector.multi_reduction <minimumf>, %488, %cst_216 [1] : vector<6x128xf32> to vector<6xf32>
    %490 = vector.shape_cast %489 : vector<6xf32> to vector<6x1xf32>
    %491 = vector.broadcast %490 : vector<6x1xf32> to vector<6x128xf32>
    %492 = arith.cmpf oeq, %484, %491 : vector<6x128xf32>
    %493 = arith.extui %492 : vector<6x128xi1> to vector<6x128xi32>
    %494 = arith.sitofp %493 : vector<6x128xi32> to vector<6x128xf32>
    %cst_217 = arith.constant dense<0.000000e+00> : vector<6x8xf32>
    %495 = tpu.matmul %494, %394, %cst_217 {dimension_numbers = #tpu.dot_dimension_numbers<[1], [0], [0], [1], [0, 0, 1, 1], [], []>} : vector<6x128xf32>, vector<128x8xf32>, vector<6x8xf32> -> vector<6x8xf32>
    %496 = tpu.concatenate %420, %445, %470, %495 in 1 : vector<6x8xf32>, vector<6x8xf32>, vector<6x8xf32>, vector<6x8xf32> -> vector<6x32xf32>
    %c0_218 = arith.constant 0 : index
    %c0_219 = arith.constant 0 : index
    %497 = vector.load %arg20[%c0_218, %c0_219] : memref<6x32xf32, #tpu.memory_space<vmem>>, vector<6x32xf32>
    tpu.vector_store %arg20[%c0_218, %c0_219], %496 {strides = array<i32>} : memref<6x32xf32, #tpu.memory_space<vmem>>, vector<6x32xf32>,
    return
  }
  func.func @transform_0(%arg0: i32) -> (i32, i32) {
    %c0_i32 = arith.constant 0 : i32
    %c0_i32_0 = arith.constant 0 : i32
    %c0_i32_1 = arith.constant 0 : i32
    return %c0_i32, %c0_i32_0 : i32, i32
  }
  func.func @transform_1(%arg0: i32) -> (i32, i32) {
    %c0_i32 = arith.constant 0 : i32
    %c0_i32_0 = arith.constant 0 : i32
    %c0_i32_1 = arith.constant 0 : i32
    return %c0_i32, %c0_i32_0 : i32, i32
  }
  func.func @transform_2(%arg0: i32) -> (i32, i32, i32) {
    %c0_i32 = arith.constant 0 : i32
    %c0_i32_0 = arith.constant 0 : i32
    %c0_i32_1 = arith.constant 0 : i32
    %c0_i32_2 = arith.constant 0 : i32
    return %c0_i32, %c0_i32_0, %c0_i32_1 : i32, i32, i32
  }
  func.func @transform_3(%arg0: i32) -> (i32, i32, i32) {
    %c0_i32 = arith.constant 0 : i32
    %c0_i32_0 = arith.constant 0 : i32
    %c0_i32_1 = arith.constant 0 : i32
    %c0_i32_2 = arith.constant 0 : i32
    return %c0_i32, %c0_i32_0, %c0_i32_1 : i32, i32, i32
  }
  func.func @transform_4(%arg0: i32) -> (i32, i32, i32, i32) {
    %c0_i32 = arith.constant 0 : i32
    %c0_i32_0 = arith.constant 0 : i32
    %c0_i32_1 = arith.constant 0 : i32
    %c0_i32_2 = arith.constant 0 : i32
    %c0_i32_3 = arith.constant 0 : i32
    return %c0_i32, %c0_i32_0, %c0_i32_1, %c0_i32_2 : i32, i32, i32, i32
  }
  func.func @transform_5(%arg0: i32) -> (i32, i32, i32) {
    %c0_i32 = arith.constant 0 : i32
    %c0_i32_0 = arith.constant 0 : i32
    %c0_i32_1 = arith.constant 0 : i32
    %c0_i32_2 = arith.constant 0 : i32
    return %c0_i32, %c0_i32_0, %c0_i32_1 : i32, i32, i32
  }
  func.func @transform_6(%arg0: i32) -> (i32, i32, i32) {
    %c0_i32 = arith.constant 0 : i32
    %c0_i32_0 = arith.constant 0 : i32
    %c0_i32_1 = arith.constant 0 : i32
    %c0_i32_2 = arith.constant 0 : i32
    return %c0_i32, %c0_i32_0, %c0_i32_1 : i32, i32, i32
  }
  func.func @transform_7(%arg0: i32) -> (i32, i32, i32) {
    %c0_i32 = arith.constant 0 : i32
    %c0_i32_0 = arith.constant 0 : i32
    %c0_i32_1 = arith.constant 0 : i32
    %c0_i32_2 = arith.constant 0 : i32
    return %c0_i32, %c0_i32_0, %c0_i32_1 : i32, i32, i32
  }
  func.func @transform_8(%arg0: i32) -> (i32, i32, i32) {
    %c0_i32 = arith.constant 0 : i32
    %c0_i32_0 = arith.constant 0 : i32
    %c0_i32_1 = arith.constant 0 : i32
    %c0_i32_2 = arith.constant 0 : i32
    return %c0_i32, %c0_i32_0, %c0_i32_1 : i32, i32, i32
  }
  func.func @transform_9(%arg0: i32) -> (i32, i32, i32) {
    %c0_i32 = arith.constant 0 : i32
    %c0_i32_0 = arith.constant 0 : i32
    %c0_i32_1 = arith.constant 0 : i32
    %c0_i32_2 = arith.constant 0 : i32
    return %c0_i32, %c0_i32_0, %c0_i32_1 : i32, i32, i32
  }
  func.func @transform_10(%arg0: i32) -> (i32, i32, i32) {
    %c0_i32 = arith.constant 0 : i32
    %c0_i32_0 = arith.constant 0 : i32
    %c0_i32_1 = arith.constant 0 : i32
    %c0_i32_2 = arith.constant 0 : i32
    return %c0_i32, %c0_i32_0, %c0_i32_1 : i32, i32, i32
  }
  func.func @transform_11(%arg0: i32) -> (i32, i32, i32) {
    %c0_i32 = arith.constant 0 : i32
    %c0_i32_0 = arith.constant 0 : i32
    %c0_i32_1 = arith.constant 0 : i32
    %c0_i32_2 = arith.constant 0 : i32
    return %c0_i32, %c0_i32_0, %c0_i32_1 : i32, i32, i32
  }
  func.func @transform_12(%arg0: i32) -> (i32, i32, i32) {
    %c0_i32 = arith.constant 0 : i32
    %c0_i32_0 = arith.constant 0 : i32
    %c0_i32_1 = arith.constant 0 : i32
    %c0_i32_2 = arith.constant 0 : i32
    return %c0_i32, %c0_i32_0, %c0_i32_1 : i32, i32, i32
  }
  func.func @transform_13(%arg0: i32) -> (i32, i32, i32) {
    %c0_i32 = arith.constant 0 : i32
    %c0_i32_0 = arith.constant 0 : i32
    %c0_i32_1 = arith.constant 0 : i32
    %c0_i32_2 = arith.constant 0 : i32
    return %c0_i32, %c0_i32_0, %c0_i32_1 : i32, i32, i32
  }
  func.func @transform_14(%arg0: i32) -> (i32, i32) {
    %c0_i32 = arith.constant 0 : i32
    %c0_i32_0 = arith.constant 0 : i32
    %c0_i32_1 = arith.constant 0 : i32
    return %c0_i32, %c0_i32_0 : i32, i32
  }
  func.func @transform_15(%arg0: i32) -> (i32, i32) {
    %c0_i32 = arith.constant 0 : i32
    %c0_i32_0 = arith.constant 0 : i32
    %c0_i32_1 = arith.constant 0 : i32
    return %c0_i32, %c0_i32_0 : i32, i32
  }
  func.func @transform_16(%arg0: i32) -> (i32, i32) {
    %c0_i32 = arith.constant 0 : i32
    %c0_i32_0 = arith.constant 0 : i32
    %c0_i32_1 = arith.constant 0 : i32
    return %c0_i32, %c0_i32_0 : i32, i32
  }
  func.func @transform_17(%arg0: i32) -> (i32, i32) {
    %c0_i32 = arith.constant 0 : i32
    %c0_i32_0 = arith.constant 0 : i32
    %c0_i32_1 = arith.constant 0 : i32
    return %c0_i32, %c0_i32_0 : i32, i32
  }
  func.func @transform_18(%arg0: i32) -> (i32, i32) {
    %c0_i32 = arith.constant 0 : i32
    %c0_i32_0 = arith.constant 0 : i32
    %c0_i32_1 = arith.constant 0 : i32
    return %c0_i32, %c0_i32_0 : i32, i32
  }
  func.func @transform_19(%arg0: i32) -> (i32, i32) {
    %c0_i32 = arith.constant 0 : i32
    %c0_i32_0 = arith.constant 0 : i32
    %c0_i32_1 = arith.constant 0 : i32
    return %c0_i32, %c0_i32_0 : i32, i32
  }
}

module attributes {stable_mosaic.version = 11 : i64} {
  func.func @_decoder_stack_kernel(%arg0: i32, %arg1: memref<24x32xf32, #tpu.memory_space<vmem>>, %arg2: memref<24x32xf32, #tpu.memory_space<vmem>>, %arg3: memref<24x24xf32, #tpu.memory_space<vmem>>, %arg4: memref<2x32x32xbf16, #tpu.memory_space<vmem>>, %arg5: memref<2x1x32xf32, #tpu.memory_space<vmem>>, %arg6: memref<2x32x96xbf16, #tpu.memory_space<vmem>>, %arg7: memref<2x1x96xf32, #tpu.memory_space<vmem>>, %arg8: memref<2x4x8x32xbf16, #tpu.memory_space<vmem>>, %arg9: memref<2x1x32xf32, #tpu.memory_space<vmem>>, %arg10: memref<2x1x32xf32, #tpu.memory_space<vmem>>, %arg11: memref<2x1x32xf32, #tpu.memory_space<vmem>>, %arg12: memref<2x32x64xbf16, #tpu.memory_space<vmem>>, %arg13: memref<2x1x64xf32, #tpu.memory_space<vmem>>, %arg14: memref<2x64x32xbf16, #tpu.memory_space<vmem>>, %arg15: memref<2x1x32xf32, #tpu.memory_space<vmem>>, %arg16: memref<2x1x32xf32, #tpu.memory_space<vmem>>, %arg17: memref<2x1x32xf32, #tpu.memory_space<vmem>>, %arg18: memref<32x128xbf16, #tpu.memory_space<vmem>>, %arg19: memref<1x128xf32, #tpu.memory_space<vmem>>, %arg20: memref<24x128xf32, #tpu.memory_space<vmem>>) attributes {dimension_semantics = [#tpu.dimension_semantics<arbitrary>], iteration_bounds = array<i64: 1>, scalar_prefetch = 0 : i64, scratch_operands = 0 : i64, tpu.core_type = #tpu.core_type<tc>, window_params = [{pipeline_mode = #tpu.pipeline_mode<synchronous>, transform_indices = @transform_0, window_bounds = array<i64: 24, 32>}, {pipeline_mode = #tpu.pipeline_mode<synchronous>, transform_indices = @transform_1, window_bounds = array<i64: 24, 32>}, {pipeline_mode = #tpu.pipeline_mode<synchronous>, transform_indices = @transform_2, window_bounds = array<i64: 24, 24>}, {pipeline_mode = #tpu.pipeline_mode<synchronous>, transform_indices = @transform_3, window_bounds = array<i64: 2, 32, 32>}, {pipeline_mode = #tpu.pipeline_mode<synchronous>, transform_indices = @transform_4, window_bounds = array<i64: 2, 1, 32>}, {pipeline_mode = #tpu.pipeline_mode<synchronous>, transform_indices = @transform_5, window_bounds = array<i64: 2, 32, 96>}, {pipeline_mode = #tpu.pipeline_mode<synchronous>, transform_indices = @transform_6, window_bounds = array<i64: 2, 1, 96>}, {pipeline_mode = #tpu.pipeline_mode<synchronous>, transform_indices = @transform_7, window_bounds = array<i64: 2, 4, 8, 32>}, {pipeline_mode = #tpu.pipeline_mode<synchronous>, transform_indices = @transform_8, window_bounds = array<i64: 2, 1, 32>}, {pipeline_mode = #tpu.pipeline_mode<synchronous>, transform_indices = @transform_9, window_bounds = array<i64: 2, 1, 32>}, {pipeline_mode = #tpu.pipeline_mode<synchronous>, transform_indices = @transform_10, window_bounds = array<i64: 2, 1, 32>}, {pipeline_mode = #tpu.pipeline_mode<synchronous>, transform_indices = @transform_11, window_bounds = array<i64: 2, 32, 64>}, {pipeline_mode = #tpu.pipeline_mode<synchronous>, transform_indices = @transform_12, window_bounds = array<i64: 2, 1, 64>}, {pipeline_mode = #tpu.pipeline_mode<synchronous>, transform_indices = @transform_13, window_bounds = array<i64: 2, 64, 32>}, {pipeline_mode = #tpu.pipeline_mode<synchronous>, transform_indices = @transform_14, window_bounds = array<i64: 2, 1, 32>}, {pipeline_mode = #tpu.pipeline_mode<synchronous>, transform_indices = @transform_15, window_bounds = array<i64: 2, 1, 32>}, {pipeline_mode = #tpu.pipeline_mode<synchronous>, transform_indices = @transform_16, window_bounds = array<i64: 2, 1, 32>}, {pipeline_mode = #tpu.pipeline_mode<synchronous>, transform_indices = @transform_17, window_bounds = array<i64: 32, 128>}, {pipeline_mode = #tpu.pipeline_mode<synchronous>, transform_indices = @transform_18, window_bounds = array<i64: 1, 128>}, {pipeline_mode = #tpu.pipeline_mode<synchronous>, transform_indices = @transform_19, window_bounds = array<i64: 24, 128>}]} {
    %c0 = arith.constant 0 : index
    %c0_0 = arith.constant 0 : index
    %0 = vector.load %arg1[%c0, %c0_0] : memref<24x32xf32, #tpu.memory_space<vmem>>, vector<24x32xf32>
    %c0_1 = arith.constant 0 : index
    %c0_2 = arith.constant 0 : index
    %1 = vector.load %arg2[%c0_1, %c0_2] : memref<24x32xf32, #tpu.memory_space<vmem>>, vector<24x32xf32>
    %2 = arith.truncf %1 : vector<24x32xf32> to vector<24x32xbf16>
    %c0_3 = arith.constant 0 : index
    %c0_4 = arith.constant 0 : index
    %3 = vector.load %arg3[%c0_3, %c0_4] : memref<24x24xf32, #tpu.memory_space<vmem>>, vector<24x24xf32>
    %c0_5 = arith.constant 0 : index
    %c0_6 = arith.constant 0 : index
    %c0_7 = arith.constant 0 : index
    %4 = vector.load %arg4[%c0_5, %c0_6, %c0_7] : memref<2x32x32xbf16, #tpu.memory_space<vmem>>, vector<1x32x32xbf16>
    %5 = vector.shape_cast %4 : vector<1x32x32xbf16> to vector<32x32xbf16>
    %cst = arith.constant dense<0.000000e+00> : vector<24x32xf32>
    %6 = tpu.matmul %2, %5, %cst {dimension_numbers = #tpu.dot_dimension_numbers<[1], [0], [0], [1], [0, 0, 1, 1], [], []>} : vector<24x32xbf16>, vector<32x32xbf16>, vector<24x32xf32> -> vector<24x32xf32>
    %c0_8 = arith.constant 0 : index
    %c0_9 = arith.constant 0 : index
    %c0_10 = arith.constant 0 : index
    %7 = vector.load %arg5[%c0_8, %c0_9, %c0_10] : memref<2x1x32xf32, #tpu.memory_space<vmem>>, vector<1x1x32xf32>
    %8 = vector.shape_cast %7 : vector<1x1x32xf32> to vector<1x32xf32>
    %9 = vector.broadcast %8 : vector<1x32xf32> to vector<24x32xf32>
    %10 = arith.addf %6, %9 : vector<24x32xf32>
    %11 = arith.addf %0, %10 : vector<24x32xf32>
    %12 = arith.truncf %11 : vector<24x32xf32> to vector<24x32xbf16>
    %c0_11 = arith.constant 0 : index
    %c0_12 = arith.constant 0 : index
    %c0_13 = arith.constant 0 : index
    %13 = vector.load %arg6[%c0_11, %c0_12, %c0_13] : memref<2x32x96xbf16, #tpu.memory_space<vmem>>, vector<1x32x96xbf16>
    %14 = vector.shape_cast %13 : vector<1x32x96xbf16> to vector<32x96xbf16>
    %cst_14 = arith.constant dense<0.000000e+00> : vector<24x96xf32>
    %15 = tpu.matmul %12, %14, %cst_14 {dimension_numbers = #tpu.dot_dimension_numbers<[1], [0], [0], [1], [0, 0, 1, 1], [], []>} : vector<24x32xbf16>, vector<32x96xbf16>, vector<24x96xf32> -> vector<24x96xf32>
    %c0_15 = arith.constant 0 : index
    %c0_16 = arith.constant 0 : index
    %c0_17 = arith.constant 0 : index
    %16 = vector.load %arg7[%c0_15, %c0_16, %c0_17] : memref<2x1x96xf32, #tpu.memory_space<vmem>>, vector<1x1x96xf32>
    %17 = vector.shape_cast %16 : vector<1x1x96xf32> to vector<1x96xf32>
    %18 = vector.broadcast %17 : vector<1x96xf32> to vector<24x96xf32>
    %19 = arith.addf %15, %18 : vector<24x96xf32>
    %cst_18 = arith.constant 0.000000e+00 : f32
    %20 = vector.broadcast %cst_18 : f32 to vector<24x32xf32>
    %21 = vector.extract_strided_slice %19 {offsets = [0, 0], sizes = [24, 8], strides = [1, 1]} : vector<24x96xf32> to vector<24x8xf32>
    %cst_19 = arith.constant 0.353553385 : f32
    %22 = vector.broadcast %cst_19 : f32 to vector<24x8xf32>
    %23 = arith.mulf %21, %22 : vector<24x8xf32>
    %24 = arith.truncf %23 : vector<24x8xf32> to vector<24x8xbf16>
    %25 = vector.extract_strided_slice %19 {offsets = [0, 32], sizes = [24, 8], strides = [1, 1]} : vector<24x96xf32> to vector<24x8xf32>
    %26 = arith.truncf %25 : vector<24x8xf32> to vector<24x8xbf16>
    %27 = vector.extract_strided_slice %19 {offsets = [0, 64], sizes = [24, 8], strides = [1, 1]} : vector<24x96xf32> to vector<24x8xf32>
    %28 = arith.truncf %27 : vector<24x8xf32> to vector<24x8xbf16>
    %cst_20 = arith.constant dense<0.000000e+00> : vector<24x24xf32>
    %29 = tpu.matmul %24, %26, %cst_20 {dimension_numbers = #tpu.dot_dimension_numbers<[1], [1], [0], [0], [0, 0, 1, 0], [], []>} : vector<24x8xbf16>, vector<24x8xbf16>, vector<24x24xf32> -> vector<24x24xf32>
    %30 = arith.addf %29, %3 : vector<24x24xf32>
    %cst_21 = arith.constant dense<0xFF800000> : vector<24xf32>
    %31 = vector.multi_reduction <maximumf>, %30, %cst_21 [1] : vector<24x24xf32> to vector<24xf32>
    %32 = vector.shape_cast %31 : vector<24xf32> to vector<24x1xf32>
    %33 = vector.broadcast %32 : vector<24x1xf32> to vector<24x24xf32>
    %34 = arith.subf %30, %33 : vector<24x24xf32>
    %35 = math.exp %34 : vector<24x24xf32>
    %cst_22 = arith.constant dense<0.000000e+00> : vector<24xf32>
    %36 = vector.multi_reduction <add>, %35, %cst_22 [1] : vector<24x24xf32> to vector<24xf32>
    %37 = vector.shape_cast %36 : vector<24xf32> to vector<24x1xf32>
    %38 = tpu.reciprocal %37 {approx = true} : vector<24x1xf32> -> vector<24x1xf32>
    %39 = vector.broadcast %38 : vector<24x1xf32> to vector<24x24xf32>
    %40 = arith.mulf %35, %39 : vector<24x24xf32>
    %41 = arith.truncf %40 : vector<24x24xf32> to vector<24x24xbf16>
    %cst_23 = arith.constant dense<0.000000e+00> : vector<24x8xf32>
    %42 = tpu.matmul %41, %28, %cst_23 {dimension_numbers = #tpu.dot_dimension_numbers<[1], [0], [0], [1], [0, 0, 1, 1], [], []>} : vector<24x24xbf16>, vector<24x8xbf16>, vector<24x8xf32> -> vector<24x8xf32>
    %43 = arith.truncf %42 : vector<24x8xf32> to vector<24x8xbf16>
    %c0_24 = arith.constant 0 : index
    %c0_25 = arith.constant 0 : index
    %c0_26 = arith.constant 0 : index
    %c0_27 = arith.constant 0 : index
    %44 = vector.load %arg8[%c0_24, %c0_25, %c0_26, %c0_27] : memref<2x4x8x32xbf16, #tpu.memory_space<vmem>>, vector<1x1x8x32xbf16>
    %45 = vector.shape_cast %44 : vector<1x1x8x32xbf16> to vector<8x32xbf16>
    %cst_28 = arith.constant dense<0.000000e+00> : vector<24x32xf32>
    %46 = tpu.matmul %43, %45, %cst_28 {dimension_numbers = #tpu.dot_dimension_numbers<[1], [0], [0], [1], [0, 0, 1, 1], [], []>} : vector<24x8xbf16>, vector<8x32xbf16>, vector<24x32xf32> -> vector<24x32xf32>
    %47 = arith.addf %20, %46 : vector<24x32xf32>
    %48 = vector.extract_strided_slice %19 {offsets = [0, 8], sizes = [24, 8], strides = [1, 1]} : vector<24x96xf32> to vector<24x8xf32>
    %cst_29 = arith.constant 0.353553385 : f32
    %49 = vector.broadcast %cst_29 : f32 to vector<24x8xf32>
    %50 = arith.mulf %48, %49 : vector<24x8xf32>
    %51 = arith.truncf %50 : vector<24x8xf32> to vector<24x8xbf16>
    %52 = vector.extract_strided_slice %19 {offsets = [0, 40], sizes = [24, 8], strides = [1, 1]} : vector<24x96xf32> to vector<24x8xf32>
    %53 = arith.truncf %52 : vector<24x8xf32> to vector<24x8xbf16>
    %54 = vector.extract_strided_slice %19 {offsets = [0, 72], sizes = [24, 8], strides = [1, 1]} : vector<24x96xf32> to vector<24x8xf32>
    %55 = arith.truncf %54 : vector<24x8xf32> to vector<24x8xbf16>
    %cst_30 = arith.constant dense<0.000000e+00> : vector<24x24xf32>
    %56 = tpu.matmul %51, %53, %cst_30 {dimension_numbers = #tpu.dot_dimension_numbers<[1], [1], [0], [0], [0, 0, 1, 0], [], []>} : vector<24x8xbf16>, vector<24x8xbf16>, vector<24x24xf32> -> vector<24x24xf32>
    %57 = arith.addf %56, %3 : vector<24x24xf32>
    %cst_31 = arith.constant dense<0xFF800000> : vector<24xf32>
    %58 = vector.multi_reduction <maximumf>, %57, %cst_31 [1] : vector<24x24xf32> to vector<24xf32>
    %59 = vector.shape_cast %58 : vector<24xf32> to vector<24x1xf32>
    %60 = vector.broadcast %59 : vector<24x1xf32> to vector<24x24xf32>
    %61 = arith.subf %57, %60 : vector<24x24xf32>
    %62 = math.exp %61 : vector<24x24xf32>
    %cst_32 = arith.constant dense<0.000000e+00> : vector<24xf32>
    %63 = vector.multi_reduction <add>, %62, %cst_32 [1] : vector<24x24xf32> to vector<24xf32>
    %64 = vector.shape_cast %63 : vector<24xf32> to vector<24x1xf32>
    %65 = tpu.reciprocal %64 {approx = true} : vector<24x1xf32> -> vector<24x1xf32>
    %66 = vector.broadcast %65 : vector<24x1xf32> to vector<24x24xf32>
    %67 = arith.mulf %62, %66 : vector<24x24xf32>
    %68 = arith.truncf %67 : vector<24x24xf32> to vector<24x24xbf16>
    %cst_33 = arith.constant dense<0.000000e+00> : vector<24x8xf32>
    %69 = tpu.matmul %68, %55, %cst_33 {dimension_numbers = #tpu.dot_dimension_numbers<[1], [0], [0], [1], [0, 0, 1, 1], [], []>} : vector<24x24xbf16>, vector<24x8xbf16>, vector<24x8xf32> -> vector<24x8xf32>
    %70 = arith.truncf %69 : vector<24x8xf32> to vector<24x8xbf16>
    %c0_34 = arith.constant 0 : index
    %c1 = arith.constant 1 : index
    %c0_35 = arith.constant 0 : index
    %c0_36 = arith.constant 0 : index
    %71 = vector.load %arg8[%c0_34, %c1, %c0_35, %c0_36] : memref<2x4x8x32xbf16, #tpu.memory_space<vmem>>, vector<1x1x8x32xbf16>
    %72 = vector.shape_cast %71 : vector<1x1x8x32xbf16> to vector<8x32xbf16>
    %cst_37 = arith.constant dense<0.000000e+00> : vector<24x32xf32>
    %73 = tpu.matmul %70, %72, %cst_37 {dimension_numbers = #tpu.dot_dimension_numbers<[1], [0], [0], [1], [0, 0, 1, 1], [], []>} : vector<24x8xbf16>, vector<8x32xbf16>, vector<24x32xf32> -> vector<24x32xf32>
    %74 = arith.addf %47, %73 : vector<24x32xf32>
    %75 = vector.extract_strided_slice %19 {offsets = [0, 16], sizes = [24, 8], strides = [1, 1]} : vector<24x96xf32> to vector<24x8xf32>
    %cst_38 = arith.constant 0.353553385 : f32
    %76 = vector.broadcast %cst_38 : f32 to vector<24x8xf32>
    %77 = arith.mulf %75, %76 : vector<24x8xf32>
    %78 = arith.truncf %77 : vector<24x8xf32> to vector<24x8xbf16>
    %79 = vector.extract_strided_slice %19 {offsets = [0, 48], sizes = [24, 8], strides = [1, 1]} : vector<24x96xf32> to vector<24x8xf32>
    %80 = arith.truncf %79 : vector<24x8xf32> to vector<24x8xbf16>
    %81 = vector.extract_strided_slice %19 {offsets = [0, 80], sizes = [24, 8], strides = [1, 1]} : vector<24x96xf32> to vector<24x8xf32>
    %82 = arith.truncf %81 : vector<24x8xf32> to vector<24x8xbf16>
    %cst_39 = arith.constant dense<0.000000e+00> : vector<24x24xf32>
    %83 = tpu.matmul %78, %80, %cst_39 {dimension_numbers = #tpu.dot_dimension_numbers<[1], [1], [0], [0], [0, 0, 1, 0], [], []>} : vector<24x8xbf16>, vector<24x8xbf16>, vector<24x24xf32> -> vector<24x24xf32>
    %84 = arith.addf %83, %3 : vector<24x24xf32>
    %cst_40 = arith.constant dense<0xFF800000> : vector<24xf32>
    %85 = vector.multi_reduction <maximumf>, %84, %cst_40 [1] : vector<24x24xf32> to vector<24xf32>
    %86 = vector.shape_cast %85 : vector<24xf32> to vector<24x1xf32>
    %87 = vector.broadcast %86 : vector<24x1xf32> to vector<24x24xf32>
    %88 = arith.subf %84, %87 : vector<24x24xf32>
    %89 = math.exp %88 : vector<24x24xf32>
    %cst_41 = arith.constant dense<0.000000e+00> : vector<24xf32>
    %90 = vector.multi_reduction <add>, %89, %cst_41 [1] : vector<24x24xf32> to vector<24xf32>
    %91 = vector.shape_cast %90 : vector<24xf32> to vector<24x1xf32>
    %92 = tpu.reciprocal %91 {approx = true} : vector<24x1xf32> -> vector<24x1xf32>
    %93 = vector.broadcast %92 : vector<24x1xf32> to vector<24x24xf32>
    %94 = arith.mulf %89, %93 : vector<24x24xf32>
    %95 = arith.truncf %94 : vector<24x24xf32> to vector<24x24xbf16>
    %cst_42 = arith.constant dense<0.000000e+00> : vector<24x8xf32>
    %96 = tpu.matmul %95, %82, %cst_42 {dimension_numbers = #tpu.dot_dimension_numbers<[1], [0], [0], [1], [0, 0, 1, 1], [], []>} : vector<24x24xbf16>, vector<24x8xbf16>, vector<24x8xf32> -> vector<24x8xf32>
    %97 = arith.truncf %96 : vector<24x8xf32> to vector<24x8xbf16>
    %c0_43 = arith.constant 0 : index
    %c2 = arith.constant 2 : index
    %c0_44 = arith.constant 0 : index
    %c0_45 = arith.constant 0 : index
    %98 = vector.load %arg8[%c0_43, %c2, %c0_44, %c0_45] : memref<2x4x8x32xbf16, #tpu.memory_space<vmem>>, vector<1x1x8x32xbf16>
    %99 = vector.shape_cast %98 : vector<1x1x8x32xbf16> to vector<8x32xbf16>
    %cst_46 = arith.constant dense<0.000000e+00> : vector<24x32xf32>
    %100 = tpu.matmul %97, %99, %cst_46 {dimension_numbers = #tpu.dot_dimension_numbers<[1], [0], [0], [1], [0, 0, 1, 1], [], []>} : vector<24x8xbf16>, vector<8x32xbf16>, vector<24x32xf32> -> vector<24x32xf32>
    %101 = arith.addf %74, %100 : vector<24x32xf32>
    %102 = vector.extract_strided_slice %19 {offsets = [0, 24], sizes = [24, 8], strides = [1, 1]} : vector<24x96xf32> to vector<24x8xf32>
    %cst_47 = arith.constant 0.353553385 : f32
    %103 = vector.broadcast %cst_47 : f32 to vector<24x8xf32>
    %104 = arith.mulf %102, %103 : vector<24x8xf32>
    %105 = arith.truncf %104 : vector<24x8xf32> to vector<24x8xbf16>
    %106 = vector.extract_strided_slice %19 {offsets = [0, 56], sizes = [24, 8], strides = [1, 1]} : vector<24x96xf32> to vector<24x8xf32>
    %107 = arith.truncf %106 : vector<24x8xf32> to vector<24x8xbf16>
    %108 = vector.extract_strided_slice %19 {offsets = [0, 88], sizes = [24, 8], strides = [1, 1]} : vector<24x96xf32> to vector<24x8xf32>
    %109 = arith.truncf %108 : vector<24x8xf32> to vector<24x8xbf16>
    %cst_48 = arith.constant dense<0.000000e+00> : vector<24x24xf32>
    %110 = tpu.matmul %105, %107, %cst_48 {dimension_numbers = #tpu.dot_dimension_numbers<[1], [1], [0], [0], [0, 0, 1, 0], [], []>} : vector<24x8xbf16>, vector<24x8xbf16>, vector<24x24xf32> -> vector<24x24xf32>
    %111 = arith.addf %110, %3 : vector<24x24xf32>
    %cst_49 = arith.constant dense<0xFF800000> : vector<24xf32>
    %112 = vector.multi_reduction <maximumf>, %111, %cst_49 [1] : vector<24x24xf32> to vector<24xf32>
    %113 = vector.shape_cast %112 : vector<24xf32> to vector<24x1xf32>
    %114 = vector.broadcast %113 : vector<24x1xf32> to vector<24x24xf32>
    %115 = arith.subf %111, %114 : vector<24x24xf32>
    %116 = math.exp %115 : vector<24x24xf32>
    %cst_50 = arith.constant dense<0.000000e+00> : vector<24xf32>
    %117 = vector.multi_reduction <add>, %116, %cst_50 [1] : vector<24x24xf32> to vector<24xf32>
    %118 = vector.shape_cast %117 : vector<24xf32> to vector<24x1xf32>
    %119 = tpu.reciprocal %118 {approx = true} : vector<24x1xf32> -> vector<24x1xf32>
    %120 = vector.broadcast %119 : vector<24x1xf32> to vector<24x24xf32>
    %121 = arith.mulf %116, %120 : vector<24x24xf32>
    %122 = arith.truncf %121 : vector<24x24xf32> to vector<24x24xbf16>
    %cst_51 = arith.constant dense<0.000000e+00> : vector<24x8xf32>
    %123 = tpu.matmul %122, %109, %cst_51 {dimension_numbers = #tpu.dot_dimension_numbers<[1], [0], [0], [1], [0, 0, 1, 1], [], []>} : vector<24x24xbf16>, vector<24x8xbf16>, vector<24x8xf32> -> vector<24x8xf32>
    %124 = arith.truncf %123 : vector<24x8xf32> to vector<24x8xbf16>
    %c0_52 = arith.constant 0 : index
    %c3 = arith.constant 3 : index
    %c0_53 = arith.constant 0 : index
    %c0_54 = arith.constant 0 : index
    %125 = vector.load %arg8[%c0_52, %c3, %c0_53, %c0_54] : memref<2x4x8x32xbf16, #tpu.memory_space<vmem>>, vector<1x1x8x32xbf16>
    %126 = vector.shape_cast %125 : vector<1x1x8x32xbf16> to vector<8x32xbf16>
    %cst_55 = arith.constant dense<0.000000e+00> : vector<24x32xf32>
    %127 = tpu.matmul %124, %126, %cst_55 {dimension_numbers = #tpu.dot_dimension_numbers<[1], [0], [0], [1], [0, 0, 1, 1], [], []>} : vector<24x8xbf16>, vector<8x32xbf16>, vector<24x32xf32> -> vector<24x32xf32>
    %128 = arith.addf %101, %127 : vector<24x32xf32>
    %c0_56 = arith.constant 0 : index
    %c0_57 = arith.constant 0 : index
    %c0_58 = arith.constant 0 : index
    %129 = vector.load %arg9[%c0_56, %c0_57, %c0_58] : memref<2x1x32xf32, #tpu.memory_space<vmem>>, vector<1x1x32xf32>
    %130 = vector.shape_cast %129 : vector<1x1x32xf32> to vector<1x32xf32>
    %131 = vector.broadcast %130 : vector<1x32xf32> to vector<24x32xf32>
    %132 = arith.addf %128, %131 : vector<24x32xf32>
    %133 = arith.addf %11, %132 : vector<24x32xf32>
    %c0_59 = arith.constant 0 : index
    %c0_60 = arith.constant 0 : index
    %c0_61 = arith.constant 0 : index
    %134 = vector.load %arg10[%c0_59, %c0_60, %c0_61] : memref<2x1x32xf32, #tpu.memory_space<vmem>>, vector<1x1x32xf32>
    %135 = vector.shape_cast %134 : vector<1x1x32xf32> to vector<1x32xf32>
    %c0_62 = arith.constant 0 : index
    %c0_63 = arith.constant 0 : index
    %c0_64 = arith.constant 0 : index
    %136 = vector.load %arg11[%c0_62, %c0_63, %c0_64] : memref<2x1x32xf32, #tpu.memory_space<vmem>>, vector<1x1x32xf32>
    %137 = vector.shape_cast %136 : vector<1x1x32xf32> to vector<1x32xf32>
    %cst_65 = arith.constant dense<0.000000e+00> : vector<24xf32>
    %138 = vector.multi_reduction <add>, %133, %cst_65 [1] : vector<24x32xf32> to vector<24xf32>
    %139 = vector.shape_cast %138 : vector<24xf32> to vector<24x1xf32>
    %cst_66 = arith.constant 3.200000e+01 : f32
    %140 = vector.broadcast %cst_66 : f32 to vector<24x1xf32>
    %141 = arith.divf %139, %140 : vector<24x1xf32>
    %142 = vector.broadcast %141 : vector<24x1xf32> to vector<24x32xf32>
    %143 = arith.subf %133, %142 : vector<24x32xf32>
    %144 = arith.mulf %143, %143 : vector<24x32xf32>
    %cst_67 = arith.constant dense<0.000000e+00> : vector<24xf32>
    %145 = vector.multi_reduction <add>, %144, %cst_67 [1] : vector<24x32xf32> to vector<24xf32>
    %146 = vector.shape_cast %145 : vector<24xf32> to vector<24x1xf32>
    %cst_68 = arith.constant 3.200000e+01 : f32
    %147 = vector.broadcast %cst_68 : f32 to vector<24x1xf32>
    %148 = arith.divf %146, %147 : vector<24x1xf32>
    %cst_69 = arith.constant 9.99999974E-6 : f32
    %149 = vector.broadcast %cst_69 : f32 to vector<24x1xf32>
    %150 = arith.addf %148, %149 : vector<24x1xf32>
    %151 = math.rsqrt %150 : vector<24x1xf32>
    %152 = vector.broadcast %151 : vector<24x1xf32> to vector<24x32xf32>
    %153 = arith.mulf %143, %152 : vector<24x32xf32>
    %154 = vector.broadcast %135 : vector<1x32xf32> to vector<24x32xf32>
    %155 = arith.mulf %153, %154 : vector<24x32xf32>
    %156 = vector.broadcast %137 : vector<1x32xf32> to vector<24x32xf32>
    %157 = arith.addf %155, %156 : vector<24x32xf32>
    %158 = arith.truncf %157 : vector<24x32xf32> to vector<24x32xbf16>
    %c0_70 = arith.constant 0 : index
    %c0_71 = arith.constant 0 : index
    %c0_72 = arith.constant 0 : index
    %159 = vector.load %arg12[%c0_70, %c0_71, %c0_72] : memref<2x32x64xbf16, #tpu.memory_space<vmem>>, vector<1x32x64xbf16>
    %160 = vector.shape_cast %159 : vector<1x32x64xbf16> to vector<32x64xbf16>
    %cst_73 = arith.constant dense<0.000000e+00> : vector<24x64xf32>
    %161 = tpu.matmul %158, %160, %cst_73 {dimension_numbers = #tpu.dot_dimension_numbers<[1], [0], [0], [1], [0, 0, 1, 1], [], []>} : vector<24x32xbf16>, vector<32x64xbf16>, vector<24x64xf32> -> vector<24x64xf32>
    %c0_74 = arith.constant 0 : index
    %c0_75 = arith.constant 0 : index
    %c0_76 = arith.constant 0 : index
    %162 = vector.load %arg13[%c0_74, %c0_75, %c0_76] : memref<2x1x64xf32, #tpu.memory_space<vmem>>, vector<1x1x64xf32>
    %163 = vector.shape_cast %162 : vector<1x1x64xf32> to vector<1x64xf32>
    %164 = vector.broadcast %163 : vector<1x64xf32> to vector<24x64xf32>
    %165 = arith.addf %161, %164 : vector<24x64xf32>
    %cst_77 = arith.constant 0.000000e+00 : f32
    %166 = vector.broadcast %cst_77 : f32 to vector<24x64xf32>
    %167 = arith.maximumf %165, %166 : vector<24x64xf32>
    %168 = arith.truncf %167 : vector<24x64xf32> to vector<24x64xbf16>
    %c0_78 = arith.constant 0 : index
    %c0_79 = arith.constant 0 : index
    %c0_80 = arith.constant 0 : index
    %169 = vector.load %arg14[%c0_78, %c0_79, %c0_80] : memref<2x64x32xbf16, #tpu.memory_space<vmem>>, vector<1x64x32xbf16>
    %170 = vector.shape_cast %169 : vector<1x64x32xbf16> to vector<64x32xbf16>
    %cst_81 = arith.constant dense<0.000000e+00> : vector<24x32xf32>
    %171 = tpu.matmul %168, %170, %cst_81 {dimension_numbers = #tpu.dot_dimension_numbers<[1], [0], [0], [1], [0, 0, 1, 1], [], []>} : vector<24x64xbf16>, vector<64x32xbf16>, vector<24x32xf32> -> vector<24x32xf32>
    %c0_82 = arith.constant 0 : index
    %c0_83 = arith.constant 0 : index
    %c0_84 = arith.constant 0 : index
    %172 = vector.load %arg15[%c0_82, %c0_83, %c0_84] : memref<2x1x32xf32, #tpu.memory_space<vmem>>, vector<1x1x32xf32>
    %173 = vector.shape_cast %172 : vector<1x1x32xf32> to vector<1x32xf32>
    %174 = vector.broadcast %173 : vector<1x32xf32> to vector<24x32xf32>
    %175 = arith.addf %171, %174 : vector<24x32xf32>
    %176 = arith.addf %157, %175 : vector<24x32xf32>
    %c0_85 = arith.constant 0 : index
    %c0_86 = arith.constant 0 : index
    %c0_87 = arith.constant 0 : index
    %177 = vector.load %arg16[%c0_85, %c0_86, %c0_87] : memref<2x1x32xf32, #tpu.memory_space<vmem>>, vector<1x1x32xf32>
    %178 = vector.shape_cast %177 : vector<1x1x32xf32> to vector<1x32xf32>
    %c0_88 = arith.constant 0 : index
    %c0_89 = arith.constant 0 : index
    %c0_90 = arith.constant 0 : index
    %179 = vector.load %arg17[%c0_88, %c0_89, %c0_90] : memref<2x1x32xf32, #tpu.memory_space<vmem>>, vector<1x1x32xf32>
    %180 = vector.shape_cast %179 : vector<1x1x32xf32> to vector<1x32xf32>
    %cst_91 = arith.constant dense<0.000000e+00> : vector<24xf32>
    %181 = vector.multi_reduction <add>, %176, %cst_91 [1] : vector<24x32xf32> to vector<24xf32>
    %182 = vector.shape_cast %181 : vector<24xf32> to vector<24x1xf32>
    %cst_92 = arith.constant 3.200000e+01 : f32
    %183 = vector.broadcast %cst_92 : f32 to vector<24x1xf32>
    %184 = arith.divf %182, %183 : vector<24x1xf32>
    %185 = vector.broadcast %184 : vector<24x1xf32> to vector<24x32xf32>
    %186 = arith.subf %176, %185 : vector<24x32xf32>
    %187 = arith.mulf %186, %186 : vector<24x32xf32>
    %cst_93 = arith.constant dense<0.000000e+00> : vector<24xf32>
    %188 = vector.multi_reduction <add>, %187, %cst_93 [1] : vector<24x32xf32> to vector<24xf32>
    %189 = vector.shape_cast %188 : vector<24xf32> to vector<24x1xf32>
    %cst_94 = arith.constant 3.200000e+01 : f32
    %190 = vector.broadcast %cst_94 : f32 to vector<24x1xf32>
    %191 = arith.divf %189, %190 : vector<24x1xf32>
    %cst_95 = arith.constant 9.99999974E-6 : f32
    %192 = vector.broadcast %cst_95 : f32 to vector<24x1xf32>
    %193 = arith.addf %191, %192 : vector<24x1xf32>
    %194 = math.rsqrt %193 : vector<24x1xf32>
    %195 = vector.broadcast %194 : vector<24x1xf32> to vector<24x32xf32>
    %196 = arith.mulf %186, %195 : vector<24x32xf32>
    %197 = vector.broadcast %178 : vector<1x32xf32> to vector<24x32xf32>
    %198 = arith.mulf %196, %197 : vector<24x32xf32>
    %199 = vector.broadcast %180 : vector<1x32xf32> to vector<24x32xf32>
    %200 = arith.addf %198, %199 : vector<24x32xf32>
    %c1_96 = arith.constant 1 : index
    %c0_97 = arith.constant 0 : index
    %c0_98 = arith.constant 0 : index
    %201 = vector.load %arg4[%c1_96, %c0_97, %c0_98] : memref<2x32x32xbf16, #tpu.memory_space<vmem>>, vector<1x32x32xbf16>
    %202 = vector.shape_cast %201 : vector<1x32x32xbf16> to vector<32x32xbf16>
    %cst_99 = arith.constant dense<0.000000e+00> : vector<24x32xf32>
    %203 = tpu.matmul %2, %202, %cst_99 {dimension_numbers = #tpu.dot_dimension_numbers<[1], [0], [0], [1], [0, 0, 1, 1], [], []>} : vector<24x32xbf16>, vector<32x32xbf16>, vector<24x32xf32> -> vector<24x32xf32>
    %c1_100 = arith.constant 1 : index
    %c0_101 = arith.constant 0 : index
    %c0_102 = arith.constant 0 : index
    %204 = vector.load %arg5[%c1_100, %c0_101, %c0_102] : memref<2x1x32xf32, #tpu.memory_space<vmem>>, vector<1x1x32xf32>
    %205 = vector.shape_cast %204 : vector<1x1x32xf32> to vector<1x32xf32>
    %206 = vector.broadcast %205 : vector<1x32xf32> to vector<24x32xf32>
    %207 = arith.addf %203, %206 : vector<24x32xf32>
    %208 = arith.addf %200, %207 : vector<24x32xf32>
    %209 = arith.truncf %208 : vector<24x32xf32> to vector<24x32xbf16>
    %c1_103 = arith.constant 1 : index
    %c0_104 = arith.constant 0 : index
    %c0_105 = arith.constant 0 : index
    %210 = vector.load %arg6[%c1_103, %c0_104, %c0_105] : memref<2x32x96xbf16, #tpu.memory_space<vmem>>, vector<1x32x96xbf16>
    %211 = vector.shape_cast %210 : vector<1x32x96xbf16> to vector<32x96xbf16>
    %cst_106 = arith.constant dense<0.000000e+00> : vector<24x96xf32>
    %212 = tpu.matmul %209, %211, %cst_106 {dimension_numbers = #tpu.dot_dimension_numbers<[1], [0], [0], [1], [0, 0, 1, 1], [], []>} : vector<24x32xbf16>, vector<32x96xbf16>, vector<24x96xf32> -> vector<24x96xf32>
    %c1_107 = arith.constant 1 : index
    %c0_108 = arith.constant 0 : index
    %c0_109 = arith.constant 0 : index
    %213 = vector.load %arg7[%c1_107, %c0_108, %c0_109] : memref<2x1x96xf32, #tpu.memory_space<vmem>>, vector<1x1x96xf32>
    %214 = vector.shape_cast %213 : vector<1x1x96xf32> to vector<1x96xf32>
    %215 = vector.broadcast %214 : vector<1x96xf32> to vector<24x96xf32>
    %216 = arith.addf %212, %215 : vector<24x96xf32>
    %cst_110 = arith.constant 0.000000e+00 : f32
    %217 = vector.broadcast %cst_110 : f32 to vector<24x32xf32>
    %218 = vector.extract_strided_slice %216 {offsets = [0, 0], sizes = [24, 8], strides = [1, 1]} : vector<24x96xf32> to vector<24x8xf32>
    %cst_111 = arith.constant 0.353553385 : f32
    %219 = vector.broadcast %cst_111 : f32 to vector<24x8xf32>
    %220 = arith.mulf %218, %219 : vector<24x8xf32>
    %221 = arith.truncf %220 : vector<24x8xf32> to vector<24x8xbf16>
    %222 = vector.extract_strided_slice %216 {offsets = [0, 32], sizes = [24, 8], strides = [1, 1]} : vector<24x96xf32> to vector<24x8xf32>
    %223 = arith.truncf %222 : vector<24x8xf32> to vector<24x8xbf16>
    %224 = vector.extract_strided_slice %216 {offsets = [0, 64], sizes = [24, 8], strides = [1, 1]} : vector<24x96xf32> to vector<24x8xf32>
    %225 = arith.truncf %224 : vector<24x8xf32> to vector<24x8xbf16>
    %cst_112 = arith.constant dense<0.000000e+00> : vector<24x24xf32>
    %226 = tpu.matmul %221, %223, %cst_112 {dimension_numbers = #tpu.dot_dimension_numbers<[1], [1], [0], [0], [0, 0, 1, 0], [], []>} : vector<24x8xbf16>, vector<24x8xbf16>, vector<24x24xf32> -> vector<24x24xf32>
    %227 = arith.addf %226, %3 : vector<24x24xf32>
    %cst_113 = arith.constant dense<0xFF800000> : vector<24xf32>
    %228 = vector.multi_reduction <maximumf>, %227, %cst_113 [1] : vector<24x24xf32> to vector<24xf32>
    %229 = vector.shape_cast %228 : vector<24xf32> to vector<24x1xf32>
    %230 = vector.broadcast %229 : vector<24x1xf32> to vector<24x24xf32>
    %231 = arith.subf %227, %230 : vector<24x24xf32>
    %232 = math.exp %231 : vector<24x24xf32>
    %cst_114 = arith.constant dense<0.000000e+00> : vector<24xf32>
    %233 = vector.multi_reduction <add>, %232, %cst_114 [1] : vector<24x24xf32> to vector<24xf32>
    %234 = vector.shape_cast %233 : vector<24xf32> to vector<24x1xf32>
    %235 = tpu.reciprocal %234 {approx = true} : vector<24x1xf32> -> vector<24x1xf32>
    %236 = vector.broadcast %235 : vector<24x1xf32> to vector<24x24xf32>
    %237 = arith.mulf %232, %236 : vector<24x24xf32>
    %238 = arith.truncf %237 : vector<24x24xf32> to vector<24x24xbf16>
    %cst_115 = arith.constant dense<0.000000e+00> : vector<24x8xf32>
    %239 = tpu.matmul %238, %225, %cst_115 {dimension_numbers = #tpu.dot_dimension_numbers<[1], [0], [0], [1], [0, 0, 1, 1], [], []>} : vector<24x24xbf16>, vector<24x8xbf16>, vector<24x8xf32> -> vector<24x8xf32>
    %240 = arith.truncf %239 : vector<24x8xf32> to vector<24x8xbf16>
    %c1_116 = arith.constant 1 : index
    %c0_117 = arith.constant 0 : index
    %c0_118 = arith.constant 0 : index
    %c0_119 = arith.constant 0 : index
    %241 = vector.load %arg8[%c1_116, %c0_117, %c0_118, %c0_119] : memref<2x4x8x32xbf16, #tpu.memory_space<vmem>>, vector<1x1x8x32xbf16>
    %242 = vector.shape_cast %241 : vector<1x1x8x32xbf16> to vector<8x32xbf16>
    %cst_120 = arith.constant dense<0.000000e+00> : vector<24x32xf32>
    %243 = tpu.matmul %240, %242, %cst_120 {dimension_numbers = #tpu.dot_dimension_numbers<[1], [0], [0], [1], [0, 0, 1, 1], [], []>} : vector<24x8xbf16>, vector<8x32xbf16>, vector<24x32xf32> -> vector<24x32xf32>
    %244 = arith.addf %217, %243 : vector<24x32xf32>
    %245 = vector.extract_strided_slice %216 {offsets = [0, 8], sizes = [24, 8], strides = [1, 1]} : vector<24x96xf32> to vector<24x8xf32>
    %cst_121 = arith.constant 0.353553385 : f32
    %246 = vector.broadcast %cst_121 : f32 to vector<24x8xf32>
    %247 = arith.mulf %245, %246 : vector<24x8xf32>
    %248 = arith.truncf %247 : vector<24x8xf32> to vector<24x8xbf16>
    %249 = vector.extract_strided_slice %216 {offsets = [0, 40], sizes = [24, 8], strides = [1, 1]} : vector<24x96xf32> to vector<24x8xf32>
    %250 = arith.truncf %249 : vector<24x8xf32> to vector<24x8xbf16>
    %251 = vector.extract_strided_slice %216 {offsets = [0, 72], sizes = [24, 8], strides = [1, 1]} : vector<24x96xf32> to vector<24x8xf32>
    %252 = arith.truncf %251 : vector<24x8xf32> to vector<24x8xbf16>
    %cst_122 = arith.constant dense<0.000000e+00> : vector<24x24xf32>
    %253 = tpu.matmul %248, %250, %cst_122 {dimension_numbers = #tpu.dot_dimension_numbers<[1], [1], [0], [0], [0, 0, 1, 0], [], []>} : vector<24x8xbf16>, vector<24x8xbf16>, vector<24x24xf32> -> vector<24x24xf32>
    %254 = arith.addf %253, %3 : vector<24x24xf32>
    %cst_123 = arith.constant dense<0xFF800000> : vector<24xf32>
    %255 = vector.multi_reduction <maximumf>, %254, %cst_123 [1] : vector<24x24xf32> to vector<24xf32>
    %256 = vector.shape_cast %255 : vector<24xf32> to vector<24x1xf32>
    %257 = vector.broadcast %256 : vector<24x1xf32> to vector<24x24xf32>
    %258 = arith.subf %254, %257 : vector<24x24xf32>
    %259 = math.exp %258 : vector<24x24xf32>
    %cst_124 = arith.constant dense<0.000000e+00> : vector<24xf32>
    %260 = vector.multi_reduction <add>, %259, %cst_124 [1] : vector<24x24xf32> to vector<24xf32>
    %261 = vector.shape_cast %260 : vector<24xf32> to vector<24x1xf32>
    %262 = tpu.reciprocal %261 {approx = true} : vector<24x1xf32> -> vector<24x1xf32>
    %263 = vector.broadcast %262 : vector<24x1xf32> to vector<24x24xf32>
    %264 = arith.mulf %259, %263 : vector<24x24xf32>
    %265 = arith.truncf %264 : vector<24x24xf32> to vector<24x24xbf16>
    %cst_125 = arith.constant dense<0.000000e+00> : vector<24x8xf32>
    %266 = tpu.matmul %265, %252, %cst_125 {dimension_numbers = #tpu.dot_dimension_numbers<[1], [0], [0], [1], [0, 0, 1, 1], [], []>} : vector<24x24xbf16>, vector<24x8xbf16>, vector<24x8xf32> -> vector<24x8xf32>
    %267 = arith.truncf %266 : vector<24x8xf32> to vector<24x8xbf16>
    %c1_126 = arith.constant 1 : index
    %c1_127 = arith.constant 1 : index
    %c0_128 = arith.constant 0 : index
    %c0_129 = arith.constant 0 : index
    %268 = vector.load %arg8[%c1_126, %c1_127, %c0_128, %c0_129] : memref<2x4x8x32xbf16, #tpu.memory_space<vmem>>, vector<1x1x8x32xbf16>
    %269 = vector.shape_cast %268 : vector<1x1x8x32xbf16> to vector<8x32xbf16>
    %cst_130 = arith.constant dense<0.000000e+00> : vector<24x32xf32>
    %270 = tpu.matmul %267, %269, %cst_130 {dimension_numbers = #tpu.dot_dimension_numbers<[1], [0], [0], [1], [0, 0, 1, 1], [], []>} : vector<24x8xbf16>, vector<8x32xbf16>, vector<24x32xf32> -> vector<24x32xf32>
    %271 = arith.addf %244, %270 : vector<24x32xf32>
    %272 = vector.extract_strided_slice %216 {offsets = [0, 16], sizes = [24, 8], strides = [1, 1]} : vector<24x96xf32> to vector<24x8xf32>
    %cst_131 = arith.constant 0.353553385 : f32
    %273 = vector.broadcast %cst_131 : f32 to vector<24x8xf32>
    %274 = arith.mulf %272, %273 : vector<24x8xf32>
    %275 = arith.truncf %274 : vector<24x8xf32> to vector<24x8xbf16>
    %276 = vector.extract_strided_slice %216 {offsets = [0, 48], sizes = [24, 8], strides = [1, 1]} : vector<24x96xf32> to vector<24x8xf32>
    %277 = arith.truncf %276 : vector<24x8xf32> to vector<24x8xbf16>
    %278 = vector.extract_strided_slice %216 {offsets = [0, 80], sizes = [24, 8], strides = [1, 1]} : vector<24x96xf32> to vector<24x8xf32>
    %279 = arith.truncf %278 : vector<24x8xf32> to vector<24x8xbf16>
    %cst_132 = arith.constant dense<0.000000e+00> : vector<24x24xf32>
    %280 = tpu.matmul %275, %277, %cst_132 {dimension_numbers = #tpu.dot_dimension_numbers<[1], [1], [0], [0], [0, 0, 1, 0], [], []>} : vector<24x8xbf16>, vector<24x8xbf16>, vector<24x24xf32> -> vector<24x24xf32>
    %281 = arith.addf %280, %3 : vector<24x24xf32>
    %cst_133 = arith.constant dense<0xFF800000> : vector<24xf32>
    %282 = vector.multi_reduction <maximumf>, %281, %cst_133 [1] : vector<24x24xf32> to vector<24xf32>
    %283 = vector.shape_cast %282 : vector<24xf32> to vector<24x1xf32>
    %284 = vector.broadcast %283 : vector<24x1xf32> to vector<24x24xf32>
    %285 = arith.subf %281, %284 : vector<24x24xf32>
    %286 = math.exp %285 : vector<24x24xf32>
    %cst_134 = arith.constant dense<0.000000e+00> : vector<24xf32>
    %287 = vector.multi_reduction <add>, %286, %cst_134 [1] : vector<24x24xf32> to vector<24xf32>
    %288 = vector.shape_cast %287 : vector<24xf32> to vector<24x1xf32>
    %289 = tpu.reciprocal %288 {approx = true} : vector<24x1xf32> -> vector<24x1xf32>
    %290 = vector.broadcast %289 : vector<24x1xf32> to vector<24x24xf32>
    %291 = arith.mulf %286, %290 : vector<24x24xf32>
    %292 = arith.truncf %291 : vector<24x24xf32> to vector<24x24xbf16>
    %cst_135 = arith.constant dense<0.000000e+00> : vector<24x8xf32>
    %293 = tpu.matmul %292, %279, %cst_135 {dimension_numbers = #tpu.dot_dimension_numbers<[1], [0], [0], [1], [0, 0, 1, 1], [], []>} : vector<24x24xbf16>, vector<24x8xbf16>, vector<24x8xf32> -> vector<24x8xf32>
    %294 = arith.truncf %293 : vector<24x8xf32> to vector<24x8xbf16>
    %c1_136 = arith.constant 1 : index
    %c2_137 = arith.constant 2 : index
    %c0_138 = arith.constant 0 : index
    %c0_139 = arith.constant 0 : index
    %295 = vector.load %arg8[%c1_136, %c2_137, %c0_138, %c0_139] : memref<2x4x8x32xbf16, #tpu.memory_space<vmem>>, vector<1x1x8x32xbf16>
    %296 = vector.shape_cast %295 : vector<1x1x8x32xbf16> to vector<8x32xbf16>
    %cst_140 = arith.constant dense<0.000000e+00> : vector<24x32xf32>
    %297 = tpu.matmul %294, %296, %cst_140 {dimension_numbers = #tpu.dot_dimension_numbers<[1], [0], [0], [1], [0, 0, 1, 1], [], []>} : vector<24x8xbf16>, vector<8x32xbf16>, vector<24x32xf32> -> vector<24x32xf32>
    %298 = arith.addf %271, %297 : vector<24x32xf32>
    %299 = vector.extract_strided_slice %216 {offsets = [0, 24], sizes = [24, 8], strides = [1, 1]} : vector<24x96xf32> to vector<24x8xf32>
    %cst_141 = arith.constant 0.353553385 : f32
    %300 = vector.broadcast %cst_141 : f32 to vector<24x8xf32>
    %301 = arith.mulf %299, %300 : vector<24x8xf32>
    %302 = arith.truncf %301 : vector<24x8xf32> to vector<24x8xbf16>
    %303 = vector.extract_strided_slice %216 {offsets = [0, 56], sizes = [24, 8], strides = [1, 1]} : vector<24x96xf32> to vector<24x8xf32>
    %304 = arith.truncf %303 : vector<24x8xf32> to vector<24x8xbf16>
    %305 = vector.extract_strided_slice %216 {offsets = [0, 88], sizes = [24, 8], strides = [1, 1]} : vector<24x96xf32> to vector<24x8xf32>
    %306 = arith.truncf %305 : vector<24x8xf32> to vector<24x8xbf16>
    %cst_142 = arith.constant dense<0.000000e+00> : vector<24x24xf32>
    %307 = tpu.matmul %302, %304, %cst_142 {dimension_numbers = #tpu.dot_dimension_numbers<[1], [1], [0], [0], [0, 0, 1, 0], [], []>} : vector<24x8xbf16>, vector<24x8xbf16>, vector<24x24xf32> -> vector<24x24xf32>
    %308 = arith.addf %307, %3 : vector<24x24xf32>
    %cst_143 = arith.constant dense<0xFF800000> : vector<24xf32>
    %309 = vector.multi_reduction <maximumf>, %308, %cst_143 [1] : vector<24x24xf32> to vector<24xf32>
    %310 = vector.shape_cast %309 : vector<24xf32> to vector<24x1xf32>
    %311 = vector.broadcast %310 : vector<24x1xf32> to vector<24x24xf32>
    %312 = arith.subf %308, %311 : vector<24x24xf32>
    %313 = math.exp %312 : vector<24x24xf32>
    %cst_144 = arith.constant dense<0.000000e+00> : vector<24xf32>
    %314 = vector.multi_reduction <add>, %313, %cst_144 [1] : vector<24x24xf32> to vector<24xf32>
    %315 = vector.shape_cast %314 : vector<24xf32> to vector<24x1xf32>
    %316 = tpu.reciprocal %315 {approx = true} : vector<24x1xf32> -> vector<24x1xf32>
    %317 = vector.broadcast %316 : vector<24x1xf32> to vector<24x24xf32>
    %318 = arith.mulf %313, %317 : vector<24x24xf32>
    %319 = arith.truncf %318 : vector<24x24xf32> to vector<24x24xbf16>
    %cst_145 = arith.constant dense<0.000000e+00> : vector<24x8xf32>
    %320 = tpu.matmul %319, %306, %cst_145 {dimension_numbers = #tpu.dot_dimension_numbers<[1], [0], [0], [1], [0, 0, 1, 1], [], []>} : vector<24x24xbf16>, vector<24x8xbf16>, vector<24x8xf32> -> vector<24x8xf32>
    %321 = arith.truncf %320 : vector<24x8xf32> to vector<24x8xbf16>
    %c1_146 = arith.constant 1 : index
    %c3_147 = arith.constant 3 : index
    %c0_148 = arith.constant 0 : index
    %c0_149 = arith.constant 0 : index
    %322 = vector.load %arg8[%c1_146, %c3_147, %c0_148, %c0_149] : memref<2x4x8x32xbf16, #tpu.memory_space<vmem>>, vector<1x1x8x32xbf16>
    %323 = vector.shape_cast %322 : vector<1x1x8x32xbf16> to vector<8x32xbf16>
    %cst_150 = arith.constant dense<0.000000e+00> : vector<24x32xf32>
    %324 = tpu.matmul %321, %323, %cst_150 {dimension_numbers = #tpu.dot_dimension_numbers<[1], [0], [0], [1], [0, 0, 1, 1], [], []>} : vector<24x8xbf16>, vector<8x32xbf16>, vector<24x32xf32> -> vector<24x32xf32>
    %325 = arith.addf %298, %324 : vector<24x32xf32>
    %c1_151 = arith.constant 1 : index
    %c0_152 = arith.constant 0 : index
    %c0_153 = arith.constant 0 : index
    %326 = vector.load %arg9[%c1_151, %c0_152, %c0_153] : memref<2x1x32xf32, #tpu.memory_space<vmem>>, vector<1x1x32xf32>
    %327 = vector.shape_cast %326 : vector<1x1x32xf32> to vector<1x32xf32>
    %328 = vector.broadcast %327 : vector<1x32xf32> to vector<24x32xf32>
    %329 = arith.addf %325, %328 : vector<24x32xf32>
    %330 = arith.addf %208, %329 : vector<24x32xf32>
    %c1_154 = arith.constant 1 : index
    %c0_155 = arith.constant 0 : index
    %c0_156 = arith.constant 0 : index
    %331 = vector.load %arg10[%c1_154, %c0_155, %c0_156] : memref<2x1x32xf32, #tpu.memory_space<vmem>>, vector<1x1x32xf32>
    %332 = vector.shape_cast %331 : vector<1x1x32xf32> to vector<1x32xf32>
    %c1_157 = arith.constant 1 : index
    %c0_158 = arith.constant 0 : index
    %c0_159 = arith.constant 0 : index
    %333 = vector.load %arg11[%c1_157, %c0_158, %c0_159] : memref<2x1x32xf32, #tpu.memory_space<vmem>>, vector<1x1x32xf32>
    %334 = vector.shape_cast %333 : vector<1x1x32xf32> to vector<1x32xf32>
    %cst_160 = arith.constant dense<0.000000e+00> : vector<24xf32>
    %335 = vector.multi_reduction <add>, %330, %cst_160 [1] : vector<24x32xf32> to vector<24xf32>
    %336 = vector.shape_cast %335 : vector<24xf32> to vector<24x1xf32>
    %cst_161 = arith.constant 3.200000e+01 : f32
    %337 = vector.broadcast %cst_161 : f32 to vector<24x1xf32>
    %338 = arith.divf %336, %337 : vector<24x1xf32>
    %339 = vector.broadcast %338 : vector<24x1xf32> to vector<24x32xf32>
    %340 = arith.subf %330, %339 : vector<24x32xf32>
    %341 = arith.mulf %340, %340 : vector<24x32xf32>
    %cst_162 = arith.constant dense<0.000000e+00> : vector<24xf32>
    %342 = vector.multi_reduction <add>, %341, %cst_162 [1] : vector<24x32xf32> to vector<24xf32>
    %343 = vector.shape_cast %342 : vector<24xf32> to vector<24x1xf32>
    %cst_163 = arith.constant 3.200000e+01 : f32
    %344 = vector.broadcast %cst_163 : f32 to vector<24x1xf32>
    %345 = arith.divf %343, %344 : vector<24x1xf32>
    %cst_164 = arith.constant 9.99999974E-6 : f32
    %346 = vector.broadcast %cst_164 : f32 to vector<24x1xf32>
    %347 = arith.addf %345, %346 : vector<24x1xf32>
    %348 = math.rsqrt %347 : vector<24x1xf32>
    %349 = vector.broadcast %348 : vector<24x1xf32> to vector<24x32xf32>
    %350 = arith.mulf %340, %349 : vector<24x32xf32>
    %351 = vector.broadcast %332 : vector<1x32xf32> to vector<24x32xf32>
    %352 = arith.mulf %350, %351 : vector<24x32xf32>
    %353 = vector.broadcast %334 : vector<1x32xf32> to vector<24x32xf32>
    %354 = arith.addf %352, %353 : vector<24x32xf32>
    %355 = arith.truncf %354 : vector<24x32xf32> to vector<24x32xbf16>
    %c1_165 = arith.constant 1 : index
    %c0_166 = arith.constant 0 : index
    %c0_167 = arith.constant 0 : index
    %356 = vector.load %arg12[%c1_165, %c0_166, %c0_167] : memref<2x32x64xbf16, #tpu.memory_space<vmem>>, vector<1x32x64xbf16>
    %357 = vector.shape_cast %356 : vector<1x32x64xbf16> to vector<32x64xbf16>
    %cst_168 = arith.constant dense<0.000000e+00> : vector<24x64xf32>
    %358 = tpu.matmul %355, %357, %cst_168 {dimension_numbers = #tpu.dot_dimension_numbers<[1], [0], [0], [1], [0, 0, 1, 1], [], []>} : vector<24x32xbf16>, vector<32x64xbf16>, vector<24x64xf32> -> vector<24x64xf32>
    %c1_169 = arith.constant 1 : index
    %c0_170 = arith.constant 0 : index
    %c0_171 = arith.constant 0 : index
    %359 = vector.load %arg13[%c1_169, %c0_170, %c0_171] : memref<2x1x64xf32, #tpu.memory_space<vmem>>, vector<1x1x64xf32>
    %360 = vector.shape_cast %359 : vector<1x1x64xf32> to vector<1x64xf32>
    %361 = vector.broadcast %360 : vector<1x64xf32> to vector<24x64xf32>
    %362 = arith.addf %358, %361 : vector<24x64xf32>
    %cst_172 = arith.constant 0.000000e+00 : f32
    %363 = vector.broadcast %cst_172 : f32 to vector<24x64xf32>
    %364 = arith.maximumf %362, %363 : vector<24x64xf32>
    %365 = arith.truncf %364 : vector<24x64xf32> to vector<24x64xbf16>
    %c1_173 = arith.constant 1 : index
    %c0_174 = arith.constant 0 : index
    %c0_175 = arith.constant 0 : index
    %366 = vector.load %arg14[%c1_173, %c0_174, %c0_175] : memref<2x64x32xbf16, #tpu.memory_space<vmem>>, vector<1x64x32xbf16>
    %367 = vector.shape_cast %366 : vector<1x64x32xbf16> to vector<64x32xbf16>
    %cst_176 = arith.constant dense<0.000000e+00> : vector<24x32xf32>
    %368 = tpu.matmul %365, %367, %cst_176 {dimension_numbers = #tpu.dot_dimension_numbers<[1], [0], [0], [1], [0, 0, 1, 1], [], []>} : vector<24x64xbf16>, vector<64x32xbf16>, vector<24x32xf32> -> vector<24x32xf32>
    %c1_177 = arith.constant 1 : index
    %c0_178 = arith.constant 0 : index
    %c0_179 = arith.constant 0 : index
    %369 = vector.load %arg15[%c1_177, %c0_178, %c0_179] : memref<2x1x32xf32, #tpu.memory_space<vmem>>, vector<1x1x32xf32>
    %370 = vector.shape_cast %369 : vector<1x1x32xf32> to vector<1x32xf32>
    %371 = vector.broadcast %370 : vector<1x32xf32> to vector<24x32xf32>
    %372 = arith.addf %368, %371 : vector<24x32xf32>
    %373 = arith.addf %354, %372 : vector<24x32xf32>
    %c1_180 = arith.constant 1 : index
    %c0_181 = arith.constant 0 : index
    %c0_182 = arith.constant 0 : index
    %374 = vector.load %arg16[%c1_180, %c0_181, %c0_182] : memref<2x1x32xf32, #tpu.memory_space<vmem>>, vector<1x1x32xf32>
    %375 = vector.shape_cast %374 : vector<1x1x32xf32> to vector<1x32xf32>
    %c1_183 = arith.constant 1 : index
    %c0_184 = arith.constant 0 : index
    %c0_185 = arith.constant 0 : index
    %376 = vector.load %arg17[%c1_183, %c0_184, %c0_185] : memref<2x1x32xf32, #tpu.memory_space<vmem>>, vector<1x1x32xf32>
    %377 = vector.shape_cast %376 : vector<1x1x32xf32> to vector<1x32xf32>
    %cst_186 = arith.constant dense<0.000000e+00> : vector<24xf32>
    %378 = vector.multi_reduction <add>, %373, %cst_186 [1] : vector<24x32xf32> to vector<24xf32>
    %379 = vector.shape_cast %378 : vector<24xf32> to vector<24x1xf32>
    %cst_187 = arith.constant 3.200000e+01 : f32
    %380 = vector.broadcast %cst_187 : f32 to vector<24x1xf32>
    %381 = arith.divf %379, %380 : vector<24x1xf32>
    %382 = vector.broadcast %381 : vector<24x1xf32> to vector<24x32xf32>
    %383 = arith.subf %373, %382 : vector<24x32xf32>
    %384 = arith.mulf %383, %383 : vector<24x32xf32>
    %cst_188 = arith.constant dense<0.000000e+00> : vector<24xf32>
    %385 = vector.multi_reduction <add>, %384, %cst_188 [1] : vector<24x32xf32> to vector<24xf32>
    %386 = vector.shape_cast %385 : vector<24xf32> to vector<24x1xf32>
    %cst_189 = arith.constant 3.200000e+01 : f32
    %387 = vector.broadcast %cst_189 : f32 to vector<24x1xf32>
    %388 = arith.divf %386, %387 : vector<24x1xf32>
    %cst_190 = arith.constant 9.99999974E-6 : f32
    %389 = vector.broadcast %cst_190 : f32 to vector<24x1xf32>
    %390 = arith.addf %388, %389 : vector<24x1xf32>
    %391 = math.rsqrt %390 : vector<24x1xf32>
    %392 = vector.broadcast %391 : vector<24x1xf32> to vector<24x32xf32>
    %393 = arith.mulf %383, %392 : vector<24x32xf32>
    %394 = vector.broadcast %375 : vector<1x32xf32> to vector<24x32xf32>
    %395 = arith.mulf %393, %394 : vector<24x32xf32>
    %396 = vector.broadcast %377 : vector<1x32xf32> to vector<24x32xf32>
    %397 = arith.addf %395, %396 : vector<24x32xf32>
    %398 = arith.truncf %397 : vector<24x32xf32> to vector<24x32xbf16>
    %c0_191 = arith.constant 0 : index
    %c0_192 = arith.constant 0 : index
    %399 = vector.load %arg18[%c0_191, %c0_192] : memref<32x128xbf16, #tpu.memory_space<vmem>>, vector<32x128xbf16>
    %cst_193 = arith.constant dense<0.000000e+00> : vector<24x128xf32>
    %400 = tpu.matmul %398, %399, %cst_193 {dimension_numbers = #tpu.dot_dimension_numbers<[1], [0], [0], [1], [0, 0, 1, 1], [], []>} : vector<24x32xbf16>, vector<32x128xbf16>, vector<24x128xf32> -> vector<24x128xf32>
    %c0_194 = arith.constant 0 : index
    %c0_195 = arith.constant 0 : index
    %401 = vector.load %arg19[%c0_194, %c0_195] : memref<1x128xf32, #tpu.memory_space<vmem>>, vector<1x128xf32>
    %402 = vector.broadcast %401 : vector<1x128xf32> to vector<24x128xf32>
    %403 = arith.addf %400, %402 : vector<24x128xf32>
    %c0_196 = arith.constant 0 : index
    %c0_197 = arith.constant 0 : index
    %404 = vector.load %arg20[%c0_196, %c0_197] : memref<24x128xf32, #tpu.memory_space<vmem>>, vector<24x128xf32>
    tpu.vector_store %arg20[%c0_196, %c0_197], %403 {strides = array<i32>} : memref<24x128xf32, #tpu.memory_space<vmem>>, vector<24x128xf32>,
    return
  }
  func.func @transform_0(%arg0: i32) -> (i32, i32) {
    %c0_i32 = arith.constant 0 : i32
    %c0_i32_0 = arith.constant 0 : i32
    %c0_i32_1 = arith.constant 0 : i32
    return %c0_i32, %c0_i32_0 : i32, i32
  }
  func.func @transform_1(%arg0: i32) -> (i32, i32) {
    %c0_i32 = arith.constant 0 : i32
    %c0_i32_0 = arith.constant 0 : i32
    %c0_i32_1 = arith.constant 0 : i32
    return %c0_i32, %c0_i32_0 : i32, i32
  }
  func.func @transform_2(%arg0: i32) -> (i32, i32) {
    %c0_i32 = arith.constant 0 : i32
    %c0_i32_0 = arith.constant 0 : i32
    %c0_i32_1 = arith.constant 0 : i32
    return %c0_i32, %c0_i32_0 : i32, i32
  }
  func.func @transform_3(%arg0: i32) -> (i32, i32, i32) {
    %c0_i32 = arith.constant 0 : i32
    %c0_i32_0 = arith.constant 0 : i32
    %c0_i32_1 = arith.constant 0 : i32
    %c0_i32_2 = arith.constant 0 : i32
    return %c0_i32, %c0_i32_0, %c0_i32_1 : i32, i32, i32
  }
  func.func @transform_4(%arg0: i32) -> (i32, i32, i32) {
    %c0_i32 = arith.constant 0 : i32
    %c0_i32_0 = arith.constant 0 : i32
    %c0_i32_1 = arith.constant 0 : i32
    %c0_i32_2 = arith.constant 0 : i32
    return %c0_i32, %c0_i32_0, %c0_i32_1 : i32, i32, i32
  }
  func.func @transform_5(%arg0: i32) -> (i32, i32, i32) {
    %c0_i32 = arith.constant 0 : i32
    %c0_i32_0 = arith.constant 0 : i32
    %c0_i32_1 = arith.constant 0 : i32
    %c0_i32_2 = arith.constant 0 : i32
    return %c0_i32, %c0_i32_0, %c0_i32_1 : i32, i32, i32
  }
  func.func @transform_6(%arg0: i32) -> (i32, i32, i32) {
    %c0_i32 = arith.constant 0 : i32
    %c0_i32_0 = arith.constant 0 : i32
    %c0_i32_1 = arith.constant 0 : i32
    %c0_i32_2 = arith.constant 0 : i32
    return %c0_i32, %c0_i32_0, %c0_i32_1 : i32, i32, i32
  }
  func.func @transform_7(%arg0: i32) -> (i32, i32, i32, i32) {
    %c0_i32 = arith.constant 0 : i32
    %c0_i32_0 = arith.constant 0 : i32
    %c0_i32_1 = arith.constant 0 : i32
    %c0_i32_2 = arith.constant 0 : i32
    %c0_i32_3 = arith.constant 0 : i32
    return %c0_i32, %c0_i32_0, %c0_i32_1, %c0_i32_2 : i32, i32, i32, i32
  }
  func.func @transform_8(%arg0: i32) -> (i32, i32, i32) {
    %c0_i32 = arith.constant 0 : i32
    %c0_i32_0 = arith.constant 0 : i32
    %c0_i32_1 = arith.constant 0 : i32
    %c0_i32_2 = arith.constant 0 : i32
    return %c0_i32, %c0_i32_0, %c0_i32_1 : i32, i32, i32
  }
  func.func @transform_9(%arg0: i32) -> (i32, i32, i32) {
    %c0_i32 = arith.constant 0 : i32
    %c0_i32_0 = arith.constant 0 : i32
    %c0_i32_1 = arith.constant 0 : i32
    %c0_i32_2 = arith.constant 0 : i32
    return %c0_i32, %c0_i32_0, %c0_i32_1 : i32, i32, i32
  }
  func.func @transform_10(%arg0: i32) -> (i32, i32, i32) {
    %c0_i32 = arith.constant 0 : i32
    %c0_i32_0 = arith.constant 0 : i32
    %c0_i32_1 = arith.constant 0 : i32
    %c0_i32_2 = arith.constant 0 : i32
    return %c0_i32, %c0_i32_0, %c0_i32_1 : i32, i32, i32
  }
  func.func @transform_11(%arg0: i32) -> (i32, i32, i32) {
    %c0_i32 = arith.constant 0 : i32
    %c0_i32_0 = arith.constant 0 : i32
    %c0_i32_1 = arith.constant 0 : i32
    %c0_i32_2 = arith.constant 0 : i32
    return %c0_i32, %c0_i32_0, %c0_i32_1 : i32, i32, i32
  }
  func.func @transform_12(%arg0: i32) -> (i32, i32, i32) {
    %c0_i32 = arith.constant 0 : i32
    %c0_i32_0 = arith.constant 0 : i32
    %c0_i32_1 = arith.constant 0 : i32
    %c0_i32_2 = arith.constant 0 : i32
    return %c0_i32, %c0_i32_0, %c0_i32_1 : i32, i32, i32
  }
  func.func @transform_13(%arg0: i32) -> (i32, i32, i32) {
    %c0_i32 = arith.constant 0 : i32
    %c0_i32_0 = arith.constant 0 : i32
    %c0_i32_1 = arith.constant 0 : i32
    %c0_i32_2 = arith.constant 0 : i32
    return %c0_i32, %c0_i32_0, %c0_i32_1 : i32, i32, i32
  }
  func.func @transform_14(%arg0: i32) -> (i32, i32, i32) {
    %c0_i32 = arith.constant 0 : i32
    %c0_i32_0 = arith.constant 0 : i32
    %c0_i32_1 = arith.constant 0 : i32
    %c0_i32_2 = arith.constant 0 : i32
    return %c0_i32, %c0_i32_0, %c0_i32_1 : i32, i32, i32
  }
  func.func @transform_15(%arg0: i32) -> (i32, i32, i32) {
    %c0_i32 = arith.constant 0 : i32
    %c0_i32_0 = arith.constant 0 : i32
    %c0_i32_1 = arith.constant 0 : i32
    %c0_i32_2 = arith.constant 0 : i32
    return %c0_i32, %c0_i32_0, %c0_i32_1 : i32, i32, i32
  }
  func.func @transform_16(%arg0: i32) -> (i32, i32, i32) {
    %c0_i32 = arith.constant 0 : i32
    %c0_i32_0 = arith.constant 0 : i32
    %c0_i32_1 = arith.constant 0 : i32
    %c0_i32_2 = arith.constant 0 : i32
    return %c0_i32, %c0_i32_0, %c0_i32_1 : i32, i32, i32
  }
  func.func @transform_17(%arg0: i32) -> (i32, i32) {
    %c0_i32 = arith.constant 0 : i32
    %c0_i32_0 = arith.constant 0 : i32
    %c0_i32_1 = arith.constant 0 : i32
    return %c0_i32, %c0_i32_0 : i32, i32
  }
  func.func @transform_18(%arg0: i32) -> (i32, i32) {
    %c0_i32 = arith.constant 0 : i32
    %c0_i32_0 = arith.constant 0 : i32
    %c0_i32_1 = arith.constant 0 : i32
    return %c0_i32, %c0_i32_0 : i32, i32
  }
  func.func @transform_19(%arg0: i32) -> (i32, i32) {
    %c0_i32 = arith.constant 0 : i32
    %c0_i32_0 = arith.constant 0 : i32
    %c0_i32_1 = arith.constant 0 : i32
    return %c0_i32, %c0_i32_0 : i32, i32
  }
}

</mosaic_0001>

<llo_original>
// kernel: eq.15
$region0: #{eq.15}
  %s0 = inlined_call_operand.vmem [shape: s32[6,8], index: 0, kind: input, shape index: {}]
  %s1 = inlined_call_operand.vmem [shape: s32[48], index: 1, kind: output, shape index: {}]
  $region1: #{eq.15} parent=0
    #allocation0 [shape = 'u8[4096]{0}', space=vmem, size = 0x1000, scoped, tag = 'scoped mem for output reshape']
    %v2 = vld [vmem:[%s0] sm:$0x1]
    %vm3 = vcmask 64512
    %4 = vst.msk [vmem:[#allocation0] sm:$0x1] %vm3, %v2
    %s5 = scalar_lea.vmem %s0, 5
    %v6 = vld [vmem:[%s5] sm:$0x1]
    %7 = vrot.lane.b32.xlu0 %v6, 40
    %v8 = vpop.permute.xlu0 %7
    %vm9 = vcmask 392512
    %10 = vst.msk [vmem:[#allocation0] sm:$0x1] %vm9, %v8
    %s11 = scalar_lea.vmem %s0, 4
    %v12 = vld [vmem:[%s11] sm:$0x1]
    %13 = vrot.lane.b32.xlu0 %v12, 32
    %v14 = vpop.permute.xlu0 %13
    %vm15 = vcmask 326912
    %16 = vst.msk [vmem:[#allocation0] sm:$0x1] %vm15, %v14
    %s17 = scalar_lea.vmem %s0, 3
    %v18 = vld [vmem:[%s17] sm:$0x1]
    %19 = vrot.lane.b32.xlu0 %v18, 24
    %v20 = vpop.permute.xlu0 %19
    %vm21 = vcmask 261312
    %22 = vst.msk [vmem:[#allocation0] sm:$0x1] %vm21, %v20
    %s23 = scalar_lea.vmem %s0, 2
    %v24 = vld [vmem:[%s23] sm:$0x1]
    %25 = vrot.lane.b32.xlu0 %v24, 16
    %v26 = vpop.permute.xlu0 %25
    %vm27 = vcmask 195712
    %28 = vst.msk [vmem:[#allocation0] sm:$0x1] %vm27, %v26
    %s29 = scalar_lea.vmem %s0, 1
    %v30 = vld [vmem:[%s29] sm:$0x1]
    %31 = vrot.lane.b32.xlu0 %v30, 8
    %v32 = vpop.permute.xlu0 %31
    %vm33 = vcmask 130112
    %34 = vst.msk [vmem:[#allocation0] sm:$0x1] %vm33, %v32
    %s36 = sshllo.u32 0, 1
    %v38 = vld [vmem:[#allocation0] sm:%s36]
    %s39 = sshllo.u32 0, 1
    %40 = vst [vmem:[%s1] sm:%s39] %v38

// kernel: custom-call.4
$region0: #{custom-call.4}
  %s0 = inlined_call_operand.vmem [shape: u32[2,12], index: 0, kind: output, shape index: {}]

// kernel: squeeze.7
$region0: #{squeeze.7}
  %s0 = inlined_call_operand.vmem [shape: s32[24], index: 0, kind: input, shape index: {}]
  %s1 = inlined_call_operand.vmem [shape: s32[2,12], index: 1, kind: output, shape index: {}]
  $region1: #{squeeze.7} parent=0
    #allocation0 [shape = 'u8[4096]{0}', space=vmem, size = 0x1000, scoped, tag = 'scoped mem for output reshape']
    #allocation1 [shape = 'u8[4096]{0}', space=vmem, size = 0x1000, scoped, tag = 'scoped mem for input reshape']
    %s3 = sshllo.u32 0, 1
    %v4 = vld [vmem:[%s0] sm:%s3]
    %5 = vst [vmem:[#allocation1] sm:%s3] %v4
    %v6 = vld [vmem:[#allocation1] sm:$0x1]
    %vm7 = vcmask 97280
    %8 = vst.msk [vmem:[#allocation0] sm:$0x1] %vm7, %v6
    %v9 = vld [vmem:[#allocation1] sm:$0x1]
    %10 = vrot.lane.b32.xlu0 %v9, 116
    %v11 = vpop.permute.xlu0 %10
    %vm12 = vcmask 97280
    %s13 = scalar_lea.vmem [#allocation0], 1
    %14 = vst.msk [vmem:[%s13] sm:$0x1] %vm12, %v11
    %s16 = sshllo.u32 0, 2
    %v18 = vld [vmem:[#allocation0] sm:%s16]
    %s19 = sshllo.u32 0, 2
    %20 = vst [vmem:[%s1] sm:%s19] %v18

// kernel: eq.22
$region0: #{eq.22}
  %s0 = inlined_call_operand.vmem [shape: s32[2,12], index: 0, kind: input, shape index: {}]
  %s1 = inlined_call_operand.vmem [shape: s32[24], index: 1, kind: output, shape index: {}]
  $region1: #{eq.22} parent=0
    #allocation0 [shape = 'u8[4096]{0}', space=vmem, size = 0x1000, scoped, tag = 'scoped mem for output reshape']
    #allocation1 [shape = 'u8[4096]{0}', space=vmem, size = 0x1000, scoped, tag = 'scoped mem for input reshape']
    %s3 = sshllo.u32 0, 2
    %v4 = vld [vmem:[%s0] sm:%s3]
    %5 = vst [vmem:[#allocation1] sm:%s3] %v4
    %v6 = vld [vmem:[#allocation1] sm:$0x1]
    %vm7 = vcmask 97280
    %8 = vst.msk [vmem:[#allocation0] sm:$0x1] %vm7, %v6
    %s9 = scalar_lea.vmem [#allocation1], 1
    %v10 = vld [vmem:[%s9] sm:$0x1]
    %11 = vrot.lane.b32.xlu0 %v10, 12
    %v12 = vpop.permute.xlu0 %11
    %vm13 = vcmask 195680
    %14 = vst.msk [vmem:[#allocation0] sm:$0x1] %vm13, %v12
    %s16 = sshllo.u32 0, 1
    %v18 = vld [vmem:[#allocation0] sm:%s16]
    %s19 = sshllo.u32 0, 1
    %20 = vst [vmem:[%s1] sm:%s19] %v18

// kernel: _lambda_.2
$region0: #{_lambda_.2}
  #allocation0 [shape = 'u32[]', space=smem, size = 0x4, offset = 0x4, fixed_abs, tag = 'smem constant byte address 0x4 - core index']
  #allocation1 [shape = 'u32[144,128]{1,0:T(1,128)}', space=vmem, size = 0x12000, scoped, tag = 'internal scratch']
  %s0 = inlined_call_operand.hbm [shape: f32[48,32], index: 0, kind: input, shape index: {}]
  %s1 = inlined_call_operand.hbm [shape: f32[48,48], index: 1, kind: input, shape index: {}]
  %s2 = inlined_call_operand.hbm [shape: bf16[2,32,96], index: 2, kind: input, shape index: {}]
  %s3 = inlined_call_operand.hbm [shape: f32[2,1,96], index: 3, kind: input, shape index: {}]
  %s4 = inlined_call_operand.hbm [shape: bf16[2,4,8,32], index: 4, kind: input, shape index: {}]
  %s5 = inlined_call_operand.hbm [shape: f32[2,1,32], index: 5, kind: input, shape index: {}]
  %s6 = inlined_call_operand.hbm [shape: f32[2,1,32], index: 6, kind: input, shape index: {}]
  %s7 = inlined_call_operand.hbm [shape: f32[2,1,32], index: 7, kind: input, shape index: {}]
  %s8 = inlined_call_operand.hbm [shape: bf16[2,32,64], index: 8, kind: input, shape index: {}]
  %s9 = inlined_call_operand.hbm [shape: f32[2,1,64], index: 9, kind: input, shape index: {}]
  %s10 = inlined_call_operand.hbm [shape: bf16[2,64,32], index: 10, kind: input, shape index: {}]
  %s11 = inlined_call_operand.hbm [shape: f32[2,1,32], index: 11, kind: input, shape index: {}]
  %s12 = inlined_call_operand.hbm [shape: f32[2,1,32], index: 12, kind: input, shape index: {}]
  %s13 = inlined_call_operand.hbm [shape: f32[2,1,32], index: 13, kind: input, shape index: {}]
  %s14 = inlined_call_operand.hbm [shape: f32[32,32], index: 14, kind: input, shape index: {}]
  %s15 = inlined_call_operand.hbm [shape: f32[1,32], index: 15, kind: input, shape index: {}]
  %s16 = inlined_call_operand.hbm [shape: f32[128,8], index: 16, kind: input, shape index: {}]
  %s17 = inlined_call_operand.hbm [shape: f32[1,128], index: 17, kind: input, shape index: {}]
  %s18 = inlined_call_operand.hbm [shape: f32[6,32], index: 18, kind: output, shape index: {0}]
  %s19 = inlined_call_operand.hbm [shape: f32[6,32], index: 19, kind: output, shape index: {1}]
  %20 = xla_tuple %s18, %s19
  %s21 = sld [smem:[#allocation0]]
  $region162: #{_lambda_.2} parent=0
    _
  %s23 = ssub.s32 1, %s21
  %s24 = scalar_select 0, %s23, %s21
  $region1: #{_lambda_.2} parent=0
    #allocation2 [shape = 'u8[24576]{0}', space=vmem, size = 0x6000, scoped, tag = 'input window, operand 0, single buffered']
    #allocation3 [shape = 's32[1]{0}', space=sflag, size = 0x4, scoped, tag = 'scoped memory for _lambda_.2']
    #allocation4 [shape = 's32[1]{0}', space=sflag, size = 0x4, scoped, tag = 'scoped memory for _lambda_.2']
    #allocation5 [shape = 'u8[24576]{0}', space=vmem, size = 0x6000, scoped, tag = 'input window, operand 1, single buffered']
    #allocation6 [shape = 's32[1]{0}', space=sflag, size = 0x4, scoped, tag = 'scoped memory for _lambda_.2']
    #allocation7 [shape = 'u8[16384]{0}', space=vmem, size = 0x4000, scoped, tag = 'input window, operand 2, single buffered']
    #allocation8 [shape = 'u8[1024]{0}', space=vmem, size = 0x400, scoped, tag = 'input window, operand 3, single buffered']
    #allocation9 [shape = 's32[1]{0}', space=sflag, size = 0x4, scoped, tag = 'scoped memory for _lambda_.2']
    #allocation10 [shape = 'u8[16384]{0}', space=vmem, size = 0x4000, scoped, tag = 'input window, operand 4, single buffered']
    #allocation11 [shape = 'u8[1024]{0}', space=vmem, size = 0x400, scoped, tag = 'input window, operand 5, single buffered']
    #allocation12 [shape = 's32[1]{0}', space=sflag, size = 0x4, scoped, tag = 'scoped memory for _lambda_.2']
    #allocation13 [shape = 'u8[1024]{0}', space=vmem, size = 0x400, scoped, tag = 'input window, operand 6, single buffered']
    #allocation14 [shape = 'u8[1024]{0}', space=vmem, size = 0x400, scoped, tag = 'input window, operand 7, single buffered']
    #allocation15 [shape = 's32[1]{0}', space=sflag, size = 0x4, scoped, tag = 'scoped memory for _lambda_.2']
    #allocation16 [shape = 'u8[16384]{0}', space=vmem, size = 0x4000, scoped, tag = 'input window, operand 8, single buffered']
    #allocation17 [shape = 'u8[1024]{0}', space=vmem, size = 0x400, scoped, tag = 'input window, operand 9, single buffered']
    #allocation18 [shape = 's32[1]{0}', space=sflag, size = 0x4, scoped, tag = 'scoped memory for _lambda_.2']
    #allocation19 [shape = 'u8[32768]{0}', space=vmem, size = 0x8000, scoped, tag = 'input window, operand 10, single buffered']
    #allocation20 [shape = 'u8[1024]{0}', space=vmem, size = 0x400, scoped, tag = 'input window, operand 11, single buffered']
    #allocation21 [shape = 's32[1]{0}', space=sflag, size = 0x4, scoped, tag = 'scoped memory for _lambda_.2']
    #allocation22 [shape = 'u8[1024]{0}', space=vmem, size = 0x400, scoped, tag = 'input window, operand 12, single buffered']
    #allocation23 [shape = 'u8[1024]{0}', space=vmem, size = 0x400, scoped, tag = 'input window, operand 13, single buffered']
    #allocation24 [shape = 's32[1]{0}', space=sflag, size = 0x4, scoped, tag = 'scoped memory for _lambda_.2']
    #allocation25 [shape = 'u8[16384]{0}', space=vmem, size = 0x4000, scoped, tag = 'input window, operand 14, single buffered']
    #allocation26 [shape = 'u8[512]{0}', space=vmem, size = 0x400, scoped, tag = 'input window, operand 15, single buffered']
    #allocation27 [shape = 's32[1]{0}', space=sflag, size = 0x4, scoped, tag = 'scoped memory for _lambda_.2']
    #allocation28 [shape = 'u8[65536]{0}', space=vmem, size = 0x10000, scoped, tag = 'input window, operand 16, single buffered']
    #allocation29 [shape = 'u8[512]{0}', space=vmem, size = 0x400, scoped, tag = 'input window, operand 17, single buffered']
    #allocation30 [shape = 's32[1]{0}', space=sflag, size = 0x4, scoped, tag = 'scoped memory for _lambda_.2']
    #allocation31 [shape = 'u8[4096]{0}', space=vmem, size = 0x1000, scoped, tag = 'output window, operand 0, single buffered']
    #allocation32 [shape = 'u8[4096]{0}', space=vmem, size = 0x1000, scoped, tag = 'output window, operand 1, single buffered']
    #allocation33 [shape = 's32[1]{0}', space=sflag, size = 0x4, scoped, tag = 'scoped memory for _lambda_.2']
    %25 = vsyncpa [#allocation3], 0
    %26 = vsyncpa [#allocation6], 0
    %27 = vsyncpa [#allocation9], 0
    %28 = vsyncpa [#allocation12], 0
    %29 = vsyncpa [#allocation15], 0
    %30 = vsyncpa [#allocation18], 0
    %31 = vsyncpa [#allocation21], 0
    %32 = vsyncpa [#allocation24], 0
    %33 = vsyncpa [#allocation27], 0
    %34 = vsyncpa [#allocation30], 0
    %35 = vsyncpa [#allocation4], 0
    %36 = vsyncpa [#allocation33], 0
    // Predicated region
    $region2: #{_lambda_.2} parent=1 // pred_check
      _
    $region3: #{_lambda_.2} parent=1 // pred_check_branch
      %38 = sbr.rel (0) target = $region5
    $region4: #{_lambda_.2} parent=1 // pred_region
      %s40 = ssub.s32 768, 768
      %41 = vsyncadd [#allocation3], %s40
      %s42 = sshll.u32 [#allocation2], 4
      %s43 = int_to_ptr.vmem [resolvable:$true] %s42
      %48 = dma.hbm_to_vmem [thread:$0]  %s0, 768, %s43, [#allocation3], 128, 128, 8
    $region5: #{_lambda_.2} parent=1 // pred_fallthru
      _
    // Predicated region
    $region6: #{_lambda_.2} parent=1 // pred_check
      _
    $region7: #{_lambda_.2} parent=1 // pred_check_branch
      %50 = sbr.rel (0) target = $region9
    $region8: #{_lambda_.2} parent=1 // pred_region
      %s52 = ssub.s32 768, 768
      %53 = vsyncadd [#allocation6], %s52
      %s54 = sshll.u32 [#allocation5], 4
      %s55 = int_to_ptr.vmem [resolvable:$true] %s54
      %60 = dma.hbm_to_vmem [thread:$0]  %s1, 768, %s55, [#allocation6], 128, 128, 8
    $region9: #{_lambda_.2} parent=1 // pred_fallthru
      _
    // Predicated region
    $region10: #{_lambda_.2} parent=1 // pred_check
      _
    $region11: #{_lambda_.2} parent=1 // pred_check_branch
      %62 = sbr.rel (0) target = $region13
    $region12: #{_lambda_.2} parent=1 // pred_region
      %s64 = ssub.s32 512, 512
      %65 = vsyncadd [#allocation6], %s64
      %s66 = sshll.u32 [#allocation7], 4
      %s67 = int_to_ptr.vmem [resolvable:$true] %s66
      %72 = dma.hbm_to_vmem [thread:$0]  %s2, 512, %s67, [#allocation6], 64, 64, 4
    $region13: #{_lambda_.2} parent=1 // pred_fallthru
      _
    // Predicated region
    $region14: #{_lambda_.2} parent=1 // pred_check
      _
    $region15: #{_lambda_.2} parent=1 // pred_check_branch
      %74 = sbr.rel (0) target = $region17
    $region16: #{_lambda_.2} parent=1 // pred_region
      %s76 = ssub.s32 32, 32
      %77 = vsyncadd [#allocation9], %s76
      %s78 = sshll.u32 [#allocation8], 4
      %s79 = int_to_ptr.vmem [resolvable:$true] %s78
      %84 = dma.hbm_to_vmem [thread:$0]  %s3, 32, %s79, [#allocation9], 16, 16, 1
    $region17: #{_lambda_.2} parent=1 // pred_fallthru
      _
    // Predicated region
    $region18: #{_lambda_.2} parent=1 // pred_check
      _
    $region19: #{_lambda_.2} parent=1 // pred_check_branch
      %86 = sbr.rel (0) target = $region21
    $region20: #{_lambda_.2} parent=1 // pred_region
      %s88 = ssub.s32 512, 512
      %89 = vsyncadd [#allocation9], %s88
      %s90 = sshll.u32 [#allocation10], 4
      %s91 = int_to_ptr.vmem [resolvable:$true] %s90
      %96 = dma.hbm_to_vmem [thread:$0]  %s4, 512, %s91, [#allocation9], 64, 64, 4
    $region21: #{_lambda_.2} parent=1 // pred_fallthru
      _
    // Predicated region
    $region22: #{_lambda_.2} parent=1 // pred_check
      _
    $region23: #{_lambda_.2} parent=1 // pred_check_branch
      %98 = sbr.rel (0) target = $region25
    $region24: #{_lambda_.2} parent=1 // pred_region
      %s100 = ssub.s32 32, 32
      %101 = vsyncadd [#allocation12], %s100
      %s102 = sshll.u32 [#allocation11], 4
      %s103 = int_to_ptr.vmem [resolvable:$true] %s102
      %108 = dma.hbm_to_vmem [thread:$0]  %s5, 32, %s103, [#allocation12], 16, 16, 1
    $region25: #{_lambda_.2} parent=1 // pred_fallthru
      _
    // Predicated region
    $region26: #{_lambda_.2} parent=1 // pred_check
      _
    $region27: #{_lambda_.2} parent=1 // pred_check_branch
      %110 = sbr.rel (0) target = $region29
    $region28: #{_lambda_.2} parent=1 // pred_region
      %s112 = ssub.s32 32, 32
      %113 = vsyncadd [#allocation12], %s112
      %s114 = sshll.u32 [#allocation13], 4
      %s115 = int_to_ptr.vmem [resolvable:$true] %s114
      %120 = dma.hbm_to_vmem [thread:$0]  %s6, 32, %s115, [#allocation12], 16, 16, 1
    $region29: #{_lambda_.2} parent=1 // pred_fallthru
      _
    // Predicated region
    $region30: #{_lambda_.2} parent=1 // pred_check
      _
    $region31: #{_lambda_.2} parent=1 // pred_check_branch
      %122 = sbr.rel (0) target = $region33
    $region32: #{_lambda_.2} parent=1 // pred_region
      %s124 = ssub.s32 32, 32
      %125 = vsyncadd [#allocation15], %s124
      %s126 = sshll.u32 [#allocation14], 4
      %s127 = int_to_ptr.vmem [resolvable:$true] %s126
      %132 = dma.hbm_to_vmem [thread:$0]  %s7, 32, %s127, [#allocation15], 16, 16, 1
    $region33: #{_lambda_.2} parent=1 // pred_fallthru
      _
    // Predicated region
    $region34: #{_lambda_.2} parent=1 // pred_check
      _
    $region35: #{_lambda_.2} parent=1 // pred_check_branch
      %134 = sbr.rel (0) target = $region37
    $region36: #{_lambda_.2} parent=1 // pred_region
      %s136 = ssub.s32 512, 512
      %137 = vsyncadd [#allocation15], %s136
      %s138 = sshll.u32 [#allocation16], 4
      %s139 = int_to_ptr.vmem [resolvable:$true] %s138
      %144 = dma.hbm_to_vmem [thread:$0]  %s8, 512, %s139, [#allocation15], 64, 64, 4
    $region37: #{_lambda_.2} parent=1 // pred_fallthru
      _
    // Predicated region
    $region38: #{_lambda_.2} parent=1 // pred_check
      _
    $region39: #{_lambda_.2} parent=1 // pred_check_branch
      %146 = sbr.rel (0) target = $region41
    $region40: #{_lambda_.2} parent=1 // pred_region
      %s148 = ssub.s32 32, 32
      %149 = vsyncadd [#allocation18], %s148
      %s150 = sshll.u32 [#allocation17], 4
      %s151 = int_to_ptr.vmem [resolvable:$true] %s150
      %156 = dma.hbm_to_vmem [thread:$0]  %s9, 32, %s151, [#allocation18], 16, 16, 1
    $region41: #{_lambda_.2} parent=1 // pred_fallthru
      _
    // Predicated region
    $region42: #{_lambda_.2} parent=1 // pred_check
      _
    $region43: #{_lambda_.2} parent=1 // pred_check_branch
      %158 = sbr.rel (0) target = $region45
    $region44: #{_lambda_.2} parent=1 // pred_region
      %s160 = ssub.s32 1024, 1024
      %161 = vsyncadd [#allocation18], %s160
      %s162 = sshll.u32 [#allocation19], 4
      %s163 = int_to_ptr.vmem [resolvable:$true] %s162
      %168 = dma.hbm_to_vmem [thread:$0]  %s10, 1024, %s163, [#allocation18], 64, 64, 4
    $region45: #{_lambda_.2} parent=1 // pred_fallthru
      _
    // Predicated region
    $region46: #{_lambda_.2} parent=1 // pred_check
      _
    $region47: #{_lambda_.2} parent=1 // pred_check_branch
      %170 = sbr.rel (0) target = $region49
    $region48: #{_lambda_.2} parent=1 // pred_region
      %s172 = ssub.s32 32, 32
      %173 = vsyncadd [#allocation21], %s172
      %s174 = sshll.u32 [#allocation20], 4
      %s175 = int_to_ptr.vmem [resolvable:$true] %s174
      %180 = dma.hbm_to_vmem [thread:$0]  %s11, 32, %s175, [#allocation21], 16, 16, 1
    $region49: #{_lambda_.2} parent=1 // pred_fallthru
      _
    // Predicated region
    $region50: #{_lambda_.2} parent=1 // pred_check
      _
    $region51: #{_lambda_.2} parent=1 // pred_check_branch
      %182 = sbr.rel (0) target = $region53
    $region52: #{_lambda_.2} parent=1 // pred_region
      %s184 = ssub.s32 32, 32
      %185 = vsyncadd [#allocation21], %s184
      %s186 = sshll.u32 [#allocation22], 4
      %s187 = int_to_ptr.vmem [resolvable:$true] %s186
      %192 = dma.hbm_to_vmem [thread:$0]  %s12, 32, %s187, [#allocation21], 16, 16, 1
    $region53: #{_lambda_.2} parent=1 // pred_fallthru
      _
    // Predicated region
    $region54: #{_lambda_.2} parent=1 // pred_check
      _
    $region55: #{_lambda_.2} parent=1 // pred_check_branch
      %194 = sbr.rel (0) target = $region57
    $region56: #{_lambda_.2} parent=1 // pred_region
      %s196 = ssub.s32 32, 32
      %197 = vsyncadd [#allocation24], %s196
      %s198 = sshll.u32 [#allocation23], 4
      %s199 = int_to_ptr.vmem [resolvable:$true] %s198
      %204 = dma.hbm_to_vmem [thread:$0]  %s13, 32, %s199, [#allocation24], 16, 16, 1
    $region57: #{_lambda_.2} parent=1 // pred_fallthru
      _
    // Predicated region
    $region58: #{_lambda_.2} parent=1 // pred_check
      _
    $region59: #{_lambda_.2} parent=1 // pred_check_branch
      %206 = sbr.rel (0) target = $region61
    $region60: #{_lambda_.2} parent=1 // pred_region
      %s208 = ssub.s32 512, 512
      %209 = vsyncadd [#allocation24], %s208
      %s210 = sshll.u32 [#allocation25], 4
      %s211 = int_to_ptr.vmem [resolvable:$true] %s210
      %216 = dma.hbm_to_vmem [thread:$0]  %s14, 512, %s211, [#allocation24], 128, 128, 8
    $region61: #{_lambda_.2} parent=1 // pred_fallthru
      _
    // Predicated region
    $region62: #{_lambda_.2} parent=1 // pred_check
      _
    $region63: #{_lambda_.2} parent=1 // pred_check_branch
      %218 = sbr.rel (0) target = $region65
    $region64: #{_lambda_.2} parent=1 // pred_region
      %s220 = ssub.s32 16, 16
      %221 = vsyncadd [#allocation27], %s220
      %s223 = sshll.u32 [#allocation26], 4
      %s224 = int_to_ptr.vmem [resolvable:$true] %s223
      %226 = dma.hbm_to_vmem [thread:$0]  %s15, 16, %s224, [#allocation27]
    $region65: #{_lambda_.2} parent=1 // pred_fallthru
      _
    // Predicated region
    $region66: #{_lambda_.2} parent=1 // pred_check
      _
    $region67: #{_lambda_.2} parent=1 // pred_check_branch
      %228 = sbr.rel (0) target = $region69
    $region68: #{_lambda_.2} parent=1 // pred_region
      %s230 = ssub.s32 2048, 2048
      %231 = vsyncadd [#allocation27], %s230
      %s232 = sshll.u32 [#allocation28], 4
      %s233 = int_to_ptr.vmem [resolvable:$true] %s232
      %238 = dma.hbm_to_vmem [thread:$0]  %s16, 2048, %s233, [#allocation27], 128, 128, 8
    $region69: #{_lambda_.2} parent=1 // pred_fallthru
      _
    // Predicated region
    $region70: #{_lambda_.2} parent=1 // pred_check
      _
    $region71: #{_lambda_.2} parent=1 // pred_check_branch
      %240 = sbr.rel (0) target = $region73
    $region72: #{_lambda_.2} parent=1 // pred_region
      %s242 = ssub.s32 16, 16
      %243 = vsyncadd [#allocation30], %s242
      %s245 = sshll.u32 [#allocation29], 4
      %s246 = int_to_ptr.vmem [resolvable:$true] %s245
      %248 = dma.hbm_to_vmem [thread:$0]  %s17, 16, %s246, [#allocation30]
    $region73: #{_lambda_.2} parent=1 // pred_fallthru
      _
    // Predicated region
    $region74: #{_lambda_.2} parent=1 // pred_check
      _
    $region75: #{_lambda_.2} parent=1 // pred_check_branch
      %250 = sbr.rel (0) target = $region77
    $region76: #{_lambda_.2} parent=1 // pred_region
      %251 = dma.done [#allocation3], 768
    $region77: #{_lambda_.2} parent=1 // pred_fallthru
      _
    // Predicated region
    $region78: #{_lambda_.2} parent=1 // pred_check
      _
    $region79: #{_lambda_.2} parent=1 // pred_check_branch
      %253 = sbr.rel (0) target = $region81
    $region80: #{_lambda_.2} parent=1 // pred_region
      %254 = dma.done [#allocation6], 768
    $region81: #{_lambda_.2} parent=1 // pred_fallthru
      _
    // Predicated region
    $region82: #{_lambda_.2} parent=1 // pred_check
      _
    $region83: #{_lambda_.2} parent=1 // pred_check_branch
      %256 = sbr.rel (0) target = $region85
    $region84: #{_lambda_.2} parent=1 // pred_region
      %257 = dma.done [#allocation6], 512
    $region85: #{_lambda_.2} parent=1 // pred_fallthru
      _
    // Predicated region
    $region86: #{_lambda_.2} parent=1 // pred_check
      _
    $region87: #{_lambda_.2} parent=1 // pred_check_branch
      %259 = sbr.rel (0) target = $region89
    $region88: #{_lambda_.2} parent=1 // pred_region
      %260 = dma.done [#allocation9], 32
    $region89: #{_lambda_.2} parent=1 // pred_fallthru
      _
    // Predicated region
    $region90: #{_lambda_.2} parent=1 // pred_check
      _
    $region91: #{_lambda_.2} parent=1 // pred_check_branch
      %262 = sbr.rel (0) target = $region93
    $region92: #{_lambda_.2} parent=1 // pred_region
      %263 = dma.done [#allocation9], 512
    $region93: #{_lambda_.2} parent=1 // pred_fallthru
      _
    // Predicated region
    $region94: #{_lambda_.2} parent=1 // pred_check
      _
    $region95: #{_lambda_.2} parent=1 // pred_check_branch
      %265 = sbr.rel (0) target = $region97
    $region96: #{_lambda_.2} parent=1 // pred_region
      %266 = dma.done [#allocation12], 32
    $region97: #{_lambda_.2} parent=1 // pred_fallthru
      _
    // Predicated region
    $region98: #{_lambda_.2} parent=1 // pred_check
      _
    $region99: #{_lambda_.2} parent=1 // pred_check_branch
      %268 = sbr.rel (0) target = $region101
    $region100: #{_lambda_.2} parent=1 // pred_region
      %269 = dma.done [#allocation12], 32
    $region101: #{_lambda_.2} parent=1 // pred_fallthru
      _
    // Predicated region
    $region102: #{_lambda_.2} parent=1 // pred_check
      _
    $region103: #{_lambda_.2} parent=1 // pred_check_branch
      %271 = sbr.rel (0) target = $region105
    $region104: #{_lambda_.2} parent=1 // pred_region
      %272 = dma.done [#allocation15], 32
    $region105: #{_lambda_.2} parent=1 // pred_fallthru
      _
    // Predicated region
    $region106: #{_lambda_.2} parent=1 // pred_check
      _
    $region107: #{_lambda_.2} parent=1 // pred_check_branch
      %274 = sbr.rel (0) target = $region109
    $region108: #{_lambda_.2} parent=1 // pred_region
      %275 = dma.done [#allocation15], 512
    $region109: #{_lambda_.2} parent=1 // pred_fallthru
      _
    // Predicated region
    $region110: #{_lambda_.2} parent=1 // pred_check
      _
    $region111: #{_lambda_.2} parent=1 // pred_check_branch
      %277 = sbr.rel (0) target = $region113
    $region112: #{_lambda_.2} parent=1 // pred_region
      %278 = dma.done [#allocation18], 32
    $region113: #{_lambda_.2} parent=1 // pred_fallthru
      _
    // Predicated region
    $region114: #{_lambda_.2} parent=1 // pred_check
      _
    $region115: #{_lambda_.2} parent=1 // pred_check_branch
      %280 = sbr.rel (0) target = $region117
    $region116: #{_lambda_.2} parent=1 // pred_region
      %281 = dma.done [#allocation18], 1024
    $region117: #{_lambda_.2} parent=1 // pred_fallthru
      _
    // Predicated region
    $region118: #{_lambda_.2} parent=1 // pred_check
      _
    $region119: #{_lambda_.2} parent=1 // pred_check_branch
      %283 = sbr.rel (0) target = $region121
    $region120: #{_lambda_.2} parent=1 // pred_region
      %284 = dma.done [#allocation21], 32
    $region121: #{_lambda_.2} parent=1 // pred_fallthru
      _
    // Predicated region
    $region122: #{_lambda_.2} parent=1 // pred_check
      _
    $region123: #{_lambda_.2} parent=1 // pred_check_branch
      %286 = sbr.rel (0) target = $region125
    $region124: #{_lambda_.2} parent=1 // pred_region
      %287 = dma.done [#allocation21], 32
    $region125: #{_lambda_.2} parent=1 // pred_fallthru
      _
    // Predicated region
    $region126: #{_lambda_.2} parent=1 // pred_check
      _
    $region127: #{_lambda_.2} parent=1 // pred_check_branch
      %289 = sbr.rel (0) target = $region129
    $region128: #{_lambda_.2} parent=1 // pred_region
      %290 = dma.done [#allocation24], 32
    $region129: #{_lambda_.2} parent=1 // pred_fallthru
      _
    // Predicated region
    $region130: #{_lambda_.2} parent=1 // pred_check
      _
    $region131: #{_lambda_.2} parent=1 // pred_check_branch
      %292 = sbr.rel (0) target = $region133
    $region132: #{_lambda_.2} parent=1 // pred_region
      %293 = dma.done [#allocation24], 512
    $region133: #{_lambda_.2} parent=1 // pred_fallthru
      _
    // Predicated region
    $region134: #{_lambda_.2} parent=1 // pred_check
      _
    $region135: #{_lambda_.2} parent=1 // pred_check_branch
      %295 = sbr.rel (0) target = $region137
    $region136: #{_lambda_.2} parent=1 // pred_region
      %296 = dma.done [#allocation27], 16
    $region137: #{_lambda_.2} parent=1 // pred_fallthru
      _
    // Predicated region
    $region138: #{_lambda_.2} parent=1 // pred_check
      _
    $region139: #{_lambda_.2} parent=1 // pred_check_branch
      %298 = sbr.rel (0) target = $region141
    $region140: #{_lambda_.2} parent=1 // pred_region
      %299 = dma.done [#allocation27], 2048
    $region141: #{_lambda_.2} parent=1 // pred_fallthru
      _
    // Predicated region
    $region142: #{_lambda_.2} parent=1 // pred_check
      _
    $region143: #{_lambda_.2} parent=1 // pred_check_branch
      %301 = sbr.rel (0) target = $region145
    $region144: #{_lambda_.2} parent=1 // pred_region
      %302 = dma.done [#allocation30], 16
    $region145: #{_lambda_.2} parent=1 // pred_fallthru
      _
    %v304 = vld [vmem:[#allocation2] sm:$0xff]
    %v305 = vld [vmem:[#allocation2 + $0x8] sm:$0xff]
    %v306 = vld [vmem:[#allocation2 + $0x10] sm:$0xff]
    %v307 = vld [vmem:[#allocation2 + $0x18] sm:$0xff]
    %v308 = vld [vmem:[#allocation2 + $0x20] sm:$0xff]
    %v309 = vld [vmem:[#allocation2 + $0x28] sm:$0xff]
    %v310 = vld [vmem:[#allocation5] sm:$0xff]
    %v311 = vld [vmem:[#allocation5 + $0x8] sm:$0xff]
    %v312 = vld [vmem:[#allocation5 + $0x10] sm:$0xff]
    %v313 = vld [vmem:[#allocation5 + $0x18] sm:$0xff]
    %v314 = vld [vmem:[#allocation5 + $0x20] sm:$0xff]
    %v315 = vld [vmem:[#allocation5 + $0x28] sm:$0xff]
    %v316 = vpack.c.bf16 %v305, %v304
    %v317 = vpack.c.bf16 %v307, %v306
    %v318 = vpack.c.bf16 %v309, %v308
    %v319 = vld [vmem:[#allocation7] sm:$0xf]
    %v320 = vld [vmem:[#allocation7 + $0x4] sm:$0xf]
    %v321 = vld [vmem:[#allocation7 + $0x8] sm:$0xf]
    %v322 = vld [vmem:[#allocation7 + $0xc] sm:$0xf]
    %v323 = vld [vmem:[#allocation8] sm:$0x1]
    %v325 = vlaneseq
    %v326 = vshrl.u32 %v325, 7
    %v327 = vsub.s32 0, %v326
    %v328 = vrot.slane %v323, %v327
    %v334 = vunpack.c.l.b16 %v319
    %v335 = vunpack.c.l.b16 %v320
    %v336 = vunpack.c.l.b16 %v321
    %v337 = vunpack.c.l.b16 %v322
    %v338 = vpack.c.b16 %v335, %v334
    %v339 = vpack.c.b16 %v337, %v336
    %vm342 = vcmask 261120
    %v344 = vsel %vm342, %v316, 0
    %v347 = vsel %vm342, %v317, 0
    %v350 = vsel %vm342, %v318, 0
    %352 = vmatprep.subr.bf16.mxu0 0
    %353 = vmatpush1.bf16.msra.mxu0 %v338
    %354 = vmatprep.subr.bf16.mxu0 0
    %355 = vmatpush1.bf16.msra.mxu0 %v339
    %356 = vmatprep.subr.bf16.mxu0 0
    %357 = vmatpush1.bf16.msra.mxu0 0
    %358 = vmatprep.subr.bf16.mxu0 0
    %359 = vmatpush1.bf16.msra.mxu0 0
    %360 = vmatprep.subr.bf16.mxu0 0
    %361 = vmatpush1.bf16.msra.mxu0 0
    %362 = vmatprep.subr.bf16.mxu0 0
    %363 = vmatpush1.bf16.msra.mxu0 0
    %364 = vmatprep.subr.bf16.mxu0 0
    %365 = vmatpush1.bf16.msra.mxu0 0
    %366 = vmatprep.subr.bf16.mxu0 0
    %367 = vmatpush1.bf16.msra.mxu0 0
    %368 = vmatprep.subr.bf16.mxu0 0
    %369 = vmatpush1.bf16.msra.mxu0 0
    %370 = vmatprep.subr.bf16.mxu0 0
    %371 = vmatpush1.bf16.msra.mxu0 0
    %372 = vmatprep.subr.bf16.mxu0 0
    %373 = vmatpush1.bf16.msra.mxu0 0
    %374 = vmatprep.subr.bf16.mxu0 0
    %375 = vmatpush1.bf16.msra.mxu0 0
    %376 = vmatprep.subr.bf16.mxu0 0
    %377 = vmatpush1.bf16.msra.mxu0 0
    %378 = vmatprep.subr.bf16.mxu0 0
    %379 = vmatpush1.bf16.msra.mxu0 0
    %380 = vmatprep.subr.bf16.mxu0 0
    %381 = vmatpush1.bf16.msra.mxu0 0
    %382 = vmatprep.subr.bf16.mxu0 0
    %383 = vmatpush1.bf16.msra.mxu0 0
    %384 = vmatprep.mubr.bf16.mxu0 0
    %385 = vmatmul.mubr.bf16.gmra.mrb[0].mxu0 %v344
    %v386 = vpop.f32.mrb[0].mxu0
    %v387 = vadd.f32 %v328, %v386
    %v388 = vpop.f32.mrb[0].mxu0
    %v389 = vpop.f32.mrb[0].mxu0
    %v390 = vadd.f32 %v328, %v389
    %v391 = vpop.f32.mrb[0].mxu0
    %392 = vmatprep.mubr.bf16.mxu0 0
    %393 = vmatmul.mubr.bf16.gmra.mrb[0].mxu0 %v347
    %v394 = vpop.f32.mrb[0].mxu0
    %v395 = vadd.f32 %v328, %v394
    %v396 = vpop.f32.mrb[0].mxu0
    %v397 = vpop.f32.mrb[0].mxu0
    %v398 = vadd.f32 %v328, %v397
    %v399 = vpop.f32.mrb[0].mxu0
    %400 = vmatprep.mubr.bf16.mxu0 0
    %401 = vmatmul.mubr.bf16.gmra.mrb[0].mxu0 %v350
    %v402 = vpop.f32.mrb[0].mxu0
    %v403 = vadd.f32 %v328, %v402
    %v404 = vpop.f32.mrb[0].mxu0
    %v405 = vpop.f32.mrb[0].mxu0
    %v406 = vadd.f32 %v328, %v405
    %v407 = vpop.f32.mrb[0].mxu0
    %408 = vdwg.mxu0
    %v409 = vmul.f32 %v387, 0.35355338
    %v410 = vmul.f32 %v390, 0.35355338
    %v411 = vmul.f32 %v395, 0.35355338
    %v412 = vmul.f32 %v398, 0.35355338
    %v413 = vmul.f32 %v403, 0.35355338
    %v414 = vmul.f32 %v406, 0.35355338
    %v415 = vpack.c.bf16 %v410, %v409
    %v416 = vpack.c.bf16 %v412, %v411
    %v417 = vpack.c.bf16 %v414, %v413
    %v418 = vpack.c.bf16 %v390, %v387
    %v419 = vpack.c.bf16 %v398, %v395
    %v420 = vpack.c.bf16 %v406, %v403
    %424 = vrot.lane.b32.xlu0 %v418, 96
    %v425 = vpop.permute.xlu0 %424
    %426 = vrot.lane.b32.xlu0 %v419, 96
    %v427 = vpop.permute.xlu0 %426
    %428 = vrot.lane.b32.xlu0 %v420, 96
    %v429 = vpop.permute.xlu0 %428
    %vm430 = vcmask 64512
    %v432 = vsel %vm430, %v415, 0
    %v435 = vsel %vm430, %v416, 0
    %v438 = vsel %vm430, %v417, 0
    %v441 = vsel %vm430, %v425, 0
    %v444 = vsel %vm430, %v427, 0
    %v447 = vsel %vm430, %v429, 0
    %449 = vmatprep.subr.bf16.mxu0 0
    %450 = vmatpush1.bf16.xpose.msra.mxu0 %v441
    %451 = vmatprep.subr.bf16.mxu0 0
    %452 = vmatpush1.bf16.xpose.msra.mxu0 %v444
    %453 = vmatprep.subr.bf16.mxu0 0
    %454 = vmatpush1.bf16.xpose.msra.mxu0 %v447
    %455 = vmatprep.subr.bf16.mxu0 0
    %456 = vmatpush1.bf16.xpose.msra.mxu0 0
    %457 = vmatprep.subr.bf16.mxu0 0
    %458 = vmatpush1.bf16.xpose.msra.mxu0 0
    %459 = vmatprep.subr.bf16.mxu0 0
    %460 = vmatpush1.bf16.xpose.msra.mxu0 0
    %461 = vmatprep.subr.bf16.mxu0 0
    %462 = vmatpush1.bf16.xpose.msra.mxu0 0
    %463 = vmatprep.subr.bf16.mxu0 0
    %464 = vmatpush1.bf16.xpose.msra.mxu0 0
    %465 = vmatprep.subr.bf16.mxu0 0
    %466 = vmatpush1.bf16.xpose.msra.mxu0 0
    %467 = vmatprep.subr.bf16.mxu0 0
    %468 = vmatpush1.bf16.xpose.msra.mxu0 0
    %469 = vmatprep.subr.bf16.mxu0 0
    %470 = vmatpush1.bf16.xpose.msra.mxu0 0
    %471 = vmatprep.subr.bf16.mxu0 0
    %472 = vmatpush1.bf16.xpose.msra.mxu0 0
    %473 = vmatprep.subr.bf16.mxu0 0
    %474 = vmatpush1.bf16.xpose.msra.mxu0 0
    %475 = vmatprep.subr.bf16.mxu0 0
    %476 = vmatpush1.bf16.xpose.msra.mxu0 0
    %477 = vmatprep.subr.bf16.mxu0 0
    %478 = vmatpush1.bf16.xpose.msra.mxu0 0
    %479 = vmatprep.subr.bf16.mxu0 0
    %480 = vmatpush1.bf16.xpose.msra.mxu0 0
    %481 = vmatprep.mubr.bf16.mxu0 0
    %482 = vmatmul.mubr.bf16.gmra.mrb[0].mxu0 %v432
    %v483 = vpop.f32.mrb[0].mxu0
    %v484 = vadd.f32 %v310, %v483
    %v485 = vpop.f32.mrb[0].mxu0
    %v486 = vpop.f32.mrb[0].mxu0
    %v487 = vadd.f32 %v311, %v486
    %v488 = vpop.f32.mrb[0].mxu0
    %489 = vmatprep.mubr.bf16.mxu0 0
    %490 = vmatmul.mubr.bf16.gmra.mrb[0].mxu0 %v435
    %v491 = vpop.f32.mrb[0].mxu0
    %v492 = vadd.f32 %v312, %v491
    %v493 = vpop.f32.mrb[0].mxu0
    %v494 = vpop.f32.mrb[0].mxu0
    %v495 = vadd.f32 %v313, %v494
    %v496 = vpop.f32.mrb[0].mxu0
    %497 = vmatprep.mubr.bf16.mxu0 0
    %498 = vmatmul.mubr.bf16.gmra.mrb[0].mxu0 %v438
    %v499 = vpop.f32.mrb[0].mxu0
    %v500 = vadd.f32 %v314, %v499
    %v501 = vpop.f32.mrb[0].mxu0
    %v502 = vpop.f32.mrb[0].mxu0
    %v503 = vadd.f32 %v315, %v502
    %v504 = vpop.f32.mrb[0].mxu0
    %505 = vdwg.mxu0
    %vm506 = vcmask 392192
    %v507 = vsel %vm506, %v484, -inf
    %508 = vmax.xlane.f32.xlu0 %v507
    %v509 = vpop.xlane.xlu0 %508
    %v510 = vsel %vm506, %v487, -inf
    %511 = vmax.xlane.f32.xlu0 %v510
    %v512 = vpop.xlane.xlu0 %511
    %v513 = vsel %vm506, %v492, -inf
    %514 = vmax.xlane.f32.xlu0 %v513
    %v515 = vpop.xlane.xlu0 %514
    %v516 = vsel %vm506, %v495, -inf
    %517 = vmax.xlane.f32.xlu0 %v516
    %v518 = vpop.xlane.xlu0 %517
    %v519 = vsel %vm506, %v500, -inf
    %520 = vmax.xlane.f32.xlu0 %v519
    %v521 = vpop.xlane.xlu0 %520
    %v522 = vsel %vm506, %v503, -inf
    %523 = vmax.xlane.f32.xlu0 %v522
    %v524 = vpop.xlane.xlu0 %523
    %v525 = vsub.f32 %v484, %v509
    %v526 = vsub.f32 %v487, %v512
    %v527 = vsub.f32 %v492, %v515
    %v528 = vsub.f32 %v495, %v518
    %v529 = vsub.f32 %v500, %v521
    %v530 = vsub.f32 %v503, %v524
    %v531 = vmul.f32 %v525, 1.442695
    %v532 = vpow.pop %v531
    %v533 = vmul.f32 %v526, 1.442695
    %v534 = vpow.pop %v533
    %v535 = vmul.f32 %v527, 1.442695
    %v536 = vpow.pop %v535
    %v537 = vmul.f32 %v528, 1.442695
    %v538 = vpow.pop %v537
    %v539 = vmul.f32 %v529, 1.442695
    %v540 = vpow.pop %v539
    %v541 = vmul.f32 %v530, 1.442695
    %v542 = vpow.pop %v541
    %v543 = vsel %vm506, %v532, 0.0
    %544 = vadd.xlane.f32.xlu0 %v543
    %v545 = vpop.xlane.xlu0 %544
    %v546 = vsel %vm506, %v534, 0.0
    %547 = vadd.xlane.f32.xlu0 %v546
    %v548 = vpop.xlane.xlu0 %547
    %v549 = vsel %vm506, %v536, 0.0
    %550 = vadd.xlane.f32.xlu0 %v549
    %v551 = vpop.xlane.xlu0 %550
    %v552 = vsel %vm506, %v538, 0.0
    %553 = vadd.xlane.f32.xlu0 %v552
    %v554 = vpop.xlane.xlu0 %553
    %v555 = vsel %vm506, %v540, 0.0
    %556 = vadd.xlane.f32.xlu0 %v555
    %v557 = vpop.xlane.xlu0 %556
    %v558 = vsel %vm506, %v542, 0.0
    %559 = vadd.xlane.f32.xlu0 %v558
    %v560 = vpop.xlane.xlu0 %559
    %v561 = vrcp.pop %v545
    %v562 = vrcp.pop %v548
    %v563 = vrcp.pop %v551
    %v564 = vrcp.pop %v554
    %v565 = vrcp.pop %v557
    %v566 = vrcp.pop %v560
    %v567 = vmul.f32 %v532, %v561
    %v568 = vmul.f32 %v534, %v562
    %v569 = vmul.f32 %v536, %v563
    %v570 = vmul.f32 %v538, %v564
    %v571 = vmul.f32 %v540, %v565
    %v572 = vmul.f32 %v542, %v566
    %v573 = vpack.c.bf16 %v568, %v567
    %v574 = vpack.c.bf16 %v570, %v569
    %v575 = vpack.c.bf16 %v572, %v571
    %576 = vrot.lane.b32.xlu0 %v418, 64
    %v577 = vpop.permute.xlu0 %576
    %578 = vrot.lane.b32.xlu0 %v419, 64
    %v579 = vpop.permute.xlu0 %578
    %580 = vrot.lane.b32.xlu0 %v420, 64
    %v581 = vpop.permute.xlu0 %580
    %v586 = vsel %vm506, %v573, 0
    %v589 = vsel %vm506, %v574, 0
    %v592 = vsel %vm506, %v575, 0
    %594 = vmatprep.subr.bf16.mxu0 0
    %595 = vmatpush1.bf16.msra.mxu0 %v577
    %596 = vmatprep.subr.bf16.mxu0 0
    %597 = vmatpush1.bf16.msra.mxu0 %v579
    %598 = vmatprep.subr.bf16.mxu0 0
    %599 = vmatpush1.bf16.msra.mxu0 %v581
    %600 = vmatprep.subr.bf16.mxu0 0
    %601 = vmatpush1.bf16.msra.mxu0 0
    %602 = vmatprep.subr.bf16.mxu0 0
    %603 = vmatpush1.bf16.msra.mxu0 0
    %604 = vmatprep.subr.bf16.mxu0 0
    %605 = vmatpush1.bf16.msra.mxu0 0
    %606 = vmatprep.subr.bf16.mxu0 0
    %607 = vmatpush1.bf16.msra.mxu0 0
    %608 = vmatprep.subr.bf16.mxu0 0
    %609 = vmatpush1.bf16.msra.mxu0 0
    %610 = vmatprep.subr.bf16.mxu0 0
    %611 = vmatpush1.bf16.msra.mxu0 0
    %612 = vmatprep.subr.bf16.mxu0 0
    %613 = vmatpush1.bf16.msra.mxu0 0
    %614 = vmatprep.subr.bf16.mxu0 0
    %615 = vmatpush1.bf16.msra.mxu0 0
    %616 = vmatprep.subr.bf16.mxu0 0
    %617 = vmatpush1.bf16.msra.mxu0 0
    %618 = vmatprep.subr.bf16.mxu0 0
    %619 = vmatpush1.bf16.msra.mxu0 0
    %620 = vmatprep.subr.bf16.mxu0 0
    %621 = vmatpush1.bf16.msra.mxu0 0
    %622 = vmatprep.subr.bf16.mxu0 0
    %623 = vmatpush1.bf16.msra.mxu0 0
    %624 = vmatprep.subr.bf16.mxu0 0
    %625 = vmatpush1.bf16.msra.mxu0 0
    %626 = vmatprep.mubr.bf16.mxu0 0
    %627 = vmatmul.mubr.bf16.gmra.mrb[0].mxu0 %v586
    %v628 = vpop.f32.mrb[0].mxu0
    %v629 = vadd.f32 0.0, %v628
    %v630 = vpop.f32.mrb[0].mxu0
    %v631 = vpop.f32.mrb[0].mxu0
    %v632 = vadd.f32 0.0, %v631
    %v633 = vpop.f32.mrb[0].mxu0
    %634 = vmatprep.mubr.bf16.mxu0 0
    %635 = vmatmul.mubr.bf16.gmra.mrb[0].mxu0 %v589
    %v636 = vpop.f32.mrb[0].mxu0
    %v637 = vadd.f32 0.0, %v636
    %v638 = vpop.f32.mrb[0].mxu0
    %v639 = vpop.f32.mrb[0].mxu0
    %v640 = vadd.f32 0.0, %v639
    %v641 = vpop.f32.mrb[0].mxu0
    %642 = vmatprep.mubr.bf16.mxu0 0
    %643 = vmatmul.mubr.bf16.gmra.mrb[0].mxu0 %v592
    %v644 = vpop.f32.mrb[0].mxu0
    %v645 = vadd.f32 0.0, %v644
    %v646 = vpop.f32.mrb[0].mxu0
    %v647 = vpop.f32.mrb[0].mxu0
    %v648 = vadd.f32 0.0, %v647
    %v649 = vpop.f32.mrb[0].mxu0
    %650 = vdwg.mxu0
    %v651 = vpack.c.bf16 %v632, %v629
    %v652 = vpack.c.bf16 %v640, %v637
    %v653 = vpack.c.bf16 %v648, %v645
    %v654 = vld [vmem:[#allocation10] sm:$0xf]
    %658 = vrot.lane.b32.xlu0 %v415, 120
    %v659 = vpop.permute.xlu0 %658
    %660 = vrot.lane.b32.xlu0 %v416, 120
    %v661 = vpop.permute.xlu0 %660
    %662 = vrot.lane.b32.xlu0 %v417, 120
    %v663 = vpop.permute.xlu0 %662
    %664 = vrot.lane.b32.xlu0 %v418, 88
    %v665 = vpop.permute.xlu0 %664
    %666 = vrot.lane.b32.xlu0 %v419, 88
    %v667 = vpop.permute.xlu0 %666
    %668 = vrot.lane.b32.xlu0 %v420, 88
    %v669 = vpop.permute.xlu0 %668
    %v671 = vsel %vm430, %v659, 0
    %v674 = vsel %vm430, %v661, 0
    %v677 = vsel %vm430, %v663, 0
    %v680 = vsel %vm430, %v665, 0
    %v683 = vsel %vm430, %v667, 0
    %v686 = vsel %vm430, %v669, 0
    %688 = vmatprep.subr.bf16.mxu0 0
    %689 = vmatpush1.bf16.xpose.msra.mxu0 %v680
    %690 = vmatprep.subr.bf16.mxu0 0
    %691 = vmatpush1.bf16.xpose.msra.mxu0 %v683
    %692 = vmatprep.subr.bf16.mxu0 0
    %693 = vmatpush1.bf16.xpose.msra.mxu0 %v686
    %694 = vmatprep.subr.bf16.mxu0 0
    %695 = vmatpush1.bf16.xpose.msra.mxu0 0
    %696 = vmatprep.subr.bf16.mxu0 0
    %697 = vmatpush1.bf16.xpose.msra.mxu0 0
    %698 = vmatprep.subr.bf16.mxu0 0
    %699 = vmatpush1.bf16.xpose.msra.mxu0 0
    %700 = vmatprep.subr.bf16.mxu0 0
    %701 = vmatpush1.bf16.xpose.msra.mxu0 0
    %702 = vmatprep.subr.bf16.mxu0 0
    %703 = vmatpush1.bf16.xpose.msra.mxu0 0
    %704 = vmatprep.subr.bf16.mxu0 0
    %705 = vmatpush1.bf16.xpose.msra.mxu0 0
    %706 = vmatprep.subr.bf16.mxu0 0
    %707 = vmatpush1.bf16.xpose.msra.mxu0 0
    %708 = vmatprep.subr.bf16.mxu0 0
    %709 = vmatpush1.bf16.xpose.msra.mxu0 0
    %710 = vmatprep.subr.bf16.mxu0 0
    %711 = vmatpush1.bf16.xpose.msra.mxu0 0
    %712 = vmatprep.subr.bf16.mxu0 0
    %713 = vmatpush1.bf16.xpose.msra.mxu0 0
    %714 = vmatprep.subr.bf16.mxu0 0
    %715 = vmatpush1.bf16.xpose.msra.mxu0 0
    %716 = vmatprep.subr.bf16.mxu0 0
    %717 = vmatpush1.bf16.xpose.msra.mxu0 0
    %718 = vmatprep.subr.bf16.mxu0 0
    %719 = vmatpush1.bf16.xpose.msra.mxu0 0
    %720 = vmatprep.mubr.bf16.mxu0 0
    %721 = vmatmul.mubr.bf16.gmra.mrb[0].mxu0 %v671
    %v722 = vpop.f32.mrb[0].mxu0
    %v723 = vadd.f32 %v310, %v722
    %v724 = vpop.f32.mrb[0].mxu0
    %v725 = vpop.f32.mrb[0].mxu0
    %v726 = vadd.f32 %v311, %v725
    %v727 = vpop.f32.mrb[0].mxu0
    %728 = vmatprep.mubr.bf16.mxu0 0
    %729 = vmatmul.mubr.bf16.gmra.mrb[0].mxu0 %v674
    %v730 = vpop.f32.mrb[0].mxu0
    %v731 = vadd.f32 %v312, %v730
    %v732 = vpop.f32.mrb[0].mxu0
    %v733 = vpop.f32.mrb[0].mxu0
    %v734 = vadd.f32 %v313, %v733
    %v735 = vpop.f32.mrb[0].mxu0
    %736 = vmatprep.mubr.bf16.mxu0 0
    %737 = vmatmul.mubr.bf16.gmra.mrb[0].mxu0 %v677
    %v738 = vpop.f32.mrb[0].mxu0
    %v739 = vadd.f32 %v314, %v738
    %v740 = vpop.f32.mrb[0].mxu0
    %v741 = vpop.f32.mrb[0].mxu0
    %v742 = vadd.f32 %v315, %v741
    %v743 = vpop.f32.mrb[0].mxu0
    %744 = vdwg.mxu0
    %v745 = vsel %vm506, %v723, -inf
    %746 = vmax.xlane.f32.xlu0 %v745
    %v747 = vpop.xlane.xlu0 %746
    %v748 = vsel %vm506, %v726, -inf
    %749 = vmax.xlane.f32.xlu0 %v748
    %v750 = vpop.xlane.xlu0 %749
    %v751 = vsel %vm506, %v731, -inf
    %752 = vmax.xlane.f32.xlu0 %v751
    %v753 = vpop.xlane.xlu0 %752
    %v754 = vsel %vm506, %v734, -inf
    %755 = vmax.xlane.f32.xlu0 %v754
    %v756 = vpop.xlane.xlu0 %755
    %v757 = vsel %vm506, %v739, -inf
    %758 = vmax.xlane.f32.xlu0 %v757
    %v759 = vpop.xlane.xlu0 %758
    %v760 = vsel %vm506, %v742, -inf
    %761 = vmax.xlane.f32.xlu0 %v760
    %v762 = vpop.xlane.xlu0 %761
    %v763 = vsub.f32 %v723, %v747
    %v764 = vsub.f32 %v726, %v750
    %v765 = vsub.f32 %v731, %v753
    %v766 = vsub.f32 %v734, %v756
    %v767 = vsub.f32 %v739, %v759
    %v768 = vsub.f32 %v742, %v762
    %v769 = vmul.f32 %v763, 1.442695
    %v770 = vpow.pop %v769
    %v771 = vmul.f32 %v764, 1.442695
    %v772 = vpow.pop %v771
    %v773 = vmul.f32 %v765, 1.442695
    %v774 = vpow.pop %v773
    %v775 = vmul.f32 %v766, 1.442695
    %v776 = vpow.pop %v775
    %v777 = vmul.f32 %v767, 1.442695
    %v778 = vpow.pop %v777
    %v779 = vmul.f32 %v768, 1.442695
    %v780 = vpow.pop %v779
    %v781 = vsel %vm506, %v770, 0.0
    %782 = vadd.xlane.f32.xlu0 %v781
    %v783 = vpop.xlane.xlu0 %782
    %v784 = vsel %vm506, %v772, 0.0
    %785 = vadd.xlane.f32.xlu0 %v784
    %v786 = vpop.xlane.xlu0 %785
    %v787 = vsel %vm506, %v774, 0.0
    %788 = vadd.xlane.f32.xlu0 %v787
    %v789 = vpop.xlane.xlu0 %788
    %v790 = vsel %vm506, %v776, 0.0
    %791 = vadd.xlane.f32.xlu0 %v790
    %v792 = vpop.xlane.xlu0 %791
    %v793 = vsel %vm506, %v778, 0.0
    %794 = vadd.xlane.f32.xlu0 %v793
    %v795 = vpop.xlane.xlu0 %794
    %v796 = vsel %vm506, %v780, 0.0
    %797 = vadd.xlane.f32.xlu0 %v796
    %v798 = vpop.xlane.xlu0 %797
    %v799 = vrcp.pop %v783
    %v800 = vrcp.pop %v786
    %v801 = vrcp.pop %v789
    %v802 = vrcp.pop %v792
    %v803 = vrcp.pop %v795
    %v804 = vrcp.pop %v798
    %v805 = vmul.f32 %v770, %v799
    %v806 = vmul.f32 %v772, %v800
    %v807 = vmul.f32 %v774, %v801
    %v808 = vmul.f32 %v776, %v802
    %v809 = vmul.f32 %v778, %v803
    %v810 = vmul.f32 %v780, %v804
    %v811 = vpack.c.bf16 %v806, %v805
    %v812 = vpack.c.bf16 %v808, %v807
    %v813 = vpack.c.bf16 %v810, %v809
    %814 = vrot.lane.b32.xlu0 %v418, 56
    %v815 = vpop.permute.xlu0 %814
    %816 = vrot.lane.b32.xlu0 %v419, 56
    %v817 = vpop.permute.xlu0 %816
    %818 = vrot.lane.b32.xlu0 %v420, 56
    %v819 = vpop.permute.xlu0 %818
    %v824 = vsel %vm506, %v811, 0
    %v827 = vsel %vm506, %v812, 0
    %v830 = vsel %vm506, %v813, 0
    %832 = vmatprep.subr.bf16.mxu0 0
    %833 = vmatpush1.bf16.msra.mxu0 %v815
    %834 = vmatprep.subr.bf16.mxu0 0
    %835 = vmatpush1.bf16.msra.mxu0 %v817
    %836 = vmatprep.subr.bf16.mxu0 0
    %837 = vmatpush1.bf16.msra.mxu0 %v819
    %838 = vmatprep.subr.bf16.mxu0 0
    %839 = vmatpush1.bf16.msra.mxu0 0
    %840 = vmatprep.subr.bf16.mxu0 0
    %841 = vmatpush1.bf16.msra.mxu0 0
    %842 = vmatprep.subr.bf16.mxu0 0
    %843 = vmatpush1.bf16.msra.mxu0 0
    %844 = vmatprep.subr.bf16.mxu0 0
    %845 = vmatpush1.bf16.msra.mxu0 0
    %846 = vmatprep.subr.bf16.mxu0 0
    %847 = vmatpush1.bf16.msra.mxu0 0
    %848 = vmatprep.subr.bf16.mxu0 0
    %849 = vmatpush1.bf16.msra.mxu0 0
    %850 = vmatprep.subr.bf16.mxu0 0
    %851 = vmatpush1.bf16.msra.mxu0 0
    %852 = vmatprep.subr.bf16.mxu0 0
    %853 = vmatpush1.bf16.msra.mxu0 0
    %854 = vmatprep.subr.bf16.mxu0 0
    %855 = vmatpush1.bf16.msra.mxu0 0
    %856 = vmatprep.subr.bf16.mxu0 0
    %857 = vmatpush1.bf16.msra.mxu0 0
    %858 = vmatprep.subr.bf16.mxu0 0
    %859 = vmatpush1.bf16.msra.mxu0 0
    %860 = vmatprep.subr.bf16.mxu0 0
    %861 = vmatpush1.bf16.msra.mxu0 0
    %862 = vmatprep.subr.bf16.mxu0 0
    %863 = vmatpush1.bf16.msra.mxu0 0
    %864 = vmatprep.mubr.bf16.mxu0 0
    %865 = vmatmul.mubr.bf16.gmra.mrb[0].mxu0 %v824
    %v866 = vpop.f32.mrb[0].mxu0
    %v867 = vadd.f32 0.0, %v866
    %v868 = vpop.f32.mrb[0].mxu0
    %v869 = vpop.f32.mrb[0].mxu0
    %v870 = vadd.f32 0.0, %v869
    %v871 = vpop.f32.mrb[0].mxu0
    %872 = vmatprep.mubr.bf16.mxu0 0
    %873 = vmatmul.mubr.bf16.gmra.mrb[0].mxu0 %v827
    %v874 = vpop.f32.mrb[0].mxu0
    %v875 = vadd.f32 0.0, %v874
    %v876 = vpop.f32.mrb[0].mxu0
    %v877 = vpop.f32.mrb[0].mxu0
    %v878 = vadd.f32 0.0, %v877
    %v879 = vpop.f32.mrb[0].mxu0
    %880 = vmatprep.mubr.bf16.mxu0 0
    %881 = vmatmul.mubr.bf16.gmra.mrb[0].mxu0 %v830
    %v882 = vpop.f32.mrb[0].mxu0
    %v883 = vadd.f32 0.0, %v882
    %v884 = vpop.f32.mrb[0].mxu0
    %v885 = vpop.f32.mrb[0].mxu0
    %v886 = vadd.f32 0.0, %v885
    %v887 = vpop.f32.mrb[0].mxu0
    %888 = vdwg.mxu0
    %v889 = vpack.c.bf16 %v870, %v867
    %v890 = vpack.c.bf16 %v878, %v875
    %v891 = vpack.c.bf16 %v886, %v883
    %s892 = scalar_lea.vmem [#allocation10], 4
    %v893 = vld [vmem:[%s892] sm:$0xf]
    %v895 = vsel %vm430, %v889, 0
    %v898 = vsel %vm430, %v890, 0
    %v901 = vsel %vm430, %v891, 0
    %vm903 = vcmask 1043456
    %v905 = vsel %vm903, %v893, 0
    %907 = vmatprep.subr.bf16.mxu0 0
    %908 = vmatpush1.bf16.msra.mxu0 %v905
    %909 = vmatprep.subr.bf16.mxu0 0
    %910 = vmatpush1.bf16.msra.mxu0 0
    %911 = vmatprep.subr.bf16.mxu0 0
    %912 = vmatpush1.bf16.msra.mxu0 0
    %913 = vmatprep.subr.bf16.mxu0 0
    %914 = vmatpush1.bf16.msra.mxu0 0
    %915 = vmatprep.subr.bf16.mxu0 0
    %916 = vmatpush1.bf16.msra.mxu0 0
    %917 = vmatprep.subr.bf16.mxu0 0
    %918 = vmatpush1.bf16.msra.mxu0 0
    %919 = vmatprep.subr.bf16.mxu0 0
    %920 = vmatpush1.bf16.msra.mxu0 0
    %921 = vmatprep.subr.bf16.mxu0 0
    %922 = vmatpush1.bf16.msra.mxu0 0
    %923 = vmatprep.subr.bf16.mxu0 0
    %924 = vmatpush1.bf16.msra.mxu0 0
    %925 = vmatprep.subr.bf16.mxu0 0
    %926 = vmatpush1.bf16.msra.mxu0 0
    %927 = vmatprep.subr.bf16.mxu0 0
    %928 = vmatpush1.bf16.msra.mxu0 0
    %929 = vmatprep.subr.bf16.mxu0 0
    %930 = vmatpush1.bf16.msra.mxu0 0
    %931 = vmatprep.subr.bf16.mxu0 0
    %932 = vmatpush1.bf16.msra.mxu0 0
    %933 = vmatprep.subr.bf16.mxu0 0
    %934 = vmatpush1.bf16.msra.mxu0 0
    %935 = vmatprep.subr.bf16.mxu0 0
    %936 = vmatpush1.bf16.msra.mxu0 0
    %937 = vmatprep.subr.bf16.mxu0 0
    %938 = vmatpush1.bf16.msra.mxu0 0
    %939 = vmatprep.mubr.bf16.mxu0 0
    %940 = vmatmul.mubr.bf16.gmra.mrb[0].mxu0 %v895
    %v941 = vpop.f32.mrb[0].mxu0
    %v942 = vadd.f32 0.0, %v941
    %v943 = vpop.f32.mrb[0].mxu0
    %v944 = vpop.f32.mrb[0].mxu0
    %v945 = vadd.f32 0.0, %v944
    %v946 = vpop.f32.mrb[0].mxu0
    %947 = vmatprep.mubr.bf16.mxu0 0
    %948 = vmatmul.mubr.bf16.gmra.mrb[0].mxu0 %v898
    %v949 = vpop.f32.mrb[0].mxu0
    %v950 = vadd.f32 0.0, %v949
    %v951 = vpop.f32.mrb[0].mxu0
    %v952 = vpop.f32.mrb[0].mxu0
    %v953 = vadd.f32 0.0, %v952
    %v954 = vpop.f32.mrb[0].mxu0
    %955 = vmatprep.mubr.bf16.mxu0 0
    %956 = vmatmul.mubr.bf16.gmra.mrb[0].mxu0 %v901
    %v957 = vpop.f32.mrb[0].mxu0
    %v958 = vadd.f32 0.0, %v957
    %v959 = vpop.f32.mrb[0].mxu0
    %v960 = vpop.f32.mrb[0].mxu0
    %v961 = vadd.f32 0.0, %v960
    %v962 = vpop.f32.mrb[0].mxu0
    %963 = vdwg.mxu0
    %v965 = vsel %vm430, %v651, 0
    %v968 = vsel %vm430, %v652, 0
    %v971 = vsel %vm430, %v653, 0
    %v974 = vsel %vm903, %v654, 0
    %976 = vmatprep.subr.bf16.mxu0 0
    %977 = vmatpush1.bf16.msra.mxu0 %v974
    %978 = vmatprep.subr.bf16.mxu0 0
    %979 = vmatpush1.bf16.msra.mxu0 0
    %980 = vmatprep.subr.bf16.mxu0 0
    %981 = vmatpush1.bf16.msra.mxu0 0
    %982 = vmatprep.subr.bf16.mxu0 0
    %983 = vmatpush1.bf16.msra.mxu0 0
    %984 = vmatprep.subr.bf16.mxu0 0
    %985 = vmatpush1.bf16.msra.mxu0 0
    %986 = vmatprep.subr.bf16.mxu0 0
    %987 = vmatpush1.bf16.msra.mxu0 0
    %988 = vmatprep.subr.bf16.mxu0 0
    %989 = vmatpush1.bf16.msra.mxu0 0
    %990 = vmatprep.subr.bf16.mxu0 0
    %991 = vmatpush1.bf16.msra.mxu0 0
    %992 = vmatprep.subr.bf16.mxu0 0
    %993 = vmatpush1.bf16.msra.mxu0 0
    %994 = vmatprep.subr.bf16.mxu0 0
    %995 = vmatpush1.bf16.msra.mxu0 0
    %996 = vmatprep.subr.bf16.mxu0 0
    %997 = vmatpush1.bf16.msra.mxu0 0
    %998 = vmatprep.subr.bf16.mxu0 0
    %999 = vmatpush1.bf16.msra.mxu0 0
    %1000 = vmatprep.subr.bf16.mxu0 0
    %1001 = vmatpush1.bf16.msra.mxu0 0
    %1002 = vmatprep.subr.bf16.mxu0 0
    %1003 = vmatpush1.bf16.msra.mxu0 0
    %1004 = vmatprep.subr.bf16.mxu0 0
    %1005 = vmatpush1.bf16.msra.mxu0 0
    %1006 = vmatprep.subr.bf16.mxu0 0
    %1007 = vmatpush1.bf16.msra.mxu0 0
    %1008 = vmatprep.mubr.bf16.mxu0 0
    %1009 = vmatmul.mubr.bf16.gmra.mrb[0].mxu0 %v965
    %v1010 = vpop.f32.mrb[0].mxu0
    %v1011 = vadd.f32 %v942, %v1010
    %v1012 = vpop.f32.mrb[0].mxu0
    %v1013 = vpop.f32.mrb[0].mxu0
    %v1014 = vadd.f32 %v945, %v1013
    %v1015 = vpop.f32.mrb[0].mxu0
    %1016 = vmatprep.mubr.bf16.mxu0 0
    %1017 = vmatmul.mubr.bf16.gmra.mrb[0].mxu0 %v968
    %v1018 = vpop.f32.mrb[0].mxu0
    %v1019 = vadd.f32 %v950, %v1018
    %v1020 = vpop.f32.mrb[0].mxu0
    %v1021 = vpop.f32.mrb[0].mxu0
    %v1022 = vadd.f32 %v953, %v1021
    %v1023 = vpop.f32.mrb[0].mxu0
    %1024 = vmatprep.mubr.bf16.mxu0 0
    %1025 = vmatmul.mubr.bf16.gmra.mrb[0].mxu0 %v971
    %v1026 = vpop.f32.mrb[0].mxu0
    %v1027 = vadd.f32 %v958, %v1026
    %v1028 = vpop.f32.mrb[0].mxu0
    %v1029 = vpop.f32.mrb[0].mxu0
    %v1030 = vadd.f32 %v961, %v1029
    %v1031 = vpop.f32.mrb[0].mxu0
    %1032 = vdwg.mxu0
    %1033 = vrot.lane.b32.xlu0 %v415, 112
    %v1034 = vpop.permute.xlu0 %1033
    %1035 = vrot.lane.b32.xlu0 %v416, 112
    %v1036 = vpop.permute.xlu0 %1035
    %1037 = vrot.lane.b32.xlu0 %v417, 112
    %v1038 = vpop.permute.xlu0 %1037
    %1039 = vrot.lane.b32.xlu0 %v418, 80
    %v1040 = vpop.permute.xlu0 %1039
    %1041 = vrot.lane.b32.xlu0 %v419, 80
    %v1042 = vpop.permute.xlu0 %1041
    %1043 = vrot.lane.b32.xlu0 %v420, 80
    %v1044 = vpop.permute.xlu0 %1043
    %v1046 = vsel %vm430, %v1034, 0
    %v1049 = vsel %vm430, %v1036, 0
    %v1052 = vsel %vm430, %v1038, 0
    %v1055 = vsel %vm430, %v1040, 0
    %v1058 = vsel %vm430, %v1042, 0
    %v1061 = vsel %vm430, %v1044, 0
    %1063 = vmatprep.subr.bf16.mxu0 0
    %1064 = vmatpush1.bf16.xpose.msra.mxu0 %v1055
    %1065 = vmatprep.subr.bf16.mxu0 0
    %1066 = vmatpush1.bf16.xpose.msra.mxu0 %v1058
    %1067 = vmatprep.subr.bf16.mxu0 0
    %1068 = vmatpush1.bf16.xpose.msra.mxu0 %v1061
    %1069 = vmatprep.subr.bf16.mxu0 0
    %1070 = vmatpush1.bf16.xpose.msra.mxu0 0
    %1071 = vmatprep.subr.bf16.mxu0 0
    %1072 = vmatpush1.bf16.xpose.msra.mxu0 0
    %1073 = vmatprep.subr.bf16.mxu0 0
    %1074 = vmatpush1.bf16.xpose.msra.mxu0 0
    %1075 = vmatprep.subr.bf16.mxu0 0
    %1076 = vmatpush1.bf16.xpose.msra.mxu0 0
    %1077 = vmatprep.subr.bf16.mxu0 0
    %1078 = vmatpush1.bf16.xpose.msra.mxu0 0
    %1079 = vmatprep.subr.bf16.mxu0 0
    %1080 = vmatpush1.bf16.xpose.msra.mxu0 0
    %1081 = vmatprep.subr.bf16.mxu0 0
    %1082 = vmatpush1.bf16.xpose.msra.mxu0 0
    %1083 = vmatprep.subr.bf16.mxu0 0
    %1084 = vmatpush1.bf16.xpose.msra.mxu0 0
    %1085 = vmatprep.subr.bf16.mxu0 0
    %1086 = vmatpush1.bf16.xpose.msra.mxu0 0
    %1087 = vmatprep.subr.bf16.mxu0 0
    %1088 = vmatpush1.bf16.xpose.msra.mxu0 0
    %1089 = vmatprep.subr.bf16.mxu0 0
    %1090 = vmatpush1.bf16.xpose.msra.mxu0 0
    %1091 = vmatprep.subr.bf16.mxu0 0
    %1092 = vmatpush1.bf16.xpose.msra.mxu0 0
    %1093 = vmatprep.subr.bf16.mxu0 0
    %1094 = vmatpush1.bf16.xpose.msra.mxu0 0
    %1095 = vmatprep.mubr.bf16.mxu0 0
    %1096 = vmatmul.mubr.bf16.gmra.mrb[0].mxu0 %v1046
    %v1097 = vpop.f32.mrb[0].mxu0
    %v1098 = vadd.f32 %v310, %v1097
    %v1099 = vpop.f32.mrb[0].mxu0
    %v1100 = vpop.f32.mrb[0].mxu0
    %v1101 = vadd.f32 %v311, %v1100
    %v1102 = vpop.f32.mrb[0].mxu0
    %1103 = vmatprep.mubr.bf16.mxu0 0
    %1104 = vmatmul.mubr.bf16.gmra.mrb[0].mxu0 %v1049
    %v1105 = vpop.f32.mrb[0].mxu0
    %v1106 = vadd.f32 %v312, %v1105
    %v1107 = vpop.f32.mrb[0].mxu0
    %v1108 = vpop.f32.mrb[0].mxu0
    %v1109 = vadd.f32 %v313, %v1108
    %v1110 = vpop.f32.mrb[0].mxu0
    %1111 = vmatprep.mubr.bf16.mxu0 0
    %1112 = vmatmul.mubr.bf16.gmra.mrb[0].mxu0 %v1052
    %v1113 = vpop.f32.mrb[0].mxu0
    %v1114 = vadd.f32 %v314, %v1113
    %v1115 = vpop.f32.mrb[0].mxu0
    %v1116 = vpop.f32.mrb[0].mxu0
    %v1117 = vadd.f32 %v315, %v1116
    %v1118 = vpop.f32.mrb[0].mxu0
    %1119 = vdwg.mxu0
    %v1120 = vsel %vm506, %v1098, -inf
    %1121 = vmax.xlane.f32.xlu0 %v1120
    %v1122 = vpop.xlane.xlu0 %1121
    %v1123 = vsel %vm506, %v1101, -inf
    %1124 = vmax.xlane.f32.xlu0 %v1123
    %v1125 = vpop.xlane.xlu0 %1124
    %v1126 = vsel %vm506, %v1106, -inf
    %1127 = vmax.xlane.f32.xlu0 %v1126
    %v1128 = vpop.xlane.xlu0 %1127
    %v1129 = vsel %vm506, %v1109, -inf
    %1130 = vmax.xlane.f32.xlu0 %v1129
    %v1131 = vpop.xlane.xlu0 %1130
    %v1132 = vsel %vm506, %v1114, -inf
    %1133 = vmax.xlane.f32.xlu0 %v1132
    %v1134 = vpop.xlane.xlu0 %1133
    %v1135 = vsel %vm506, %v1117, -inf
    %1136 = vmax.xlane.f32.xlu0 %v1135
    %v1137 = vpop.xlane.xlu0 %1136
    %v1138 = vsub.f32 %v1098, %v1122
    %v1139 = vsub.f32 %v1101, %v1125
    %v1140 = vsub.f32 %v1106, %v1128
    %v1141 = vsub.f32 %v1109, %v1131
    %v1142 = vsub.f32 %v1114, %v1134
    %v1143 = vsub.f32 %v1117, %v1137
    %v1144 = vmul.f32 %v1138, 1.442695
    %v1145 = vpow.pop %v1144
    %v1146 = vmul.f32 %v1139, 1.442695
    %v1147 = vpow.pop %v1146
    %v1148 = vmul.f32 %v1140, 1.442695
    %v1149 = vpow.pop %v1148
    %v1150 = vmul.f32 %v1141, 1.442695
    %v1151 = vpow.pop %v1150
    %v1152 = vmul.f32 %v1142, 1.442695
    %v1153 = vpow.pop %v1152
    %v1154 = vmul.f32 %v1143, 1.442695
    %v1155 = vpow.pop %v1154
    %v1156 = vsel %vm506, %v1145, 0.0
    %1157 = vadd.xlane.f32.xlu0 %v1156
    %v1158 = vpop.xlane.xlu0 %1157
    %v1159 = vsel %vm506, %v1147, 0.0
    %1160 = vadd.xlane.f32.xlu0 %v1159
    %v1161 = vpop.xlane.xlu0 %1160
    %v1162 = vsel %vm506, %v1149, 0.0
    %1163 = vadd.xlane.f32.xlu0 %v1162
    %v1164 = vpop.xlane.xlu0 %1163
    %v1165 = vsel %vm506, %v1151, 0.0
    %1166 = vadd.xlane.f32.xlu0 %v1165
    %v1167 = vpop.xlane.xlu0 %1166
    %v1168 = vsel %vm506, %v1153, 0.0
    %1169 = vadd.xlane.f32.xlu0 %v1168
    %v1170 = vpop.xlane.xlu0 %1169
    %v1171 = vsel %vm506, %v1155, 0.0
    %1172 = vadd.xlane.f32.xlu0 %v1171
    %v1173 = vpop.xlane.xlu0 %1172
    %v1174 = vrcp.pop %v1158
    %v1175 = vrcp.pop %v1161
    %v1176 = vrcp.pop %v1164
    %v1177 = vrcp.pop %v1167
    %v1178 = vrcp.pop %v1170
    %v1179 = vrcp.pop %v1173
    %v1180 = vmul.f32 %v1145, %v1174
    %v1181 = vmul.f32 %v1147, %v1175
    %v1182 = vmul.f32 %v1149, %v1176
    %v1183 = vmul.f32 %v1151, %v1177
    %v1184 = vmul.f32 %v1153, %v1178
    %v1185 = vmul.f32 %v1155, %v1179
    %v1186 = vpack.c.bf16 %v1181, %v1180
    %v1187 = vpack.c.bf16 %v1183, %v1182
    %v1188 = vpack.c.bf16 %v1185, %v1184
    %1189 = vrot.lane.b32.xlu0 %v418, 48
    %v1190 = vpop.permute.xlu0 %1189
    %1191 = vrot.lane.b32.xlu0 %v419, 48
    %v1192 = vpop.permute.xlu0 %1191
    %1193 = vrot.lane.b32.xlu0 %v420, 48
    %v1194 = vpop.permute.xlu0 %1193
    %v1199 = vsel %vm506, %v1186, 0
    %v1202 = vsel %vm506, %v1187, 0
    %v1205 = vsel %vm506, %v1188, 0
    %1207 = vmatprep.subr.bf16.mxu0 0
    %1208 = vmatpush1.bf16.msra.mxu0 %v1190
    %1209 = vmatprep.subr.bf16.mxu0 0
    %1210 = vmatpush1.bf16.msra.mxu0 %v1192
    %1211 = vmatprep.subr.bf16.mxu0 0
    %1212 = vmatpush1.bf16.msra.mxu0 %v1194
    %1213 = vmatprep.subr.bf16.mxu0 0
    %1214 = vmatpush1.bf16.msra.mxu0 0
    %1215 = vmatprep.subr.bf16.mxu0 0
    %1216 = vmatpush1.bf16.msra.mxu0 0
    %1217 = vmatprep.subr.bf16.mxu0 0
    %1218 = vmatpush1.bf16.msra.mxu0 0
    %1219 = vmatprep.subr.bf16.mxu0 0
    %1220 = vmatpush1.bf16.msra.mxu0 0
    %1221 = vmatprep.subr.bf16.mxu0 0
    %1222 = vmatpush1.bf16.msra.mxu0 0
    %1223 = vmatprep.subr.bf16.mxu0 0
    %1224 = vmatpush1.bf16.msra.mxu0 0
    %1225 = vmatprep.subr.bf16.mxu0 0
    %1226 = vmatpush1.bf16.msra.mxu0 0
    %1227 = vmatprep.subr.bf16.mxu0 0
    %1228 = vmatpush1.bf16.msra.mxu0 0
    %1229 = vmatprep.subr.bf16.mxu0 0
    %1230 = vmatpush1.bf16.msra.mxu0 0
    %1231 = vmatprep.subr.bf16.mxu0 0
    %1232 = vmatpush1.bf16.msra.mxu0 0
    %1233 = vmatprep.subr.bf16.mxu0 0
    %1234 = vmatpush1.bf16.msra.mxu0 0
    %1235 = vmatprep.subr.bf16.mxu0 0
    %1236 = vmatpush1.bf16.msra.mxu0 0
    %1237 = vmatprep.subr.bf16.mxu0 0
    %1238 = vmatpush1.bf16.msra.mxu0 0
    %1239 = vmatprep.mubr.bf16.mxu0 0
    %1240 = vmatmul.mubr.bf16.gmra.mrb[0].mxu0 %v1199
    %v1241 = vpop.f32.mrb[0].mxu0
    %v1242 = vadd.f32 0.0, %v1241
    %v1243 = vpop.f32.mrb[0].mxu0
    %v1244 = vpop.f32.mrb[0].mxu0
    %v1245 = vadd.f32 0.0, %v1244
    %v1246 = vpop.f32.mrb[0].mxu0
    %1247 = vmatprep.mubr.bf16.mxu0 0
    %1248 = vmatmul.mubr.bf16.gmra.mrb[0].mxu0 %v1202
    %v1249 = vpop.f32.mrb[0].mxu0
    %v1250 = vadd.f32 0.0, %v1249
    %v1251 = vpop.f32.mrb[0].mxu0
    %v1252 = vpop.f32.mrb[0].mxu0
    %v1253 = vadd.f32 0.0, %v1252
    %v1254 = vpop.f32.mrb[0].mxu0
    %1255 = vmatprep.mubr.bf16.mxu0 0
    %1256 = vmatmul.mubr.bf16.gmra.mrb[0].mxu0 %v1205
    %v1257 = vpop.f32.mrb[0].mxu0
    %v1258 = vadd.f32 0.0, %v1257
    %v1259 = vpop.f32.mrb[0].mxu0
    %v1260 = vpop.f32.mrb[0].mxu0
    %v1261 = vadd.f32 0.0, %v1260
    %v1262 = vpop.f32.mrb[0].mxu0
    %1263 = vdwg.mxu0
    %v1264 = vpack.c.bf16 %v1245, %v1242
    %v1265 = vpack.c.bf16 %v1253, %v1250
    %v1266 = vpack.c.bf16 %v1261, %v1258
    %s1267 = scalar_lea.vmem [#allocation10], 8
    %v1268 = vld [vmem:[%s1267] sm:$0xf]
    %v1270 = vsel %vm430, %v1264, 0
    %v1273 = vsel %vm430, %v1265, 0
    %v1276 = vsel %vm430, %v1266, 0
    %v1279 = vsel %vm903, %v1268, 0
    %1281 = vmatprep.subr.bf16.mxu0 0
    %1282 = vmatpush1.bf16.msra.mxu0 %v1279
    %1283 = vmatprep.subr.bf16.mxu0 0
    %1284 = vmatpush1.bf16.msra.mxu0 0
    %1285 = vmatprep.subr.bf16.mxu0 0
    %1286 = vmatpush1.bf16.msra.mxu0 0
    %1287 = vmatprep.subr.bf16.mxu0 0
    %1288 = vmatpush1.bf16.msra.mxu0 0
    %1289 = vmatprep.subr.bf16.mxu0 0
    %1290 = vmatpush1.bf16.msra.mxu0 0
    %1291 = vmatprep.subr.bf16.mxu0 0
    %1292 = vmatpush1.bf16.msra.mxu0 0
    %1293 = vmatprep.subr.bf16.mxu0 0
    %1294 = vmatpush1.bf16.msra.mxu0 0
    %1295 = vmatprep.subr.bf16.mxu0 0
    %1296 = vmatpush1.bf16.msra.mxu0 0
    %1297 = vmatprep.subr.bf16.mxu0 0
    %1298 = vmatpush1.bf16.msra.mxu0 0
    %1299 = vmatprep.subr.bf16.mxu0 0
    %1300 = vmatpush1.bf16.msra.mxu0 0
    %1301 = vmatprep.subr.bf16.mxu0 0
    %1302 = vmatpush1.bf16.msra.mxu0 0
    %1303 = vmatprep.subr.bf16.mxu0 0
    %1304 = vmatpush1.bf16.msra.mxu0 0
    %1305 = vmatprep.subr.bf16.mxu0 0
    %1306 = vmatpush1.bf16.msra.mxu0 0
    %1307 = vmatprep.subr.bf16.mxu0 0
    %1308 = vmatpush1.bf16.msra.mxu0 0
    %1309 = vmatprep.subr.bf16.mxu0 0
    %1310 = vmatpush1.bf16.msra.mxu0 0
    %1311 = vmatprep.subr.bf16.mxu0 0
    %1312 = vmatpush1.bf16.msra.mxu0 0
    %1313 = vmatprep.mubr.bf16.mxu0 0
    %1314 = vmatmul.mubr.bf16.gmra.mrb[0].mxu0 %v1270
    %v1315 = vpop.f32.mrb[0].mxu0
    %v1316 = vadd.f32 0.0, %v1315
    %v1317 = vpop.f32.mrb[0].mxu0
    %v1318 = vpop.f32.mrb[0].mxu0
    %v1319 = vadd.f32 0.0, %v1318
    %v1320 = vpop.f32.mrb[0].mxu0
    %1321 = vmatprep.mubr.bf16.mxu0 0
    %1322 = vmatmul.mubr.bf16.gmra.mrb[0].mxu0 %v1273
    %v1323 = vpop.f32.mrb[0].mxu0
    %v1324 = vadd.f32 0.0, %v1323
    %v1325 = vpop.f32.mrb[0].mxu0
    %v1326 = vpop.f32.mrb[0].mxu0
    %v1327 = vadd.f32 0.0, %v1326
    %v1328 = vpop.f32.mrb[0].mxu0
    %1329 = vmatprep.mubr.bf16.mxu0 0
    %1330 = vmatmul.mubr.bf16.gmra.mrb[0].mxu0 %v1276
    %v1331 = vpop.f32.mrb[0].mxu0
    %v1332 = vadd.f32 0.0, %v1331
    %v1333 = vpop.f32.mrb[0].mxu0
    %v1334 = vpop.f32.mrb[0].mxu0
    %v1335 = vadd.f32 0.0, %v1334
    %v1336 = vpop.f32.mrb[0].mxu0
    %1337 = vdwg.mxu0
    %v1338 = vadd.f32 %v1011, %v1316
    %v1339 = vadd.f32 %v1014, %v1319
    %v1340 = vadd.f32 %v1019, %v1324
    %v1341 = vadd.f32 %v1022, %v1327
    %v1342 = vadd.f32 %v1027, %v1332
    %v1343 = vadd.f32 %v1030, %v1335
    %1344 = vrot.lane.b32.xlu0 %v415, 104
    %v1345 = vpop.permute.xlu0 %1344
    %1346 = vrot.lane.b32.xlu0 %v416, 104
    %v1347 = vpop.permute.xlu0 %1346
    %1348 = vrot.lane.b32.xlu0 %v417, 104
    %v1349 = vpop.permute.xlu0 %1348
    %1350 = vrot.lane.b32.xlu0 %v418, 72
    %v1351 = vpop.permute.xlu0 %1350
    %1352 = vrot.lane.b32.xlu0 %v419, 72
    %v1353 = vpop.permute.xlu0 %1352
    %1354 = vrot.lane.b32.xlu0 %v420, 72
    %v1355 = vpop.permute.xlu0 %1354
    %v1357 = vsel %vm430, %v1345, 0
    %v1360 = vsel %vm430, %v1347, 0
    %v1363 = vsel %vm430, %v1349, 0
    %v1366 = vsel %vm430, %v1351, 0
    %v1369 = vsel %vm430, %v1353, 0
    %v1372 = vsel %vm430, %v1355, 0
    %1374 = vmatprep.subr.bf16.mxu0 0
    %1375 = vmatpush1.bf16.xpose.msra.mxu0 %v1366
    %1376 = vmatprep.subr.bf16.mxu0 0
    %1377 = vmatpush1.bf16.xpose.msra.mxu0 %v1369
    %1378 = vmatprep.subr.bf16.mxu0 0
    %1379 = vmatpush1.bf16.xpose.msra.mxu0 %v1372
    %1380 = vmatprep.subr.bf16.mxu0 0
    %1381 = vmatpush1.bf16.xpose.msra.mxu0 0
    %1382 = vmatprep.subr.bf16.mxu0 0
    %1383 = vmatpush1.bf16.xpose.msra.mxu0 0
    %1384 = vmatprep.subr.bf16.mxu0 0
    %1385 = vmatpush1.bf16.xpose.msra.mxu0 0
    %1386 = vmatprep.subr.bf16.mxu0 0
    %1387 = vmatpush1.bf16.xpose.msra.mxu0 0
    %1388 = vmatprep.subr.bf16.mxu0 0
    %1389 = vmatpush1.bf16.xpose.msra.mxu0 0
    %1390 = vmatprep.subr.bf16.mxu0 0
    %1391 = vmatpush1.bf16.xpose.msra.mxu0 0
    %1392 = vmatprep.subr.bf16.mxu0 0
    %1393 = vmatpush1.bf16.xpose.msra.mxu0 0
    %1394 = vmatprep.subr.bf16.mxu0 0
    %1395 = vmatpush1.bf16.xpose.msra.mxu0 0
    %1396 = vmatprep.subr.bf16.mxu0 0
    %1397 = vmatpush1.bf16.xpose.msra.mxu0 0
    %1398 = vmatprep.subr.bf16.mxu0 0
    %1399 = vmatpush1.bf16.xpose.msra.mxu0 0
    %1400 = vmatprep.subr.bf16.mxu0 0
    %1401 = vmatpush1.bf16.xpose.msra.mxu0 0
    %1402 = vmatprep.subr.bf16.mxu0 0
    %1403 = vmatpush1.bf16.xpose.msra.mxu0 0
    %1404 = vmatprep.subr.bf16.mxu0 0
    %1405 = vmatpush1.bf16.xpose.msra.mxu0 0
    %1406 = vmatprep.mubr.bf16.mxu0 0
    %1407 = vmatmul.mubr.bf16.gmra.mrb[0].mxu0 %v1357
    %v1408 = vpop.f32.mrb[0].mxu0
    %v1409 = vadd.f32 %v310, %v1408
    %v1410 = vpop.f32.mrb[0].mxu0
    %v1411 = vpop.f32.mrb[0].mxu0
    %v1412 = vadd.f32 %v311, %v1411
    %v1413 = vpop.f32.mrb[0].mxu0
    %1414 = vmatprep.mubr.bf16.mxu0 0
    %1415 = vmatmul.mubr.bf16.gmra.mrb[0].mxu0 %v1360
    %v1416 = vpop.f32.mrb[0].mxu0
    %v1417 = vadd.f32 %v312, %v1416
    %v1418 = vpop.f32.mrb[0].mxu0
    %v1419 = vpop.f32.mrb[0].mxu0
    %v1420 = vadd.f32 %v313, %v1419
    %v1421 = vpop.f32.mrb[0].mxu0
    %1422 = vmatprep.mubr.bf16.mxu0 0
    %1423 = vmatmul.mubr.bf16.gmra.mrb[0].mxu0 %v1363
    %v1424 = vpop.f32.mrb[0].mxu0
    %v1425 = vadd.f32 %v314, %v1424
    %v1426 = vpop.f32.mrb[0].mxu0
    %v1427 = vpop.f32.mrb[0].mxu0
    %v1428 = vadd.f32 %v315, %v1427
    %v1429 = vpop.f32.mrb[0].mxu0
    %1430 = vdwg.mxu0
    %v1431 = vsel %vm506, %v1409, -inf
    %1432 = vmax.xlane.f32.xlu0 %v1431
    %v1433 = vpop.xlane.xlu0 %1432
    %v1434 = vsel %vm506, %v1412, -inf
    %1435 = vmax.xlane.f32.xlu0 %v1434
    %v1436 = vpop.xlane.xlu0 %1435
    %v1437 = vsel %vm506, %v1417, -inf
    %1438 = vmax.xlane.f32.xlu0 %v1437
    %v1439 = vpop.xlane.xlu0 %1438
    %v1440 = vsel %vm506, %v1420, -inf
    %1441 = vmax.xlane.f32.xlu0 %v1440
    %v1442 = vpop.xlane.xlu0 %1441
    %v1443 = vsel %vm506, %v1425, -inf
    %1444 = vmax.xlane.f32.xlu0 %v1443
    %v1445 = vpop.xlane.xlu0 %1444
    %v1446 = vsel %vm506, %v1428, -inf
    %1447 = vmax.xlane.f32.xlu0 %v1446
    %v1448 = vpop.xlane.xlu0 %1447
    %v1449 = vsub.f32 %v1409, %v1433
    %v1450 = vsub.f32 %v1412, %v1436
    %v1451 = vsub.f32 %v1417, %v1439
    %v1452 = vsub.f32 %v1420, %v1442
    %v1453 = vsub.f32 %v1425, %v1445
    %v1454 = vsub.f32 %v1428, %v1448
    %v1455 = vmul.f32 %v1449, 1.442695
    %v1456 = vpow.pop %v1455
    %v1457 = vmul.f32 %v1450, 1.442695
    %v1458 = vpow.pop %v1457
    %v1459 = vmul.f32 %v1451, 1.442695
    %v1460 = vpow.pop %v1459
    %v1461 = vmul.f32 %v1452, 1.442695
    %v1462 = vpow.pop %v1461
    %v1463 = vmul.f32 %v1453, 1.442695
    %v1464 = vpow.pop %v1463
    %v1465 = vmul.f32 %v1454, 1.442695
    %v1466 = vpow.pop %v1465
    %v1467 = vsel %vm506, %v1456, 0.0
    %1468 = vadd.xlane.f32.xlu0 %v1467
    %v1469 = vpop.xlane.xlu0 %1468
    %v1470 = vsel %vm506, %v1458, 0.0
    %1471 = vadd.xlane.f32.xlu0 %v1470
    %v1472 = vpop.xlane.xlu0 %1471
    %v1473 = vsel %vm506, %v1460, 0.0
    %1474 = vadd.xlane.f32.xlu0 %v1473
    %v1475 = vpop.xlane.xlu0 %1474
    %v1476 = vsel %vm506, %v1462, 0.0
    %1477 = vadd.xlane.f32.xlu0 %v1476
    %v1478 = vpop.xlane.xlu0 %1477
    %v1479 = vsel %vm506, %v1464, 0.0
    %1480 = vadd.xlane.f32.xlu0 %v1479
    %v1481 = vpop.xlane.xlu0 %1480
    %v1482 = vsel %vm506, %v1466, 0.0
    %1483 = vadd.xlane.f32.xlu0 %v1482
    %v1484 = vpop.xlane.xlu0 %1483
    %v1485 = vrcp.pop %v1469
    %v1486 = vrcp.pop %v1472
    %v1487 = vrcp.pop %v1475
    %v1488 = vrcp.pop %v1478
    %v1489 = vrcp.pop %v1481
    %v1490 = vrcp.pop %v1484
    %v1491 = vmul.f32 %v1456, %v1485
    %v1492 = vmul.f32 %v1458, %v1486
    %v1493 = vmul.f32 %v1460, %v1487
    %v1494 = vmul.f32 %v1462, %v1488
    %v1495 = vmul.f32 %v1464, %v1489
    %v1496 = vmul.f32 %v1466, %v1490
    %v1497 = vpack.c.bf16 %v1492, %v1491
    %v1498 = vpack.c.bf16 %v1494, %v1493
    %v1499 = vpack.c.bf16 %v1496, %v1495
    %1500 = vrot.lane.b32.xlu0 %v418, 40
    %v1501 = vpop.permute.xlu0 %1500
    %1502 = vrot.lane.b32.xlu0 %v419, 40
    %v1503 = vpop.permute.xlu0 %1502
    %1504 = vrot.lane.b32.xlu0 %v420, 40
    %v1505 = vpop.permute.xlu0 %1504
    %v1510 = vsel %vm506, %v1497, 0
    %v1513 = vsel %vm506, %v1498, 0
    %v1516 = vsel %vm506, %v1499, 0
    %1518 = vmatprep.subr.bf16.mxu0 0
    %1519 = vmatpush1.bf16.msra.mxu0 %v1501
    %1520 = vmatprep.subr.bf16.mxu0 0
    %1521 = vmatpush1.bf16.msra.mxu0 %v1503
    %1522 = vmatprep.subr.bf16.mxu0 0
    %1523 = vmatpush1.bf16.msra.mxu0 %v1505
    %1524 = vmatprep.subr.bf16.mxu0 0
    %1525 = vmatpush1.bf16.msra.mxu0 0
    %1526 = vmatprep.subr.bf16.mxu0 0
    %1527 = vmatpush1.bf16.msra.mxu0 0
    %1528 = vmatprep.subr.bf16.mxu0 0
    %1529 = vmatpush1.bf16.msra.mxu0 0
    %1530 = vmatprep.subr.bf16.mxu0 0
    %1531 = vmatpush1.bf16.msra.mxu0 0
    %1532 = vmatprep.subr.bf16.mxu0 0
    %1533 = vmatpush1.bf16.msra.mxu0 0
    %1534 = vmatprep.subr.bf16.mxu0 0
    %1535 = vmatpush1.bf16.msra.mxu0 0
    %1536 = vmatprep.subr.bf16.mxu0 0
    %1537 = vmatpush1.bf16.msra.mxu0 0
    %1538 = vmatprep.subr.bf16.mxu0 0
    %1539 = vmatpush1.bf16.msra.mxu0 0
    %1540 = vmatprep.subr.bf16.mxu0 0
    %1541 = vmatpush1.bf16.msra.mxu0 0
    %1542 = vmatprep.subr.bf16.mxu0 0
    %1543 = vmatpush1.bf16.msra.mxu0 0
    %1544 = vmatprep.subr.bf16.mxu0 0
    %1545 = vmatpush1.bf16.msra.mxu0 0
    %1546 = vmatprep.subr.bf16.mxu0 0
    %1547 = vmatpush1.bf16.msra.mxu0 0
    %1548 = vmatprep.subr.bf16.mxu0 0
    %1549 = vmatpush1.bf16.msra.mxu0 0
    %1550 = vmatprep.mubr.bf16.mxu0 0
    %1551 = vmatmul.mubr.bf16.gmra.mrb[0].mxu0 %v1510
    %v1552 = vpop.f32.mrb[0].mxu0
    %v1553 = vadd.f32 0.0, %v1552
    %v1554 = vpop.f32.mrb[0].mxu0
    %v1555 = vpop.f32.mrb[0].mxu0
    %v1556 = vadd.f32 0.0, %v1555
    %v1557 = vpop.f32.mrb[0].mxu0
    %1558 = vmatprep.mubr.bf16.mxu0 0
    %1559 = vmatmul.mubr.bf16.gmra.mrb[0].mxu0 %v1513
    %v1560 = vpop.f32.mrb[0].mxu0
    %v1561 = vadd.f32 0.0, %v1560
    %v1562 = vpop.f32.mrb[0].mxu0
    %v1563 = vpop.f32.mrb[0].mxu0
    %v1564 = vadd.f32 0.0, %v1563
    %v1565 = vpop.f32.mrb[0].mxu0
    %1566 = vmatprep.mubr.bf16.mxu0 0
    %1567 = vmatmul.mubr.bf16.gmra.mrb[0].mxu0 %v1516
    %v1568 = vpop.f32.mrb[0].mxu0
    %v1569 = vadd.f32 0.0, %v1568
    %v1570 = vpop.f32.mrb[0].mxu0
    %v1571 = vpop.f32.mrb[0].mxu0
    %v1572 = vadd.f32 0.0, %v1571
    %v1573 = vpop.f32.mrb[0].mxu0
    %1574 = vdwg.mxu0
    %v1575 = vpack.c.bf16 %v1556, %v1553
    %v1576 = vpack.c.bf16 %v1564, %v1561
    %v1577 = vpack.c.bf16 %v1572, %v1569
    %s1578 = scalar_lea.vmem [#allocation10], 12
    %v1579 = vld [vmem:[%s1578] sm:$0xf]
    %v1581 = vsel %vm430, %v1575, 0
    %v1584 = vsel %vm430, %v1576, 0
    %v1587 = vsel %vm430, %v1577, 0
    %v1590 = vsel %vm903, %v1579, 0
    %1592 = vmatprep.subr.bf16.mxu0 0
    %1593 = vmatpush1.bf16.msra.mxu0 %v1590
    %1594 = vmatprep.subr.bf16.mxu0 0
    %1595 = vmatpush1.bf16.msra.mxu0 0
    %1596 = vmatprep.subr.bf16.mxu0 0
    %1597 = vmatpush1.bf16.msra.mxu0 0
    %1598 = vmatprep.subr.bf16.mxu0 0
    %1599 = vmatpush1.bf16.msra.mxu0 0
    %1600 = vmatprep.subr.bf16.mxu0 0
    %1601 = vmatpush1.bf16.msra.mxu0 0
    %1602 = vmatprep.subr.bf16.mxu0 0
    %1603 = vmatpush1.bf16.msra.mxu0 0
    %1604 = vmatprep.subr.bf16.mxu0 0
    %1605 = vmatpush1.bf16.msra.mxu0 0
    %1606 = vmatprep.subr.bf16.mxu0 0
    %1607 = vmatpush1.bf16.msra.mxu0 0
    %1608 = vmatprep.subr.bf16.mxu0 0
    %1609 = vmatpush1.bf16.msra.mxu0 0
    %1610 = vmatprep.subr.bf16.mxu0 0
    %1611 = vmatpush1.bf16.msra.mxu0 0
    %1612 = vmatprep.subr.bf16.mxu0 0
    %1613 = vmatpush1.bf16.msra.mxu0 0
    %1614 = vmatprep.subr.bf16.mxu0 0
    %1615 = vmatpush1.bf16.msra.mxu0 0
    %1616 = vmatprep.subr.bf16.mxu0 0
    %1617 = vmatpush1.bf16.msra.mxu0 0
    %1618 = vmatprep.subr.bf16.mxu0 0
    %1619 = vmatpush1.bf16.msra.mxu0 0
    %1620 = vmatprep.subr.bf16.mxu0 0
    %1621 = vmatpush1.bf16.msra.mxu0 0
    %1622 = vmatprep.subr.bf16.mxu0 0
    %1623 = vmatpush1.bf16.msra.mxu0 0
    %1624 = vmatprep.mubr.bf16.mxu0 0
    %1625 = vmatmul.mubr.bf16.gmra.mrb[0].mxu0 %v1581
    %v1626 = vpop.f32.mrb[0].mxu0
    %v1627 = vadd.f32 0.0, %v1626
    %v1628 = vpop.f32.mrb[0].mxu0
    %v1629 = vpop.f32.mrb[0].mxu0
    %v1630 = vadd.f32 0.0, %v1629
    %v1631 = vpop.f32.mrb[0].mxu0
    %1632 = vmatprep.mubr.bf16.mxu0 0
    %1633 = vmatmul.mubr.bf16.gmra.mrb[0].mxu0 %v1584
    %v1634 = vpop.f32.mrb[0].mxu0
    %v1635 = vadd.f32 0.0, %v1634
    %v1636 = vpop.f32.mrb[0].mxu0
    %v1637 = vpop.f32.mrb[0].mxu0
    %v1638 = vadd.f32 0.0, %v1637
    %v1639 = vpop.f32.mrb[0].mxu0
    %1640 = vmatprep.mubr.bf16.mxu0 0
    %1641 = vmatmul.mubr.bf16.gmra.mrb[0].mxu0 %v1587
    %v1642 = vpop.f32.mrb[0].mxu0
    %v1643 = vadd.f32 0.0, %v1642
    %v1644 = vpop.f32.mrb[0].mxu0
    %v1645 = vpop.f32.mrb[0].mxu0
    %v1646 = vadd.f32 0.0, %v1645
    %v1647 = vpop.f32.mrb[0].mxu0
    %1648 = vdwg.mxu0
    %v1649 = vadd.f32 %v1338, %v1627
    %v1650 = vadd.f32 %v1339, %v1630
    %v1651 = vadd.f32 %v1340, %v1635
    %v1652 = vadd.f32 %v1341, %v1638
    %v1653 = vadd.f32 %v1342, %v1643
    %v1654 = vadd.f32 %v1343, %v1646
    %v1655 = vld [vmem:[#allocation11] sm:$0x1]
    %v1657 = vlaneseq
    %v1658 = vshrl.u32 %v1657, 7
    %v1659 = vsub.s32 0, %v1658
    %v1660 = vrot.slane %v1655, %v1659
    %v1662 = vadd.f32 %v1649, %v1660
    %v1663 = vadd.f32 %v1650, %v1660
    %v1664 = vadd.f32 %v1651, %v1660
    %v1665 = vadd.f32 %v1652, %v1660
    %v1666 = vadd.f32 %v1653, %v1660
    %v1667 = vadd.f32 %v1654, %v1660
    %v1668 = vadd.f32 %v304, %v1662
    %v1669 = vadd.f32 %v305, %v1663
    %v1670 = vadd.f32 %v306, %v1664
    %v1671 = vadd.f32 %v307, %v1665
    %v1672 = vadd.f32 %v308, %v1666
    %v1673 = vadd.f32 %v309, %v1667
    %v1674 = vld [vmem:[#allocation13] sm:$0x1]
    %v1675 = vld [vmem:[#allocation14] sm:$0x1]
    %v1676 = vsel %vm342, %v1668, 0.0
    %1677 = vadd.xlane.f32.xlu0 %v1676
    %v1678 = vpop.xlane.xlu0 %1677
    %v1679 = vsel %vm342, %v1669, 0.0
    %1680 = vadd.xlane.f32.xlu0 %v1679
    %v1681 = vpop.xlane.xlu0 %1680
    %v1682 = vsel %vm342, %v1670, 0.0
    %1683 = vadd.xlane.f32.xlu0 %v1682
    %v1684 = vpop.xlane.xlu0 %1683
    %v1685 = vsel %vm342, %v1671, 0.0
    %1686 = vadd.xlane.f32.xlu0 %v1685
    %v1687 = vpop.xlane.xlu0 %1686
    %v1688 = vsel %vm342, %v1672, 0.0
    %1689 = vadd.xlane.f32.xlu0 %v1688
    %v1690 = vpop.xlane.xlu0 %1689
    %v1691 = vsel %vm342, %v1673, 0.0
    %1692 = vadd.xlane.f32.xlu0 %v1691
    %v1693 = vpop.xlane.xlu0 %1692
    %v1694 = vrcp.pop 32.0
    %v1695 = vmul.f32 %v1678, %v1694
    %v1696 = vmul.f32 %v1681, %v1694
    %v1697 = vmul.f32 %v1684, %v1694
    %v1698 = vmul.f32 %v1687, %v1694
    %v1699 = vmul.f32 %v1690, %v1694
    %v1700 = vmul.f32 %v1693, %v1694
    %v1701 = vsub.f32 %v1668, %v1695
    %v1702 = vsub.f32 %v1669, %v1696
    %v1703 = vsub.f32 %v1670, %v1697
    %v1704 = vsub.f32 %v1671, %v1698
    %v1705 = vsub.f32 %v1672, %v1699
    %v1706 = vsub.f32 %v1673, %v1700
    %v1707 = vmul.f32 %v1701, %v1701
    %v1708 = vmul.f32 %v1702, %v1702
    %v1709 = vmul.f32 %v1703, %v1703
    %v1710 = vmul.f32 %v1704, %v1704
    %v1711 = vmul.f32 %v1705, %v1705
    %v1712 = vmul.f32 %v1706, %v1706
    %v1713 = vsel %vm342, %v1707, 0.0
    %1714 = vadd.xlane.f32.xlu0 %v1713
    %v1715 = vpop.xlane.xlu0 %1714
    %v1716 = vsel %vm342, %v1708, 0.0
    %1717 = vadd.xlane.f32.xlu0 %v1716
    %v1718 = vpop.xlane.xlu0 %1717
    %v1719 = vsel %vm342, %v1709, 0.0
    %1720 = vadd.xlane.f32.xlu0 %v1719
    %v1721 = vpop.xlane.xlu0 %1720
    %v1722 = vsel %vm342, %v1710, 0.0
    %1723 = vadd.xlane.f32.xlu0 %v1722
    %v1724 = vpop.xlane.xlu0 %1723
    %v1725 = vsel %vm342, %v1711, 0.0
    %1726 = vadd.xlane.f32.xlu0 %v1725
    %v1727 = vpop.xlane.xlu0 %1726
    %v1728 = vsel %vm342, %v1712, 0.0
    %1729 = vadd.xlane.f32.xlu0 %v1728
    %v1730 = vpop.xlane.xlu0 %1729
    %v1731 = vmul.f32 %v1715, %v1694
    %v1732 = vmul.f32 %v1718, %v1694
    %v1733 = vmul.f32 %v1721, %v1694
    %v1734 = vmul.f32 %v1724, %v1694
    %v1735 = vmul.f32 %v1727, %v1694
    %v1736 = vmul.f32 %v1730, %v1694
    %v1737 = vadd.f32 %v1731, 1e-05
    %v1738 = vadd.f32 %v1732, 1e-05
    %v1739 = vadd.f32 %v1733, 1e-05
    %v1740 = vadd.f32 %v1734, 1e-05
    %v1741 = vadd.f32 %v1735, 1e-05
    %v1742 = vadd.f32 %v1736, 1e-05
    %v1743 = vrsqrt.pop %v1737
    %v1744 = vrsqrt.pop %v1738
    %v1745 = vrsqrt.pop %v1739
    %v1746 = vrsqrt.pop %v1740
    %v1747 = vrsqrt.pop %v1741
    %v1748 = vrsqrt.pop %v1742
    %v1749 = vmul.f32 %v1701, %v1743
    %v1750 = vmul.f32 %v1702, %v1744
    %v1751 = vmul.f32 %v1703, %v1745
    %v1752 = vmul.f32 %v1704, %v1746
    %v1753 = vmul.f32 %v1705, %v1747
    %v1754 = vmul.f32 %v1706, %v1748
    %v1756 = vlaneseq
    %v1757 = vshrl.u32 %v1756, 7
    %v1758 = vsub.s32 0, %v1757
    %v1759 = vrot.slane %v1674, %v1758
    %v1761 = vmul.f32 %v1749, %v1759
    %v1762 = vmul.f32 %v1750, %v1759
    %v1763 = vmul.f32 %v1751, %v1759
    %v1764 = vmul.f32 %v1752, %v1759
    %v1765 = vmul.f32 %v1753, %v1759
    %v1766 = vmul.f32 %v1754, %v1759
    %v1768 = vlaneseq
    %v1769 = vshrl.u32 %v1768, 7
    %v1770 = vsub.s32 0, %v1769
    %v1771 = vrot.slane %v1675, %v1770
    %v1773 = vadd.f32 %v1761, %v1771
    %v1774 = vadd.f32 %v1762, %v1771
    %v1775 = vadd.f32 %v1763, %v1771
    %v1776 = vadd.f32 %v1764, %v1771
    %v1777 = vadd.f32 %v1765, %v1771
    %v1778 = vadd.f32 %v1766, %v1771
    %v1779 = vpack.c.bf16 %v1774, %v1773
    %v1780 = vpack.c.bf16 %v1776, %v1775
    %v1781 = vpack.c.bf16 %v1778, %v1777
    %v1782 = vld [vmem:[#allocation16] sm:$0xf]
    %v1783 = vld [vmem:[#allocation16 + $0x4] sm:$0xf]
    %v1784 = vld [vmem:[#allocation16 + $0x8] sm:$0xf]
    %v1785 = vld [vmem:[#allocation16 + $0xc] sm:$0xf]
    %v1786 = vld [vmem:[#allocation17] sm:$0x1]
    %v1788 = vlaneseq
    %v1789 = vshrl.u32 %v1788, 7
    %v1790 = vsub.s32 0, %v1789
    %v1791 = vrot.slane %v1786, %v1790
    %v1797 = vunpack.c.l.b16 %v1782
    %v1798 = vunpack.c.l.b16 %v1783
    %v1799 = vunpack.c.l.b16 %v1784
    %v1800 = vunpack.c.l.b16 %v1785
    %v1801 = vpack.c.b16 %v1798, %v1797
    %v1802 = vpack.c.b16 %v1800, %v1799
    %v1806 = vsel %vm342, %v1779, 0
    %v1809 = vsel %vm342, %v1780, 0
    %v1812 = vsel %vm342, %v1781, 0
    %1814 = vmatprep.subr.bf16.mxu0 0
    %1815 = vmatpush1.bf16.msra.mxu0 %v1801
    %1816 = vmatprep.subr.bf16.mxu0 0
    %1817 = vmatpush1.bf16.msra.mxu0 %v1802
    %1818 = vmatprep.subr.bf16.mxu0 0
    %1819 = vmatpush1.bf16.msra.mxu0 0
    %1820 = vmatprep.subr.bf16.mxu0 0
    %1821 = vmatpush1.bf16.msra.mxu0 0
    %1822 = vmatprep.subr.bf16.mxu0 0
    %1823 = vmatpush1.bf16.msra.mxu0 0
    %1824 = vmatprep.subr.bf16.mxu0 0
    %1825 = vmatpush1.bf16.msra.mxu0 0
    %1826 = vmatprep.subr.bf16.mxu0 0
    %1827 = vmatpush1.bf16.msra.mxu0 0
    %1828 = vmatprep.subr.bf16.mxu0 0
    %1829 = vmatpush1.bf16.msra.mxu0 0
    %1830 = vmatprep.subr.bf16.mxu0 0
    %1831 = vmatpush1.bf16.msra.mxu0 0
    %1832 = vmatprep.subr.bf16.mxu0 0
    %1833 = vmatpush1.bf16.msra.mxu0 0
    %1834 = vmatprep.subr.bf16.mxu0 0
    %1835 = vmatpush1.bf16.msra.mxu0 0
    %1836 = vmatprep.subr.bf16.mxu0 0
    %1837 = vmatpush1.bf16.msra.mxu0 0
    %1838 = vmatprep.subr.bf16.mxu0 0
    %1839 = vmatpush1.bf16.msra.mxu0 0
    %1840 = vmatprep.subr.bf16.mxu0 0
    %1841 = vmatpush1.bf16.msra.mxu0 0
    %1842 = vmatprep.subr.bf16.mxu0 0
    %1843 = vmatpush1.bf16.msra.mxu0 0
    %1844 = vmatprep.subr.bf16.mxu0 0
    %1845 = vmatpush1.bf16.msra.mxu0 0
    %1846 = vmatprep.mubr.bf16.mxu0 0
    %1847 = vmatmul.mubr.bf16.gmra.mrb[0].mxu0 %v1806
    %v1848 = vpop.f32.mrb[0].mxu0
    %v1849 = vadd.f32 %v1791, %v1848
    %v1850 = vpop.f32.mrb[0].mxu0
    %v1851 = vpop.f32.mrb[0].mxu0
    %v1852 = vadd.f32 %v1791, %v1851
    %v1853 = vpop.f32.mrb[0].mxu0
    %1854 = vmatprep.mubr.bf16.mxu0 0
    %1855 = vmatmul.mubr.bf16.gmra.mrb[0].mxu0 %v1809
    %v1856 = vpop.f32.mrb[0].mxu0
    %v1857 = vadd.f32 %v1791, %v1856
    %v1858 = vpop.f32.mrb[0].mxu0
    %v1859 = vpop.f32.mrb[0].mxu0
    %v1860 = vadd.f32 %v1791, %v1859
    %v1861 = vpop.f32.mrb[0].mxu0
    %1862 = vmatprep.mubr.bf16.mxu0 0
    %1863 = vmatmul.mubr.bf16.gmra.mrb[0].mxu0 %v1812
    %v1864 = vpop.f32.mrb[0].mxu0
    %v1865 = vadd.f32 %v1791, %v1864
    %v1866 = vpop.f32.mrb[0].mxu0
    %v1867 = vpop.f32.mrb[0].mxu0
    %v1868 = vadd.f32 %v1791, %v1867
    %v1869 = vpop.f32.mrb[0].mxu0
    %1870 = vdwg.mxu0
    %v1871 = vmax.f32 %v1849, 0.0
    %v1872 = vmax.f32 %v1852, 0.0
    %v1873 = vmax.f32 %v1857, 0.0
    %v1874 = vmax.f32 %v1860, 0.0
    %v1875 = vmax.f32 %v1865, 0.0
    %v1876 = vmax.f32 %v1868, 0.0
    %v1877 = vpack.c.bf16 %v1872, %v1871
    %v1878 = vpack.c.bf16 %v1874, %v1873
    %v1879 = vpack.c.bf16 %v1876, %v1875
    %v1880 = vld [vmem:[#allocation19] sm:$0xf]
    %v1881 = vld [vmem:[#allocation19 + $0x4] sm:$0xf]
    %v1882 = vld [vmem:[#allocation19 + $0x8] sm:$0xf]
    %v1883 = vld [vmem:[#allocation19 + $0xc] sm:$0xf]
    %v1884 = vld [vmem:[#allocation19 + $0x10] sm:$0xf]
    %v1885 = vld [vmem:[#allocation19 + $0x14] sm:$0xf]
    %v1886 = vld [vmem:[#allocation19 + $0x18] sm:$0xf]
    %v1887 = vld [vmem:[#allocation19 + $0x1c] sm:$0xf]
    %v1888 = vld [vmem:[#allocation20] sm:$0x1]
    %v1890 = vlaneseq
    %v1891 = vshrl.u32 %v1890, 7
    %v1892 = vsub.s32 0, %v1891
    %v1893 = vrot.slane %v1888, %v1892
    %v1903 = vunpack.c.l.b16 %v1880
    %v1904 = vunpack.c.l.b16 %v1881
    %v1905 = vunpack.c.l.b16 %v1882
    %v1906 = vunpack.c.l.b16 %v1883
    %v1907 = vunpack.c.l.b16 %v1884
    %v1908 = vunpack.c.l.b16 %v1885
    %v1909 = vunpack.c.l.b16 %v1886
    %v1910 = vunpack.c.l.b16 %v1887
    %v1911 = vpack.c.b16 %v1904, %v1903
    %v1912 = vpack.c.b16 %v1906, %v1905
    %v1913 = vpack.c.b16 %v1908, %v1907
    %v1914 = vpack.c.b16 %v1910, %v1909
    %vm1919 = vcmask 523264
    %v1921 = vsel %vm1919, %v1877, 0
    %v1924 = vsel %vm1919, %v1878, 0
    %v1927 = vsel %vm1919, %v1879, 0
    %1929 = vmatprep.subr.bf16.mxu0 0
    %1930 = vmatpush1.bf16.msra.mxu0 %v1911
    %1931 = vmatprep.subr.bf16.mxu0 0
    %1932 = vmatpush1.bf16.msra.mxu0 %v1912
    %1933 = vmatprep.subr.bf16.mxu0 0
    %1934 = vmatpush1.bf16.msra.mxu0 %v1913
    %1935 = vmatprep.subr.bf16.mxu0 0
    %1936 = vmatpush1.bf16.msra.mxu0 %v1914
    %1937 = vmatprep.subr.bf16.mxu0 0
    %1938 = vmatpush1.bf16.msra.mxu0 0
    %1939 = vmatprep.subr.bf16.mxu0 0
    %1940 = vmatpush1.bf16.msra.mxu0 0
    %1941 = vmatprep.subr.bf16.mxu0 0
    %1942 = vmatpush1.bf16.msra.mxu0 0
    %1943 = vmatprep.subr.bf16.mxu0 0
    %1944 = vmatpush1.bf16.msra.mxu0 0
    %1945 = vmatprep.subr.bf16.mxu0 0
    %1946 = vmatpush1.bf16.msra.mxu0 0
    %1947 = vmatprep.subr.bf16.mxu0 0
    %1948 = vmatpush1.bf16.msra.mxu0 0
    %1949 = vmatprep.subr.bf16.mxu0 0
    %1950 = vmatpush1.bf16.msra.mxu0 0
    %1951 = vmatprep.subr.bf16.mxu0 0
    %1952 = vmatpush1.bf16.msra.mxu0 0
    %1953 = vmatprep.subr.bf16.mxu0 0
    %1954 = vmatpush1.bf16.msra.mxu0 0
    %1955 = vmatprep.subr.bf16.mxu0 0
    %1956 = vmatpush1.bf16.msra.mxu0 0
    %1957 = vmatprep.subr.bf16.mxu0 0
    %1958 = vmatpush1.bf16.msra.mxu0 0
    %1959 = vmatprep.subr.bf16.mxu0 0
    %1960 = vmatpush1.bf16.msra.mxu0 0
    %1961 = vmatprep.mubr.bf16.mxu0 0
    %1962 = vmatmul.mubr.bf16.gmra.mrb[0].mxu0 %v1921
    %v1963 = vpop.f32.mrb[0].mxu0
    %v1964 = vadd.f32 %v1893, %v1963
    %v1965 = vpop.f32.mrb[0].mxu0
    %v1966 = vpop.f32.mrb[0].mxu0
    %v1967 = vadd.f32 %v1893, %v1966
    %v1968 = vpop.f32.mrb[0].mxu0
    %1969 = vmatprep.mubr.bf16.mxu0 0
    %1970 = vmatmul.mubr.bf16.gmra.mrb[0].mxu0 %v1924
    %v1971 = vpop.f32.mrb[0].mxu0
    %v1972 = vadd.f32 %v1893, %v1971
    %v1973 = vpop.f32.mrb[0].mxu0
    %v1974 = vpop.f32.mrb[0].mxu0
    %v1975 = vadd.f32 %v1893, %v1974
    %v1976 = vpop.f32.mrb[0].mxu0
    %1977 = vmatprep.mubr.bf16.mxu0 0
    %1978 = vmatmul.mubr.bf16.gmra.mrb[0].mxu0 %v1927
    %v1979 = vpop.f32.mrb[0].mxu0
    %v1980 = vadd.f32 %v1893, %v1979
    %v1981 = vpop.f32.mrb[0].mxu0
    %v1982 = vpop.f32.mrb[0].mxu0
    %v1983 = vadd.f32 %v1893, %v1982
    %v1984 = vpop.f32.mrb[0].mxu0
    %1985 = vdwg.mxu0
    %v1986 = vadd.f32 %v1773, %v1964
    %v1987 = vadd.f32 %v1774, %v1967
    %v1988 = vadd.f32 %v1775, %v1972
    %v1989 = vadd.f32 %v1776, %v1975
    %v1990 = vadd.f32 %v1777, %v1980
    %v1991 = vadd.f32 %v1778, %v1983
    %v1992 = vld [vmem:[#allocation22] sm:$0x1]
    %v1993 = vld [vmem:[#allocation23] sm:$0x1]
    %v1994 = vsel %vm342, %v1986, 0.0
    %1995 = vadd.xlane.f32.xlu0 %v1994
    %v1996 = vpop.xlane.xlu0 %1995
    %v1997 = vsel %vm342, %v1987, 0.0
    %1998 = vadd.xlane.f32.xlu0 %v1997
    %v1999 = vpop.xlane.xlu0 %1998
    %v2000 = vsel %vm342, %v1988, 0.0
    %2001 = vadd.xlane.f32.xlu0 %v2000
    %v2002 = vpop.xlane.xlu0 %2001
    %v2003 = vsel %vm342, %v1989, 0.0
    %2004 = vadd.xlane.f32.xlu0 %v2003
    %v2005 = vpop.xlane.xlu0 %2004
    %v2006 = vsel %vm342, %v1990, 0.0
    %2007 = vadd.xlane.f32.xlu0 %v2006
    %v2008 = vpop.xlane.xlu0 %2007
    %v2009 = vsel %vm342, %v1991, 0.0
    %2010 = vadd.xlane.f32.xlu0 %v2009
    %v2011 = vpop.xlane.xlu0 %2010
    %v2012 = vmul.f32 %v1996, %v1694
    %v2013 = vmul.f32 %v1999, %v1694
    %v2014 = vmul.f32 %v2002, %v1694
    %v2015 = vmul.f32 %v2005, %v1694
    %v2016 = vmul.f32 %v2008, %v1694
    %v2017 = vmul.f32 %v2011, %v1694
    %v2018 = vsub.f32 %v1986, %v2012
    %v2019 = vsub.f32 %v1987, %v2013
    %v2020 = vsub.f32 %v1988, %v2014
    %v2021 = vsub.f32 %v1989, %v2015
    %v2022 = vsub.f32 %v1990, %v2016
    %v2023 = vsub.f32 %v1991, %v2017
    %v2024 = vmul.f32 %v2018, %v2018
    %v2025 = vmul.f32 %v2019, %v2019
    %v2026 = vmul.f32 %v2020, %v2020
    %v2027 = vmul.f32 %v2021, %v2021
    %v2028 = vmul.f32 %v2022, %v2022
    %v2029 = vmul.f32 %v2023, %v2023
    %v2030 = vsel %vm342, %v2024, 0.0
    %2031 = vadd.xlane.f32.xlu0 %v2030
    %v2032 = vpop.xlane.xlu0 %2031
    %v2033 = vsel %vm342, %v2025, 0.0
    %2034 = vadd.xlane.f32.xlu0 %v2033
    %v2035 = vpop.xlane.xlu0 %2034
    %v2036 = vsel %vm342, %v2026, 0.0
    %2037 = vadd.xlane.f32.xlu0 %v2036
    %v2038 = vpop.xlane.xlu0 %2037
    %v2039 = vsel %vm342, %v2027, 0.0
    %2040 = vadd.xlane.f32.xlu0 %v2039
    %v2041 = vpop.xlane.xlu0 %2040
    %v2042 = vsel %vm342, %v2028, 0.0
    %2043 = vadd.xlane.f32.xlu0 %v2042
    %v2044 = vpop.xlane.xlu0 %2043
    %v2045 = vsel %vm342, %v2029, 0.0
    %2046 = vadd.xlane.f32.xlu0 %v2045
    %v2047 = vpop.xlane.xlu0 %2046
    %v2048 = vmul.f32 %v2032, %v1694
    %v2049 = vmul.f32 %v2035, %v1694
    %v2050 = vmul.f32 %v2038, %v1694
    %v2051 = vmul.f32 %v2041, %v1694
    %v2052 = vmul.f32 %v2044, %v1694
    %v2053 = vmul.f32 %v2047, %v1694
    %v2054 = vadd.f32 %v2048, 1e-05
    %v2055 = vadd.f32 %v2049, 1e-05
    %v2056 = vadd.f32 %v2050, 1e-05
    %v2057 = vadd.f32 %v2051, 1e-05
    %v2058 = vadd.f32 %v2052, 1e-05
    %v2059 = vadd.f32 %v2053, 1e-05
    %v2060 = vrsqrt.pop %v2054
    %v2061 = vrsqrt.pop %v2055
    %v2062 = vrsqrt.pop %v2056
    %v2063 = vrsqrt.pop %v2057
    %v2064 = vrsqrt.pop %v2058
    %v2065 = vrsqrt.pop %v2059
    %v2066 = vmul.f32 %v2018, %v2060
    %v2067 = vmul.f32 %v2019, %v2061
    %v2068 = vmul.f32 %v2020, %v2062
    %v2069 = vmul.f32 %v2021, %v2063
    %v2070 = vmul.f32 %v2022, %v2064
    %v2071 = vmul.f32 %v2023, %v2065
    %v2073 = vlaneseq
    %v2074 = vshrl.u32 %v2073, 7
    %v2075 = vsub.s32 0, %v2074
    %v2076 = vrot.slane %v1992, %v2075
    %v2078 = vmul.f32 %v2066, %v2076
    %v2079 = vmul.f32 %v2067, %v2076
    %v2080 = vmul.f32 %v2068, %v2076
    %v2081 = vmul.f32 %v2069, %v2076
    %v2082 = vmul.f32 %v2070, %v2076
    %v2083 = vmul.f32 %v2071, %v2076
    %v2085 = vlaneseq
    %v2086 = vshrl.u32 %v2085, 7
    %v2087 = vsub.s32 0, %v2086
    %v2088 = vrot.slane %v1993, %v2087
    %v2090 = vadd.f32 %v2078, %v2088
    %v2091 = vadd.f32 %v2079, %v2088
    %v2092 = vadd.f32 %v2080, %v2088
    %v2093 = vadd.f32 %v2081, %v2088
    %v2094 = vadd.f32 %v2082, %v2088
    %v2095 = vadd.f32 %v2083, %v2088
    %v2096 = vpack.c.bf16 %v2091, %v2090
    %v2097 = vpack.c.bf16 %v2093, %v2092
    %v2098 = vpack.c.bf16 %v2095, %v2094
    %s2099 = scalar_lea.vmem [#allocation7], 16
    %v2100 = vld [vmem:[%s2099] sm:$0xf]
    %v2101 = vld [vmem:[%s2099 + $0x4] sm:$0xf]
    %v2102 = vld [vmem:[%s2099 + $0x8] sm:$0xf]
    %v2103 = vld [vmem:[%s2099 + $0xc] sm:$0xf]
    %s2104 = scalar_lea.vmem [#allocation8], 1
    %v2105 = vld [vmem:[%s2104] sm:$0x1]
    %v2107 = vlaneseq
    %v2108 = vshrl.u32 %v2107, 7
    %v2109 = vsub.s32 0, %v2108
    %v2110 = vrot.slane %v2105, %v2109
    %v2116 = vunpack.c.l.b16 %v2100
    %v2117 = vunpack.c.l.b16 %v2101
    %v2118 = vunpack.c.l.b16 %v2102
    %v2119 = vunpack.c.l.b16 %v2103
    %v2120 = vpack.c.b16 %v2117, %v2116
    %v2121 = vpack.c.b16 %v2119, %v2118
    %v2125 = vsel %vm342, %v2096, 0
    %v2128 = vsel %vm342, %v2097, 0
    %v2131 = vsel %vm342, %v2098, 0
    %2133 = vmatprep.subr.bf16.mxu0 0
    %2134 = vmatpush1.bf16.msra.mxu0 %v2120
    %2135 = vmatprep.subr.bf16.mxu0 0
    %2136 = vmatpush1.bf16.msra.mxu0 %v2121
    %2137 = vmatprep.subr.bf16.mxu0 0
    %2138 = vmatpush1.bf16.msra.mxu0 0
    %2139 = vmatprep.subr.bf16.mxu0 0
    %2140 = vmatpush1.bf16.msra.mxu0 0
    %2141 = vmatprep.subr.bf16.mxu0 0
    %2142 = vmatpush1.bf16.msra.mxu0 0
    %2143 = vmatprep.subr.bf16.mxu0 0
    %2144 = vmatpush1.bf16.msra.mxu0 0
    %2145 = vmatprep.subr.bf16.mxu0 0
    %2146 = vmatpush1.bf16.msra.mxu0 0
    %2147 = vmatprep.subr.bf16.mxu0 0
    %2148 = vmatpush1.bf16.msra.mxu0 0
    %2149 = vmatprep.subr.bf16.mxu0 0
    %2150 = vmatpush1.bf16.msra.mxu0 0
    %2151 = vmatprep.subr.bf16.mxu0 0
    %2152 = vmatpush1.bf16.msra.mxu0 0
    %2153 = vmatprep.subr.bf16.mxu0 0
    %2154 = vmatpush1.bf16.msra.mxu0 0
    %2155 = vmatprep.subr.bf16.mxu0 0
    %2156 = vmatpush1.bf16.msra.mxu0 0
    %2157 = vmatprep.subr.bf16.mxu0 0
    %2158 = vmatpush1.bf16.msra.mxu0 0
    %2159 = vmatprep.subr.bf16.mxu0 0
    %2160 = vmatpush1.bf16.msra.mxu0 0
    %2161 = vmatprep.subr.bf16.mxu0 0
    %2162 = vmatpush1.bf16.msra.mxu0 0
    %2163 = vmatprep.subr.bf16.mxu0 0
    %2164 = vmatpush1.bf16.msra.mxu0 0
    %2165 = vmatprep.mubr.bf16.mxu0 0
    %2166 = vmatmul.mubr.bf16.gmra.mrb[0].mxu0 %v2125
    %v2167 = vpop.f32.mrb[0].mxu0
    %v2168 = vadd.f32 %v2110, %v2167
    %v2169 = vpop.f32.mrb[0].mxu0
    %v2170 = vpop.f32.mrb[0].mxu0
    %v2171 = vadd.f32 %v2110, %v2170
    %v2172 = vpop.f32.mrb[0].mxu0
    %2173 = vmatprep.mubr.bf16.mxu0 0
    %2174 = vmatmul.mubr.bf16.gmra.mrb[0].mxu0 %v2128
    %v2175 = vpop.f32.mrb[0].mxu0
    %v2176 = vadd.f32 %v2110, %v2175
    %v2177 = vpop.f32.mrb[0].mxu0
    %v2178 = vpop.f32.mrb[0].mxu0
    %v2179 = vadd.f32 %v2110, %v2178
    %v2180 = vpop.f32.mrb[0].mxu0
    %2181 = vmatprep.mubr.bf16.mxu0 0
    %2182 = vmatmul.mubr.bf16.gmra.mrb[0].mxu0 %v2131
    %v2183 = vpop.f32.mrb[0].mxu0
    %v2184 = vadd.f32 %v2110, %v2183
    %v2185 = vpop.f32.mrb[0].mxu0
    %v2186 = vpop.f32.mrb[0].mxu0
    %v2187 = vadd.f32 %v2110, %v2186
    %v2188 = vpop.f32.mrb[0].mxu0
    %2189 = vdwg.mxu0
    %v2190 = vmul.f32 %v2168, 0.35355338
    %v2191 = vmul.f32 %v2171, 0.35355338
    %v2192 = vmul.f32 %v2176, 0.35355338
    %v2193 = vmul.f32 %v2179, 0.35355338
    %v2194 = vmul.f32 %v2184, 0.35355338
    %v2195 = vmul.f32 %v2187, 0.35355338
    %v2196 = vpack.c.bf16 %v2191, %v2190
    %v2197 = vpack.c.bf16 %v2193, %v2192
    %v2198 = vpack.c.bf16 %v2195, %v2194
    %v2199 = vpack.c.bf16 %v2171, %v2168
    %v2200 = vpack.c.bf16 %v2179, %v2176
    %v2201 = vpack.c.bf16 %v2187, %v2184
    %2205 = vrot.lane.b32.xlu0 %v2199, 96
    %v2206 = vpop.permute.xlu0 %2205
    %2207 = vrot.lane.b32.xlu0 %v2200, 96
    %v2208 = vpop.permute.xlu0 %2207
    %2209 = vrot.lane.b32.xlu0 %v2201, 96
    %v2210 = vpop.permute.xlu0 %2209
    %v2212 = vsel %vm430, %v2196, 0
    %v2215 = vsel %vm430, %v2197, 0
    %v2218 = vsel %vm430, %v2198, 0
    %v2221 = vsel %vm430, %v2206, 0
    %v2224 = vsel %vm430, %v2208, 0
    %v2227 = vsel %vm430, %v2210, 0
    %2229 = vmatprep.subr.bf16.mxu0 0
    %2230 = vmatpush1.bf16.xpose.msra.mxu0 %v2221
    %2231 = vmatprep.subr.bf16.mxu0 0
    %2232 = vmatpush1.bf16.xpose.msra.mxu0 %v2224
    %2233 = vmatprep.subr.bf16.mxu0 0
    %2234 = vmatpush1.bf16.xpose.msra.mxu0 %v2227
    %2235 = vmatprep.subr.bf16.mxu0 0
    %2236 = vmatpush1.bf16.xpose.msra.mxu0 0
    %2237 = vmatprep.subr.bf16.mxu0 0
    %2238 = vmatpush1.bf16.xpose.msra.mxu0 0
    %2239 = vmatprep.subr.bf16.mxu0 0
    %2240 = vmatpush1.bf16.xpose.msra.mxu0 0
    %2241 = vmatprep.subr.bf16.mxu0 0
    %2242 = vmatpush1.bf16.xpose.msra.mxu0 0
    %2243 = vmatprep.subr.bf16.mxu0 0
    %2244 = vmatpush1.bf16.xpose.msra.mxu0 0
    %2245 = vmatprep.subr.bf16.mxu0 0
    %2246 = vmatpush1.bf16.xpose.msra.mxu0 0
    %2247 = vmatprep.subr.bf16.mxu0 0
    %2248 = vmatpush1.bf16.xpose.msra.mxu0 0
    %2249 = vmatprep.subr.bf16.mxu0 0
    %2250 = vmatpush1.bf16.xpose.msra.mxu0 0
    %2251 = vmatprep.subr.bf16.mxu0 0
    %2252 = vmatpush1.bf16.xpose.msra.mxu0 0
    %2253 = vmatprep.subr.bf16.mxu0 0
    %2254 = vmatpush1.bf16.xpose.msra.mxu0 0
    %2255 = vmatprep.subr.bf16.mxu0 0
    %2256 = vmatpush1.bf16.xpose.msra.mxu0 0
    %2257 = vmatprep.subr.bf16.mxu0 0
    %2258 = vmatpush1.bf16.xpose.msra.mxu0 0
    %2259 = vmatprep.subr.bf16.mxu0 0
    %2260 = vmatpush1.bf16.xpose.msra.mxu0 0
    %2261 = vmatprep.mubr.bf16.mxu0 0
    %2262 = vmatmul.mubr.bf16.gmra.mrb[0].mxu0 %v2212
    %v2263 = vpop.f32.mrb[0].mxu0
    %v2264 = vadd.f32 %v310, %v2263
    %v2265 = vpop.f32.mrb[0].mxu0
    %v2266 = vpop.f32.mrb[0].mxu0
    %v2267 = vadd.f32 %v311, %v2266
    %v2268 = vpop.f32.mrb[0].mxu0
    %2269 = vmatprep.mubr.bf16.mxu0 0
    %2270 = vmatmul.mubr.bf16.gmra.mrb[0].mxu0 %v2215
    %v2271 = vpop.f32.mrb[0].mxu0
    %v2272 = vadd.f32 %v312, %v2271
    %v2273 = vpop.f32.mrb[0].mxu0
    %v2274 = vpop.f32.mrb[0].mxu0
    %v2275 = vadd.f32 %v313, %v2274
    %v2276 = vpop.f32.mrb[0].mxu0
    %2277 = vmatprep.mubr.bf16.mxu0 0
    %2278 = vmatmul.mubr.bf16.gmra.mrb[0].mxu0 %v2218
    %v2279 = vpop.f32.mrb[0].mxu0
    %v2280 = vadd.f32 %v314, %v2279
    %v2281 = vpop.f32.mrb[0].mxu0
    %v2282 = vpop.f32.mrb[0].mxu0
    %v2283 = vadd.f32 %v315, %v2282
    %v2284 = vpop.f32.mrb[0].mxu0
    %2285 = vdwg.mxu0
    %v2286 = vsel %vm506, %v2264, -inf
    %2287 = vmax.xlane.f32.xlu0 %v2286
    %v2288 = vpop.xlane.xlu0 %2287
    %v2289 = vsel %vm506, %v2267, -inf
    %2290 = vmax.xlane.f32.xlu0 %v2289
    %v2291 = vpop.xlane.xlu0 %2290
    %v2292 = vsel %vm506, %v2272, -inf
    %2293 = vmax.xlane.f32.xlu0 %v2292
    %v2294 = vpop.xlane.xlu0 %2293
    %v2295 = vsel %vm506, %v2275, -inf
    %2296 = vmax.xlane.f32.xlu0 %v2295
    %v2297 = vpop.xlane.xlu0 %2296
    %v2298 = vsel %vm506, %v2280, -inf
    %2299 = vmax.xlane.f32.xlu0 %v2298
    %v2300 = vpop.xlane.xlu0 %2299
    %v2301 = vsel %vm506, %v2283, -inf
    %2302 = vmax.xlane.f32.xlu0 %v2301
    %v2303 = vpop.xlane.xlu0 %2302
    %v2304 = vsub.f32 %v2264, %v2288
    %v2305 = vsub.f32 %v2267, %v2291
    %v2306 = vsub.f32 %v2272, %v2294
    %v2307 = vsub.f32 %v2275, %v2297
    %v2308 = vsub.f32 %v2280, %v2300
    %v2309 = vsub.f32 %v2283, %v2303
    %v2310 = vmul.f32 %v2304, 1.442695
    %v2311 = vpow.pop %v2310
    %v2312 = vmul.f32 %v2305, 1.442695
    %v2313 = vpow.pop %v2312
    %v2314 = vmul.f32 %v2306, 1.442695
    %v2315 = vpow.pop %v2314
    %v2316 = vmul.f32 %v2307, 1.442695
    %v2317 = vpow.pop %v2316
    %v2318 = vmul.f32 %v2308, 1.442695
    %v2319 = vpow.pop %v2318
    %v2320 = vmul.f32 %v2309, 1.442695
    %v2321 = vpow.pop %v2320
    %v2322 = vsel %vm506, %v2311, 0.0
    %2323 = vadd.xlane.f32.xlu0 %v2322
    %v2324 = vpop.xlane.xlu0 %2323
    %v2325 = vsel %vm506, %v2313, 0.0
    %2326 = vadd.xlane.f32.xlu0 %v2325
    %v2327 = vpop.xlane.xlu0 %2326
    %v2328 = vsel %vm506, %v2315, 0.0
    %2329 = vadd.xlane.f32.xlu0 %v2328
    %v2330 = vpop.xlane.xlu0 %2329
    %v2331 = vsel %vm506, %v2317, 0.0
    %2332 = vadd.xlane.f32.xlu0 %v2331
    %v2333 = vpop.xlane.xlu0 %2332
    %v2334 = vsel %vm506, %v2319, 0.0
    %2335 = vadd.xlane.f32.xlu0 %v2334
    %v2336 = vpop.xlane.xlu0 %2335
    %v2337 = vsel %vm506, %v2321, 0.0
    %2338 = vadd.xlane.f32.xlu0 %v2337
    %v2339 = vpop.xlane.xlu0 %2338
    %v2340 = vrcp.pop %v2324
    %v2341 = vrcp.pop %v2327
    %v2342 = vrcp.pop %v2330
    %v2343 = vrcp.pop %v2333
    %v2344 = vrcp.pop %v2336
    %v2345 = vrcp.pop %v2339
    %v2346 = vmul.f32 %v2311, %v2340
    %v2347 = vmul.f32 %v2313, %v2341
    %v2348 = vmul.f32 %v2315, %v2342
    %v2349 = vmul.f32 %v2317, %v2343
    %v2350 = vmul.f32 %v2319, %v2344
    %v2351 = vmul.f32 %v2321, %v2345
    %v2352 = vpack.c.bf16 %v2347, %v2346
    %v2353 = vpack.c.bf16 %v2349, %v2348
    %v2354 = vpack.c.bf16 %v2351, %v2350
    %2355 = vrot.lane.b32.xlu0 %v2199, 64
    %v2356 = vpop.permute.xlu0 %2355
    %2357 = vrot.lane.b32.xlu0 %v2200, 64
    %v2358 = vpop.permute.xlu0 %2357
    %2359 = vrot.lane.b32.xlu0 %v2201, 64
    %v2360 = vpop.permute.xlu0 %2359
    %v2365 = vsel %vm506, %v2352, 0
    %v2368 = vsel %vm506, %v2353, 0
    %v2371 = vsel %vm506, %v2354, 0
    %2373 = vmatprep.subr.bf16.mxu0 0
    %2374 = vmatpush1.bf16.msra.mxu0 %v2356
    %2375 = vmatprep.subr.bf16.mxu0 0
    %2376 = vmatpush1.bf16.msra.mxu0 %v2358
    %2377 = vmatprep.subr.bf16.mxu0 0
    %2378 = vmatpush1.bf16.msra.mxu0 %v2360
    %2379 = vmatprep.subr.bf16.mxu0 0
    %2380 = vmatpush1.bf16.msra.mxu0 0
    %2381 = vmatprep.subr.bf16.mxu0 0
    %2382 = vmatpush1.bf16.msra.mxu0 0
    %2383 = vmatprep.subr.bf16.mxu0 0
    %2384 = vmatpush1.bf16.msra.mxu0 0
    %2385 = vmatprep.subr.bf16.mxu0 0
    %2386 = vmatpush1.bf16.msra.mxu0 0
    %2387 = vmatprep.subr.bf16.mxu0 0
    %2388 = vmatpush1.bf16.msra.mxu0 0
    %2389 = vmatprep.subr.bf16.mxu0 0
    %2390 = vmatpush1.bf16.msra.mxu0 0
    %2391 = vmatprep.subr.bf16.mxu0 0
    %2392 = vmatpush1.bf16.msra.mxu0 0
    %2393 = vmatprep.subr.bf16.mxu0 0
    %2394 = vmatpush1.bf16.msra.mxu0 0
    %2395 = vmatprep.subr.bf16.mxu0 0
    %2396 = vmatpush1.bf16.msra.mxu0 0
    %2397 = vmatprep.subr.bf16.mxu0 0
    %2398 = vmatpush1.bf16.msra.mxu0 0
    %2399 = vmatprep.subr.bf16.mxu0 0
    %2400 = vmatpush1.bf16.msra.mxu0 0
    %2401 = vmatprep.subr.bf16.mxu0 0
    %2402 = vmatpush1.bf16.msra.mxu0 0
    %2403 = vmatprep.subr.bf16.mxu0 0
    %2404 = vmatpush1.bf16.msra.mxu0 0
    %2405 = vmatprep.mubr.bf16.mxu0 0
    %2406 = vmatmul.mubr.bf16.gmra.mrb[0].mxu0 %v2365
    %v2407 = vpop.f32.mrb[0].mxu0
    %v2408 = vadd.f32 0.0, %v2407
    %v2409 = vpop.f32.mrb[0].mxu0
    %v2410 = vpop.f32.mrb[0].mxu0
    %v2411 = vadd.f32 0.0, %v2410
    %v2412 = vpop.f32.mrb[0].mxu0
    %2413 = vmatprep.mubr.bf16.mxu0 0
    %2414 = vmatmul.mubr.bf16.gmra.mrb[0].mxu0 %v2368
    %v2415 = vpop.f32.mrb[0].mxu0
    %v2416 = vadd.f32 0.0, %v2415
    %v2417 = vpop.f32.mrb[0].mxu0
    %v2418 = vpop.f32.mrb[0].mxu0
    %v2419 = vadd.f32 0.0, %v2418
    %v2420 = vpop.f32.mrb[0].mxu0
    %2421 = vmatprep.mubr.bf16.mxu0 0
    %2422 = vmatmul.mubr.bf16.gmra.mrb[0].mxu0 %v2371
    %v2423 = vpop.f32.mrb[0].mxu0
    %v2424 = vadd.f32 0.0, %v2423
    %v2425 = vpop.f32.mrb[0].mxu0
    %v2426 = vpop.f32.mrb[0].mxu0
    %v2427 = vadd.f32 0.0, %v2426
    %v2428 = vpop.f32.mrb[0].mxu0
    %2429 = vdwg.mxu0
    %v2430 = vpack.c.bf16 %v2411, %v2408
    %v2431 = vpack.c.bf16 %v2419, %v2416
    %v2432 = vpack.c.bf16 %v2427, %v2424
    %s2433 = scalar_lea.vmem [#allocation10], 16
    %v2434 = vld [vmem:[%s2433] sm:$0xf]
    %2438 = vrot.lane.b32.xlu0 %v2196, 120
    %v2439 = vpop.permute.xlu0 %2438
    %2440 = vrot.lane.b32.xlu0 %v2197, 120
    %v2441 = vpop.permute.xlu0 %2440
    %2442 = vrot.lane.b32.xlu0 %v2198, 120
    %v2443 = vpop.permute.xlu0 %2442
    %2444 = vrot.lane.b32.xlu0 %v2199, 88
    %v2445 = vpop.permute.xlu0 %2444
    %2446 = vrot.lane.b32.xlu0 %v2200, 88
    %v2447 = vpop.permute.xlu0 %2446
    %2448 = vrot.lane.b32.xlu0 %v2201, 88
    %v2449 = vpop.permute.xlu0 %2448
    %v2451 = vsel %vm430, %v2439, 0
    %v2454 = vsel %vm430, %v2441, 0
    %v2457 = vsel %vm430, %v2443, 0
    %v2460 = vsel %vm430, %v2445, 0
    %v2463 = vsel %vm430, %v2447, 0
    %v2466 = vsel %vm430, %v2449, 0
    %2468 = vmatprep.subr.bf16.mxu0 0
    %2469 = vmatpush1.bf16.xpose.msra.mxu0 %v2460
    %2470 = vmatprep.subr.bf16.mxu0 0
    %2471 = vmatpush1.bf16.xpose.msra.mxu0 %v2463
    %2472 = vmatprep.subr.bf16.mxu0 0
    %2473 = vmatpush1.bf16.xpose.msra.mxu0 %v2466
    %2474 = vmatprep.subr.bf16.mxu0 0
    %2475 = vmatpush1.bf16.xpose.msra.mxu0 0
    %2476 = vmatprep.subr.bf16.mxu0 0
    %2477 = vmatpush1.bf16.xpose.msra.mxu0 0
    %2478 = vmatprep.subr.bf16.mxu0 0
    %2479 = vmatpush1.bf16.xpose.msra.mxu0 0
    %2480 = vmatprep.subr.bf16.mxu0 0
    %2481 = vmatpush1.bf16.xpose.msra.mxu0 0
    %2482 = vmatprep.subr.bf16.mxu0 0
    %2483 = vmatpush1.bf16.xpose.msra.mxu0 0
    %2484 = vmatprep.subr.bf16.mxu0 0
    %2485 = vmatpush1.bf16.xpose.msra.mxu0 0
    %2486 = vmatprep.subr.bf16.mxu0 0
    %2487 = vmatpush1.bf16.xpose.msra.mxu0 0
    %2488 = vmatprep.subr.bf16.mxu0 0
    %2489 = vmatpush1.bf16.xpose.msra.mxu0 0
    %2490 = vmatprep.subr.bf16.mxu0 0
    %2491 = vmatpush1.bf16.xpose.msra.mxu0 0
    %2492 = vmatprep.subr.bf16.mxu0 0
    %2493 = vmatpush1.bf16.xpose.msra.mxu0 0
    %2494 = vmatprep.subr.bf16.mxu0 0
    %2495 = vmatpush1.bf16.xpose.msra.mxu0 0
    %2496 = vmatprep.subr.bf16.mxu0 0
    %2497 = vmatpush1.bf16.xpose.msra.mxu0 0
    %2498 = vmatprep.subr.bf16.mxu0 0
    %2499 = vmatpush1.bf16.xpose.msra.mxu0 0
    %2500 = vmatprep.mubr.bf16.mxu0 0
    %2501 = vmatmul.mubr.bf16.gmra.mrb[0].mxu0 %v2451
    %v2502 = vpop.f32.mrb[0].mxu0
    %v2503 = vadd.f32 %v310, %v2502
    %v2504 = vpop.f32.mrb[0].mxu0
    %v2505 = vpop.f32.mrb[0].mxu0
    %v2506 = vadd.f32 %v311, %v2505
    %v2507 = vpop.f32.mrb[0].mxu0
    %2508 = vmatprep.mubr.bf16.mxu0 0
    %2509 = vmatmul.mubr.bf16.gmra.mrb[0].mxu0 %v2454
    %v2510 = vpop.f32.mrb[0].mxu0
    %v2511 = vadd.f32 %v312, %v2510
    %v2512 = vpop.f32.mrb[0].mxu0
    %v2513 = vpop.f32.mrb[0].mxu0
    %v2514 = vadd.f32 %v313, %v2513
    %v2515 = vpop.f32.mrb[0].mxu0
    %2516 = vmatprep.mubr.bf16.mxu0 0
    %2517 = vmatmul.mubr.bf16.gmra.mrb[0].mxu0 %v2457
    %v2518 = vpop.f32.mrb[0].mxu0
    %v2519 = vadd.f32 %v314, %v2518
    %v2520 = vpop.f32.mrb[0].mxu0
    %v2521 = vpop.f32.mrb[0].mxu0
    %v2522 = vadd.f32 %v315, %v2521
    %v2523 = vpop.f32.mrb[0].mxu0
    %2524 = vdwg.mxu0
    %v2525 = vsel %vm506, %v2503, -inf
    %2526 = vmax.xlane.f32.xlu0 %v2525
    %v2527 = vpop.xlane.xlu0 %2526
    %v2528 = vsel %vm506, %v2506, -inf
    %2529 = vmax.xlane.f32.xlu0 %v2528
    %v2530 = vpop.xlane.xlu0 %2529
    %v2531 = vsel %vm506, %v2511, -inf
    %2532 = vmax.xlane.f32.xlu0 %v2531
    %v2533 = vpop.xlane.xlu0 %2532
    %v2534 = vsel %vm506, %v2514, -inf
    %2535 = vmax.xlane.f32.xlu0 %v2534
    %v2536 = vpop.xlane.xlu0 %2535
    %v2537 = vsel %vm506, %v2519, -inf
    %2538 = vmax.xlane.f32.xlu0 %v2537
    %v2539 = vpop.xlane.xlu0 %2538
    %v2540 = vsel %vm506, %v2522, -inf
    %2541 = vmax.xlane.f32.xlu0 %v2540
    %v2542 = vpop.xlane.xlu0 %2541
    %v2543 = vsub.f32 %v2503, %v2527
    %v2544 = vsub.f32 %v2506, %v2530
    %v2545 = vsub.f32 %v2511, %v2533
    %v2546 = vsub.f32 %v2514, %v2536
    %v2547 = vsub.f32 %v2519, %v2539
    %v2548 = vsub.f32 %v2522, %v2542
    %v2549 = vmul.f32 %v2543, 1.442695
    %v2550 = vpow.pop %v2549
    %v2551 = vmul.f32 %v2544, 1.442695
    %v2552 = vpow.pop %v2551
    %v2553 = vmul.f32 %v2545, 1.442695
    %v2554 = vpow.pop %v2553
    %v2555 = vmul.f32 %v2546, 1.442695
    %v2556 = vpow.pop %v2555
    %v2557 = vmul.f32 %v2547, 1.442695
    %v2558 = vpow.pop %v2557
    %v2559 = vmul.f32 %v2548, 1.442695
    %v2560 = vpow.pop %v2559
    %v2561 = vsel %vm506, %v2550, 0.0
    %2562 = vadd.xlane.f32.xlu0 %v2561
    %v2563 = vpop.xlane.xlu0 %2562
    %v2564 = vsel %vm506, %v2552, 0.0
    %2565 = vadd.xlane.f32.xlu0 %v2564
    %v2566 = vpop.xlane.xlu0 %2565
    %v2567 = vsel %vm506, %v2554, 0.0
    %2568 = vadd.xlane.f32.xlu0 %v2567
    %v2569 = vpop.xlane.xlu0 %2568
    %v2570 = vsel %vm506, %v2556, 0.0
    %2571 = vadd.xlane.f32.xlu0 %v2570
    %v2572 = vpop.xlane.xlu0 %2571
    %v2573 = vsel %vm506, %v2558, 0.0
    %2574 = vadd.xlane.f32.xlu0 %v2573
    %v2575 = vpop.xlane.xlu0 %2574
    %v2576 = vsel %vm506, %v2560, 0.0
    %2577 = vadd.xlane.f32.xlu0 %v2576
    %v2578 = vpop.xlane.xlu0 %2577
    %v2579 = vrcp.pop %v2563
    %v2580 = vrcp.pop %v2566
    %v2581 = vrcp.pop %v2569
    %v2582 = vrcp.pop %v2572
    %v2583 = vrcp.pop %v2575
    %v2584 = vrcp.pop %v2578
    %v2585 = vmul.f32 %v2550, %v2579
    %v2586 = vmul.f32 %v2552, %v2580
    %v2587 = vmul.f32 %v2554, %v2581
    %v2588 = vmul.f32 %v2556, %v2582
    %v2589 = vmul.f32 %v2558, %v2583
    %v2590 = vmul.f32 %v2560, %v2584
    %v2591 = vpack.c.bf16 %v2586, %v2585
    %v2592 = vpack.c.bf16 %v2588, %v2587
    %v2593 = vpack.c.bf16 %v2590, %v2589
    %2594 = vrot.lane.b32.xlu0 %v2199, 56
    %v2595 = vpop.permute.xlu0 %2594
    %2596 = vrot.lane.b32.xlu0 %v2200, 56
    %v2597 = vpop.permute.xlu0 %2596
    %2598 = vrot.lane.b32.xlu0 %v2201, 56
    %v2599 = vpop.permute.xlu0 %2598
    %v2604 = vsel %vm506, %v2591, 0
    %v2607 = vsel %vm506, %v2592, 0
    %v2610 = vsel %vm506, %v2593, 0
    %2612 = vmatprep.subr.bf16.mxu0 0
    %2613 = vmatpush1.bf16.msra.mxu0 %v2595
    %2614 = vmatprep.subr.bf16.mxu0 0
    %2615 = vmatpush1.bf16.msra.mxu0 %v2597
    %2616 = vmatprep.subr.bf16.mxu0 0
    %2617 = vmatpush1.bf16.msra.mxu0 %v2599
    %2618 = vmatprep.subr.bf16.mxu0 0
    %2619 = vmatpush1.bf16.msra.mxu0 0
    %2620 = vmatprep.subr.bf16.mxu0 0
    %2621 = vmatpush1.bf16.msra.mxu0 0
    %2622 = vmatprep.subr.bf16.mxu0 0
    %2623 = vmatpush1.bf16.msra.mxu0 0
    %2624 = vmatprep.subr.bf16.mxu0 0
    %2625 = vmatpush1.bf16.msra.mxu0 0
    %2626 = vmatprep.subr.bf16.mxu0 0
    %2627 = vmatpush1.bf16.msra.mxu0 0
    %2628 = vmatprep.subr.bf16.mxu0 0
    %2629 = vmatpush1.bf16.msra.mxu0 0
    %2630 = vmatprep.subr.bf16.mxu0 0
    %2631 = vmatpush1.bf16.msra.mxu0 0
    %2632 = vmatprep.subr.bf16.mxu0 0
    %2633 = vmatpush1.bf16.msra.mxu0 0
    %2634 = vmatprep.subr.bf16.mxu0 0
    %2635 = vmatpush1.bf16.msra.mxu0 0
    %2636 = vmatprep.subr.bf16.mxu0 0
    %2637 = vmatpush1.bf16.msra.mxu0 0
    %2638 = vmatprep.subr.bf16.mxu0 0
    %2639 = vmatpush1.bf16.msra.mxu0 0
    %2640 = vmatprep.subr.bf16.mxu0 0
    %2641 = vmatpush1.bf16.msra.mxu0 0
    %2642 = vmatprep.subr.bf16.mxu0 0
    %2643 = vmatpush1.bf16.msra.mxu0 0
    %2644 = vmatprep.mubr.bf16.mxu0 0
    %2645 = vmatmul.mubr.bf16.gmra.mrb[0].mxu0 %v2604
    %v2646 = vpop.f32.mrb[0].mxu0
    %v2647 = vadd.f32 0.0, %v2646
    %v2648 = vpop.f32.mrb[0].mxu0
    %v2649 = vpop.f32.mrb[0].mxu0
    %v2650 = vadd.f32 0.0, %v2649
    %v2651 = vpop.f32.mrb[0].mxu0
    %2652 = vmatprep.mubr.bf16.mxu0 0
    %2653 = vmatmul.mubr.bf16.gmra.mrb[0].mxu0 %v2607
    %v2654 = vpop.f32.mrb[0].mxu0
    %v2655 = vadd.f32 0.0, %v2654
    %v2656 = vpop.f32.mrb[0].mxu0
    %v2657 = vpop.f32.mrb[0].mxu0
    %v2658 = vadd.f32 0.0, %v2657
    %v2659 = vpop.f32.mrb[0].mxu0
    %2660 = vmatprep.mubr.bf16.mxu0 0
    %2661 = vmatmul.mubr.bf16.gmra.mrb[0].mxu0 %v2610
    %v2662 = vpop.f32.mrb[0].mxu0
    %v2663 = vadd.f32 0.0, %v2662
    %v2664 = vpop.f32.mrb[0].mxu0
    %v2665 = vpop.f32.mrb[0].mxu0
    %v2666 = vadd.f32 0.0, %v2665
    %v2667 = vpop.f32.mrb[0].mxu0
    %2668 = vdwg.mxu0
    %v2669 = vpack.c.bf16 %v2650, %v2647
    %v2670 = vpack.c.bf16 %v2658, %v2655
    %v2671 = vpack.c.bf16 %v2666, %v2663
    %s2672 = scalar_lea.vmem [#allocation10], 20
    %v2673 = vld [vmem:[%s2672] sm:$0xf]
    %v2675 = vsel %vm430, %v2669, 0
    %v2678 = vsel %vm430, %v2670, 0
    %v2681 = vsel %vm430, %v2671, 0
    %v2684 = vsel %vm903, %v2673, 0
    %2686 = vmatprep.subr.bf16.mxu0 0
    %2687 = vmatpush1.bf16.msra.mxu0 %v2684
    %2688 = vmatprep.subr.bf16.mxu0 0
    %2689 = vmatpush1.bf16.msra.mxu0 0
    %2690 = vmatprep.subr.bf16.mxu0 0
    %2691 = vmatpush1.bf16.msra.mxu0 0
    %2692 = vmatprep.subr.bf16.mxu0 0
    %2693 = vmatpush1.bf16.msra.mxu0 0
    %2694 = vmatprep.subr.bf16.mxu0 0
    %2695 = vmatpush1.bf16.msra.mxu0 0
    %2696 = vmatprep.subr.bf16.mxu0 0
    %2697 = vmatpush1.bf16.msra.mxu0 0
    %2698 = vmatprep.subr.bf16.mxu0 0
    %2699 = vmatpush1.bf16.msra.mxu0 0
    %2700 = vmatprep.subr.bf16.mxu0 0
    %2701 = vmatpush1.bf16.msra.mxu0 0
    %2702 = vmatprep.subr.bf16.mxu0 0
    %2703 = vmatpush1.bf16.msra.mxu0 0
    %2704 = vmatprep.subr.bf16.mxu0 0
    %2705 = vmatpush1.bf16.msra.mxu0 0
    %2706 = vmatprep.subr.bf16.mxu0 0
    %2707 = vmatpush1.bf16.msra.mxu0 0
    %2708 = vmatprep.subr.bf16.mxu0 0
    %2709 = vmatpush1.bf16.msra.mxu0 0
    %2710 = vmatprep.subr.bf16.mxu0 0
    %2711 = vmatpush1.bf16.msra.mxu0 0
    %2712 = vmatprep.subr.bf16.mxu0 0
    %2713 = vmatpush1.bf16.msra.mxu0 0
    %2714 = vmatprep.subr.bf16.mxu0 0
    %2715 = vmatpush1.bf16.msra.mxu0 0
    %2716 = vmatprep.subr.bf16.mxu0 0
    %2717 = vmatpush1.bf16.msra.mxu0 0
    %2718 = vmatprep.mubr.bf16.mxu0 0
    %2719 = vmatmul.mubr.bf16.gmra.mrb[0].mxu0 %v2675
    %v2720 = vpop.f32.mrb[0].mxu0
    %v2721 = vadd.f32 0.0, %v2720
    %v2722 = vpop.f32.mrb[0].mxu0
    %v2723 = vpop.f32.mrb[0].mxu0
    %v2724 = vadd.f32 0.0, %v2723
    %v2725 = vpop.f32.mrb[0].mxu0
    %2726 = vmatprep.mubr.bf16.mxu0 0
    %2727 = vmatmul.mubr.bf16.gmra.mrb[0].mxu0 %v2678
    %v2728 = vpop.f32.mrb[0].mxu0
    %v2729 = vadd.f32 0.0, %v2728
    %v2730 = vpop.f32.mrb[0].mxu0
    %v2731 = vpop.f32.mrb[0].mxu0
    %v2732 = vadd.f32 0.0, %v2731
    %v2733 = vpop.f32.mrb[0].mxu0
    %2734 = vmatprep.mubr.bf16.mxu0 0
    %2735 = vmatmul.mubr.bf16.gmra.mrb[0].mxu0 %v2681
    %v2736 = vpop.f32.mrb[0].mxu0
    %v2737 = vadd.f32 0.0, %v2736
    %v2738 = vpop.f32.mrb[0].mxu0
    %v2739 = vpop.f32.mrb[0].mxu0
    %v2740 = vadd.f32 0.0, %v2739
    %v2741 = vpop.f32.mrb[0].mxu0
    %2742 = vdwg.mxu0
    %v2744 = vsel %vm430, %v2430, 0
    %v2747 = vsel %vm430, %v2431, 0
    %v2750 = vsel %vm430, %v2432, 0
    %v2753 = vsel %vm903, %v2434, 0
    %2755 = vmatprep.subr.bf16.mxu0 0
    %2756 = vmatpush1.bf16.msra.mxu0 %v2753
    %2757 = vmatprep.subr.bf16.mxu0 0
    %2758 = vmatpush1.bf16.msra.mxu0 0
    %2759 = vmatprep.subr.bf16.mxu0 0
    %2760 = vmatpush1.bf16.msra.mxu0 0
    %2761 = vmatprep.subr.bf16.mxu0 0
    %2762 = vmatpush1.bf16.msra.mxu0 0
    %2763 = vmatprep.subr.bf16.mxu0 0
    %2764 = vmatpush1.bf16.msra.mxu0 0
    %2765 = vmatprep.subr.bf16.mxu0 0
    %2766 = vmatpush1.bf16.msra.mxu0 0
    %2767 = vmatprep.subr.bf16.mxu0 0
    %2768 = vmatpush1.bf16.msra.mxu0 0
    %2769 = vmatprep.subr.bf16.mxu0 0
    %2770 = vmatpush1.bf16.msra.mxu0 0
    %2771 = vmatprep.subr.bf16.mxu0 0
    %2772 = vmatpush1.bf16.msra.mxu0 0
    %2773 = vmatprep.subr.bf16.mxu0 0
    %2774 = vmatpush1.bf16.msra.mxu0 0
    %2775 = vmatprep.subr.bf16.mxu0 0
    %2776 = vmatpush1.bf16.msra.mxu0 0
    %2777 = vmatprep.subr.bf16.mxu0 0
    %2778 = vmatpush1.bf16.msra.mxu0 0
    %2779 = vmatprep.subr.bf16.mxu0 0
    %2780 = vmatpush1.bf16.msra.mxu0 0
    %2781 = vmatprep.subr.bf16.mxu0 0
    %2782 = vmatpush1.bf16.msra.mxu0 0
    %2783 = vmatprep.subr.bf16.mxu0 0
    %2784 = vmatpush1.bf16.msra.mxu0 0
    %2785 = vmatprep.subr.bf16.mxu0 0
    %2786 = vmatpush1.bf16.msra.mxu0 0
    %2787 = vmatprep.mubr.bf16.mxu0 0
    %2788 = vmatmul.mubr.bf16.gmra.mrb[0].mxu0 %v2744
    %v2789 = vpop.f32.mrb[0].mxu0
    %v2790 = vadd.f32 %v2721, %v2789
    %v2791 = vpop.f32.mrb[0].mxu0
    %v2792 = vpop.f32.mrb[0].mxu0
    %v2793 = vadd.f32 %v2724, %v2792
    %v2794 = vpop.f32.mrb[0].mxu0
    %2795 = vmatprep.mubr.bf16.mxu0 0
    %2796 = vmatmul.mubr.bf16.gmra.mrb[0].mxu0 %v2747
    %v2797 = vpop.f32.mrb[0].mxu0
    %v2798 = vadd.f32 %v2729, %v2797
    %v2799 = vpop.f32.mrb[0].mxu0
    %v2800 = vpop.f32.mrb[0].mxu0
    %v2801 = vadd.f32 %v2732, %v2800
    %v2802 = vpop.f32.mrb[0].mxu0
    %2803 = vmatprep.mubr.bf16.mxu0 0
    %2804 = vmatmul.mubr.bf16.gmra.mrb[0].mxu0 %v2750
    %v2805 = vpop.f32.mrb[0].mxu0
    %v2806 = vadd.f32 %v2737, %v2805
    %v2807 = vpop.f32.mrb[0].mxu0
    %v2808 = vpop.f32.mrb[0].mxu0
    %v2809 = vadd.f32 %v2740, %v2808
    %v2810 = vpop.f32.mrb[0].mxu0
    %2811 = vdwg.mxu0
    %2812 = vrot.lane.b32.xlu0 %v2196, 112
    %v2813 = vpop.permute.xlu0 %2812
    %2814 = vrot.lane.b32.xlu0 %v2197, 112
    %v2815 = vpop.permute.xlu0 %2814
    %2816 = vrot.lane.b32.xlu0 %v2198, 112
    %v2817 = vpop.permute.xlu0 %2816
    %2818 = vrot.lane.b32.xlu0 %v2199, 80
    %v2819 = vpop.permute.xlu0 %2818
    %2820 = vrot.lane.b32.xlu0 %v2200, 80
    %v2821 = vpop.permute.xlu0 %2820
    %2822 = vrot.lane.b32.xlu0 %v2201, 80
    %v2823 = vpop.permute.xlu0 %2822
    %v2825 = vsel %vm430, %v2813, 0
    %v2828 = vsel %vm430, %v2815, 0
    %v2831 = vsel %vm430, %v2817, 0
    %v2834 = vsel %vm430, %v2819, 0
    %v2837 = vsel %vm430, %v2821, 0
    %v2840 = vsel %vm430, %v2823, 0
    %2842 = vmatprep.subr.bf16.mxu0 0
    %2843 = vmatpush1.bf16.xpose.msra.mxu0 %v2834
    %2844 = vmatprep.subr.bf16.mxu0 0
    %2845 = vmatpush1.bf16.xpose.msra.mxu0 %v2837
    %2846 = vmatprep.subr.bf16.mxu0 0
    %2847 = vmatpush1.bf16.xpose.msra.mxu0 %v2840
    %2848 = vmatprep.subr.bf16.mxu0 0
    %2849 = vmatpush1.bf16.xpose.msra.mxu0 0
    %2850 = vmatprep.subr.bf16.mxu0 0
    %2851 = vmatpush1.bf16.xpose.msra.mxu0 0
    %2852 = vmatprep.subr.bf16.mxu0 0
    %2853 = vmatpush1.bf16.xpose.msra.mxu0 0
    %2854 = vmatprep.subr.bf16.mxu0 0
    %2855 = vmatpush1.bf16.xpose.msra.mxu0 0
    %2856 = vmatprep.subr.bf16.mxu0 0
    %2857 = vmatpush1.bf16.xpose.msra.mxu0 0
    %2858 = vmatprep.subr.bf16.mxu0 0
    %2859 = vmatpush1.bf16.xpose.msra.mxu0 0
    %2860 = vmatprep.subr.bf16.mxu0 0
    %2861 = vmatpush1.bf16.xpose.msra.mxu0 0
    %2862 = vmatprep.subr.bf16.mxu0 0
    %2863 = vmatpush1.bf16.xpose.msra.mxu0 0
    %2864 = vmatprep.subr.bf16.mxu0 0
    %2865 = vmatpush1.bf16.xpose.msra.mxu0 0
    %2866 = vmatprep.subr.bf16.mxu0 0
    %2867 = vmatpush1.bf16.xpose.msra.mxu0 0
    %2868 = vmatprep.subr.bf16.mxu0 0
    %2869 = vmatpush1.bf16.xpose.msra.mxu0 0
    %2870 = vmatprep.subr.bf16.mxu0 0
    %2871 = vmatpush1.bf16.xpose.msra.mxu0 0
    %2872 = vmatprep.subr.bf16.mxu0 0
    %2873 = vmatpush1.bf16.xpose.msra.mxu0 0
    %2874 = vmatprep.mubr.bf16.mxu0 0
    %2875 = vmatmul.mubr.bf16.gmra.mrb[0].mxu0 %v2825
    %v2876 = vpop.f32.mrb[0].mxu0
    %v2877 = vadd.f32 %v310, %v2876
    %v2878 = vpop.f32.mrb[0].mxu0
    %v2879 = vpop.f32.mrb[0].mxu0
    %v2880 = vadd.f32 %v311, %v2879
    %v2881 = vpop.f32.mrb[0].mxu0
    %2882 = vmatprep.mubr.bf16.mxu0 0
    %2883 = vmatmul.mubr.bf16.gmra.mrb[0].mxu0 %v2828
    %v2884 = vpop.f32.mrb[0].mxu0
    %v2885 = vadd.f32 %v312, %v2884
    %v2886 = vpop.f32.mrb[0].mxu0
    %v2887 = vpop.f32.mrb[0].mxu0
    %v2888 = vadd.f32 %v313, %v2887
    %v2889 = vpop.f32.mrb[0].mxu0
    %2890 = vmatprep.mubr.bf16.mxu0 0
    %2891 = vmatmul.mubr.bf16.gmra.mrb[0].mxu0 %v2831
    %v2892 = vpop.f32.mrb[0].mxu0
    %v2893 = vadd.f32 %v314, %v2892
    %v2894 = vpop.f32.mrb[0].mxu0
    %v2895 = vpop.f32.mrb[0].mxu0
    %v2896 = vadd.f32 %v315, %v2895
    %v2897 = vpop.f32.mrb[0].mxu0
    %2898 = vdwg.mxu0
    %v2899 = vsel %vm506, %v2877, -inf
    %2900 = vmax.xlane.f32.xlu0 %v2899
    %v2901 = vpop.xlane.xlu0 %2900
    %v2902 = vsel %vm506, %v2880, -inf
    %2903 = vmax.xlane.f32.xlu0 %v2902
    %v2904 = vpop.xlane.xlu0 %2903
    %v2905 = vsel %vm506, %v2885, -inf
    %2906 = vmax.xlane.f32.xlu0 %v2905
    %v2907 = vpop.xlane.xlu0 %2906
    %v2908 = vsel %vm506, %v2888, -inf
    %2909 = vmax.xlane.f32.xlu0 %v2908
    %v2910 = vpop.xlane.xlu0 %2909
    %v2911 = vsel %vm506, %v2893, -inf
    %2912 = vmax.xlane.f32.xlu0 %v2911
    %v2913 = vpop.xlane.xlu0 %2912
    %v2914 = vsel %vm506, %v2896, -inf
    %2915 = vmax.xlane.f32.xlu0 %v2914
    %v2916 = vpop.xlane.xlu0 %2915
    %v2917 = vsub.f32 %v2877, %v2901
    %v2918 = vsub.f32 %v2880, %v2904
    %v2919 = vsub.f32 %v2885, %v2907
    %v2920 = vsub.f32 %v2888, %v2910
    %v2921 = vsub.f32 %v2893, %v2913
    %v2922 = vsub.f32 %v2896, %v2916
    %v2923 = vmul.f32 %v2917, 1.442695
    %v2924 = vpow.pop %v2923
    %v2925 = vmul.f32 %v2918, 1.442695
    %v2926 = vpow.pop %v2925
    %v2927 = vmul.f32 %v2919, 1.442695
    %v2928 = vpow.pop %v2927
    %v2929 = vmul.f32 %v2920, 1.442695
    %v2930 = vpow.pop %v2929
    %v2931 = vmul.f32 %v2921, 1.442695
    %v2932 = vpow.pop %v2931
    %v2933 = vmul.f32 %v2922, 1.442695
    %v2934 = vpow.pop %v2933
    %v2935 = vsel %vm506, %v2924, 0.0
    %2936 = vadd.xlane.f32.xlu0 %v2935
    %v2937 = vpop.xlane.xlu0 %2936
    %v2938 = vsel %vm506, %v2926, 0.0
    %2939 = vadd.xlane.f32.xlu0 %v2938
    %v2940 = vpop.xlane.xlu0 %2939
    %v2941 = vsel %vm506, %v2928, 0.0
    %2942 = vadd.xlane.f32.xlu0 %v2941
    %v2943 = vpop.xlane.xlu0 %2942
    %v2944 = vsel %vm506, %v2930, 0.0
    %2945 = vadd.xlane.f32.xlu0 %v2944
    %v2946 = vpop.xlane.xlu0 %2945
    %v2947 = vsel %vm506, %v2932, 0.0
    %2948 = vadd.xlane.f32.xlu0 %v2947
    %v2949 = vpop.xlane.xlu0 %2948
    %v2950 = vsel %vm506, %v2934, 0.0
    %2951 = vadd.xlane.f32.xlu0 %v2950
    %v2952 = vpop.xlane.xlu0 %2951
    %v2953 = vrcp.pop %v2937
    %v2954 = vrcp.pop %v2940
    %v2955 = vrcp.pop %v2943
    %v2956 = vrcp.pop %v2946
    %v2957 = vrcp.pop %v2949
    %v2958 = vrcp.pop %v2952
    %v2959 = vmul.f32 %v2924, %v2953
    %v2960 = vmul.f32 %v2926, %v2954
    %v2961 = vmul.f32 %v2928, %v2955
    %v2962 = vmul.f32 %v2930, %v2956
    %v2963 = vmul.f32 %v2932, %v2957
    %v2964 = vmul.f32 %v2934, %v2958
    %v2965 = vpack.c.bf16 %v2960, %v2959
    %v2966 = vpack.c.bf16 %v2962, %v2961
    %v2967 = vpack.c.bf16 %v2964, %v2963
    %2968 = vrot.lane.b32.xlu0 %v2199, 48
    %v2969 = vpop.permute.xlu0 %2968
    %2970 = vrot.lane.b32.xlu0 %v2200, 48
    %v2971 = vpop.permute.xlu0 %2970
    %2972 = vrot.lane.b32.xlu0 %v2201, 48
    %v2973 = vpop.permute.xlu0 %2972
    %v2978 = vsel %vm506, %v2965, 0
    %v2981 = vsel %vm506, %v2966, 0
    %v2984 = vsel %vm506, %v2967, 0
    %2986 = vmatprep.subr.bf16.mxu0 0
    %2987 = vmatpush1.bf16.msra.mxu0 %v2969
    %2988 = vmatprep.subr.bf16.mxu0 0
    %2989 = vmatpush1.bf16.msra.mxu0 %v2971
    %2990 = vmatprep.subr.bf16.mxu0 0
    %2991 = vmatpush1.bf16.msra.mxu0 %v2973
    %2992 = vmatprep.subr.bf16.mxu0 0
    %2993 = vmatpush1.bf16.msra.mxu0 0
    %2994 = vmatprep.subr.bf16.mxu0 0
    %2995 = vmatpush1.bf16.msra.mxu0 0
    %2996 = vmatprep.subr.bf16.mxu0 0
    %2997 = vmatpush1.bf16.msra.mxu0 0
    %2998 = vmatprep.subr.bf16.mxu0 0
    %2999 = vmatpush1.bf16.msra.mxu0 0
    %3000 = vmatprep.subr.bf16.mxu0 0
    %3001 = vmatpush1.bf16.msra.mxu0 0
    %3002 = vmatprep.subr.bf16.mxu0 0
    %3003 = vmatpush1.bf16.msra.mxu0 0
    %3004 = vmatprep.subr.bf16.mxu0 0
    %3005 = vmatpush1.bf16.msra.mxu0 0
    %3006 = vmatprep.subr.bf16.mxu0 0
    %3007 = vmatpush1.bf16.msra.mxu0 0
    %3008 = vmatprep.subr.bf16.mxu0 0
    %3009 = vmatpush1.bf16.msra.mxu0 0
    %3010 = vmatprep.subr.bf16.mxu0 0
    %3011 = vmatpush1.bf16.msra.mxu0 0
    %3012 = vmatprep.subr.bf16.mxu0 0
    %3013 = vmatpush1.bf16.msra.mxu0 0
    %3014 = vmatprep.subr.bf16.mxu0 0
    %3015 = vmatpush1.bf16.msra.mxu0 0
    %3016 = vmatprep.subr.bf16.mxu0 0
    %3017 = vmatpush1.bf16.msra.mxu0 0
    %3018 = vmatprep.mubr.bf16.mxu0 0
    %3019 = vmatmul.mubr.bf16.gmra.mrb[0].mxu0 %v2978
    %v3020 = vpop.f32.mrb[0].mxu0
    %v3021 = vadd.f32 0.0, %v3020
    %v3022 = vpop.f32.mrb[0].mxu0
    %v3023 = vpop.f32.mrb[0].mxu0
    %v3024 = vadd.f32 0.0, %v3023
    %v3025 = vpop.f32.mrb[0].mxu0
    %3026 = vmatprep.mubr.bf16.mxu0 0
    %3027 = vmatmul.mubr.bf16.gmra.mrb[0].mxu0 %v2981
    %v3028 = vpop.f32.mrb[0].mxu0
    %v3029 = vadd.f32 0.0, %v3028
    %v3030 = vpop.f32.mrb[0].mxu0
    %v3031 = vpop.f32.mrb[0].mxu0
    %v3032 = vadd.f32 0.0, %v3031
    %v3033 = vpop.f32.mrb[0].mxu0
    %3034 = vmatprep.mubr.bf16.mxu0 0
    %3035 = vmatmul.mubr.bf16.gmra.mrb[0].mxu0 %v2984
    %v3036 = vpop.f32.mrb[0].mxu0
    %v3037 = vadd.f32 0.0, %v3036
    %v3038 = vpop.f32.mrb[0].mxu0
    %v3039 = vpop.f32.mrb[0].mxu0
    %v3040 = vadd.f32 0.0, %v3039
    %v3041 = vpop.f32.mrb[0].mxu0
    %3042 = vdwg.mxu0
    %v3043 = vpack.c.bf16 %v3024, %v3021
    %v3044 = vpack.c.bf16 %v3032, %v3029
    %v3045 = vpack.c.bf16 %v3040, %v3037
    %s3046 = scalar_lea.vmem [#allocation10], 24
    %v3047 = vld [vmem:[%s3046] sm:$0xf]
    %v3049 = vsel %vm430, %v3043, 0
    %v3052 = vsel %vm430, %v3044, 0
    %v3055 = vsel %vm430, %v3045, 0
    %v3058 = vsel %vm903, %v3047, 0
    %3060 = vmatprep.subr.bf16.mxu0 0
    %3061 = vmatpush1.bf16.msra.mxu0 %v3058
    %3062 = vmatprep.subr.bf16.mxu0 0
    %3063 = vmatpush1.bf16.msra.mxu0 0
    %3064 = vmatprep.subr.bf16.mxu0 0
    %3065 = vmatpush1.bf16.msra.mxu0 0
    %3066 = vmatprep.subr.bf16.mxu0 0
    %3067 = vmatpush1.bf16.msra.mxu0 0
    %3068 = vmatprep.subr.bf16.mxu0 0
    %3069 = vmatpush1.bf16.msra.mxu0 0
    %3070 = vmatprep.subr.bf16.mxu0 0
    %3071 = vmatpush1.bf16.msra.mxu0 0
    %3072 = vmatprep.subr.bf16.mxu0 0
    %3073 = vmatpush1.bf16.msra.mxu0 0
    %3074 = vmatprep.subr.bf16.mxu0 0
    %3075 = vmatpush1.bf16.msra.mxu0 0
    %3076 = vmatprep.subr.bf16.mxu0 0
    %3077 = vmatpush1.bf16.msra.mxu0 0
    %3078 = vmatprep.subr.bf16.mxu0 0
    %3079 = vmatpush1.bf16.msra.mxu0 0
    %3080 = vmatprep.subr.bf16.mxu0 0
    %3081 = vmatpush1.bf16.msra.mxu0 0
    %3082 = vmatprep.subr.bf16.mxu0 0
    %3083 = vmatpush1.bf16.msra.mxu0 0
    %3084 = vmatprep.subr.bf16.mxu0 0
    %3085 = vmatpush1.bf16.msra.mxu0 0
    %3086 = vmatprep.subr.bf16.mxu0 0
    %3087 = vmatpush1.bf16.msra.mxu0 0
    %3088 = vmatprep.subr.bf16.mxu0 0
    %3089 = vmatpush1.bf16.msra.mxu0 0
    %3090 = vmatprep.subr.bf16.mxu0 0
    %3091 = vmatpush1.bf16.msra.mxu0 0
    %3092 = vmatprep.mubr.bf16.mxu0 0
    %3093 = vmatmul.mubr.bf16.gmra.mrb[0].mxu0 %v3049
    %v3094 = vpop.f32.mrb[0].mxu0
    %v3095 = vadd.f32 0.0, %v3094
    %v3096 = vpop.f32.mrb[0].mxu0
    %v3097 = vpop.f32.mrb[0].mxu0
    %v3098 = vadd.f32 0.0, %v3097
    %v3099 = vpop.f32.mrb[0].mxu0
    %3100 = vmatprep.mubr.bf16.mxu0 0
    %3101 = vmatmul.mubr.bf16.gmra.mrb[0].mxu0 %v3052
    %v3102 = vpop.f32.mrb[0].mxu0
    %v3103 = vadd.f32 0.0, %v3102
    %v3104 = vpop.f32.mrb[0].mxu0
    %v3105 = vpop.f32.mrb[0].mxu0
    %v3106 = vadd.f32 0.0, %v3105
    %v3107 = vpop.f32.mrb[0].mxu0
    %3108 = vmatprep.mubr.bf16.mxu0 0
    %3109 = vmatmul.mubr.bf16.gmra.mrb[0].mxu0 %v3055
    %v3110 = vpop.f32.mrb[0].mxu0
    %v3111 = vadd.f32 0.0, %v3110
    %v3112 = vpop.f32.mrb[0].mxu0
    %v3113 = vpop.f32.mrb[0].mxu0
    %v3114 = vadd.f32 0.0, %v3113
    %v3115 = vpop.f32.mrb[0].mxu0
    %3116 = vdwg.mxu0
    %v3117 = vadd.f32 %v2790, %v3095
    %v3118 = vadd.f32 %v2793, %v3098
    %v3119 = vadd.f32 %v2798, %v3103
    %v3120 = vadd.f32 %v2801, %v3106
    %v3121 = vadd.f32 %v2806, %v3111
    %v3122 = vadd.f32 %v2809, %v3114
    %3123 = vrot.lane.b32.xlu0 %v2196, 104
    %v3124 = vpop.permute.xlu0 %3123
    %3125 = vrot.lane.b32.xlu0 %v2197, 104
    %v3126 = vpop.permute.xlu0 %3125
    %3127 = vrot.lane.b32.xlu0 %v2198, 104
    %v3128 = vpop.permute.xlu0 %3127
    %3129 = vrot.lane.b32.xlu0 %v2199, 72
    %v3130 = vpop.permute.xlu0 %3129
    %3131 = vrot.lane.b32.xlu0 %v2200, 72
    %v3132 = vpop.permute.xlu0 %3131
    %3133 = vrot.lane.b32.xlu0 %v2201, 72
    %v3134 = vpop.permute.xlu0 %3133
    %v3136 = vsel %vm430, %v3124, 0
    %v3139 = vsel %vm430, %v3126, 0
    %v3142 = vsel %vm430, %v3128, 0
    %v3145 = vsel %vm430, %v3130, 0
    %v3148 = vsel %vm430, %v3132, 0
    %v3151 = vsel %vm430, %v3134, 0
    %3153 = vmatprep.subr.bf16.mxu0 0
    %3154 = vmatpush1.bf16.xpose.msra.mxu0 %v3145
    %3155 = vmatprep.subr.bf16.mxu0 0
    %3156 = vmatpush1.bf16.xpose.msra.mxu0 %v3148
    %3157 = vmatprep.subr.bf16.mxu0 0
    %3158 = vmatpush1.bf16.xpose.msra.mxu0 %v3151
    %3159 = vmatprep.subr.bf16.mxu0 0
    %3160 = vmatpush1.bf16.xpose.msra.mxu0 0
    %3161 = vmatprep.subr.bf16.mxu0 0
    %3162 = vmatpush1.bf16.xpose.msra.mxu0 0
    %3163 = vmatprep.subr.bf16.mxu0 0
    %3164 = vmatpush1.bf16.xpose.msra.mxu0 0
    %3165 = vmatprep.subr.bf16.mxu0 0
    %3166 = vmatpush1.bf16.xpose.msra.mxu0 0
    %3167 = vmatprep.subr.bf16.mxu0 0
    %3168 = vmatpush1.bf16.xpose.msra.mxu0 0
    %3169 = vmatprep.subr.bf16.mxu0 0
    %3170 = vmatpush1.bf16.xpose.msra.mxu0 0
    %3171 = vmatprep.subr.bf16.mxu0 0
    %3172 = vmatpush1.bf16.xpose.msra.mxu0 0
    %3173 = vmatprep.subr.bf16.mxu0 0
    %3174 = vmatpush1.bf16.xpose.msra.mxu0 0
    %3175 = vmatprep.subr.bf16.mxu0 0
    %3176 = vmatpush1.bf16.xpose.msra.mxu0 0
    %3177 = vmatprep.subr.bf16.mxu0 0
    %3178 = vmatpush1.bf16.xpose.msra.mxu0 0
    %3179 = vmatprep.subr.bf16.mxu0 0
    %3180 = vmatpush1.bf16.xpose.msra.mxu0 0
    %3181 = vmatprep.subr.bf16.mxu0 0
    %3182 = vmatpush1.bf16.xpose.msra.mxu0 0
    %3183 = vmatprep.subr.bf16.mxu0 0
    %3184 = vmatpush1.bf16.xpose.msra.mxu0 0
    %3185 = vmatprep.mubr.bf16.mxu0 0
    %3186 = vmatmul.mubr.bf16.gmra.mrb[0].mxu0 %v3136
    %v3187 = vpop.f32.mrb[0].mxu0
    %v3188 = vadd.f32 %v310, %v3187
    %v3189 = vpop.f32.mrb[0].mxu0
    %v3190 = vpop.f32.mrb[0].mxu0
    %v3191 = vadd.f32 %v311, %v3190
    %v3192 = vpop.f32.mrb[0].mxu0
    %3193 = vmatprep.mubr.bf16.mxu0 0
    %3194 = vmatmul.mubr.bf16.gmra.mrb[0].mxu0 %v3139
    %v3195 = vpop.f32.mrb[0].mxu0
    %v3196 = vadd.f32 %v312, %v3195
    %v3197 = vpop.f32.mrb[0].mxu0
    %v3198 = vpop.f32.mrb[0].mxu0
    %v3199 = vadd.f32 %v313, %v3198
    %v3200 = vpop.f32.mrb[0].mxu0
    %3201 = vmatprep.mubr.bf16.mxu0 0
    %3202 = vmatmul.mubr.bf16.gmra.mrb[0].mxu0 %v3142
    %v3203 = vpop.f32.mrb[0].mxu0
    %v3204 = vadd.f32 %v314, %v3203
    %v3205 = vpop.f32.mrb[0].mxu0
    %v3206 = vpop.f32.mrb[0].mxu0
    %v3207 = vadd.f32 %v315, %v3206
    %v3208 = vpop.f32.mrb[0].mxu0
    %3209 = vdwg.mxu0
    %v3210 = vsel %vm506, %v3188, -inf
    %3211 = vmax.xlane.f32.xlu0 %v3210
    %v3212 = vpop.xlane.xlu0 %3211
    %v3213 = vsel %vm506, %v3191, -inf
    %3214 = vmax.xlane.f32.xlu0 %v3213
    %v3215 = vpop.xlane.xlu0 %3214
    %v3216 = vsel %vm506, %v3196, -inf
    %3217 = vmax.xlane.f32.xlu0 %v3216
    %v3218 = vpop.xlane.xlu0 %3217
    %v3219 = vsel %vm506, %v3199, -inf
    %3220 = vmax.xlane.f32.xlu0 %v3219
    %v3221 = vpop.xlane.xlu0 %3220
    %v3222 = vsel %vm506, %v3204, -inf
    %3223 = vmax.xlane.f32.xlu0 %v3222
    %v3224 = vpop.xlane.xlu0 %3223
    %v3225 = vsel %vm506, %v3207, -inf
    %3226 = vmax.xlane.f32.xlu0 %v3225
    %v3227 = vpop.xlane.xlu0 %3226
    %v3228 = vsub.f32 %v3188, %v3212
    %v3229 = vsub.f32 %v3191, %v3215
    %v3230 = vsub.f32 %v3196, %v3218
    %v3231 = vsub.f32 %v3199, %v3221
    %v3232 = vsub.f32 %v3204, %v3224
    %v3233 = vsub.f32 %v3207, %v3227
    %v3234 = vmul.f32 %v3228, 1.442695
    %v3235 = vpow.pop %v3234
    %v3236 = vmul.f32 %v3229, 1.442695
    %v3237 = vpow.pop %v3236
    %v3238 = vmul.f32 %v3230, 1.442695
    %v3239 = vpow.pop %v3238
    %v3240 = vmul.f32 %v3231, 1.442695
    %v3241 = vpow.pop %v3240
    %v3242 = vmul.f32 %v3232, 1.442695
    %v3243 = vpow.pop %v3242
    %v3244 = vmul.f32 %v3233, 1.442695
    %v3245 = vpow.pop %v3244
    %v3246 = vsel %vm506, %v3235, 0.0
    %3247 = vadd.xlane.f32.xlu0 %v3246
    %v3248 = vpop.xlane.xlu0 %3247
    %v3249 = vsel %vm506, %v3237, 0.0
    %3250 = vadd.xlane.f32.xlu0 %v3249
    %v3251 = vpop.xlane.xlu0 %3250
    %v3252 = vsel %vm506, %v3239, 0.0
    %3253 = vadd.xlane.f32.xlu0 %v3252
    %v3254 = vpop.xlane.xlu0 %3253
    %v3255 = vsel %vm506, %v3241, 0.0
    %3256 = vadd.xlane.f32.xlu0 %v3255
    %v3257 = vpop.xlane.xlu0 %3256
    %v3258 = vsel %vm506, %v3243, 0.0
    %3259 = vadd.xlane.f32.xlu0 %v3258
    %v3260 = vpop.xlane.xlu0 %3259
    %v3261 = vsel %vm506, %v3245, 0.0
    %3262 = vadd.xlane.f32.xlu0 %v3261
    %v3263 = vpop.xlane.xlu0 %3262
    %v3264 = vrcp.pop %v3248
    %v3265 = vrcp.pop %v3251
    %v3266 = vrcp.pop %v3254
    %v3267 = vrcp.pop %v3257
    %v3268 = vrcp.pop %v3260
    %v3269 = vrcp.pop %v3263
    %v3270 = vmul.f32 %v3235, %v3264
    %v3271 = vmul.f32 %v3237, %v3265
    %v3272 = vmul.f32 %v3239, %v3266
    %v3273 = vmul.f32 %v3241, %v3267
    %v3274 = vmul.f32 %v3243, %v3268
    %v3275 = vmul.f32 %v3245, %v3269
    %v3276 = vpack.c.bf16 %v3271, %v3270
    %v3277 = vpack.c.bf16 %v3273, %v3272
    %v3278 = vpack.c.bf16 %v3275, %v3274
    %3279 = vrot.lane.b32.xlu0 %v2199, 40
    %v3280 = vpop.permute.xlu0 %3279
    %3281 = vrot.lane.b32.xlu0 %v2200, 40
    %v3282 = vpop.permute.xlu0 %3281
    %3283 = vrot.lane.b32.xlu0 %v2201, 40
    %v3284 = vpop.permute.xlu0 %3283
    %v3289 = vsel %vm506, %v3276, 0
    %v3292 = vsel %vm506, %v3277, 0
    %v3295 = vsel %vm506, %v3278, 0
    %3297 = vmatprep.subr.bf16.mxu0 0
    %3298 = vmatpush1.bf16.msra.mxu0 %v3280
    %3299 = vmatprep.subr.bf16.mxu0 0
    %3300 = vmatpush1.bf16.msra.mxu0 %v3282
    %3301 = vmatprep.subr.bf16.mxu0 0
    %3302 = vmatpush1.bf16.msra.mxu0 %v3284
    %3303 = vmatprep.subr.bf16.mxu0 0
    %3304 = vmatpush1.bf16.msra.mxu0 0
    %3305 = vmatprep.subr.bf16.mxu0 0
    %3306 = vmatpush1.bf16.msra.mxu0 0
    %3307 = vmatprep.subr.bf16.mxu0 0
    %3308 = vmatpush1.bf16.msra.mxu0 0
    %3309 = vmatprep.subr.bf16.mxu0 0
    %3310 = vmatpush1.bf16.msra.mxu0 0
    %3311 = vmatprep.subr.bf16.mxu0 0
    %3312 = vmatpush1.bf16.msra.mxu0 0
    %3313 = vmatprep.subr.bf16.mxu0 0
    %3314 = vmatpush1.bf16.msra.mxu0 0
    %3315 = vmatprep.subr.bf16.mxu0 0
    %3316 = vmatpush1.bf16.msra.mxu0 0
    %3317 = vmatprep.subr.bf16.mxu0 0
    %3318 = vmatpush1.bf16.msra.mxu0 0
    %3319 = vmatprep.subr.bf16.mxu0 0
    %3320 = vmatpush1.bf16.msra.mxu0 0
    %3321 = vmatprep.subr.bf16.mxu0 0
    %3322 = vmatpush1.bf16.msra.mxu0 0
    %3323 = vmatprep.subr.bf16.mxu0 0
    %3324 = vmatpush1.bf16.msra.mxu0 0
    %3325 = vmatprep.subr.bf16.mxu0 0
    %3326 = vmatpush1.bf16.msra.mxu0 0
    %3327 = vmatprep.subr.bf16.mxu0 0
    %3328 = vmatpush1.bf16.msra.mxu0 0
    %3329 = vmatprep.mubr.bf16.mxu0 0
    %3330 = vmatmul.mubr.bf16.gmra.mrb[0].mxu0 %v3289
    %v3331 = vpop.f32.mrb[0].mxu0
    %v3332 = vadd.f32 0.0, %v3331
    %v3333 = vpop.f32.mrb[0].mxu0
    %v3334 = vpop.f32.mrb[0].mxu0
    %v3335 = vadd.f32 0.0, %v3334
    %v3336 = vpop.f32.mrb[0].mxu0
    %3337 = vmatprep.mubr.bf16.mxu0 0
    %3338 = vmatmul.mubr.bf16.gmra.mrb[0].mxu0 %v3292
    %v3339 = vpop.f32.mrb[0].mxu0
    %v3340 = vadd.f32 0.0, %v3339
    %v3341 = vpop.f32.mrb[0].mxu0
    %v3342 = vpop.f32.mrb[0].mxu0
    %v3343 = vadd.f32 0.0, %v3342
    %v3344 = vpop.f32.mrb[0].mxu0
    %3345 = vmatprep.mubr.bf16.mxu0 0
    %3346 = vmatmul.mubr.bf16.gmra.mrb[0].mxu0 %v3295
    %v3347 = vpop.f32.mrb[0].mxu0
    %v3348 = vadd.f32 0.0, %v3347
    %v3349 = vpop.f32.mrb[0].mxu0
    %v3350 = vpop.f32.mrb[0].mxu0
    %v3351 = vadd.f32 0.0, %v3350
    %v3352 = vpop.f32.mrb[0].mxu0
    %3353 = vdwg.mxu0
    %v3354 = vpack.c.bf16 %v3335, %v3332
    %v3355 = vpack.c.bf16 %v3343, %v3340
    %v3356 = vpack.c.bf16 %v3351, %v3348
    %s3357 = scalar_lea.vmem [#allocation10], 28
    %v3358 = vld [vmem:[%s3357] sm:$0xf]
    %v3360 = vsel %vm430, %v3354, 0
    %v3363 = vsel %vm430, %v3355, 0
    %v3366 = vsel %vm430, %v3356, 0
    %v3369 = vsel %vm903, %v3358, 0
    %3371 = vmatprep.subr.bf16.mxu0 0
    %3372 = vmatpush1.bf16.msra.mxu0 %v3369
    %3373 = vmatprep.subr.bf16.mxu0 0
    %3374 = vmatpush1.bf16.msra.mxu0 0
    %3375 = vmatprep.subr.bf16.mxu0 0
    %3376 = vmatpush1.bf16.msra.mxu0 0
    %3377 = vmatprep.subr.bf16.mxu0 0
    %3378 = vmatpush1.bf16.msra.mxu0 0
    %3379 = vmatprep.subr.bf16.mxu0 0
    %3380 = vmatpush1.bf16.msra.mxu0 0
    %3381 = vmatprep.subr.bf16.mxu0 0
    %3382 = vmatpush1.bf16.msra.mxu0 0
    %3383 = vmatprep.subr.bf16.mxu0 0
    %3384 = vmatpush1.bf16.msra.mxu0 0
    %3385 = vmatprep.subr.bf16.mxu0 0
    %3386 = vmatpush1.bf16.msra.mxu0 0
    %3387 = vmatprep.subr.bf16.mxu0 0
    %3388 = vmatpush1.bf16.msra.mxu0 0
    %3389 = vmatprep.subr.bf16.mxu0 0
    %3390 = vmatpush1.bf16.msra.mxu0 0
    %3391 = vmatprep.subr.bf16.mxu0 0
    %3392 = vmatpush1.bf16.msra.mxu0 0
    %3393 = vmatprep.subr.bf16.mxu0 0
    %3394 = vmatpush1.bf16.msra.mxu0 0
    %3395 = vmatprep.subr.bf16.mxu0 0
    %3396 = vmatpush1.bf16.msra.mxu0 0
    %3397 = vmatprep.subr.bf16.mxu0 0
    %3398 = vmatpush1.bf16.msra.mxu0 0
    %3399 = vmatprep.subr.bf16.mxu0 0
    %3400 = vmatpush1.bf16.msra.mxu0 0
    %3401 = vmatprep.subr.bf16.mxu0 0
    %3402 = vmatpush1.bf16.msra.mxu0 0
    %3403 = vmatprep.mubr.bf16.mxu0 0
    %3404 = vmatmul.mubr.bf16.gmra.mrb[0].mxu0 %v3360
    %v3405 = vpop.f32.mrb[0].mxu0
    %v3406 = vadd.f32 0.0, %v3405
    %v3407 = vpop.f32.mrb[0].mxu0
    %v3408 = vpop.f32.mrb[0].mxu0
    %v3409 = vadd.f32 0.0, %v3408
    %v3410 = vpop.f32.mrb[0].mxu0
    %3411 = vmatprep.mubr.bf16.mxu0 0
    %3412 = vmatmul.mubr.bf16.gmra.mrb[0].mxu0 %v3363
    %v3413 = vpop.f32.mrb[0].mxu0
    %v3414 = vadd.f32 0.0, %v3413
    %v3415 = vpop.f32.mrb[0].mxu0
    %v3416 = vpop.f32.mrb[0].mxu0
    %v3417 = vadd.f32 0.0, %v3416
    %v3418 = vpop.f32.mrb[0].mxu0
    %3419 = vmatprep.mubr.bf16.mxu0 0
    %3420 = vmatmul.mubr.bf16.gmra.mrb[0].mxu0 %v3366
    %v3421 = vpop.f32.mrb[0].mxu0
    %v3422 = vadd.f32 0.0, %v3421
    %v3423 = vpop.f32.mrb[0].mxu0
    %v3424 = vpop.f32.mrb[0].mxu0
    %v3425 = vadd.f32 0.0, %v3424
    %v3426 = vpop.f32.mrb[0].mxu0
    %3427 = vdwg.mxu0
    %v3428 = vadd.f32 %v3117, %v3406
    %v3429 = vadd.f32 %v3118, %v3409
    %v3430 = vadd.f32 %v3119, %v3414
    %v3431 = vadd.f32 %v3120, %v3417
    %v3432 = vadd.f32 %v3121, %v3422
    %v3433 = vadd.f32 %v3122, %v3425
    %s3434 = scalar_lea.vmem [#allocation11], 1
    %v3435 = vld [vmem:[%s3434] sm:$0x1]
    %v3437 = vlaneseq
    %v3438 = vshrl.u32 %v3437, 7
    %v3439 = vsub.s32 0, %v3438
    %v3440 = vrot.slane %v3435, %v3439
    %v3442 = vadd.f32 %v3428, %v3440
    %v3443 = vadd.f32 %v3429, %v3440
    %v3444 = vadd.f32 %v3430, %v3440
    %v3445 = vadd.f32 %v3431, %v3440
    %v3446 = vadd.f32 %v3432, %v3440
    %v3447 = vadd.f32 %v3433, %v3440
    %v3448 = vadd.f32 %v2090, %v3442
    %v3449 = vadd.f32 %v2091, %v3443
    %v3450 = vadd.f32 %v2092, %v3444
    %v3451 = vadd.f32 %v2093, %v3445
    %v3452 = vadd.f32 %v2094, %v3446
    %v3453 = vadd.f32 %v2095, %v3447
    %s3454 = scalar_lea.vmem [#allocation13], 1
    %v3455 = vld [vmem:[%s3454] sm:$0x1]
    %s3456 = scalar_lea.vmem [#allocation14], 1
    %v3457 = vld [vmem:[%s3456] sm:$0x1]
    %v3458 = vsel %vm342, %v3448, 0.0
    %3459 = vadd.xlane.f32.xlu0 %v3458
    %v3460 = vpop.xlane.xlu0 %3459
    %v3461 = vsel %vm342, %v3449, 0.0
    %3462 = vadd.xlane.f32.xlu0 %v3461
    %v3463 = vpop.xlane.xlu0 %3462
    %v3464 = vsel %vm342, %v3450, 0.0
    %3465 = vadd.xlane.f32.xlu0 %v3464
    %v3466 = vpop.xlane.xlu0 %3465
    %v3467 = vsel %vm342, %v3451, 0.0
    %3468 = vadd.xlane.f32.xlu0 %v3467
    %v3469 = vpop.xlane.xlu0 %3468
    %v3470 = vsel %vm342, %v3452, 0.0
    %3471 = vadd.xlane.f32.xlu0 %v3470
    %v3472 = vpop.xlane.xlu0 %3471
    %v3473 = vsel %vm342, %v3453, 0.0
    %3474 = vadd.xlane.f32.xlu0 %v3473
    %v3475 = vpop.xlane.xlu0 %3474
    %v3476 = vmul.f32 %v3460, %v1694
    %v3477 = vmul.f32 %v3463, %v1694
    %v3478 = vmul.f32 %v3466, %v1694
    %v3479 = vmul.f32 %v3469, %v1694
    %v3480 = vmul.f32 %v3472, %v1694
    %v3481 = vmul.f32 %v3475, %v1694
    %v3482 = vsub.f32 %v3448, %v3476
    %v3483 = vsub.f32 %v3449, %v3477
    %v3484 = vsub.f32 %v3450, %v3478
    %v3485 = vsub.f32 %v3451, %v3479
    %v3486 = vsub.f32 %v3452, %v3480
    %v3487 = vsub.f32 %v3453, %v3481
    %v3488 = vmul.f32 %v3482, %v3482
    %v3489 = vmul.f32 %v3483, %v3483
    %v3490 = vmul.f32 %v3484, %v3484
    %v3491 = vmul.f32 %v3485, %v3485
    %v3492 = vmul.f32 %v3486, %v3486
    %v3493 = vmul.f32 %v3487, %v3487
    %v3494 = vsel %vm342, %v3488, 0.0
    %3495 = vadd.xlane.f32.xlu0 %v3494
    %v3496 = vpop.xlane.xlu0 %3495
    %v3497 = vsel %vm342, %v3489, 0.0
    %3498 = vadd.xlane.f32.xlu0 %v3497
    %v3499 = vpop.xlane.xlu0 %3498
    %v3500 = vsel %vm342, %v3490, 0.0
    %3501 = vadd.xlane.f32.xlu0 %v3500
    %v3502 = vpop.xlane.xlu0 %3501
    %v3503 = vsel %vm342, %v3491, 0.0
    %3504 = vadd.xlane.f32.xlu0 %v3503
    %v3505 = vpop.xlane.xlu0 %3504
    %v3506 = vsel %vm342, %v3492, 0.0
    %3507 = vadd.xlane.f32.xlu0 %v3506
    %v3508 = vpop.xlane.xlu0 %3507
    %v3509 = vsel %vm342, %v3493, 0.0
    %3510 = vadd.xlane.f32.xlu0 %v3509
    %v3511 = vpop.xlane.xlu0 %3510
    %v3512 = vmul.f32 %v3496, %v1694
    %v3513 = vmul.f32 %v3499, %v1694
    %v3514 = vmul.f32 %v3502, %v1694
    %v3515 = vmul.f32 %v3505, %v1694
    %v3516 = vmul.f32 %v3508, %v1694
    %v3517 = vmul.f32 %v3511, %v1694
    %v3518 = vadd.f32 %v3512, 1e-05
    %v3519 = vadd.f32 %v3513, 1e-05
    %v3520 = vadd.f32 %v3514, 1e-05
    %v3521 = vadd.f32 %v3515, 1e-05
    %v3522 = vadd.f32 %v3516, 1e-05
    %v3523 = vadd.f32 %v3517, 1e-05
    %v3524 = vrsqrt.pop %v3518
    %v3525 = vrsqrt.pop %v3519
    %v3526 = vrsqrt.pop %v3520
    %v3527 = vrsqrt.pop %v3521
    %v3528 = vrsqrt.pop %v3522
    %v3529 = vrsqrt.pop %v3523
    %v3530 = vmul.f32 %v3482, %v3524
    %v3531 = vmul.f32 %v3483, %v3525
    %v3532 = vmul.f32 %v3484, %v3526
    %v3533 = vmul.f32 %v3485, %v3527
    %v3534 = vmul.f32 %v3486, %v3528
    %v3535 = vmul.f32 %v3487, %v3529
    %v3537 = vlaneseq
    %v3538 = vshrl.u32 %v3537, 7
    %v3539 = vsub.s32 0, %v3538
    %v3540 = vrot.slane %v3455, %v3539
    %v3542 = vmul.f32 %v3530, %v3540
    %v3543 = vmul.f32 %v3531, %v3540
    %v3544 = vmul.f32 %v3532, %v3540
    %v3545 = vmul.f32 %v3533, %v3540
    %v3546 = vmul.f32 %v3534, %v3540
    %v3547 = vmul.f32 %v3535, %v3540
    %v3549 = vlaneseq
    %v3550 = vshrl.u32 %v3549, 7
    %v3551 = vsub.s32 0, %v3550
    %v3552 = vrot.slane %v3457, %v3551
    %v3554 = vadd.f32 %v3542, %v3552
    %v3555 = vadd.f32 %v3543, %v3552
    %v3556 = vadd.f32 %v3544, %v3552
    %v3557 = vadd.f32 %v3545, %v3552
    %v3558 = vadd.f32 %v3546, %v3552
    %v3559 = vadd.f32 %v3547, %v3552
    %v3560 = vpack.c.bf16 %v3555, %v3554
    %v3561 = vpack.c.bf16 %v3557, %v3556
    %v3562 = vpack.c.bf16 %v3559, %v3558
    %s3563 = scalar_lea.vmem [#allocation16], 16
    %v3564 = vld [vmem:[%s3563] sm:$0xf]
    %v3565 = vld [vmem:[%s3563 + $0x4] sm:$0xf]
    %v3566 = vld [vmem:[%s3563 + $0x8] sm:$0xf]
    %v3567 = vld [vmem:[%s3563 + $0xc] sm:$0xf]
    %s3568 = scalar_lea.vmem [#allocation17], 1
    %v3569 = vld [vmem:[%s3568] sm:$0x1]
    %v3571 = vlaneseq
    %v3572 = vshrl.u32 %v3571, 7
    %v3573 = vsub.s32 0, %v3572
    %v3574 = vrot.slane %v3569, %v3573
    %v3580 = vunpack.c.l.b16 %v3564
    %v3581 = vunpack.c.l.b16 %v3565
    %v3582 = vunpack.c.l.b16 %v3566
    %v3583 = vunpack.c.l.b16 %v3567
    %v3584 = vpack.c.b16 %v3581, %v3580
    %v3585 = vpack.c.b16 %v3583, %v3582
    %v3589 = vsel %vm342, %v3560, 0
    %v3592 = vsel %vm342, %v3561, 0
    %v3595 = vsel %vm342, %v3562, 0
    %3597 = vmatprep.subr.bf16.mxu0 0
    %3598 = vmatpush1.bf16.msra.mxu0 %v3584
    %3599 = vmatprep.subr.bf16.mxu0 0
    %3600 = vmatpush1.bf16.msra.mxu0 %v3585
    %3601 = vmatprep.subr.bf16.mxu0 0
    %3602 = vmatpush1.bf16.msra.mxu0 0
    %3603 = vmatprep.subr.bf16.mxu0 0
    %3604 = vmatpush1.bf16.msra.mxu0 0
    %3605 = vmatprep.subr.bf16.mxu0 0
    %3606 = vmatpush1.bf16.msra.mxu0 0
    %3607 = vmatprep.subr.bf16.mxu0 0
    %3608 = vmatpush1.bf16.msra.mxu0 0
    %3609 = vmatprep.subr.bf16.mxu0 0
    %3610 = vmatpush1.bf16.msra.mxu0 0
    %3611 = vmatprep.subr.bf16.mxu0 0
    %3612 = vmatpush1.bf16.msra.mxu0 0
    %3613 = vmatprep.subr.bf16.mxu0 0
    %3614 = vmatpush1.bf16.msra.mxu0 0
    %3615 = vmatprep.subr.bf16.mxu0 0
    %3616 = vmatpush1.bf16.msra.mxu0 0
    %3617 = vmatprep.subr.bf16.mxu0 0
    %3618 = vmatpush1.bf16.msra.mxu0 0
    %3619 = vmatprep.subr.bf16.mxu0 0
    %3620 = vmatpush1.bf16.msra.mxu0 0
    %3621 = vmatprep.subr.bf16.mxu0 0
    %3622 = vmatpush1.bf16.msra.mxu0 0
    %3623 = vmatprep.subr.bf16.mxu0 0
    %3624 = vmatpush1.bf16.msra.mxu0 0
    %3625 = vmatprep.subr.bf16.mxu0 0
    %3626 = vmatpush1.bf16.msra.mxu0 0
    %3627 = vmatprep.subr.bf16.mxu0 0
    %3628 = vmatpush1.bf16.msra.mxu0 0
    %3629 = vmatprep.mubr.bf16.mxu0 0
    %3630 = vmatmul.mubr.bf16.gmra.mrb[0].mxu0 %v3589
    %v3631 = vpop.f32.mrb[0].mxu0
    %v3632 = vadd.f32 %v3574, %v3631
    %v3633 = vpop.f32.mrb[0].mxu0
    %v3634 = vpop.f32.mrb[0].mxu0
    %v3635 = vadd.f32 %v3574, %v3634
    %v3636 = vpop.f32.mrb[0].mxu0
    %3637 = vmatprep.mubr.bf16.mxu0 0
    %3638 = vmatmul.mubr.bf16.gmra.mrb[0].mxu0 %v3592
    %v3639 = vpop.f32.mrb[0].mxu0
    %v3640 = vadd.f32 %v3574, %v3639
    %v3641 = vpop.f32.mrb[0].mxu0
    %v3642 = vpop.f32.mrb[0].mxu0
    %v3643 = vadd.f32 %v3574, %v3642
    %v3644 = vpop.f32.mrb[0].mxu0
    %3645 = vmatprep.mubr.bf16.mxu0 0
    %3646 = vmatmul.mubr.bf16.gmra.mrb[0].mxu0 %v3595
    %v3647 = vpop.f32.mrb[0].mxu0
    %v3648 = vadd.f32 %v3574, %v3647
    %v3649 = vpop.f32.mrb[0].mxu0
    %v3650 = vpop.f32.mrb[0].mxu0
    %v3651 = vadd.f32 %v3574, %v3650
    %v3652 = vpop.f32.mrb[0].mxu0
    %3653 = vdwg.mxu0
    %v3654 = vmax.f32 %v3632, 0.0
    %v3655 = vmax.f32 %v3635, 0.0
    %v3656 = vmax.f32 %v3640, 0.0
    %v3657 = vmax.f32 %v3643, 0.0
    %v3658 = vmax.f32 %v3648, 0.0
    %v3659 = vmax.f32 %v3651, 0.0
    %v3660 = vpack.c.bf16 %v3655, %v3654
    %v3661 = vpack.c.bf16 %v3657, %v3656
    %v3662 = vpack.c.bf16 %v3659, %v3658
    %s3663 = scalar_lea.vmem [#allocation19], 32
    %v3664 = vld [vmem:[%s3663] sm:$0xf]
    %v3665 = vld [vmem:[%s3663 + $0x4] sm:$0xf]
    %v3666 = vld [vmem:[%s3663 + $0x8] sm:$0xf]
    %v3667 = vld [vmem:[%s3663 + $0xc] sm:$0xf]
    %v3668 = vld [vmem:[%s3663 + $0x10] sm:$0xf]
    %v3669 = vld [vmem:[%s3663 + $0x14] sm:$0xf]
    %v3670 = vld [vmem:[%s3663 + $0x18] sm:$0xf]
    %v3671 = vld [vmem:[%s3663 + $0x1c] sm:$0xf]
    %s3672 = scalar_lea.vmem [#allocation20], 1
    %v3673 = vld [vmem:[%s3672] sm:$0x1]
    %v3675 = vlaneseq
    %v3676 = vshrl.u32 %v3675, 7
    %v3677 = vsub.s32 0, %v3676
    %v3678 = vrot.slane %v3673, %v3677
    %v3688 = vunpack.c.l.b16 %v3664
    %v3689 = vunpack.c.l.b16 %v3665
    %v3690 = vunpack.c.l.b16 %v3666
    %v3691 = vunpack.c.l.b16 %v3667
    %v3692 = vunpack.c.l.b16 %v3668
    %v3693 = vunpack.c.l.b16 %v3669
    %v3694 = vunpack.c.l.b16 %v3670
    %v3695 = vunpack.c.l.b16 %v3671
    %v3696 = vpack.c.b16 %v3689, %v3688
    %v3697 = vpack.c.b16 %v3691, %v3690
    %v3698 = vpack.c.b16 %v3693, %v3692
    %v3699 = vpack.c.b16 %v3695, %v3694
    %v3705 = vsel %vm1919, %v3660, 0
    %v3708 = vsel %vm1919, %v3661, 0
    %v3711 = vsel %vm1919, %v3662, 0
    %3713 = vmatprep.subr.bf16.mxu0 0
    %3714 = vmatpush1.bf16.msra.mxu0 %v3696
    %3715 = vmatprep.subr.bf16.mxu0 0
    %3716 = vmatpush1.bf16.msra.mxu0 %v3697
    %3717 = vmatprep.subr.bf16.mxu0 0
    %3718 = vmatpush1.bf16.msra.mxu0 %v3698
    %3719 = vmatprep.subr.bf16.mxu0 0
    %3720 = vmatpush1.bf16.msra.mxu0 %v3699
    %3721 = vmatprep.subr.bf16.mxu0 0
    %3722 = vmatpush1.bf16.msra.mxu0 0
    %3723 = vmatprep.subr.bf16.mxu0 0
    %3724 = vmatpush1.bf16.msra.mxu0 0
    %3725 = vmatprep.subr.bf16.mxu0 0
    %3726 = vmatpush1.bf16.msra.mxu0 0
    %3727 = vmatprep.subr.bf16.mxu0 0
    %3728 = vmatpush1.bf16.msra.mxu0 0
    %3729 = vmatprep.subr.bf16.mxu0 0
    %3730 = vmatpush1.bf16.msra.mxu0 0
    %3731 = vmatprep.subr.bf16.mxu0 0
    %3732 = vmatpush1.bf16.msra.mxu0 0
    %3733 = vmatprep.subr.bf16.mxu0 0
    %3734 = vmatpush1.bf16.msra.mxu0 0
    %3735 = vmatprep.subr.bf16.mxu0 0
    %3736 = vmatpush1.bf16.msra.mxu0 0
    %3737 = vmatprep.subr.bf16.mxu0 0
    %3738 = vmatpush1.bf16.msra.mxu0 0
    %3739 = vmatprep.subr.bf16.mxu0 0
    %3740 = vmatpush1.bf16.msra.mxu0 0
    %3741 = vmatprep.subr.bf16.mxu0 0
    %3742 = vmatpush1.bf16.msra.mxu0 0
    %3743 = vmatprep.subr.bf16.mxu0 0
    %3744 = vmatpush1.bf16.msra.mxu0 0
    %3745 = vmatprep.mubr.bf16.mxu0 0
    %3746 = vmatmul.mubr.bf16.gmra.mrb[0].mxu0 %v3705
    %v3747 = vpop.f32.mrb[0].mxu0
    %v3748 = vadd.f32 %v3678, %v3747
    %v3749 = vpop.f32.mrb[0].mxu0
    %v3750 = vpop.f32.mrb[0].mxu0
    %v3751 = vadd.f32 %v3678, %v3750
    %v3752 = vpop.f32.mrb[0].mxu0
    %3753 = vmatprep.mubr.bf16.mxu0 0
    %3754 = vmatmul.mubr.bf16.gmra.mrb[0].mxu0 %v3708
    %v3755 = vpop.f32.mrb[0].mxu0
    %v3756 = vadd.f32 %v3678, %v3755
    %v3757 = vpop.f32.mrb[0].mxu0
    %v3758 = vpop.f32.mrb[0].mxu0
    %v3759 = vadd.f32 %v3678, %v3758
    %v3760 = vpop.f32.mrb[0].mxu0
    %3761 = vmatprep.mubr.bf16.mxu0 0
    %3762 = vmatmul.mubr.bf16.gmra.mrb[0].mxu0 %v3711
    %v3763 = vpop.f32.mrb[0].mxu0
    %v3764 = vadd.f32 %v3678, %v3763
    %v3765 = vpop.f32.mrb[0].mxu0
    %v3766 = vpop.f32.mrb[0].mxu0
    %v3767 = vadd.f32 %v3678, %v3766
    %v3768 = vpop.f32.mrb[0].mxu0
    %3769 = vdwg.mxu0
    %v3770 = vadd.f32 %v3554, %v3748
    %v3771 = vadd.f32 %v3555, %v3751
    %v3772 = vadd.f32 %v3556, %v3756
    %v3773 = vadd.f32 %v3557, %v3759
    %v3774 = vadd.f32 %v3558, %v3764
    %v3775 = vadd.f32 %v3559, %v3767
    %s3776 = scalar_lea.vmem [#allocation22], 1
    %v3777 = vld [vmem:[%s3776] sm:$0x1]
    %s3778 = scalar_lea.vmem [#allocation23], 1
    %v3779 = vld [vmem:[%s3778] sm:$0x1]
    %v3780 = vsel %vm342, %v3770, 0.0
    %3781 = vadd.xlane.f32.xlu0 %v3780
    %v3782 = vpop.xlane.xlu0 %3781
    %v3783 = vsel %vm342, %v3771, 0.0
    %3784 = vadd.xlane.f32.xlu0 %v3783
    %v3785 = vpop.xlane.xlu0 %3784
    %v3786 = vsel %vm342, %v3772, 0.0
    %3787 = vadd.xlane.f32.xlu0 %v3786
    %v3788 = vpop.xlane.xlu0 %3787
    %v3789 = vsel %vm342, %v3773, 0.0
    %3790 = vadd.xlane.f32.xlu0 %v3789
    %v3791 = vpop.xlane.xlu0 %3790
    %v3792 = vsel %vm342, %v3774, 0.0
    %3793 = vadd.xlane.f32.xlu0 %v3792
    %v3794 = vpop.xlane.xlu0 %3793
    %v3795 = vsel %vm342, %v3775, 0.0
    %3796 = vadd.xlane.f32.xlu0 %v3795
    %v3797 = vpop.xlane.xlu0 %3796
    %v3798 = vmul.f32 %v3782, %v1694
    %v3799 = vmul.f32 %v3785, %v1694
    %v3800 = vmul.f32 %v3788, %v1694
    %v3801 = vmul.f32 %v3791, %v1694
    %v3802 = vmul.f32 %v3794, %v1694
    %v3803 = vmul.f32 %v3797, %v1694
    %v3804 = vsub.f32 %v3770, %v3798
    %v3805 = vsub.f32 %v3771, %v3799
    %v3806 = vsub.f32 %v3772, %v3800
    %v3807 = vsub.f32 %v3773, %v3801
    %v3808 = vsub.f32 %v3774, %v3802
    %v3809 = vsub.f32 %v3775, %v3803
    %v3810 = vmul.f32 %v3804, %v3804
    %v3811 = vmul.f32 %v3805, %v3805
    %v3812 = vmul.f32 %v3806, %v3806
    %v3813 = vmul.f32 %v3807, %v3807
    %v3814 = vmul.f32 %v3808, %v3808
    %v3815 = vmul.f32 %v3809, %v3809
    %v3816 = vsel %vm342, %v3810, 0.0
    %3817 = vadd.xlane.f32.xlu0 %v3816
    %v3818 = vpop.xlane.xlu0 %3817
    %v3819 = vsel %vm342, %v3811, 0.0
    %3820 = vadd.xlane.f32.xlu0 %v3819
    %v3821 = vpop.xlane.xlu0 %3820
    %v3822 = vsel %vm342, %v3812, 0.0
    %3823 = vadd.xlane.f32.xlu0 %v3822
    %v3824 = vpop.xlane.xlu0 %3823
    %v3825 = vsel %vm342, %v3813, 0.0
    %3826 = vadd.xlane.f32.xlu0 %v3825
    %v3827 = vpop.xlane.xlu0 %3826
    %v3828 = vsel %vm342, %v3814, 0.0
    %3829 = vadd.xlane.f32.xlu0 %v3828
    %v3830 = vpop.xlane.xlu0 %3829
    %v3831 = vsel %vm342, %v3815, 0.0
    %3832 = vadd.xlane.f32.xlu0 %v3831
    %v3833 = vpop.xlane.xlu0 %3832
    %v3834 = vmul.f32 %v3818, %v1694
    %v3835 = vmul.f32 %v3821, %v1694
    %v3836 = vmul.f32 %v3824, %v1694
    %v3837 = vmul.f32 %v3827, %v1694
    %v3838 = vmul.f32 %v3830, %v1694
    %v3839 = vmul.f32 %v3833, %v1694
    %v3840 = vadd.f32 %v3834, 1e-05
    %v3841 = vadd.f32 %v3835, 1e-05
    %v3842 = vadd.f32 %v3836, 1e-05
    %v3843 = vadd.f32 %v3837, 1e-05
    %v3844 = vadd.f32 %v3838, 1e-05
    %v3845 = vadd.f32 %v3839, 1e-05
    %v3846 = vrsqrt.pop %v3840
    %v3847 = vrsqrt.pop %v3841
    %v3848 = vrsqrt.pop %v3842
    %v3849 = vrsqrt.pop %v3843
    %v3850 = vrsqrt.pop %v3844
    %v3851 = vrsqrt.pop %v3845
    %v3852 = vmul.f32 %v3804, %v3846
    %v3853 = vmul.f32 %v3805, %v3847
    %v3854 = vmul.f32 %v3806, %v3848
    %v3855 = vmul.f32 %v3807, %v3849
    %v3856 = vmul.f32 %v3808, %v3850
    %v3857 = vmul.f32 %v3809, %v3851
    %v3859 = vlaneseq
    %v3860 = vshrl.u32 %v3859, 7
    %v3861 = vsub.s32 0, %v3860
    %v3862 = vrot.slane %v3777, %v3861
    %v3864 = vmul.f32 %v3852, %v3862
    %v3865 = vmul.f32 %v3853, %v3862
    %v3866 = vmul.f32 %v3854, %v3862
    %v3867 = vmul.f32 %v3855, %v3862
    %v3868 = vmul.f32 %v3856, %v3862
    %v3869 = vmul.f32 %v3857, %v3862
    %v3871 = vlaneseq
    %v3872 = vshrl.u32 %v3871, 7
    %v3873 = vsub.s32 0, %v3872
    %v3874 = vrot.slane %v3779, %v3873
    %v3876 = vadd.f32 %v3864, %v3874
    %v3877 = vadd.f32 %v3865, %v3874
    %v3878 = vadd.f32 %v3866, %v3874
    %v3879 = vadd.f32 %v3867, %v3874
    %v3880 = vadd.f32 %v3868, %v3874
    %v3881 = vadd.f32 %v3869, %v3874
    %v3882 = vlaneseq
    %v3883 = vshrl.u32 %v3882, 7
    %v3884 = vlaneseq
    %v3885 = vand.u32 %v3884, 127
    %v3886 = vmul.u32 %v3883, 8
    %vm3887 = vcmp.eq.s32.totalorder %v3885, %v3886
    %v3888 = vsel %vm3887, 1, 0
    %v3889 = vcvt.s32.f32 %v3888
    %v3891 = vsel %vm506, %v3889, 0
    %3893 = vmatprep.subr.mxu0 0.0
    %3894 = vmatpush1.msra.mxu0 %v3876
    %3895 = vmatprep.subr.mxu0 0.0
    %3896 = vmatpush1.msra.mxu0 %v3877
    %3897 = vmatprep.subr.mxu0 0.0
    %3898 = vmatpush1.msra.mxu0 %v3878
    %3899 = vmatprep.subr.mxu0 0.0
    %3900 = vmatpush1.msra.mxu0 %v3879
    %3901 = vmatprep.subr.mxu0 0.0
    %3902 = vmatpush1.msra.mxu0 %v3880
    %3903 = vmatprep.subr.mxu0 0.0
    %3904 = vmatpush1.msra.mxu0 %v3881
    %3905 = vmatprep.subr.mxu0 0.0
    %3906 = vmatpush1.msra.mxu0 0.0
    %3907 = vmatprep.subr.mxu0 0.0
    %3908 = vmatpush1.msra.mxu0 0.0
    %3909 = vmatprep.subr.mxu0 0.0
    %3910 = vmatpush1.msra.mxu0 0.0
    %3911 = vmatprep.subr.mxu0 0.0
    %3912 = vmatpush1.msra.mxu0 0.0
    %3913 = vmatprep.subr.mxu0 0.0
    %3914 = vmatpush1.msra.mxu0 0.0
    %3915 = vmatprep.subr.mxu0 0.0
    %3916 = vmatpush1.msra.mxu0 0.0
    %3917 = vmatprep.subr.mxu0 0.0
    %3918 = vmatpush1.msra.mxu0 0.0
    %3919 = vmatprep.subr.mxu0 0.0
    %3920 = vmatpush1.msra.mxu0 0.0
    %3921 = vmatprep.subr.mxu0 0.0
    %3922 = vmatpush1.msra.mxu0 0.0
    %3923 = vmatprep.subr.mxu0 0.0
    %3924 = vmatpush1.msra.mxu0 0.0
    %3925 = vmatprep.subr.mxu0 0.0
    %3926 = vmatpush1.msra.mxu0 0.0
    %3927 = vmatprep.subr.mxu0 0.0
    %3928 = vmatpush1.msra.mxu0 0.0
    %3929 = vmatprep.subr.mxu0 0.0
    %3930 = vmatpush1.msra.mxu0 0.0
    %3931 = vmatprep.subr.mxu0 0.0
    %3932 = vmatpush1.msra.mxu0 0.0
    %3933 = vmatprep.subr.mxu0 0.0
    %3934 = vmatpush1.msra.mxu0 0.0
    %3935 = vmatprep.subr.mxu0 0.0
    %3936 = vmatpush1.msra.mxu0 0.0
    %3937 = vmatprep.subr.mxu0 0.0
    %3938 = vmatpush1.msra.mxu0 0.0
    %3939 = vmatprep.subr.mxu0 0.0
    %3940 = vmatpush1.msra.mxu0 0.0
    %3941 = vmatprep.subr.mxu0 0.0
    %3942 = vmatpush1.msra.mxu0 0.0
    %3943 = vmatprep.subr.mxu0 0.0
    %3944 = vmatpush1.msra.mxu0 0.0
    %3945 = vmatprep.subr.mxu0 0.0
    %3946 = vmatpush1.msra.mxu0 0.0
    %3947 = vmatprep.subr.mxu0 0.0
    %3948 = vmatpush1.msra.mxu0 0.0
    %3949 = vmatprep.subr.mxu0 0.0
    %3950 = vmatpush1.msra.mxu0 0.0
    %3951 = vmatprep.subr.mxu0 0.0
    %3952 = vmatpush1.msra.mxu0 0.0
    %3953 = vmatprep.subr.mxu0 0.0
    %3954 = vmatpush1.msra.mxu0 0.0
    %3955 = vmatprep.subr.mxu0 0.0
    %3956 = vmatpush1.msra.mxu0 0.0
    %3957 = vmatprep.mubr.f32.mxu0 0.0
    %3958 = vmatmul.mubr.f32.gmra.mrb[0].mxu0 %v3891
    %v3959 = vpop.f32.mrb[0].mxu0
    %v3960 = vadd.f32 0.0, %v3959
    %v3961 = vpop.f32.mrb[0].mxu0
    %3962 = vdwg.mxu0
    %v3963 = vld [vmem:[#allocation25] sm:$0xff]
    %v3964 = vld [vmem:[#allocation25 + $0x8] sm:$0xff]
    %v3965 = vld [vmem:[#allocation25 + $0x10] sm:$0xff]
    %v3966 = vld [vmem:[#allocation25 + $0x18] sm:$0xff]
    %v3967 = vld [vmem:[#allocation26] sm:$0x1]
    %v3969 = vlaneseq
    %v3970 = vshrl.u32 %v3969, 7
    %v3971 = vsub.s32 0, %v3970
    %v3972 = vrot.slane %v3967, %v3971
    %v3975 = vsel %vm342, %v3960, 0
    %3977 = vmatprep.subr.mxu0 0.0
    %3978 = vmatpush1.msra.mxu0 %v3963
    %3979 = vmatprep.subr.mxu0 0.0
    %3980 = vmatpush1.msra.mxu0 %v3964
    %3981 = vmatprep.subr.mxu0 0.0
    %3982 = vmatpush1.msra.mxu0 %v3965
    %3983 = vmatprep.subr.mxu0 0.0
    %3984 = vmatpush1.msra.mxu0 %v3966
    %3985 = vmatprep.subr.mxu0 0.0
    %3986 = vmatpush1.msra.mxu0 0.0
    %3987 = vmatprep.subr.mxu0 0.0
    %3988 = vmatpush1.msra.mxu0 0.0
    %3989 = vmatprep.subr.mxu0 0.0
    %3990 = vmatpush1.msra.mxu0 0.0
    %3991 = vmatprep.subr.mxu0 0.0
    %3992 = vmatpush1.msra.mxu0 0.0
    %3993 = vmatprep.subr.mxu0 0.0
    %3994 = vmatpush1.msra.mxu0 0.0
    %3995 = vmatprep.subr.mxu0 0.0
    %3996 = vmatpush1.msra.mxu0 0.0
    %3997 = vmatprep.subr.mxu0 0.0
    %3998 = vmatpush1.msra.mxu0 0.0
    %3999 = vmatprep.subr.mxu0 0.0
    %4000 = vmatpush1.msra.mxu0 0.0
    %4001 = vmatprep.subr.mxu0 0.0
    %4002 = vmatpush1.msra.mxu0 0.0
    %4003 = vmatprep.subr.mxu0 0.0
    %4004 = vmatpush1.msra.mxu0 0.0
    %4005 = vmatprep.subr.mxu0 0.0
    %4006 = vmatpush1.msra.mxu0 0.0
    %4007 = vmatprep.subr.mxu0 0.0
    %4008 = vmatpush1.msra.mxu0 0.0
    %4009 = vmatprep.subr.mxu0 0.0
    %4010 = vmatpush1.msra.mxu0 0.0
    %4011 = vmatprep.subr.mxu0 0.0
    %4012 = vmatpush1.msra.mxu0 0.0
    %4013 = vmatprep.subr.mxu0 0.0
    %4014 = vmatpush1.msra.mxu0 0.0
    %4015 = vmatprep.subr.mxu0 0.0
    %4016 = vmatpush1.msra.mxu0 0.0
    %4017 = vmatprep.subr.mxu0 0.0
    %4018 = vmatpush1.msra.mxu0 0.0
    %4019 = vmatprep.subr.mxu0 0.0
    %4020 = vmatpush1.msra.mxu0 0.0
    %4021 = vmatprep.subr.mxu0 0.0
    %4022 = vmatpush1.msra.mxu0 0.0
    %4023 = vmatprep.subr.mxu0 0.0
    %4024 = vmatpush1.msra.mxu0 0.0
    %4025 = vmatprep.subr.mxu0 0.0
    %4026 = vmatpush1.msra.mxu0 0.0
    %4027 = vmatprep.subr.mxu0 0.0
    %4028 = vmatpush1.msra.mxu0 0.0
    %4029 = vmatprep.subr.mxu0 0.0
    %4030 = vmatpush1.msra.mxu0 0.0
    %4031 = vmatprep.subr.mxu0 0.0
    %4032 = vmatpush1.msra.mxu0 0.0
    %4033 = vmatprep.subr.mxu0 0.0
    %4034 = vmatpush1.msra.mxu0 0.0
    %4035 = vmatprep.subr.mxu0 0.0
    %4036 = vmatpush1.msra.mxu0 0.0
    %4037 = vmatprep.subr.mxu0 0.0
    %4038 = vmatpush1.msra.mxu0 0.0
    %4039 = vmatprep.subr.mxu0 0.0
    %4040 = vmatpush1.msra.mxu0 0.0
    %4041 = vmatprep.mubr.f32.mxu0 0.0
    %4042 = vmatmul.mubr.f32.gmra.mrb[0].mxu0 %v3975
    %v4043 = vpop.f32.mrb[0].mxu0
    %v4044 = vadd.f32 %v3972, %v4043
    %v4045 = vpop.f32.mrb[0].mxu0
    %4046 = vdwg.mxu0
    %vm4047 = vcmask 259072
    %4048 = vst.msk [vmem:[#allocation31] sm:$0x3f] %vm4047, %v4044
    %v4049 = vld [vmem:[#allocation28] sm:$0xff]
    %v4050 = vld [vmem:[#allocation28 + $0x8] sm:$0xff]
    %v4051 = vld [vmem:[#allocation28 + $0x10] sm:$0xff]
    %v4052 = vld [vmem:[#allocation28 + $0x18] sm:$0xff]
    %v4053 = vld [vmem:[#allocation28 + $0x20] sm:$0xff]
    %v4054 = vld [vmem:[#allocation28 + $0x28] sm:$0xff]
    %v4055 = vld [vmem:[#allocation28 + $0x30] sm:$0xff]
    %v4056 = vld [vmem:[#allocation28 + $0x38] sm:$0xff]
    %v4057 = vld [vmem:[#allocation28 + $0x40] sm:$0xff]
    %v4058 = vld [vmem:[#allocation28 + $0x48] sm:$0xff]
    %v4059 = vld [vmem:[#allocation28 + $0x50] sm:$0xff]
    %v4060 = vld [vmem:[#allocation28 + $0x58] sm:$0xff]
    %v4061 = vld [vmem:[#allocation28 + $0x60] sm:$0xff]
    %v4062 = vld [vmem:[#allocation28 + $0x68] sm:$0xff]
    %v4063 = vld [vmem:[#allocation28 + $0x70] sm:$0xff]
    %v4064 = vld [vmem:[#allocation28 + $0x78] sm:$0xff]
    %v4065 = vld [vmem:[#allocation29] sm:$0x1]
    %v4067 = vsel %vm430, %v4044, 0
    %v4070 = vsel %vm430, %v4049, 0
    %v4073 = vsel %vm430, %v4050, 0
    %v4076 = vsel %vm430, %v4051, 0
    %v4079 = vsel %vm430, %v4052, 0
    %v4082 = vsel %vm430, %v4053, 0
    %v4085 = vsel %vm430, %v4054, 0
    %v4088 = vsel %vm430, %v4055, 0
    %v4091 = vsel %vm430, %v4056, 0
    %v4094 = vsel %vm430, %v4057, 0
    %v4097 = vsel %vm430, %v4058, 0
    %v4100 = vsel %vm430, %v4059, 0
    %v4103 = vsel %vm430, %v4060, 0
    %v4106 = vsel %vm430, %v4061, 0
    %v4109 = vsel %vm430, %v4062, 0
    %v4112 = vsel %vm430, %v4063, 0
    %v4115 = vsel %vm430, %v4064, 0
    %4117 = vmatprep.subr.mxu0 0.0
    %4118 = vmatpush1.xpose.msra.mxu0 %v4070
    %4119 = vmatprep.subr.mxu0 0.0
    %4120 = vmatpush1.xpose.msra.mxu0 %v4073
    %4121 = vmatprep.subr.mxu0 0.0
    %4122 = vmatpush1.xpose.msra.mxu0 %v4076
    %4123 = vmatprep.subr.mxu0 0.0
    %4124 = vmatpush1.xpose.msra.mxu0 %v4079
    %4125 = vmatprep.subr.mxu0 0.0
    %4126 = vmatpush1.xpose.msra.mxu0 %v4082
    %4127 = vmatprep.subr.mxu0 0.0
    %4128 = vmatpush1.xpose.msra.mxu0 %v4085
    %4129 = vmatprep.subr.mxu0 0.0
    %4130 = vmatpush1.xpose.msra.mxu0 %v4088
    %4131 = vmatprep.subr.mxu0 0.0
    %4132 = vmatpush1.xpose.msra.mxu0 %v4091
    %4133 = vmatprep.subr.mxu0 0.0
    %4134 = vmatpush1.xpose.msra.mxu0 %v4094
    %4135 = vmatprep.subr.mxu0 0.0
    %4136 = vmatpush1.xpose.msra.mxu0 %v4097
    %4137 = vmatprep.subr.mxu0 0.0
    %4138 = vmatpush1.xpose.msra.mxu0 %v4100
    %4139 = vmatprep.subr.mxu0 0.0
    %4140 = vmatpush1.xpose.msra.mxu0 %v4103
    %4141 = vmatprep.subr.mxu0 0.0
    %4142 = vmatpush1.xpose.msra.mxu0 %v4106
    %4143 = vmatprep.subr.mxu0 0.0
    %4144 = vmatpush1.xpose.msra.mxu0 %v4109
    %4145 = vmatprep.subr.mxu0 0.0
    %4146 = vmatpush1.xpose.msra.mxu0 %v4112
    %4147 = vmatprep.subr.mxu0 0.0
    %4148 = vmatpush1.xpose.msra.mxu0 %v4115
    %4149 = vmatprep.subr.mxu0 0.0
    %4150 = vmatpush1.xpose.msra.mxu0 0.0
    %4151 = vmatprep.subr.mxu0 0.0
    %4152 = vmatpush1.xpose.msra.mxu0 0.0
    %4153 = vmatprep.subr.mxu0 0.0
    %4154 = vmatpush1.xpose.msra.mxu0 0.0
    %4155 = vmatprep.subr.mxu0 0.0
    %4156 = vmatpush1.xpose.msra.mxu0 0.0
    %4157 = vmatprep.subr.mxu0 0.0
    %4158 = vmatpush1.xpose.msra.mxu0 0.0
    %4159 = vmatprep.subr.mxu0 0.0
    %4160 = vmatpush1.xpose.msra.mxu0 0.0
    %4161 = vmatprep.subr.mxu0 0.0
    %4162 = vmatpush1.xpose.msra.mxu0 0.0
    %4163 = vmatprep.subr.mxu0 0.0
    %4164 = vmatpush1.xpose.msra.mxu0 0.0
    %4165 = vmatprep.subr.mxu0 0.0
    %4166 = vmatpush1.xpose.msra.mxu0 0.0
    %4167 = vmatprep.subr.mxu0 0.0
    %4168 = vmatpush1.xpose.msra.mxu0 0.0
    %4169 = vmatprep.subr.mxu0 0.0
    %4170 = vmatpush1.xpose.msra.mxu0 0.0
    %4171 = vmatprep.subr.mxu0 0.0
    %4172 = vmatpush1.xpose.msra.mxu0 0.0
    %4173 = vmatprep.subr.mxu0 0.0
    %4174 = vmatpush1.xpose.msra.mxu0 0.0
    %4175 = vmatprep.subr.mxu0 0.0
    %4176 = vmatpush1.xpose.msra.mxu0 0.0
    %4177 = vmatprep.subr.mxu0 0.0
    %4178 = vmatpush1.xpose.msra.mxu0 0.0
    %4179 = vmatprep.subr.mxu0 0.0
    %4180 = vmatpush1.xpose.msra.mxu0 0.0
    %4181 = vmatprep.mubr.f32.mxu0 0.0
    %4182 = vmatmul.mubr.f32.gmra.mrb[0].mxu0 %v4067
    %v4183 = vpop.f32.mrb[0].mxu0
    %v4184 = vadd.f32 0.0, %v4183
    %v4185 = vpop.f32.mrb[0].mxu0
    %4186 = vdwg.mxu0
    %v4187 = vmul.f32 %v4184, 2.0
    %v4189 = vlaneseq
    %v4190 = vshrl.u32 %v4189, 7
    %v4191 = vsub.s32 0, %v4190
    %v4192 = vrot.slane %v4065, %v4191
    %v4194 = vsub.f32 %v4192, %v4187
    %vm4195 = vcmp.lt.s32.totalorder %v3885, 16
    %v4196 = vsel %vm4195, %v4194, 1e+30
    %vm4197 = vcmask 1045504
    %v4198 = vsel %vm4197, %v4196, inf
    %4199 = vmin.xlane.f32.xlu0 %v4198
    %v4200 = vpop.xlane.xlu0 %4199
    %v4201 = vcvt.s32.f32 %v3885
    %vm4202 = vcmp.le.f32.partialorder %v4196, %v4200
    %v4203 = vsel %vm4202, %v4201, 128.0
    %v4204 = vsel %vm4197, %v4203, inf
    %4205 = vmin.xlane.f32.xlu0 %v4204
    %v4206 = vpop.xlane.xlu0 %4205
    %vm4207 = vcmp.eq.f32.partialorder %v4201, %v4206
    %v4208 = vsel %vm4207, 1, 0
    %v4209 = vcvt.s32.f32 %v4208
    %4210 = vmatprep.subr.mxu0 0.0
    %4211 = vmatpush1.msra.mxu0 %v4049
    %4212 = vmatprep.subr.mxu0 0.0
    %4213 = vmatpush1.msra.mxu0 %v4050
    %4214 = vmatprep.subr.mxu0 0.0
    %4215 = vmatpush1.msra.mxu0 %v4051
    %4216 = vmatprep.subr.mxu0 0.0
    %4217 = vmatpush1.msra.mxu0 %v4052
    %4218 = vmatprep.subr.mxu0 0.0
    %4219 = vmatpush1.msra.mxu0 %v4053
    %4220 = vmatprep.subr.mxu0 0.0
    %4221 = vmatpush1.msra.mxu0 %v4054
    %4222 = vmatprep.subr.mxu0 0.0
    %4223 = vmatpush1.msra.mxu0 %v4055
    %4224 = vmatprep.subr.mxu0 0.0
    %4225 = vmatpush1.msra.mxu0 %v4056
    %4226 = vmatprep.subr.mxu0 0.0
    %4227 = vmatpush1.msra.mxu0 %v4057
    %4228 = vmatprep.subr.mxu0 0.0
    %4229 = vmatpush1.msra.mxu0 %v4058
    %4230 = vmatprep.subr.mxu0 0.0
    %4231 = vmatpush1.msra.mxu0 %v4059
    %4232 = vmatprep.subr.mxu0 0.0
    %4233 = vmatpush1.msra.mxu0 %v4060
    %4234 = vmatprep.subr.mxu0 0.0
    %4235 = vmatpush1.msra.mxu0 %v4061
    %4236 = vmatprep.subr.mxu0 0.0
    %4237 = vmatpush1.msra.mxu0 %v4062
    %4238 = vmatprep.subr.mxu0 0.0
    %4239 = vmatpush1.msra.mxu0 %v4063
    %4240 = vmatprep.subr.mxu0 0.0
    %4241 = vmatpush1.msra.mxu0 %v4064
    %4242 = vmatprep.subr.mxu0 0.0
    %4243 = vmatpush1.msra.mxu0 0.0
    %4244 = vmatprep.subr.mxu0 0.0
    %4245 = vmatpush1.msra.mxu0 0.0
    %4246 = vmatprep.subr.mxu0 0.0
    %4247 = vmatpush1.msra.mxu0 0.0
    %4248 = vmatprep.subr.mxu0 0.0
    %4249 = vmatpush1.msra.mxu0 0.0
    %4250 = vmatprep.subr.mxu0 0.0
    %4251 = vmatpush1.msra.mxu0 0.0
    %4252 = vmatprep.subr.mxu0 0.0
    %4253 = vmatpush1.msra.mxu0 0.0
    %4254 = vmatprep.subr.mxu0 0.0
    %4255 = vmatpush1.msra.mxu0 0.0
    %4256 = vmatprep.subr.mxu0 0.0
    %4257 = vmatpush1.msra.mxu0 0.0
    %4258 = vmatprep.subr.mxu0 0.0
    %4259 = vmatpush1.msra.mxu0 0.0
    %4260 = vmatprep.subr.mxu0 0.0
    %4261 = vmatpush1.msra.mxu0 0.0
    %4262 = vmatprep.subr.mxu0 0.0
    %4263 = vmatpush1.msra.mxu0 0.0
    %4264 = vmatprep.subr.mxu0 0.0
    %4265 = vmatpush1.msra.mxu0 0.0
    %4266 = vmatprep.subr.mxu0 0.0
    %4267 = vmatpush1.msra.mxu0 0.0
    %4268 = vmatprep.subr.mxu0 0.0
    %4269 = vmatpush1.msra.mxu0 0.0
    %4270 = vmatprep.subr.mxu0 0.0
    %4271 = vmatpush1.msra.mxu0 0.0
    %4272 = vmatprep.subr.mxu0 0.0
    %4273 = vmatpush1.msra.mxu0 0.0
    %4274 = vmatprep.mubr.f32.mxu0 0.0
    %4275 = vmatmul.mubr.f32.gmra.mrb[0].mxu0 %v4209
    %v4276 = vpop.f32.mrb[0].mxu0
    %v4277 = vadd.f32 0.0, %v4276
    %v4278 = vpop.f32.mrb[0].mxu0
    %4279 = vdwg.mxu0
    %4280 = vrot.lane.b32.xlu0 %v4044, 120
    %v4281 = vpop.permute.xlu0 %4280
    %v4282 = vsel %vm430, %v4281, 0
    %4284 = vmatprep.subr.mxu0 0.0
    %4285 = vmatpush1.xpose.msra.mxu0 %v4070
    %4286 = vmatprep.subr.mxu0 0.0
    %4287 = vmatpush1.xpose.msra.mxu0 %v4073
    %4288 = vmatprep.subr.mxu0 0.0
    %4289 = vmatpush1.xpose.msra.mxu0 %v4076
    %4290 = vmatprep.subr.mxu0 0.0
    %4291 = vmatpush1.xpose.msra.mxu0 %v4079
    %4292 = vmatprep.subr.mxu0 0.0
    %4293 = vmatpush1.xpose.msra.mxu0 %v4082
    %4294 = vmatprep.subr.mxu0 0.0
    %4295 = vmatpush1.xpose.msra.mxu0 %v4085
    %4296 = vmatprep.subr.mxu0 0.0
    %4297 = vmatpush1.xpose.msra.mxu0 %v4088
    %4298 = vmatprep.subr.mxu0 0.0
    %4299 = vmatpush1.xpose.msra.mxu0 %v4091
    %4300 = vmatprep.subr.mxu0 0.0
    %4301 = vmatpush1.xpose.msra.mxu0 %v4094
    %4302 = vmatprep.subr.mxu0 0.0
    %4303 = vmatpush1.xpose.msra.mxu0 %v4097
    %4304 = vmatprep.subr.mxu0 0.0
    %4305 = vmatpush1.xpose.msra.mxu0 %v4100
    %4306 = vmatprep.subr.mxu0 0.0
    %4307 = vmatpush1.xpose.msra.mxu0 %v4103
    %4308 = vmatprep.subr.mxu0 0.0
    %4309 = vmatpush1.xpose.msra.mxu0 %v4106
    %4310 = vmatprep.subr.mxu0 0.0
    %4311 = vmatpush1.xpose.msra.mxu0 %v4109
    %4312 = vmatprep.subr.mxu0 0.0
    %4313 = vmatpush1.xpose.msra.mxu0 %v4112
    %4314 = vmatprep.subr.mxu0 0.0
    %4315 = vmatpush1.xpose.msra.mxu0 %v4115
    %4316 = vmatprep.subr.mxu0 0.0
    %4317 = vmatpush1.xpose.msra.mxu0 0.0
    %4318 = vmatprep.subr.mxu0 0.0
    %4319 = vmatpush1.xpose.msra.mxu0 0.0
    %4320 = vmatprep.subr.mxu0 0.0
    %4321 = vmatpush1.xpose.msra.mxu0 0.0
    %4322 = vmatprep.subr.mxu0 0.0
    %4323 = vmatpush1.xpose.msra.mxu0 0.0
    %4324 = vmatprep.subr.mxu0 0.0
    %4325 = vmatpush1.xpose.msra.mxu0 0.0
    %4326 = vmatprep.subr.mxu0 0.0
    %4327 = vmatpush1.xpose.msra.mxu0 0.0
    %4328 = vmatprep.subr.mxu0 0.0
    %4329 = vmatpush1.xpose.msra.mxu0 0.0
    %4330 = vmatprep.subr.mxu0 0.0
    %4331 = vmatpush1.xpose.msra.mxu0 0.0
    %4332 = vmatprep.subr.mxu0 0.0
    %4333 = vmatpush1.xpose.msra.mxu0 0.0
    %4334 = vmatprep.subr.mxu0 0.0
    %4335 = vmatpush1.xpose.msra.mxu0 0.0
    %4336 = vmatprep.subr.mxu0 0.0
    %4337 = vmatpush1.xpose.msra.mxu0 0.0
    %4338 = vmatprep.subr.mxu0 0.0
    %4339 = vmatpush1.xpose.msra.mxu0 0.0
    %4340 = vmatprep.subr.mxu0 0.0
    %4341 = vmatpush1.xpose.msra.mxu0 0.0
    %4342 = vmatprep.subr.mxu0 0.0
    %4343 = vmatpush1.xpose.msra.mxu0 0.0
    %4344 = vmatprep.subr.mxu0 0.0
    %4345 = vmatpush1.xpose.msra.mxu0 0.0
    %4346 = vmatprep.subr.mxu0 0.0
    %4347 = vmatpush1.xpose.msra.mxu0 0.0
    %4348 = vmatprep.mubr.f32.mxu0 0.0
    %4349 = vmatmul.mubr.f32.gmra.mrb[0].mxu0 %v4282
    %v4350 = vpop.f32.mrb[0].mxu0
    %v4351 = vadd.f32 0.0, %v4350
    %v4352 = vpop.f32.mrb[0].mxu0
    %4353 = vdwg.mxu0
    %v4354 = vmul.f32 %v4351, 2.0
    %v4355 = vsub.f32 %v4192, %v4354
    %v4356 = vsel %vm4195, %v4355, 1e+30
    %v4357 = vsel %vm4197, %v4356, inf
    %4358 = vmin.xlane.f32.xlu0 %v4357
    %v4359 = vpop.xlane.xlu0 %4358
    %vm4360 = vcmp.le.f32.partialorder %v4356, %v4359
    %v4361 = vsel %vm4360, %v4201, 128.0
    %v4362 = vsel %vm4197, %v4361, inf
    %4363 = vmin.xlane.f32.xlu0 %v4362
    %v4364 = vpop.xlane.xlu0 %4363
    %vm4365 = vcmp.eq.f32.partialorder %v4201, %v4364
    %v4366 = vsel %vm4365, 1, 0
    %v4367 = vcvt.s32.f32 %v4366
    %4368 = vmatprep.subr.mxu0 0.0
    %4369 = vmatpush1.msra.mxu0 %v4049
    %4370 = vmatprep.subr.mxu0 0.0
    %4371 = vmatpush1.msra.mxu0 %v4050
    %4372 = vmatprep.subr.mxu0 0.0
    %4373 = vmatpush1.msra.mxu0 %v4051
    %4374 = vmatprep.subr.mxu0 0.0
    %4375 = vmatpush1.msra.mxu0 %v4052
    %4376 = vmatprep.subr.mxu0 0.0
    %4377 = vmatpush1.msra.mxu0 %v4053
    %4378 = vmatprep.subr.mxu0 0.0
    %4379 = vmatpush1.msra.mxu0 %v4054
    %4380 = vmatprep.subr.mxu0 0.0
    %4381 = vmatpush1.msra.mxu0 %v4055
    %4382 = vmatprep.subr.mxu0 0.0
    %4383 = vmatpush1.msra.mxu0 %v4056
    %4384 = vmatprep.subr.mxu0 0.0
    %4385 = vmatpush1.msra.mxu0 %v4057
    %4386 = vmatprep.subr.mxu0 0.0
    %4387 = vmatpush1.msra.mxu0 %v4058
    %4388 = vmatprep.subr.mxu0 0.0
    %4389 = vmatpush1.msra.mxu0 %v4059
    %4390 = vmatprep.subr.mxu0 0.0
    %4391 = vmatpush1.msra.mxu0 %v4060
    %4392 = vmatprep.subr.mxu0 0.0
    %4393 = vmatpush1.msra.mxu0 %v4061
    %4394 = vmatprep.subr.mxu0 0.0
    %4395 = vmatpush1.msra.mxu0 %v4062
    %4396 = vmatprep.subr.mxu0 0.0
    %4397 = vmatpush1.msra.mxu0 %v4063
    %4398 = vmatprep.subr.mxu0 0.0
    %4399 = vmatpush1.msra.mxu0 %v4064
    %4400 = vmatprep.subr.mxu0 0.0
    %4401 = vmatpush1.msra.mxu0 0.0
    %4402 = vmatprep.subr.mxu0 0.0
    %4403 = vmatpush1.msra.mxu0 0.0
    %4404 = vmatprep.subr.mxu0 0.0
    %4405 = vmatpush1.msra.mxu0 0.0
    %4406 = vmatprep.subr.mxu0 0.0
    %4407 = vmatpush1.msra.mxu0 0.0
    %4408 = vmatprep.subr.mxu0 0.0
    %4409 = vmatpush1.msra.mxu0 0.0
    %4410 = vmatprep.subr.mxu0 0.0
    %4411 = vmatpush1.msra.mxu0 0.0
    %4412 = vmatprep.subr.mxu0 0.0
    %4413 = vmatpush1.msra.mxu0 0.0
    %4414 = vmatprep.subr.mxu0 0.0
    %4415 = vmatpush1.msra.mxu0 0.0
    %4416 = vmatprep.subr.mxu0 0.0
    %4417 = vmatpush1.msra.mxu0 0.0
    %4418 = vmatprep.subr.mxu0 0.0
    %4419 = vmatpush1.msra.mxu0 0.0
    %4420 = vmatprep.subr.mxu0 0.0
    %4421 = vmatpush1.msra.mxu0 0.0
    %4422 = vmatprep.subr.mxu0 0.0
    %4423 = vmatpush1.msra.mxu0 0.0
    %4424 = vmatprep.subr.mxu0 0.0
    %4425 = vmatpush1.msra.mxu0 0.0
    %4426 = vmatprep.subr.mxu0 0.0
    %4427 = vmatpush1.msra.mxu0 0.0
    %4428 = vmatprep.subr.mxu0 0.0
    %4429 = vmatpush1.msra.mxu0 0.0
    %4430 = vmatprep.subr.mxu0 0.0
    %4431 = vmatpush1.msra.mxu0 0.0
    %4432 = vmatprep.mubr.f32.mxu0 0.0
    %4433 = vmatmul.mubr.f32.gmra.mrb[0].mxu0 %v4367
    %v4434 = vpop.f32.mrb[0].mxu0
    %v4435 = vadd.f32 0.0, %v4434
    %v4436 = vpop.f32.mrb[0].mxu0
    %4437 = vdwg.mxu0
    %4438 = vrot.lane.b32.xlu0 %v4044, 112
    %v4439 = vpop.permute.xlu0 %4438
    %v4440 = vsel %vm430, %v4439, 0
    %4442 = vmatprep.subr.mxu0 0.0
    %4443 = vmatpush1.xpose.msra.mxu0 %v4070
    %4444 = vmatprep.subr.mxu0 0.0
    %4445 = vmatpush1.xpose.msra.mxu0 %v4073
    %4446 = vmatprep.subr.mxu0 0.0
    %4447 = vmatpush1.xpose.msra.mxu0 %v4076
    %4448 = vmatprep.subr.mxu0 0.0
    %4449 = vmatpush1.xpose.msra.mxu0 %v4079
    %4450 = vmatprep.subr.mxu0 0.0
    %4451 = vmatpush1.xpose.msra.mxu0 %v4082
    %4452 = vmatprep.subr.mxu0 0.0
    %4453 = vmatpush1.xpose.msra.mxu0 %v4085
    %4454 = vmatprep.subr.mxu0 0.0
    %4455 = vmatpush1.xpose.msra.mxu0 %v4088
    %4456 = vmatprep.subr.mxu0 0.0
    %4457 = vmatpush1.xpose.msra.mxu0 %v4091
    %4458 = vmatprep.subr.mxu0 0.0
    %4459 = vmatpush1.xpose.msra.mxu0 %v4094
    %4460 = vmatprep.subr.mxu0 0.0
    %4461 = vmatpush1.xpose.msra.mxu0 %v4097
    %4462 = vmatprep.subr.mxu0 0.0
    %4463 = vmatpush1.xpose.msra.mxu0 %v4100
    %4464 = vmatprep.subr.mxu0 0.0
    %4465 = vmatpush1.xpose.msra.mxu0 %v4103
    %4466 = vmatprep.subr.mxu0 0.0
    %4467 = vmatpush1.xpose.msra.mxu0 %v4106
    %4468 = vmatprep.subr.mxu0 0.0
    %4469 = vmatpush1.xpose.msra.mxu0 %v4109
    %4470 = vmatprep.subr.mxu0 0.0
    %4471 = vmatpush1.xpose.msra.mxu0 %v4112
    %4472 = vmatprep.subr.mxu0 0.0
    %4473 = vmatpush1.xpose.msra.mxu0 %v4115
    %4474 = vmatprep.subr.mxu0 0.0
    %4475 = vmatpush1.xpose.msra.mxu0 0.0
    %4476 = vmatprep.subr.mxu0 0.0
    %4477 = vmatpush1.xpose.msra.mxu0 0.0
    %4478 = vmatprep.subr.mxu0 0.0
    %4479 = vmatpush1.xpose.msra.mxu0 0.0
    %4480 = vmatprep.subr.mxu0 0.0
    %4481 = vmatpush1.xpose.msra.mxu0 0.0
    %4482 = vmatprep.subr.mxu0 0.0
    %4483 = vmatpush1.xpose.msra.mxu0 0.0
    %4484 = vmatprep.subr.mxu0 0.0
    %4485 = vmatpush1.xpose.msra.mxu0 0.0
    %4486 = vmatprep.subr.mxu0 0.0
    %4487 = vmatpush1.xpose.msra.mxu0 0.0
    %4488 = vmatprep.subr.mxu0 0.0
    %4489 = vmatpush1.xpose.msra.mxu0 0.0
    %4490 = vmatprep.subr.mxu0 0.0
    %4491 = vmatpush1.xpose.msra.mxu0 0.0
    %4492 = vmatprep.subr.mxu0 0.0
    %4493 = vmatpush1.xpose.msra.mxu0 0.0
    %4494 = vmatprep.subr.mxu0 0.0
    %4495 = vmatpush1.xpose.msra.mxu0 0.0
    %4496 = vmatprep.subr.mxu0 0.0
    %4497 = vmatpush1.xpose.msra.mxu0 0.0
    %4498 = vmatprep.subr.mxu0 0.0
    %4499 = vmatpush1.xpose.msra.mxu0 0.0
    %4500 = vmatprep.subr.mxu0 0.0
    %4501 = vmatpush1.xpose.msra.mxu0 0.0
    %4502 = vmatprep.subr.mxu0 0.0
    %4503 = vmatpush1.xpose.msra.mxu0 0.0
    %4504 = vmatprep.subr.mxu0 0.0
    %4505 = vmatpush1.xpose.msra.mxu0 0.0
    %4506 = vmatprep.mubr.f32.mxu0 0.0
    %4507 = vmatmul.mubr.f32.gmra.mrb[0].mxu0 %v4440
    %v4508 = vpop.f32.mrb[0].mxu0
    %v4509 = vadd.f32 0.0, %v4508
    %v4510 = vpop.f32.mrb[0].mxu0
    %4511 = vdwg.mxu0
    %v4512 = vmul.f32 %v4509, 2.0
    %v4513 = vsub.f32 %v4192, %v4512
    %v4514 = vsel %vm4195, %v4513, 1e+30
    %v4515 = vsel %vm4197, %v4514, inf
    %4516 = vmin.xlane.f32.xlu0 %v4515
    %v4517 = vpop.xlane.xlu0 %4516
    %vm4518 = vcmp.le.f32.partialorder %v4514, %v4517
    %v4519 = vsel %vm4518, %v4201, 128.0
    %v4520 = vsel %vm4197, %v4519, inf
    %4521 = vmin.xlane.f32.xlu0 %v4520
    %v4522 = vpop.xlane.xlu0 %4521
    %vm4523 = vcmp.eq.f32.partialorder %v4201, %v4522
    %v4524 = vsel %vm4523, 1, 0
    %v4525 = vcvt.s32.f32 %v4524
    %4526 = vmatprep.subr.mxu0 0.0
    %4527 = vmatpush1.msra.mxu0 %v4049
    %4528 = vmatprep.subr.mxu0 0.0
    %4529 = vmatpush1.msra.mxu0 %v4050
    %4530 = vmatprep.subr.mxu0 0.0
    %4531 = vmatpush1.msra.mxu0 %v4051
    %4532 = vmatprep.subr.mxu0 0.0
    %4533 = vmatpush1.msra.mxu0 %v4052
    %4534 = vmatprep.subr.mxu0 0.0
    %4535 = vmatpush1.msra.mxu0 %v4053
    %4536 = vmatprep.subr.mxu0 0.0
    %4537 = vmatpush1.msra.mxu0 %v4054
    %4538 = vmatprep.subr.mxu0 0.0
    %4539 = vmatpush1.msra.mxu0 %v4055
    %4540 = vmatprep.subr.mxu0 0.0
    %4541 = vmatpush1.msra.mxu0 %v4056
    %4542 = vmatprep.subr.mxu0 0.0
    %4543 = vmatpush1.msra.mxu0 %v4057
    %4544 = vmatprep.subr.mxu0 0.0
    %4545 = vmatpush1.msra.mxu0 %v4058
    %4546 = vmatprep.subr.mxu0 0.0
    %4547 = vmatpush1.msra.mxu0 %v4059
    %4548 = vmatprep.subr.mxu0 0.0
    %4549 = vmatpush1.msra.mxu0 %v4060
    %4550 = vmatprep.subr.mxu0 0.0
    %4551 = vmatpush1.msra.mxu0 %v4061
    %4552 = vmatprep.subr.mxu0 0.0
    %4553 = vmatpush1.msra.mxu0 %v4062
    %4554 = vmatprep.subr.mxu0 0.0
    %4555 = vmatpush1.msra.mxu0 %v4063
    %4556 = vmatprep.subr.mxu0 0.0
    %4557 = vmatpush1.msra.mxu0 %v4064
    %4558 = vmatprep.subr.mxu0 0.0
    %4559 = vmatpush1.msra.mxu0 0.0
    %4560 = vmatprep.subr.mxu0 0.0
    %4561 = vmatpush1.msra.mxu0 0.0
    %4562 = vmatprep.subr.mxu0 0.0
    %4563 = vmatpush1.msra.mxu0 0.0
    %4564 = vmatprep.subr.mxu0 0.0
    %4565 = vmatpush1.msra.mxu0 0.0
    %4566 = vmatprep.subr.mxu0 0.0
    %4567 = vmatpush1.msra.mxu0 0.0
    %4568 = vmatprep.subr.mxu0 0.0
    %4569 = vmatpush1.msra.mxu0 0.0
    %4570 = vmatprep.subr.mxu0 0.0
    %4571 = vmatpush1.msra.mxu0 0.0
    %4572 = vmatprep.subr.mxu0 0.0
    %4573 = vmatpush1.msra.mxu0 0.0
    %4574 = vmatprep.subr.mxu0 0.0
    %4575 = vmatpush1.msra.mxu0 0.0
    %4576 = vmatprep.subr.mxu0 0.0
    %4577 = vmatpush1.msra.mxu0 0.0
    %4578 = vmatprep.subr.mxu0 0.0
    %4579 = vmatpush1.msra.mxu0 0.0
    %4580 = vmatprep.subr.mxu0 0.0
    %4581 = vmatpush1.msra.mxu0 0.0
    %4582 = vmatprep.subr.mxu0 0.0
    %4583 = vmatpush1.msra.mxu0 0.0
    %4584 = vmatprep.subr.mxu0 0.0
    %4585 = vmatpush1.msra.mxu0 0.0
    %4586 = vmatprep.subr.mxu0 0.0
    %4587 = vmatpush1.msra.mxu0 0.0
    %4588 = vmatprep.subr.mxu0 0.0
    %4589 = vmatpush1.msra.mxu0 0.0
    %4590 = vmatprep.mubr.f32.mxu0 0.0
    %4591 = vmatmul.mubr.f32.gmra.mrb[0].mxu0 %v4525
    %v4592 = vpop.f32.mrb[0].mxu0
    %v4593 = vadd.f32 0.0, %v4592
    %v4594 = vpop.f32.mrb[0].mxu0
    %4595 = vdwg.mxu0
    %4596 = vrot.lane.b32.xlu0 %v4044, 104
    %v4597 = vpop.permute.xlu0 %4596
    %v4598 = vsel %vm430, %v4597, 0
    %4600 = vmatprep.subr.mxu0 0.0
    %4601 = vmatpush1.xpose.msra.mxu0 %v4070
    %4602 = vmatprep.subr.mxu0 0.0
    %4603 = vmatpush1.xpose.msra.mxu0 %v4073
    %4604 = vmatprep.subr.mxu0 0.0
    %4605 = vmatpush1.xpose.msra.mxu0 %v4076
    %4606 = vmatprep.subr.mxu0 0.0
    %4607 = vmatpush1.xpose.msra.mxu0 %v4079
    %4608 = vmatprep.subr.mxu0 0.0
    %4609 = vmatpush1.xpose.msra.mxu0 %v4082
    %4610 = vmatprep.subr.mxu0 0.0
    %4611 = vmatpush1.xpose.msra.mxu0 %v4085
    %4612 = vmatprep.subr.mxu0 0.0
    %4613 = vmatpush1.xpose.msra.mxu0 %v4088
    %4614 = vmatprep.subr.mxu0 0.0
    %4615 = vmatpush1.xpose.msra.mxu0 %v4091
    %4616 = vmatprep.subr.mxu0 0.0
    %4617 = vmatpush1.xpose.msra.mxu0 %v4094
    %4618 = vmatprep.subr.mxu0 0.0
    %4619 = vmatpush1.xpose.msra.mxu0 %v4097
    %4620 = vmatprep.subr.mxu0 0.0
    %4621 = vmatpush1.xpose.msra.mxu0 %v4100
    %4622 = vmatprep.subr.mxu0 0.0
    %4623 = vmatpush1.xpose.msra.mxu0 %v4103
    %4624 = vmatprep.subr.mxu0 0.0
    %4625 = vmatpush1.xpose.msra.mxu0 %v4106
    %4626 = vmatprep.subr.mxu0 0.0
    %4627 = vmatpush1.xpose.msra.mxu0 %v4109
    %4628 = vmatprep.subr.mxu0 0.0
    %4629 = vmatpush1.xpose.msra.mxu0 %v4112
    %4630 = vmatprep.subr.mxu0 0.0
    %4631 = vmatpush1.xpose.msra.mxu0 %v4115
    %4632 = vmatprep.subr.mxu0 0.0
    %4633 = vmatpush1.xpose.msra.mxu0 0.0
    %4634 = vmatprep.subr.mxu0 0.0
    %4635 = vmatpush1.xpose.msra.mxu0 0.0
    %4636 = vmatprep.subr.mxu0 0.0
    %4637 = vmatpush1.xpose.msra.mxu0 0.0
    %4638 = vmatprep.subr.mxu0 0.0
    %4639 = vmatpush1.xpose.msra.mxu0 0.0
    %4640 = vmatprep.subr.mxu0 0.0
    %4641 = vmatpush1.xpose.msra.mxu0 0.0
    %4642 = vmatprep.subr.mxu0 0.0
    %4643 = vmatpush1.xpose.msra.mxu0 0.0
    %4644 = vmatprep.subr.mxu0 0.0
    %4645 = vmatpush1.xpose.msra.mxu0 0.0
    %4646 = vmatprep.subr.mxu0 0.0
    %4647 = vmatpush1.xpose.msra.mxu0 0.0
    %4648 = vmatprep.subr.mxu0 0.0
    %4649 = vmatpush1.xpose.msra.mxu0 0.0
    %4650 = vmatprep.subr.mxu0 0.0
    %4651 = vmatpush1.xpose.msra.mxu0 0.0
    %4652 = vmatprep.subr.mxu0 0.0
    %4653 = vmatpush1.xpose.msra.mxu0 0.0
    %4654 = vmatprep.subr.mxu0 0.0
    %4655 = vmatpush1.xpose.msra.mxu0 0.0
    %4656 = vmatprep.subr.mxu0 0.0
    %4657 = vmatpush1.xpose.msra.mxu0 0.0
    %4658 = vmatprep.subr.mxu0 0.0
    %4659 = vmatpush1.xpose.msra.mxu0 0.0
    %4660 = vmatprep.subr.mxu0 0.0
    %4661 = vmatpush1.xpose.msra.mxu0 0.0
    %4662 = vmatprep.subr.mxu0 0.0
    %4663 = vmatpush1.xpose.msra.mxu0 0.0
    %4664 = vmatprep.mubr.f32.mxu0 0.0
    %4665 = vmatmul.mubr.f32.gmra.mrb[0].mxu0 %v4598
    %v4666 = vpop.f32.mrb[0].mxu0
    %v4667 = vadd.f32 0.0, %v4666
    %v4668 = vpop.f32.mrb[0].mxu0
    %4669 = vdwg.mxu0
    %v4670 = vmul.f32 %v4667, 2.0
    %v4671 = vsub.f32 %v4192, %v4670
    %v4672 = vsel %vm4195, %v4671, 1e+30
    %v4673 = vsel %vm4197, %v4672, inf
    %4674 = vmin.xlane.f32.xlu0 %v4673
    %v4675 = vpop.xlane.xlu0 %4674
    %vm4676 = vcmp.le.f32.partialorder %v4672, %v4675
    %v4677 = vsel %vm4676, %v4201, 128.0
    %v4678 = vsel %vm4197, %v4677, inf
    %4679 = vmin.xlane.f32.xlu0 %v4678
    %v4680 = vpop.xlane.xlu0 %4679
    %vm4681 = vcmp.eq.f32.partialorder %v4201, %v4680
    %v4682 = vsel %vm4681, 1, 0
    %v4683 = vcvt.s32.f32 %v4682
    %4684 = vmatprep.subr.mxu0 0.0
    %4685 = vmatpush1.msra.mxu0 %v4049
    %4686 = vmatprep.subr.mxu0 0.0
    %4687 = vmatpush1.msra.mxu0 %v4050
    %4688 = vmatprep.subr.mxu0 0.0
    %4689 = vmatpush1.msra.mxu0 %v4051
    %4690 = vmatprep.subr.mxu0 0.0
    %4691 = vmatpush1.msra.mxu0 %v4052
    %4692 = vmatprep.subr.mxu0 0.0
    %4693 = vmatpush1.msra.mxu0 %v4053
    %4694 = vmatprep.subr.mxu0 0.0
    %4695 = vmatpush1.msra.mxu0 %v4054
    %4696 = vmatprep.subr.mxu0 0.0
    %4697 = vmatpush1.msra.mxu0 %v4055
    %4698 = vmatprep.subr.mxu0 0.0
    %4699 = vmatpush1.msra.mxu0 %v4056
    %4700 = vmatprep.subr.mxu0 0.0
    %4701 = vmatpush1.msra.mxu0 %v4057
    %4702 = vmatprep.subr.mxu0 0.0
    %4703 = vmatpush1.msra.mxu0 %v4058
    %4704 = vmatprep.subr.mxu0 0.0
    %4705 = vmatpush1.msra.mxu0 %v4059
    %4706 = vmatprep.subr.mxu0 0.0
    %4707 = vmatpush1.msra.mxu0 %v4060
    %4708 = vmatprep.subr.mxu0 0.0
    %4709 = vmatpush1.msra.mxu0 %v4061
    %4710 = vmatprep.subr.mxu0 0.0
    %4711 = vmatpush1.msra.mxu0 %v4062
    %4712 = vmatprep.subr.mxu0 0.0
    %4713 = vmatpush1.msra.mxu0 %v4063
    %4714 = vmatprep.subr.mxu0 0.0
    %4715 = vmatpush1.msra.mxu0 %v4064
    %4716 = vmatprep.subr.mxu0 0.0
    %4717 = vmatpush1.msra.mxu0 0.0
    %4718 = vmatprep.subr.mxu0 0.0
    %4719 = vmatpush1.msra.mxu0 0.0
    %4720 = vmatprep.subr.mxu0 0.0
    %4721 = vmatpush1.msra.mxu0 0.0
    %4722 = vmatprep.subr.mxu0 0.0
    %4723 = vmatpush1.msra.mxu0 0.0
    %4724 = vmatprep.subr.mxu0 0.0
    %4725 = vmatpush1.msra.mxu0 0.0
    %4726 = vmatprep.subr.mxu0 0.0
    %4727 = vmatpush1.msra.mxu0 0.0
    %4728 = vmatprep.subr.mxu0 0.0
    %4729 = vmatpush1.msra.mxu0 0.0
    %4730 = vmatprep.subr.mxu0 0.0
    %4731 = vmatpush1.msra.mxu0 0.0
    %4732 = vmatprep.subr.mxu0 0.0
    %4733 = vmatpush1.msra.mxu0 0.0
    %4734 = vmatprep.subr.mxu0 0.0
    %4735 = vmatpush1.msra.mxu0 0.0
    %4736 = vmatprep.subr.mxu0 0.0
    %4737 = vmatpush1.msra.mxu0 0.0
    %4738 = vmatprep.subr.mxu0 0.0
    %4739 = vmatpush1.msra.mxu0 0.0
    %4740 = vmatprep.subr.mxu0 0.0
    %4741 = vmatpush1.msra.mxu0 0.0
    %4742 = vmatprep.subr.mxu0 0.0
    %4743 = vmatpush1.msra.mxu0 0.0
    %4744 = vmatprep.subr.mxu0 0.0
    %4745 = vmatpush1.msra.mxu0 0.0
    %4746 = vmatprep.subr.mxu0 0.0
    %4747 = vmatpush1.msra.mxu0 0.0
    %4748 = vmatprep.mubr.f32.mxu0 0.0
    %4749 = vmatmul.mubr.f32.gmra.mrb[0].mxu0 %v4683
    %v4750 = vpop.f32.mrb[0].mxu0
    %v4751 = vadd.f32 0.0, %v4750
    %v4752 = vpop.f32.mrb[0].mxu0
    %4753 = vdwg.mxu0
    %4755 = vrot.lane.b32.xlu0 %v4435, 8
    %v4756 = vpop.permute.xlu0 %4755
    %4759 = vrot.lane.b32.xlu0 %v4593, 16
    %v4760 = vpop.permute.xlu0 %4759
    %4763 = vrot.lane.b32.xlu0 %v4751, 24
    %v4764 = vpop.permute.xlu0 %4763
    %v4766 = vsel %vm430, %v4277, %v4756
    %vm4767 = vcmask 130048
    %v4768 = vsel %vm4767, %v4766, %v4760
    %vm4769 = vcmask 195584
    %v4770 = vsel %vm4769, %v4768, %v4764
    %4771 = vst.msk [vmem:[#allocation32] sm:$0x3f] %vm4047, %v4770
    // Predicated region
    $region146: #{_lambda_.2} parent=1 // pred_check
      _
    $region147: #{_lambda_.2} parent=1 // pred_check_branch
      %4773 = sbr.rel (0) target = $region149
    $region148: #{_lambda_.2} parent=1 // pred_region
      %s4775 = ssub.s32 128, 128
      %4776 = vsyncadd [#allocation4], %s4775
      %s4778 = sshll.u32 [#allocation31], 4
      %s4779 = int_to_ptr.vmem [resolvable:$true] %s4778
      %4781 = dma.vmem_to_hbm [thread:$0]  %s4779, 128, %s18, [#allocation4]
    $region149: #{_lambda_.2} parent=1 // pred_fallthru
      _
    // Predicated region
    $region150: #{_lambda_.2} parent=1 // pred_check
      _
    $region151: #{_lambda_.2} parent=1 // pred_check_branch
      %4783 = sbr.rel (0) target = $region153
    $region152: #{_lambda_.2} parent=1 // pred_region
      %s4785 = ssub.s32 128, 128
      %4786 = vsyncadd [#allocation33], %s4785
      %s4788 = sshll.u32 [#allocation32], 4
      %s4789 = int_to_ptr.vmem [resolvable:$true] %s4788
      %4791 = dma.vmem_to_hbm [thread:$0]  %s4789, 128, %s19, [#allocation33]
    $region153: #{_lambda_.2} parent=1 // pred_fallthru
      _
    // Predicated region
    $region154: #{_lambda_.2} parent=1 // pred_check
      _
    $region155: #{_lambda_.2} parent=1 // pred_check_branch
      %4793 = sbr.rel (0) target = $region157
    $region156: #{_lambda_.2} parent=1 // pred_region
      %4794 = dma.done [#allocation4], 128
    $region157: #{_lambda_.2} parent=1 // pred_fallthru
      _
    // Predicated region
    $region158: #{_lambda_.2} parent=1 // pred_check
      _
    $region159: #{_lambda_.2} parent=1 // pred_check_branch
      %4796 = sbr.rel (0) target = $region161
    $region160: #{_lambda_.2} parent=1 // pred_region
      %4797 = dma.done [#allocation33], 128
    $region161: #{_lambda_.2} parent=1 // pred_fallthru
      _
    %4798 = vsyncpa [#allocation3], 1
    %4799 = vsyncpa [#allocation6], 1
    %4800 = vsyncpa [#allocation9], 1
    %4801 = vsyncpa [#allocation12], 1
    %4802 = vsyncpa [#allocation15], 1
    %4803 = vsyncpa [#allocation18], 1
    %4804 = vsyncpa [#allocation21], 1
    %4805 = vsyncpa [#allocation24], 1
    %4806 = vsyncpa [#allocation27], 1
    %4807 = vsyncpa [#allocation30], 1
    %4808 = vsyncpa [#allocation4], 1
    %4809 = vsyncpa [#allocation33], 1

// kernel: _lambda_.3
$region0: #{_lambda_.3}
  #allocation0 [shape = 'u32[]', space=smem, size = 0x4, offset = 0x4, fixed_abs, tag = 'smem constant byte address 0x4 - core index']
  #allocation1 [shape = 'u32[144,128]{1,0:T(1,128)}', space=vmem, size = 0x12000, scoped, tag = 'internal scratch']
  %s0 = inlined_call_operand.hbm [shape: f32[24,32], index: 0, kind: input, shape index: {}]
  %s1 = inlined_call_operand.hbm [shape: f32[24,32], index: 1, kind: input, shape index: {}]
  %s2 = inlined_call_operand.hbm [shape: f32[24,24], index: 2, kind: input, shape index: {}]
  %s3 = inlined_call_operand.hbm [shape: bf16[2,32,32], index: 3, kind: input, shape index: {}]
  %s4 = inlined_call_operand.hbm [shape: f32[2,1,32], index: 4, kind: input, shape index: {}]
  %s5 = inlined_call_operand.hbm [shape: bf16[2,32,96], index: 5, kind: input, shape index: {}]
  %s6 = inlined_call_operand.hbm [shape: f32[2,1,96], index: 6, kind: input, shape index: {}]
  %s7 = inlined_call_operand.hbm [shape: bf16[2,4,8,32], index: 7, kind: input, shape index: {}]
  %s8 = inlined_call_operand.hbm [shape: f32[2,1,32], index: 8, kind: input, shape index: {}]
  %s9 = inlined_call_operand.hbm [shape: f32[2,1,32], index: 9, kind: input, shape index: {}]
  %s10 = inlined_call_operand.hbm [shape: f32[2,1,32], index: 10, kind: input, shape index: {}]
  %s11 = inlined_call_operand.hbm [shape: bf16[2,32,64], index: 11, kind: input, shape index: {}]
  %s12 = inlined_call_operand.hbm [shape: f32[2,1,64], index: 12, kind: input, shape index: {}]
  %s13 = inlined_call_operand.hbm [shape: bf16[2,64,32], index: 13, kind: input, shape index: {}]
  %s14 = inlined_call_operand.hbm [shape: f32[2,1,32], index: 14, kind: input, shape index: {}]
  %s15 = inlined_call_operand.hbm [shape: f32[2,1,32], index: 15, kind: input, shape index: {}]
  %s16 = inlined_call_operand.hbm [shape: f32[2,1,32], index: 16, kind: input, shape index: {}]
  %s17 = inlined_call_operand.hbm [shape: bf16[32,128], index: 17, kind: input, shape index: {}]
  %s18 = inlined_call_operand.hbm [shape: f32[1,128], index: 18, kind: input, shape index: {}]
  %s19 = inlined_call_operand.hbm [shape: f32[24,128], index: 19, kind: output, shape index: {}]
  %s20 = sld [smem:[#allocation0]]
  $region162: #{_lambda_.3} parent=0
    _
  %s22 = ssub.s32 1, %s20
  %s23 = scalar_select 0, %s22, %s20
  $region1: #{_lambda_.3} parent=0
    #allocation2 [shape = 'u8[12288]{0}', space=vmem, size = 0x3000, scoped, tag = 'input window, operand 0, single buffered']
    #allocation3 [shape = 's32[1]{0}', space=sflag, size = 0x4, scoped, tag = 'scoped memory for _lambda_.3']
    #allocation4 [shape = 's32[1]{0}', space=sflag, size = 0x4, scoped, tag = 'scoped memory for _lambda_.3']
    #allocation5 [shape = 'u8[12288]{0}', space=vmem, size = 0x3000, scoped, tag = 'input window, operand 1, single buffered']
    #allocation6 [shape = 's32[1]{0}', space=sflag, size = 0x4, scoped, tag = 'scoped memory for _lambda_.3']
    #allocation7 [shape = 'u8[12288]{0}', space=vmem, size = 0x3000, scoped, tag = 'input window, operand 2, single buffered']
    #allocation8 [shape = 'u8[16384]{0}', space=vmem, size = 0x4000, scoped, tag = 'input window, operand 3, single buffered']
    #allocation9 [shape = 's32[1]{0}', space=sflag, size = 0x4, scoped, tag = 'scoped memory for _lambda_.3']
    #allocation10 [shape = 'u8[1024]{0}', space=vmem, size = 0x400, scoped, tag = 'input window, operand 4, single buffered']
    #allocation11 [shape = 'u8[16384]{0}', space=vmem, size = 0x4000, scoped, tag = 'input window, operand 5, single buffered']
    #allocation12 [shape = 's32[1]{0}', space=sflag, size = 0x4, scoped, tag = 'scoped memory for _lambda_.3']
    #allocation13 [shape = 'u8[1024]{0}', space=vmem, size = 0x400, scoped, tag = 'input window, operand 6, single buffered']
    #allocation14 [shape = 'u8[16384]{0}', space=vmem, size = 0x4000, scoped, tag = 'input window, operand 7, single buffered']
    #allocation15 [shape = 's32[1]{0}', space=sflag, size = 0x4, scoped, tag = 'scoped memory for _lambda_.3']
    #allocation16 [shape = 'u8[1024]{0}', space=vmem, size = 0x400, scoped, tag = 'input window, operand 8, single buffered']
    #allocation17 [shape = 'u8[1024]{0}', space=vmem, size = 0x400, scoped, tag = 'input window, operand 9, single buffered']
    #allocation18 [shape = 's32[1]{0}', space=sflag, size = 0x4, scoped, tag = 'scoped memory for _lambda_.3']
    #allocation19 [shape = 'u8[1024]{0}', space=vmem, size = 0x400, scoped, tag = 'input window, operand 10, single buffered']
    #allocation20 [shape = 'u8[16384]{0}', space=vmem, size = 0x4000, scoped, tag = 'input window, operand 11, single buffered']
    #allocation21 [shape = 's32[1]{0}', space=sflag, size = 0x4, scoped, tag = 'scoped memory for _lambda_.3']
    #allocation22 [shape = 'u8[1024]{0}', space=vmem, size = 0x400, scoped, tag = 'input window, operand 12, single buffered']
    #allocation23 [shape = 'u8[32768]{0}', space=vmem, size = 0x8000, scoped, tag = 'input window, operand 13, single buffered']
    #allocation24 [shape = 's32[1]{0}', space=sflag, size = 0x4, scoped, tag = 'scoped memory for _lambda_.3']
    #allocation25 [shape = 'u8[1024]{0}', space=vmem, size = 0x400, scoped, tag = 'input window, operand 14, single buffered']
    #allocation26 [shape = 'u8[1024]{0}', space=vmem, size = 0x400, scoped, tag = 'input window, operand 15, single buffered']
    #allocation27 [shape = 's32[1]{0}', space=sflag, size = 0x4, scoped, tag = 'scoped memory for _lambda_.3']
    #allocation28 [shape = 'u8[1024]{0}', space=vmem, size = 0x400, scoped, tag = 'input window, operand 16, single buffered']
    #allocation29 [shape = 'u8[8192]{0}', space=vmem, size = 0x2000, scoped, tag = 'input window, operand 17, single buffered']
    #allocation30 [shape = 's32[1]{0}', space=sflag, size = 0x4, scoped, tag = 'scoped memory for _lambda_.3']
    #allocation31 [shape = 'u8[512]{0}', space=vmem, size = 0x400, scoped, tag = 'input window, operand 18, single buffered']
    #allocation32 [shape = 'u8[12288]{0}', space=vmem, size = 0x3000, scoped, tag = 'output window, operand 0, single buffered']
    %24 = vsyncpa [#allocation3], 0
    %25 = vsyncpa [#allocation6], 0
    %26 = vsyncpa [#allocation9], 0
    %27 = vsyncpa [#allocation12], 0
    %28 = vsyncpa [#allocation15], 0
    %29 = vsyncpa [#allocation18], 0
    %30 = vsyncpa [#allocation21], 0
    %31 = vsyncpa [#allocation24], 0
    %32 = vsyncpa [#allocation27], 0
    %33 = vsyncpa [#allocation30], 0
    %34 = vsyncpa [#allocation4], 0
    // Predicated region
    $region2: #{_lambda_.3} parent=1 // pred_check
      _
    $region3: #{_lambda_.3} parent=1 // pred_check_branch
      %36 = sbr.rel (0) target = $region5
    $region4: #{_lambda_.3} parent=1 // pred_region
      %s38 = ssub.s32 384, 384
      %39 = vsyncadd [#allocation3], %s38
      %s40 = sshll.u32 [#allocation2], 4
      %s41 = int_to_ptr.vmem [resolvable:$true] %s40
      %46 = dma.hbm_to_vmem [thread:$0]  %s0, 384, %s41, [#allocation3], 128, 128, 8
    $region5: #{_lambda_.3} parent=1 // pred_fallthru
      _
    // Predicated region
    $region6: #{_lambda_.3} parent=1 // pred_check
      _
    $region7: #{_lambda_.3} parent=1 // pred_check_branch
      %48 = sbr.rel (0) target = $region9
    $region8: #{_lambda_.3} parent=1 // pred_region
      %s50 = ssub.s32 384, 384
      %51 = vsyncadd [#allocation6], %s50
      %s52 = sshll.u32 [#allocation5], 4
      %s53 = int_to_ptr.vmem [resolvable:$true] %s52
      %58 = dma.hbm_to_vmem [thread:$0]  %s1, 384, %s53, [#allocation6], 128, 128, 8
    $region9: #{_lambda_.3} parent=1 // pred_fallthru
      _
    // Predicated region
    $region10: #{_lambda_.3} parent=1 // pred_check
      _
    $region11: #{_lambda_.3} parent=1 // pred_check_branch
      %60 = sbr.rel (0) target = $region13
    $region12: #{_lambda_.3} parent=1 // pred_region
      %s62 = ssub.s32 384, 384
      %63 = vsyncadd [#allocation6], %s62
      %s64 = sshll.u32 [#allocation7], 4
      %s65 = int_to_ptr.vmem [resolvable:$true] %s64
      %70 = dma.hbm_to_vmem [thread:$0]  %s2, 384, %s65, [#allocation6], 128, 128, 8
    $region13: #{_lambda_.3} parent=1 // pred_fallthru
      _
    // Predicated region
    $region14: #{_lambda_.3} parent=1 // pred_check
      _
    $region15: #{_lambda_.3} parent=1 // pred_check_branch
      %72 = sbr.rel (0) target = $region17
    $region16: #{_lambda_.3} parent=1 // pred_region
      %s74 = ssub.s32 512, 512
      %75 = vsyncadd [#allocation9], %s74
      %s76 = sshll.u32 [#allocation8], 4
      %s77 = int_to_ptr.vmem [resolvable:$true] %s76
      %82 = dma.hbm_to_vmem [thread:$0]  %s3, 512, %s77, [#allocation9], 64, 64, 4
    $region17: #{_lambda_.3} parent=1 // pred_fallthru
      _
    // Predicated region
    $region18: #{_lambda_.3} parent=1 // pred_check
      _
    $region19: #{_lambda_.3} parent=1 // pred_check_branch
      %84 = sbr.rel (0) target = $region21
    $region20: #{_lambda_.3} parent=1 // pred_region
      %s86 = ssub.s32 32, 32
      %87 = vsyncadd [#allocation9], %s86
      %s88 = sshll.u32 [#allocation10], 4
      %s89 = int_to_ptr.vmem [resolvable:$true] %s88
      %94 = dma.hbm_to_vmem [thread:$0]  %s4, 32, %s89, [#allocation9], 16, 16, 1
    $region21: #{_lambda_.3} parent=1 // pred_fallthru
      _
    // Predicated region
    $region22: #{_lambda_.3} parent=1 // pred_check
      _
    $region23: #{_lambda_.3} parent=1 // pred_check_branch
      %96 = sbr.rel (0) target = $region25
    $region24: #{_lambda_.3} parent=1 // pred_region
      %s98 = ssub.s32 512, 512
      %99 = vsyncadd [#allocation12], %s98
      %s100 = sshll.u32 [#allocation11], 4
      %s101 = int_to_ptr.vmem [resolvable:$true] %s100
      %106 = dma.hbm_to_vmem [thread:$0]  %s5, 512, %s101, [#allocation12], 64, 64, 4
    $region25: #{_lambda_.3} parent=1 // pred_fallthru
      _
    // Predicated region
    $region26: #{_lambda_.3} parent=1 // pred_check
      _
    $region27: #{_lambda_.3} parent=1 // pred_check_branch
      %108 = sbr.rel (0) target = $region29
    $region28: #{_lambda_.3} parent=1 // pred_region
      %s110 = ssub.s32 32, 32
      %111 = vsyncadd [#allocation12], %s110
      %s112 = sshll.u32 [#allocation13], 4
      %s113 = int_to_ptr.vmem [resolvable:$true] %s112
      %118 = dma.hbm_to_vmem [thread:$0]  %s6, 32, %s113, [#allocation12], 16, 16, 1
    $region29: #{_lambda_.3} parent=1 // pred_fallthru
      _
    // Predicated region
    $region30: #{_lambda_.3} parent=1 // pred_check
      _
    $region31: #{_lambda_.3} parent=1 // pred_check_branch
      %120 = sbr.rel (0) target = $region33
    $region32: #{_lambda_.3} parent=1 // pred_region
      %s122 = ssub.s32 512, 512
      %123 = vsyncadd [#allocation15], %s122
      %s124 = sshll.u32 [#allocation14], 4
      %s125 = int_to_ptr.vmem [resolvable:$true] %s124
      %130 = dma.hbm_to_vmem [thread:$0]  %s7, 512, %s125, [#allocation15], 64, 64, 4
    $region33: #{_lambda_.3} parent=1 // pred_fallthru
      _
    // Predicated region
    $region34: #{_lambda_.3} parent=1 // pred_check
      _
    $region35: #{_lambda_.3} parent=1 // pred_check_branch
      %132 = sbr.rel (0) target = $region37
    $region36: #{_lambda_.3} parent=1 // pred_region
      %s134 = ssub.s32 32, 32
      %135 = vsyncadd [#allocation15], %s134
      %s136 = sshll.u32 [#allocation16], 4
      %s137 = int_to_ptr.vmem [resolvable:$true] %s136
      %142 = dma.hbm_to_vmem [thread:$0]  %s8, 32, %s137, [#allocation15], 16, 16, 1
    $region37: #{_lambda_.3} parent=1 // pred_fallthru
      _
    // Predicated region
    $region38: #{_lambda_.3} parent=1 // pred_check
      _
    $region39: #{_lambda_.3} parent=1 // pred_check_branch
      %144 = sbr.rel (0) target = $region41
    $region40: #{_lambda_.3} parent=1 // pred_region
      %s146 = ssub.s32 32, 32
      %147 = vsyncadd [#allocation18], %s146
      %s148 = sshll.u32 [#allocation17], 4
      %s149 = int_to_ptr.vmem [resolvable:$true] %s148
      %154 = dma.hbm_to_vmem [thread:$0]  %s9, 32, %s149, [#allocation18], 16, 16, 1
    $region41: #{_lambda_.3} parent=1 // pred_fallthru
      _
    // Predicated region
    $region42: #{_lambda_.3} parent=1 // pred_check
      _
    $region43: #{_lambda_.3} parent=1 // pred_check_branch
      %156 = sbr.rel (0) target = $region45
    $region44: #{_lambda_.3} parent=1 // pred_region
      %s158 = ssub.s32 32, 32
      %159 = vsyncadd [#allocation18], %s158
      %s160 = sshll.u32 [#allocation19], 4
      %s161 = int_to_ptr.vmem [resolvable:$true] %s160
      %166 = dma.hbm_to_vmem [thread:$0]  %s10, 32, %s161, [#allocation18], 16, 16, 1
    $region45: #{_lambda_.3} parent=1 // pred_fallthru
      _
    // Predicated region
    $region46: #{_lambda_.3} parent=1 // pred_check
      _
    $region47: #{_lambda_.3} parent=1 // pred_check_branch
      %168 = sbr.rel (0) target = $region49
    $region48: #{_lambda_.3} parent=1 // pred_region
      %s170 = ssub.s32 512, 512
      %171 = vsyncadd [#allocation21], %s170
      %s172 = sshll.u32 [#allocation20], 4
      %s173 = int_to_ptr.vmem [resolvable:$true] %s172
      %178 = dma.hbm_to_vmem [thread:$0]  %s11, 512, %s173, [#allocation21], 64, 64, 4
    $region49: #{_lambda_.3} parent=1 // pred_fallthru
      _
    // Predicated region
    $region50: #{_lambda_.3} parent=1 // pred_check
      _
    $region51: #{_lambda_.3} parent=1 // pred_check_branch
      %180 = sbr.rel (0) target = $region53
    $region52: #{_lambda_.3} parent=1 // pred_region
      %s182 = ssub.s32 32, 32
      %183 = vsyncadd [#allocation21], %s182
      %s184 = sshll.u32 [#allocation22], 4
      %s185 = int_to_ptr.vmem [resolvable:$true] %s184
      %190 = dma.hbm_to_vmem [thread:$0]  %s12, 32, %s185, [#allocation21], 16, 16, 1
    $region53: #{_lambda_.3} parent=1 // pred_fallthru
      _
    // Predicated region
    $region54: #{_lambda_.3} parent=1 // pred_check
      _
    $region55: #{_lambda_.3} parent=1 // pred_check_branch
      %192 = sbr.rel (0) target = $region57
    $region56: #{_lambda_.3} parent=1 // pred_region
      %s194 = ssub.s32 1024, 1024
      %195 = vsyncadd [#allocation24], %s194
      %s196 = sshll.u32 [#allocation23], 4
      %s197 = int_to_ptr.vmem [resolvable:$true] %s196
      %202 = dma.hbm_to_vmem [thread:$0]  %s13, 1024, %s197, [#allocation24], 64, 64, 4
    $region57: #{_lambda_.3} parent=1 // pred_fallthru
      _
    // Predicated region
    $region58: #{_lambda_.3} parent=1 // pred_check
      _
    $region59: #{_lambda_.3} parent=1 // pred_check_branch
      %204 = sbr.rel (0) target = $region61
    $region60: #{_lambda_.3} parent=1 // pred_region
      %s206 = ssub.s32 32, 32
      %207 = vsyncadd [#allocation24], %s206
      %s208 = sshll.u32 [#allocation25], 4
      %s209 = int_to_ptr.vmem [resolvable:$true] %s208
      %214 = dma.hbm_to_vmem [thread:$0]  %s14, 32, %s209, [#allocation24], 16, 16, 1
    $region61: #{_lambda_.3} parent=1 // pred_fallthru
      _
    // Predicated region
    $region62: #{_lambda_.3} parent=1 // pred_check
      _
    $region63: #{_lambda_.3} parent=1 // pred_check_branch
      %216 = sbr.rel (0) target = $region65
    $region64: #{_lambda_.3} parent=1 // pred_region
      %s218 = ssub.s32 32, 32
      %219 = vsyncadd [#allocation27], %s218
      %s220 = sshll.u32 [#allocation26], 4
      %s221 = int_to_ptr.vmem [resolvable:$true] %s220
      %226 = dma.hbm_to_vmem [thread:$0]  %s15, 32, %s221, [#allocation27], 16, 16, 1
    $region65: #{_lambda_.3} parent=1 // pred_fallthru
      _
    // Predicated region
    $region66: #{_lambda_.3} parent=1 // pred_check
      _
    $region67: #{_lambda_.3} parent=1 // pred_check_branch
      %228 = sbr.rel (0) target = $region69
    $region68: #{_lambda_.3} parent=1 // pred_region
      %s230 = ssub.s32 32, 32
      %231 = vsyncadd [#allocation27], %s230
      %s232 = sshll.u32 [#allocation28], 4
      %s233 = int_to_ptr.vmem [resolvable:$true] %s232
      %238 = dma.hbm_to_vmem [thread:$0]  %s16, 32, %s233, [#allocation27], 16, 16, 1
    $region69: #{_lambda_.3} parent=1 // pred_fallthru
      _
    // Predicated region
    $region70: #{_lambda_.3} parent=1 // pred_check
      _
    $region71: #{_lambda_.3} parent=1 // pred_check_branch
      %240 = sbr.rel (0) target = $region73
    $region72: #{_lambda_.3} parent=1 // pred_region
      %s242 = ssub.s32 256, 256
      %243 = vsyncadd [#allocation30], %s242
      %s244 = sshll.u32 [#allocation29], 4
      %s245 = int_to_ptr.vmem [resolvable:$true] %s244
      %250 = dma.hbm_to_vmem [thread:$0]  %s17, 256, %s245, [#allocation30], 64, 64, 4
    $region73: #{_lambda_.3} parent=1 // pred_fallthru
      _
    // Predicated region
    $region74: #{_lambda_.3} parent=1 // pred_check
      _
    $region75: #{_lambda_.3} parent=1 // pred_check_branch
      %252 = sbr.rel (0) target = $region77
    $region76: #{_lambda_.3} parent=1 // pred_region
      %s254 = ssub.s32 16, 16
      %255 = vsyncadd [#allocation30], %s254
      %s257 = sshll.u32 [#allocation31], 4
      %s258 = int_to_ptr.vmem [resolvable:$true] %s257
      %260 = dma.hbm_to_vmem [thread:$0]  %s18, 16, %s258, [#allocation30]
    $region77: #{_lambda_.3} parent=1 // pred_fallthru
      _
    // Predicated region
    $region78: #{_lambda_.3} parent=1 // pred_check
      _
    $region79: #{_lambda_.3} parent=1 // pred_check_branch
      %262 = sbr.rel (0) target = $region81
    $region80: #{_lambda_.3} parent=1 // pred_region
      %263 = dma.done [#allocation3], 384
    $region81: #{_lambda_.3} parent=1 // pred_fallthru
      _
    // Predicated region
    $region82: #{_lambda_.3} parent=1 // pred_check
      _
    $region83: #{_lambda_.3} parent=1 // pred_check_branch
      %265 = sbr.rel (0) target = $region85
    $region84: #{_lambda_.3} parent=1 // pred_region
      %266 = dma.done [#allocation6], 384
    $region85: #{_lambda_.3} parent=1 // pred_fallthru
      _
    // Predicated region
    $region86: #{_lambda_.3} parent=1 // pred_check
      _
    $region87: #{_lambda_.3} parent=1 // pred_check_branch
      %268 = sbr.rel (0) target = $region89
    $region88: #{_lambda_.3} parent=1 // pred_region
      %269 = dma.done [#allocation6], 384
    $region89: #{_lambda_.3} parent=1 // pred_fallthru
      _
    // Predicated region
    $region90: #{_lambda_.3} parent=1 // pred_check
      _
    $region91: #{_lambda_.3} parent=1 // pred_check_branch
      %271 = sbr.rel (0) target = $region93
    $region92: #{_lambda_.3} parent=1 // pred_region
      %272 = dma.done [#allocation9], 512
    $region93: #{_lambda_.3} parent=1 // pred_fallthru
      _
    // Predicated region
    $region94: #{_lambda_.3} parent=1 // pred_check
      _
    $region95: #{_lambda_.3} parent=1 // pred_check_branch
      %274 = sbr.rel (0) target = $region97
    $region96: #{_lambda_.3} parent=1 // pred_region
      %275 = dma.done [#allocation9], 32
    $region97: #{_lambda_.3} parent=1 // pred_fallthru
      _
    // Predicated region
    $region98: #{_lambda_.3} parent=1 // pred_check
      _
    $region99: #{_lambda_.3} parent=1 // pred_check_branch
      %277 = sbr.rel (0) target = $region101
    $region100: #{_lambda_.3} parent=1 // pred_region
      %278 = dma.done [#allocation12], 512
    $region101: #{_lambda_.3} parent=1 // pred_fallthru
      _
    // Predicated region
    $region102: #{_lambda_.3} parent=1 // pred_check
      _
    $region103: #{_lambda_.3} parent=1 // pred_check_branch
      %280 = sbr.rel (0) target = $region105
    $region104: #{_lambda_.3} parent=1 // pred_region
      %281 = dma.done [#allocation12], 32
    $region105: #{_lambda_.3} parent=1 // pred_fallthru
      _
    // Predicated region
    $region106: #{_lambda_.3} parent=1 // pred_check
      _
    $region107: #{_lambda_.3} parent=1 // pred_check_branch
      %283 = sbr.rel (0) target = $region109
    $region108: #{_lambda_.3} parent=1 // pred_region
      %284 = dma.done [#allocation15], 512
    $region109: #{_lambda_.3} parent=1 // pred_fallthru
      _
    // Predicated region
    $region110: #{_lambda_.3} parent=1 // pred_check
      _
    $region111: #{_lambda_.3} parent=1 // pred_check_branch
      %286 = sbr.rel (0) target = $region113
    $region112: #{_lambda_.3} parent=1 // pred_region
      %287 = dma.done [#allocation15], 32
    $region113: #{_lambda_.3} parent=1 // pred_fallthru
      _
    // Predicated region
    $region114: #{_lambda_.3} parent=1 // pred_check
      _
    $region115: #{_lambda_.3} parent=1 // pred_check_branch
      %289 = sbr.rel (0) target = $region117
    $region116: #{_lambda_.3} parent=1 // pred_region
      %290 = dma.done [#allocation18], 32
    $region117: #{_lambda_.3} parent=1 // pred_fallthru
      _
    // Predicated region
    $region118: #{_lambda_.3} parent=1 // pred_check
      _
    $region119: #{_lambda_.3} parent=1 // pred_check_branch
      %292 = sbr.rel (0) target = $region121
    $region120: #{_lambda_.3} parent=1 // pred_region
      %293 = dma.done [#allocation18], 32
    $region121: #{_lambda_.3} parent=1 // pred_fallthru
      _
    // Predicated region
    $region122: #{_lambda_.3} parent=1 // pred_check
      _
    $region123: #{_lambda_.3} parent=1 // pred_check_branch
      %295 = sbr.rel (0) target = $region125
    $region124: #{_lambda_.3} parent=1 // pred_region
      %296 = dma.done [#allocation21], 512
    $region125: #{_lambda_.3} parent=1 // pred_fallthru
      _
    // Predicated region
    $region126: #{_lambda_.3} parent=1 // pred_check
      _
    $region127: #{_lambda_.3} parent=1 // pred_check_branch
      %298 = sbr.rel (0) target = $region129
    $region128: #{_lambda_.3} parent=1 // pred_region
      %299 = dma.done [#allocation21], 32
    $region129: #{_lambda_.3} parent=1 // pred_fallthru
      _
    // Predicated region
    $region130: #{_lambda_.3} parent=1 // pred_check
      _
    $region131: #{_lambda_.3} parent=1 // pred_check_branch
      %301 = sbr.rel (0) target = $region133
    $region132: #{_lambda_.3} parent=1 // pred_region
      %302 = dma.done [#allocation24], 1024
    $region133: #{_lambda_.3} parent=1 // pred_fallthru
      _
    // Predicated region
    $region134: #{_lambda_.3} parent=1 // pred_check
      _
    $region135: #{_lambda_.3} parent=1 // pred_check_branch
      %304 = sbr.rel (0) target = $region137
    $region136: #{_lambda_.3} parent=1 // pred_region
      %305 = dma.done [#allocation24], 32
    $region137: #{_lambda_.3} parent=1 // pred_fallthru
      _
    // Predicated region
    $region138: #{_lambda_.3} parent=1 // pred_check
      _
    $region139: #{_lambda_.3} parent=1 // pred_check_branch
      %307 = sbr.rel (0) target = $region141
    $region140: #{_lambda_.3} parent=1 // pred_region
      %308 = dma.done [#allocation27], 32
    $region141: #{_lambda_.3} parent=1 // pred_fallthru
      _
    // Predicated region
    $region142: #{_lambda_.3} parent=1 // pred_check
      _
    $region143: #{_lambda_.3} parent=1 // pred_check_branch
      %310 = sbr.rel (0) target = $region145
    $region144: #{_lambda_.3} parent=1 // pred_region
      %311 = dma.done [#allocation27], 32
    $region145: #{_lambda_.3} parent=1 // pred_fallthru
      _
    // Predicated region
    $region146: #{_lambda_.3} parent=1 // pred_check
      _
    $region147: #{_lambda_.3} parent=1 // pred_check_branch
      %313 = sbr.rel (0) target = $region149
    $region148: #{_lambda_.3} parent=1 // pred_region
      %314 = dma.done [#allocation30], 256
    $region149: #{_lambda_.3} parent=1 // pred_fallthru
      _
    // Predicated region
    $region150: #{_lambda_.3} parent=1 // pred_check
      _
    $region151: #{_lambda_.3} parent=1 // pred_check_branch
      %316 = sbr.rel (0) target = $region153
    $region152: #{_lambda_.3} parent=1 // pred_region
      %317 = dma.done [#allocation30], 16
    $region153: #{_lambda_.3} parent=1 // pred_fallthru
      _
    %v319 = vld [vmem:[#allocation2] sm:$0xff]
    %v320 = vld [vmem:[#allocation2 + $0x8] sm:$0xff]
    %v321 = vld [vmem:[#allocation2 + $0x10] sm:$0xff]
    %v322 = vld [vmem:[#allocation5] sm:$0xff]
    %v323 = vld [vmem:[#allocation5 + $0x8] sm:$0xff]
    %v324 = vld [vmem:[#allocation5 + $0x10] sm:$0xff]
    %v325 = vpack.c.bf16 %v323, %v322
    %v326 = vpack.c.bf16 %v324, %v324
    %v327 = vld [vmem:[#allocation7] sm:$0xff]
    %v328 = vld [vmem:[#allocation7 + $0x8] sm:$0xff]
    %v329 = vld [vmem:[#allocation7 + $0x10] sm:$0xff]
    %v330 = vld [vmem:[#allocation8] sm:$0xf]
    %v331 = vld [vmem:[#allocation8 + $0x4] sm:$0xf]
    %v332 = vld [vmem:[#allocation8 + $0x8] sm:$0xf]
    %v333 = vld [vmem:[#allocation8 + $0xc] sm:$0xf]
    %v334 = vld [vmem:[#allocation10] sm:$0x1]
    %v336 = vlaneseq
    %v337 = vshrl.u32 %v336, 7
    %v338 = vsub.s32 0, %v337
    %v339 = vrot.slane %v334, %v338
    %v345 = vunpack.c.l.b16 %v330
    %v346 = vunpack.c.l.b16 %v331
    %v347 = vunpack.c.l.b16 %v332
    %v348 = vunpack.c.l.b16 %v333
    %v349 = vpack.c.b16 %v346, %v345
    %v350 = vpack.c.b16 %v348, %v347
    %vm353 = vcmask 261120
    %v355 = vsel %vm353, %v325, 0
    %v358 = vsel %vm353, %v326, 0
    %360 = vmatprep.subr.bf16.mxu0 0
    %361 = vmatpush1.bf16.msra.mxu0 %v349
    %362 = vmatprep.subr.bf16.mxu0 0
    %363 = vmatpush1.bf16.msra.mxu0 %v350
    %364 = vmatprep.subr.bf16.mxu0 0
    %365 = vmatpush1.bf16.msra.mxu0 0
    %366 = vmatprep.subr.bf16.mxu0 0
    %367 = vmatpush1.bf16.msra.mxu0 0
    %368 = vmatprep.subr.bf16.mxu0 0
    %369 = vmatpush1.bf16.msra.mxu0 0
    %370 = vmatprep.subr.bf16.mxu0 0
    %371 = vmatpush1.bf16.msra.mxu0 0
    %372 = vmatprep.subr.bf16.mxu0 0
    %373 = vmatpush1.bf16.msra.mxu0 0
    %374 = vmatprep.subr.bf16.mxu0 0
    %375 = vmatpush1.bf16.msra.mxu0 0
    %376 = vmatprep.subr.bf16.mxu0 0
    %377 = vmatpush1.bf16.msra.mxu0 0
    %378 = vmatprep.subr.bf16.mxu0 0
    %379 = vmatpush1.bf16.msra.mxu0 0
    %380 = vmatprep.subr.bf16.mxu0 0
    %381 = vmatpush1.bf16.msra.mxu0 0
    %382 = vmatprep.subr.bf16.mxu0 0
    %383 = vmatpush1.bf16.msra.mxu0 0
    %384 = vmatprep.subr.bf16.mxu0 0
    %385 = vmatpush1.bf16.msra.mxu0 0
    %386 = vmatprep.subr.bf16.mxu0 0
    %387 = vmatpush1.bf16.msra.mxu0 0
    %388 = vmatprep.subr.bf16.mxu0 0
    %389 = vmatpush1.bf16.msra.mxu0 0
    %390 = vmatprep.subr.bf16.mxu0 0
    %391 = vmatpush1.bf16.msra.mxu0 0
    %392 = vmatprep.mubr.bf16.mxu0 0
    %393 = vmatmul.mubr.bf16.gmra.mrb[0].mxu0 %v355
    %v394 = vpop.f32.mrb[0].mxu0
    %v395 = vadd.f32 %v339, %v394
    %v396 = vpop.f32.mrb[0].mxu0
    %v397 = vpop.f32.mrb[0].mxu0
    %v398 = vadd.f32 %v339, %v397
    %v399 = vpop.f32.mrb[0].mxu0
    %400 = vmatprep.mubr.bf16.mxu0 0
    %401 = vmatmul.mubr.bf16.gmra.mrb[0].mxu0 %v358
    %v402 = vpop.f32.mrb[0].mxu0
    %v403 = vadd.f32 %v339, %v402
    %v404 = vpop.f32.mrb[0].mxu0
    %v405 = vpop.f32.mrb[0].mxu0
    %v406 = vpop.f32.mrb[0].mxu0
    %407 = vdwg.mxu0
    %v408 = vadd.f32 %v319, %v395
    %v409 = vadd.f32 %v320, %v398
    %v410 = vadd.f32 %v321, %v403
    %v411 = vpack.c.bf16 %v409, %v408
    %v412 = vpack.c.bf16 %v410, %v410
    %v413 = vld [vmem:[#allocation11] sm:$0xf]
    %v414 = vld [vmem:[#allocation11 + $0x4] sm:$0xf]
    %v415 = vld [vmem:[#allocation11 + $0x8] sm:$0xf]
    %v416 = vld [vmem:[#allocation11 + $0xc] sm:$0xf]
    %v417 = vld [vmem:[#allocation13] sm:$0x1]
    %v419 = vlaneseq
    %v420 = vshrl.u32 %v419, 7
    %v421 = vsub.s32 0, %v420
    %v422 = vrot.slane %v417, %v421
    %v428 = vunpack.c.l.b16 %v413
    %v429 = vunpack.c.l.b16 %v414
    %v430 = vunpack.c.l.b16 %v415
    %v431 = vunpack.c.l.b16 %v416
    %v432 = vpack.c.b16 %v429, %v428
    %v433 = vpack.c.b16 %v431, %v430
    %v437 = vsel %vm353, %v411, 0
    %v440 = vsel %vm353, %v412, 0
    %442 = vmatprep.subr.bf16.mxu0 0
    %443 = vmatpush1.bf16.msra.mxu0 %v432
    %444 = vmatprep.subr.bf16.mxu0 0
    %445 = vmatpush1.bf16.msra.mxu0 %v433
    %446 = vmatprep.subr.bf16.mxu0 0
    %447 = vmatpush1.bf16.msra.mxu0 0
    %448 = vmatprep.subr.bf16.mxu0 0
    %449 = vmatpush1.bf16.msra.mxu0 0
    %450 = vmatprep.subr.bf16.mxu0 0
    %451 = vmatpush1.bf16.msra.mxu0 0
    %452 = vmatprep.subr.bf16.mxu0 0
    %453 = vmatpush1.bf16.msra.mxu0 0
    %454 = vmatprep.subr.bf16.mxu0 0
    %455 = vmatpush1.bf16.msra.mxu0 0
    %456 = vmatprep.subr.bf16.mxu0 0
    %457 = vmatpush1.bf16.msra.mxu0 0
    %458 = vmatprep.subr.bf16.mxu0 0
    %459 = vmatpush1.bf16.msra.mxu0 0
    %460 = vmatprep.subr.bf16.mxu0 0
    %461 = vmatpush1.bf16.msra.mxu0 0
    %462 = vmatprep.subr.bf16.mxu0 0
    %463 = vmatpush1.bf16.msra.mxu0 0
    %464 = vmatprep.subr.bf16.mxu0 0
    %465 = vmatpush1.bf16.msra.mxu0 0
    %466 = vmatprep.subr.bf16.mxu0 0
    %467 = vmatpush1.bf16.msra.mxu0 0
    %468 = vmatprep.subr.bf16.mxu0 0
    %469 = vmatpush1.bf16.msra.mxu0 0
    %470 = vmatprep.subr.bf16.mxu0 0
    %471 = vmatpush1.bf16.msra.mxu0 0
    %472 = vmatprep.subr.bf16.mxu0 0
    %473 = vmatpush1.bf16.msra.mxu0 0
    %474 = vmatprep.mubr.bf16.mxu0 0
    %475 = vmatmul.mubr.bf16.gmra.mrb[0].mxu0 %v437
    %v476 = vpop.f32.mrb[0].mxu0
    %v477 = vadd.f32 %v422, %v476
    %v478 = vpop.f32.mrb[0].mxu0
    %v479 = vpop.f32.mrb[0].mxu0
    %v480 = vadd.f32 %v422, %v479
    %v481 = vpop.f32.mrb[0].mxu0
    %482 = vmatprep.mubr.bf16.mxu0 0
    %483 = vmatmul.mubr.bf16.gmra.mrb[0].mxu0 %v440
    %v484 = vpop.f32.mrb[0].mxu0
    %v485 = vadd.f32 %v422, %v484
    %v486 = vpop.f32.mrb[0].mxu0
    %v487 = vpop.f32.mrb[0].mxu0
    %v488 = vpop.f32.mrb[0].mxu0
    %489 = vdwg.mxu0
    %v490 = vmul.f32 %v477, 0.35355338
    %v491 = vmul.f32 %v480, 0.35355338
    %v492 = vmul.f32 %v485, 0.35355338
    %v493 = vpack.c.bf16 %v491, %v490
    %v494 = vpack.c.bf16 %v492, %v492
    %v495 = vpack.c.bf16 %v480, %v477
    %v496 = vpack.c.bf16 %v485, %v485
    %499 = vrot.lane.b32.xlu0 %v495, 96
    %v500 = vpop.permute.xlu0 %499
    %501 = vrot.lane.b32.xlu0 %v496, 96
    %v502 = vpop.permute.xlu0 %501
    %vm503 = vcmask 64512
    %v505 = vsel %vm503, %v493, 0
    %v508 = vsel %vm503, %v494, 0
    %v511 = vsel %vm503, %v500, 0
    %v514 = vsel %vm503, %v502, 0
    %516 = vmatprep.subr.bf16.mxu0 0
    %517 = vmatpush1.bf16.xpose.msra.mxu0 %v511
    %518 = vmatprep.subr.bf16.mxu0 0
    %519 = vmatpush1.bf16.xpose.msra.mxu0 %v514
    %520 = vmatprep.subr.bf16.mxu0 0
    %521 = vmatpush1.bf16.xpose.msra.mxu0 0
    %522 = vmatprep.subr.bf16.mxu0 0
    %523 = vmatpush1.bf16.xpose.msra.mxu0 0
    %524 = vmatprep.subr.bf16.mxu0 0
    %525 = vmatpush1.bf16.xpose.msra.mxu0 0
    %526 = vmatprep.subr.bf16.mxu0 0
    %527 = vmatpush1.bf16.xpose.msra.mxu0 0
    %528 = vmatprep.subr.bf16.mxu0 0
    %529 = vmatpush1.bf16.xpose.msra.mxu0 0
    %530 = vmatprep.subr.bf16.mxu0 0
    %531 = vmatpush1.bf16.xpose.msra.mxu0 0
    %532 = vmatprep.subr.bf16.mxu0 0
    %533 = vmatpush1.bf16.xpose.msra.mxu0 0
    %534 = vmatprep.subr.bf16.mxu0 0
    %535 = vmatpush1.bf16.xpose.msra.mxu0 0
    %536 = vmatprep.subr.bf16.mxu0 0
    %537 = vmatpush1.bf16.xpose.msra.mxu0 0
    %538 = vmatprep.subr.bf16.mxu0 0
    %539 = vmatpush1.bf16.xpose.msra.mxu0 0
    %540 = vmatprep.subr.bf16.mxu0 0
    %541 = vmatpush1.bf16.xpose.msra.mxu0 0
    %542 = vmatprep.subr.bf16.mxu0 0
    %543 = vmatpush1.bf16.xpose.msra.mxu0 0
    %544 = vmatprep.subr.bf16.mxu0 0
    %545 = vmatpush1.bf16.xpose.msra.mxu0 0
    %546 = vmatprep.subr.bf16.mxu0 0
    %547 = vmatpush1.bf16.xpose.msra.mxu0 0
    %548 = vmatprep.mubr.bf16.mxu0 0
    %549 = vmatmul.mubr.bf16.gmra.mrb[0].mxu0 %v505
    %v550 = vpop.f32.mrb[0].mxu0
    %v551 = vadd.f32 %v327, %v550
    %v552 = vpop.f32.mrb[0].mxu0
    %v553 = vpop.f32.mrb[0].mxu0
    %v554 = vadd.f32 %v328, %v553
    %v555 = vpop.f32.mrb[0].mxu0
    %556 = vmatprep.mubr.bf16.mxu0 0
    %557 = vmatmul.mubr.bf16.gmra.mrb[0].mxu0 %v508
    %v558 = vpop.f32.mrb[0].mxu0
    %v559 = vadd.f32 %v329, %v558
    %v560 = vpop.f32.mrb[0].mxu0
    %v561 = vpop.f32.mrb[0].mxu0
    %v562 = vpop.f32.mrb[0].mxu0
    %563 = vdwg.mxu0
    %vm564 = vcmask 195584
    %v565 = vsel %vm564, %v551, -inf
    %566 = vmax.xlane.f32.xlu0 %v565
    %v567 = vpop.xlane.xlu0 %566
    %v568 = vsel %vm564, %v554, -inf
    %569 = vmax.xlane.f32.xlu0 %v568
    %v570 = vpop.xlane.xlu0 %569
    %v571 = vsel %vm564, %v559, -inf
    %572 = vmax.xlane.f32.xlu0 %v571
    %v573 = vpop.xlane.xlu0 %572
    %v574 = vsub.f32 %v551, %v567
    %v575 = vsub.f32 %v554, %v570
    %v576 = vsub.f32 %v559, %v573
    %v577 = vmul.f32 %v574, 1.442695
    %v578 = vpow.pop %v577
    %v579 = vmul.f32 %v575, 1.442695
    %v580 = vpow.pop %v579
    %v581 = vmul.f32 %v576, 1.442695
    %v582 = vpow.pop %v581
    %v583 = vsel %vm564, %v578, 0.0
    %584 = vadd.xlane.f32.xlu0 %v583
    %v585 = vpop.xlane.xlu0 %584
    %v586 = vsel %vm564, %v580, 0.0
    %587 = vadd.xlane.f32.xlu0 %v586
    %v588 = vpop.xlane.xlu0 %587
    %v589 = vsel %vm564, %v582, 0.0
    %590 = vadd.xlane.f32.xlu0 %v589
    %v591 = vpop.xlane.xlu0 %590
    %v592 = vrcp.pop %v585
    %v593 = vrcp.pop %v588
    %v594 = vrcp.pop %v591
    %v595 = vmul.f32 %v578, %v592
    %v596 = vmul.f32 %v580, %v593
    %v597 = vmul.f32 %v582, %v594
    %v598 = vpack.c.bf16 %v596, %v595
    %v599 = vpack.c.bf16 %v597, %v597
    %600 = vrot.lane.b32.xlu0 %v495, 64
    %v601 = vpop.permute.xlu0 %600
    %602 = vrot.lane.b32.xlu0 %v496, 64
    %v603 = vpop.permute.xlu0 %602
    %v606 = vsel %vm564, %v598, 0
    %v609 = vsel %vm564, %v599, 0
    %vm611 = vcmask 1043456
    %v613 = vsel %vm611, %v603, 0
    %615 = vmatprep.subr.bf16.mxu0 0
    %616 = vmatpush1.bf16.msra.mxu0 %v601
    %617 = vmatprep.subr.bf16.mxu0 0
    %618 = vmatpush1.bf16.msra.mxu0 %v613
    %619 = vmatprep.subr.bf16.mxu0 0
    %620 = vmatpush1.bf16.msra.mxu0 0
    %621 = vmatprep.subr.bf16.mxu0 0
    %622 = vmatpush1.bf16.msra.mxu0 0
    %623 = vmatprep.subr.bf16.mxu0 0
    %624 = vmatpush1.bf16.msra.mxu0 0
    %625 = vmatprep.subr.bf16.mxu0 0
    %626 = vmatpush1.bf16.msra.mxu0 0
    %627 = vmatprep.subr.bf16.mxu0 0
    %628 = vmatpush1.bf16.msra.mxu0 0
    %629 = vmatprep.subr.bf16.mxu0 0
    %630 = vmatpush1.bf16.msra.mxu0 0
    %631 = vmatprep.subr.bf16.mxu0 0
    %632 = vmatpush1.bf16.msra.mxu0 0
    %633 = vmatprep.subr.bf16.mxu0 0
    %634 = vmatpush1.bf16.msra.mxu0 0
    %635 = vmatprep.subr.bf16.mxu0 0
    %636 = vmatpush1.bf16.msra.mxu0 0
    %637 = vmatprep.subr.bf16.mxu0 0
    %638 = vmatpush1.bf16.msra.mxu0 0
    %639 = vmatprep.subr.bf16.mxu0 0
    %640 = vmatpush1.bf16.msra.mxu0 0
    %641 = vmatprep.subr.bf16.mxu0 0
    %642 = vmatpush1.bf16.msra.mxu0 0
    %643 = vmatprep.subr.bf16.mxu0 0
    %644 = vmatpush1.bf16.msra.mxu0 0
    %645 = vmatprep.subr.bf16.mxu0 0
    %646 = vmatpush1.bf16.msra.mxu0 0
    %647 = vmatprep.mubr.bf16.mxu0 0
    %648 = vmatmul.mubr.bf16.gmra.mrb[0].mxu0 %v606
    %v649 = vpop.f32.mrb[0].mxu0
    %v650 = vadd.f32 0.0, %v649
    %v651 = vpop.f32.mrb[0].mxu0
    %v652 = vpop.f32.mrb[0].mxu0
    %v653 = vadd.f32 0.0, %v652
    %v654 = vpop.f32.mrb[0].mxu0
    %655 = vmatprep.mubr.bf16.mxu0 0
    %656 = vmatmul.mubr.bf16.gmra.mrb[0].mxu0 %v609
    %v657 = vpop.f32.mrb[0].mxu0
    %v658 = vadd.f32 0.0, %v657
    %v659 = vpop.f32.mrb[0].mxu0
    %v660 = vpop.f32.mrb[0].mxu0
    %v661 = vpop.f32.mrb[0].mxu0
    %662 = vdwg.mxu0
    %v663 = vpack.c.bf16 %v653, %v650
    %v664 = vpack.c.bf16 %v658, %v658
    %v665 = vld [vmem:[#allocation14] sm:$0xf]
    %668 = vrot.lane.b32.xlu0 %v493, 120
    %v669 = vpop.permute.xlu0 %668
    %670 = vrot.lane.b32.xlu0 %v494, 120
    %v671 = vpop.permute.xlu0 %670
    %672 = vrot.lane.b32.xlu0 %v495, 88
    %v673 = vpop.permute.xlu0 %672
    %674 = vrot.lane.b32.xlu0 %v496, 88
    %v675 = vpop.permute.xlu0 %674
    %v677 = vsel %vm503, %v669, 0
    %v680 = vsel %vm503, %v671, 0
    %v683 = vsel %vm503, %v673, 0
    %v686 = vsel %vm503, %v675, 0
    %688 = vmatprep.subr.bf16.mxu0 0
    %689 = vmatpush1.bf16.xpose.msra.mxu0 %v683
    %690 = vmatprep.subr.bf16.mxu0 0
    %691 = vmatpush1.bf16.xpose.msra.mxu0 %v686
    %692 = vmatprep.subr.bf16.mxu0 0
    %693 = vmatpush1.bf16.xpose.msra.mxu0 0
    %694 = vmatprep.subr.bf16.mxu0 0
    %695 = vmatpush1.bf16.xpose.msra.mxu0 0
    %696 = vmatprep.subr.bf16.mxu0 0
    %697 = vmatpush1.bf16.xpose.msra.mxu0 0
    %698 = vmatprep.subr.bf16.mxu0 0
    %699 = vmatpush1.bf16.xpose.msra.mxu0 0
    %700 = vmatprep.subr.bf16.mxu0 0
    %701 = vmatpush1.bf16.xpose.msra.mxu0 0
    %702 = vmatprep.subr.bf16.mxu0 0
    %703 = vmatpush1.bf16.xpose.msra.mxu0 0
    %704 = vmatprep.subr.bf16.mxu0 0
    %705 = vmatpush1.bf16.xpose.msra.mxu0 0
    %706 = vmatprep.subr.bf16.mxu0 0
    %707 = vmatpush1.bf16.xpose.msra.mxu0 0
    %708 = vmatprep.subr.bf16.mxu0 0
    %709 = vmatpush1.bf16.xpose.msra.mxu0 0
    %710 = vmatprep.subr.bf16.mxu0 0
    %711 = vmatpush1.bf16.xpose.msra.mxu0 0
    %712 = vmatprep.subr.bf16.mxu0 0
    %713 = vmatpush1.bf16.xpose.msra.mxu0 0
    %714 = vmatprep.subr.bf16.mxu0 0
    %715 = vmatpush1.bf16.xpose.msra.mxu0 0
    %716 = vmatprep.subr.bf16.mxu0 0
    %717 = vmatpush1.bf16.xpose.msra.mxu0 0
    %718 = vmatprep.subr.bf16.mxu0 0
    %719 = vmatpush1.bf16.xpose.msra.mxu0 0
    %720 = vmatprep.mubr.bf16.mxu0 0
    %721 = vmatmul.mubr.bf16.gmra.mrb[0].mxu0 %v677
    %v722 = vpop.f32.mrb[0].mxu0
    %v723 = vadd.f32 %v327, %v722
    %v724 = vpop.f32.mrb[0].mxu0
    %v725 = vpop.f32.mrb[0].mxu0
    %v726 = vadd.f32 %v328, %v725
    %v727 = vpop.f32.mrb[0].mxu0
    %728 = vmatprep.mubr.bf16.mxu0 0
    %729 = vmatmul.mubr.bf16.gmra.mrb[0].mxu0 %v680
    %v730 = vpop.f32.mrb[0].mxu0
    %v731 = vadd.f32 %v329, %v730
    %v732 = vpop.f32.mrb[0].mxu0
    %v733 = vpop.f32.mrb[0].mxu0
    %v734 = vpop.f32.mrb[0].mxu0
    %735 = vdwg.mxu0
    %v736 = vsel %vm564, %v723, -inf
    %737 = vmax.xlane.f32.xlu0 %v736
    %v738 = vpop.xlane.xlu0 %737
    %v739 = vsel %vm564, %v726, -inf
    %740 = vmax.xlane.f32.xlu0 %v739
    %v741 = vpop.xlane.xlu0 %740
    %v742 = vsel %vm564, %v731, -inf
    %743 = vmax.xlane.f32.xlu0 %v742
    %v744 = vpop.xlane.xlu0 %743
    %v745 = vsub.f32 %v723, %v738
    %v746 = vsub.f32 %v726, %v741
    %v747 = vsub.f32 %v731, %v744
    %v748 = vmul.f32 %v745, 1.442695
    %v749 = vpow.pop %v748
    %v750 = vmul.f32 %v746, 1.442695
    %v751 = vpow.pop %v750
    %v752 = vmul.f32 %v747, 1.442695
    %v753 = vpow.pop %v752
    %v754 = vsel %vm564, %v749, 0.0
    %755 = vadd.xlane.f32.xlu0 %v754
    %v756 = vpop.xlane.xlu0 %755
    %v757 = vsel %vm564, %v751, 0.0
    %758 = vadd.xlane.f32.xlu0 %v757
    %v759 = vpop.xlane.xlu0 %758
    %v760 = vsel %vm564, %v753, 0.0
    %761 = vadd.xlane.f32.xlu0 %v760
    %v762 = vpop.xlane.xlu0 %761
    %v763 = vrcp.pop %v756
    %v764 = vrcp.pop %v759
    %v765 = vrcp.pop %v762
    %v766 = vmul.f32 %v749, %v763
    %v767 = vmul.f32 %v751, %v764
    %v768 = vmul.f32 %v753, %v765
    %v769 = vpack.c.bf16 %v767, %v766
    %v770 = vpack.c.bf16 %v768, %v768
    %771 = vrot.lane.b32.xlu0 %v495, 56
    %v772 = vpop.permute.xlu0 %771
    %773 = vrot.lane.b32.xlu0 %v496, 56
    %v774 = vpop.permute.xlu0 %773
    %v777 = vsel %vm564, %v769, 0
    %v780 = vsel %vm564, %v770, 0
    %v783 = vsel %vm611, %v774, 0
    %785 = vmatprep.subr.bf16.mxu0 0
    %786 = vmatpush1.bf16.msra.mxu0 %v772
    %787 = vmatprep.subr.bf16.mxu0 0
    %788 = vmatpush1.bf16.msra.mxu0 %v783
    %789 = vmatprep.subr.bf16.mxu0 0
    %790 = vmatpush1.bf16.msra.mxu0 0
    %791 = vmatprep.subr.bf16.mxu0 0
    %792 = vmatpush1.bf16.msra.mxu0 0
    %793 = vmatprep.subr.bf16.mxu0 0
    %794 = vmatpush1.bf16.msra.mxu0 0
    %795 = vmatprep.subr.bf16.mxu0 0
    %796 = vmatpush1.bf16.msra.mxu0 0
    %797 = vmatprep.subr.bf16.mxu0 0
    %798 = vmatpush1.bf16.msra.mxu0 0
    %799 = vmatprep.subr.bf16.mxu0 0
    %800 = vmatpush1.bf16.msra.mxu0 0
    %801 = vmatprep.subr.bf16.mxu0 0
    %802 = vmatpush1.bf16.msra.mxu0 0
    %803 = vmatprep.subr.bf16.mxu0 0
    %804 = vmatpush1.bf16.msra.mxu0 0
    %805 = vmatprep.subr.bf16.mxu0 0
    %806 = vmatpush1.bf16.msra.mxu0 0
    %807 = vmatprep.subr.bf16.mxu0 0
    %808 = vmatpush1.bf16.msra.mxu0 0
    %809 = vmatprep.subr.bf16.mxu0 0
    %810 = vmatpush1.bf16.msra.mxu0 0
    %811 = vmatprep.subr.bf16.mxu0 0
    %812 = vmatpush1.bf16.msra.mxu0 0
    %813 = vmatprep.subr.bf16.mxu0 0
    %814 = vmatpush1.bf16.msra.mxu0 0
    %815 = vmatprep.subr.bf16.mxu0 0
    %816 = vmatpush1.bf16.msra.mxu0 0
    %817 = vmatprep.mubr.bf16.mxu0 0
    %818 = vmatmul.mubr.bf16.gmra.mrb[0].mxu0 %v777
    %v819 = vpop.f32.mrb[0].mxu0
    %v820 = vadd.f32 0.0, %v819
    %v821 = vpop.f32.mrb[0].mxu0
    %v822 = vpop.f32.mrb[0].mxu0
    %v823 = vadd.f32 0.0, %v822
    %v824 = vpop.f32.mrb[0].mxu0
    %825 = vmatprep.mubr.bf16.mxu0 0
    %826 = vmatmul.mubr.bf16.gmra.mrb[0].mxu0 %v780
    %v827 = vpop.f32.mrb[0].mxu0
    %v828 = vadd.f32 0.0, %v827
    %v829 = vpop.f32.mrb[0].mxu0
    %v830 = vpop.f32.mrb[0].mxu0
    %v831 = vpop.f32.mrb[0].mxu0
    %832 = vdwg.mxu0
    %v833 = vpack.c.bf16 %v823, %v820
    %v834 = vpack.c.bf16 %v828, %v828
    %s835 = scalar_lea.vmem [#allocation14], 4
    %v836 = vld [vmem:[%s835] sm:$0xf]
    %v838 = vsel %vm503, %v833, 0
    %v841 = vsel %vm503, %v834, 0
    %v844 = vsel %vm611, %v836, 0
    %846 = vmatprep.subr.bf16.mxu0 0
    %847 = vmatpush1.bf16.msra.mxu0 %v844
    %848 = vmatprep.subr.bf16.mxu0 0
    %849 = vmatpush1.bf16.msra.mxu0 0
    %850 = vmatprep.subr.bf16.mxu0 0
    %851 = vmatpush1.bf16.msra.mxu0 0
    %852 = vmatprep.subr.bf16.mxu0 0
    %853 = vmatpush1.bf16.msra.mxu0 0
    %854 = vmatprep.subr.bf16.mxu0 0
    %855 = vmatpush1.bf16.msra.mxu0 0
    %856 = vmatprep.subr.bf16.mxu0 0
    %857 = vmatpush1.bf16.msra.mxu0 0
    %858 = vmatprep.subr.bf16.mxu0 0
    %859 = vmatpush1.bf16.msra.mxu0 0
    %860 = vmatprep.subr.bf16.mxu0 0
    %861 = vmatpush1.bf16.msra.mxu0 0
    %862 = vmatprep.subr.bf16.mxu0 0
    %863 = vmatpush1.bf16.msra.mxu0 0
    %864 = vmatprep.subr.bf16.mxu0 0
    %865 = vmatpush1.bf16.msra.mxu0 0
    %866 = vmatprep.subr.bf16.mxu0 0
    %867 = vmatpush1.bf16.msra.mxu0 0
    %868 = vmatprep.subr.bf16.mxu0 0
    %869 = vmatpush1.bf16.msra.mxu0 0
    %870 = vmatprep.subr.bf16.mxu0 0
    %871 = vmatpush1.bf16.msra.mxu0 0
    %872 = vmatprep.subr.bf16.mxu0 0
    %873 = vmatpush1.bf16.msra.mxu0 0
    %874 = vmatprep.subr.bf16.mxu0 0
    %875 = vmatpush1.bf16.msra.mxu0 0
    %876 = vmatprep.subr.bf16.mxu0 0
    %877 = vmatpush1.bf16.msra.mxu0 0
    %878 = vmatprep.mubr.bf16.mxu0 0
    %879 = vmatmul.mubr.bf16.gmra.mrb[0].mxu0 %v838
    %v880 = vpop.f32.mrb[0].mxu0
    %v881 = vadd.f32 0.0, %v880
    %v882 = vpop.f32.mrb[0].mxu0
    %v883 = vpop.f32.mrb[0].mxu0
    %v884 = vadd.f32 0.0, %v883
    %v885 = vpop.f32.mrb[0].mxu0
    %886 = vmatprep.mubr.bf16.mxu0 0
    %887 = vmatmul.mubr.bf16.gmra.mrb[0].mxu0 %v841
    %v888 = vpop.f32.mrb[0].mxu0
    %v889 = vadd.f32 0.0, %v888
    %v890 = vpop.f32.mrb[0].mxu0
    %v891 = vpop.f32.mrb[0].mxu0
    %v892 = vpop.f32.mrb[0].mxu0
    %893 = vdwg.mxu0
    %v895 = vsel %vm503, %v663, 0
    %v898 = vsel %vm503, %v664, 0
    %v901 = vsel %vm611, %v665, 0
    %903 = vmatprep.subr.bf16.mxu0 0
    %904 = vmatpush1.bf16.msra.mxu0 %v901
    %905 = vmatprep.subr.bf16.mxu0 0
    %906 = vmatpush1.bf16.msra.mxu0 0
    %907 = vmatprep.subr.bf16.mxu0 0
    %908 = vmatpush1.bf16.msra.mxu0 0
    %909 = vmatprep.subr.bf16.mxu0 0
    %910 = vmatpush1.bf16.msra.mxu0 0
    %911 = vmatprep.subr.bf16.mxu0 0
    %912 = vmatpush1.bf16.msra.mxu0 0
    %913 = vmatprep.subr.bf16.mxu0 0
    %914 = vmatpush1.bf16.msra.mxu0 0
    %915 = vmatprep.subr.bf16.mxu0 0
    %916 = vmatpush1.bf16.msra.mxu0 0
    %917 = vmatprep.subr.bf16.mxu0 0
    %918 = vmatpush1.bf16.msra.mxu0 0
    %919 = vmatprep.subr.bf16.mxu0 0
    %920 = vmatpush1.bf16.msra.mxu0 0
    %921 = vmatprep.subr.bf16.mxu0 0
    %922 = vmatpush1.bf16.msra.mxu0 0
    %923 = vmatprep.subr.bf16.mxu0 0
    %924 = vmatpush1.bf16.msra.mxu0 0
    %925 = vmatprep.subr.bf16.mxu0 0
    %926 = vmatpush1.bf16.msra.mxu0 0
    %927 = vmatprep.subr.bf16.mxu0 0
    %928 = vmatpush1.bf16.msra.mxu0 0
    %929 = vmatprep.subr.bf16.mxu0 0
    %930 = vmatpush1.bf16.msra.mxu0 0
    %931 = vmatprep.subr.bf16.mxu0 0
    %932 = vmatpush1.bf16.msra.mxu0 0
    %933 = vmatprep.subr.bf16.mxu0 0
    %934 = vmatpush1.bf16.msra.mxu0 0
    %935 = vmatprep.mubr.bf16.mxu0 0
    %936 = vmatmul.mubr.bf16.gmra.mrb[0].mxu0 %v895
    %v937 = vpop.f32.mrb[0].mxu0
    %v938 = vadd.f32 %v881, %v937
    %v939 = vpop.f32.mrb[0].mxu0
    %v940 = vpop.f32.mrb[0].mxu0
    %v941 = vadd.f32 %v884, %v940
    %v942 = vpop.f32.mrb[0].mxu0
    %943 = vmatprep.mubr.bf16.mxu0 0
    %944 = vmatmul.mubr.bf16.gmra.mrb[0].mxu0 %v898
    %v945 = vpop.f32.mrb[0].mxu0
    %v946 = vadd.f32 %v889, %v945
    %v947 = vpop.f32.mrb[0].mxu0
    %v948 = vpop.f32.mrb[0].mxu0
    %v949 = vpop.f32.mrb[0].mxu0
    %950 = vdwg.mxu0
    %951 = vrot.lane.b32.xlu0 %v493, 112
    %v952 = vpop.permute.xlu0 %951
    %953 = vrot.lane.b32.xlu0 %v494, 112
    %v954 = vpop.permute.xlu0 %953
    %955 = vrot.lane.b32.xlu0 %v495, 80
    %v956 = vpop.permute.xlu0 %955
    %957 = vrot.lane.b32.xlu0 %v496, 80
    %v958 = vpop.permute.xlu0 %957
    %v960 = vsel %vm503, %v952, 0
    %v963 = vsel %vm503, %v954, 0
    %v966 = vsel %vm503, %v956, 0
    %v969 = vsel %vm503, %v958, 0
    %971 = vmatprep.subr.bf16.mxu0 0
    %972 = vmatpush1.bf16.xpose.msra.mxu0 %v966
    %973 = vmatprep.subr.bf16.mxu0 0
    %974 = vmatpush1.bf16.xpose.msra.mxu0 %v969
    %975 = vmatprep.subr.bf16.mxu0 0
    %976 = vmatpush1.bf16.xpose.msra.mxu0 0
    %977 = vmatprep.subr.bf16.mxu0 0
    %978 = vmatpush1.bf16.xpose.msra.mxu0 0
    %979 = vmatprep.subr.bf16.mxu0 0
    %980 = vmatpush1.bf16.xpose.msra.mxu0 0
    %981 = vmatprep.subr.bf16.mxu0 0
    %982 = vmatpush1.bf16.xpose.msra.mxu0 0
    %983 = vmatprep.subr.bf16.mxu0 0
    %984 = vmatpush1.bf16.xpose.msra.mxu0 0
    %985 = vmatprep.subr.bf16.mxu0 0
    %986 = vmatpush1.bf16.xpose.msra.mxu0 0
    %987 = vmatprep.subr.bf16.mxu0 0
    %988 = vmatpush1.bf16.xpose.msra.mxu0 0
    %989 = vmatprep.subr.bf16.mxu0 0
    %990 = vmatpush1.bf16.xpose.msra.mxu0 0
    %991 = vmatprep.subr.bf16.mxu0 0
    %992 = vmatpush1.bf16.xpose.msra.mxu0 0
    %993 = vmatprep.subr.bf16.mxu0 0
    %994 = vmatpush1.bf16.xpose.msra.mxu0 0
    %995 = vmatprep.subr.bf16.mxu0 0
    %996 = vmatpush1.bf16.xpose.msra.mxu0 0
    %997 = vmatprep.subr.bf16.mxu0 0
    %998 = vmatpush1.bf16.xpose.msra.mxu0 0
    %999 = vmatprep.subr.bf16.mxu0 0
    %1000 = vmatpush1.bf16.xpose.msra.mxu0 0
    %1001 = vmatprep.subr.bf16.mxu0 0
    %1002 = vmatpush1.bf16.xpose.msra.mxu0 0
    %1003 = vmatprep.mubr.bf16.mxu0 0
    %1004 = vmatmul.mubr.bf16.gmra.mrb[0].mxu0 %v960
    %v1005 = vpop.f32.mrb[0].mxu0
    %v1006 = vadd.f32 %v327, %v1005
    %v1007 = vpop.f32.mrb[0].mxu0
    %v1008 = vpop.f32.mrb[0].mxu0
    %v1009 = vadd.f32 %v328, %v1008
    %v1010 = vpop.f32.mrb[0].mxu0
    %1011 = vmatprep.mubr.bf16.mxu0 0
    %1012 = vmatmul.mubr.bf16.gmra.mrb[0].mxu0 %v963
    %v1013 = vpop.f32.mrb[0].mxu0
    %v1014 = vadd.f32 %v329, %v1013
    %v1015 = vpop.f32.mrb[0].mxu0
    %v1016 = vpop.f32.mrb[0].mxu0
    %v1017 = vpop.f32.mrb[0].mxu0
    %1018 = vdwg.mxu0
    %v1019 = vsel %vm564, %v1006, -inf
    %1020 = vmax.xlane.f32.xlu0 %v1019
    %v1021 = vpop.xlane.xlu0 %1020
    %v1022 = vsel %vm564, %v1009, -inf
    %1023 = vmax.xlane.f32.xlu0 %v1022
    %v1024 = vpop.xlane.xlu0 %1023
    %v1025 = vsel %vm564, %v1014, -inf
    %1026 = vmax.xlane.f32.xlu0 %v1025
    %v1027 = vpop.xlane.xlu0 %1026
    %v1028 = vsub.f32 %v1006, %v1021
    %v1029 = vsub.f32 %v1009, %v1024
    %v1030 = vsub.f32 %v1014, %v1027
    %v1031 = vmul.f32 %v1028, 1.442695
    %v1032 = vpow.pop %v1031
    %v1033 = vmul.f32 %v1029, 1.442695
    %v1034 = vpow.pop %v1033
    %v1035 = vmul.f32 %v1030, 1.442695
    %v1036 = vpow.pop %v1035
    %v1037 = vsel %vm564, %v1032, 0.0
    %1038 = vadd.xlane.f32.xlu0 %v1037
    %v1039 = vpop.xlane.xlu0 %1038
    %v1040 = vsel %vm564, %v1034, 0.0
    %1041 = vadd.xlane.f32.xlu0 %v1040
    %v1042 = vpop.xlane.xlu0 %1041
    %v1043 = vsel %vm564, %v1036, 0.0
    %1044 = vadd.xlane.f32.xlu0 %v1043
    %v1045 = vpop.xlane.xlu0 %1044
    %v1046 = vrcp.pop %v1039
    %v1047 = vrcp.pop %v1042
    %v1048 = vrcp.pop %v1045
    %v1049 = vmul.f32 %v1032, %v1046
    %v1050 = vmul.f32 %v1034, %v1047
    %v1051 = vmul.f32 %v1036, %v1048
    %v1052 = vpack.c.bf16 %v1050, %v1049
    %v1053 = vpack.c.bf16 %v1051, %v1051
    %1054 = vrot.lane.b32.xlu0 %v495, 48
    %v1055 = vpop.permute.xlu0 %1054
    %1056 = vrot.lane.b32.xlu0 %v496, 48
    %v1057 = vpop.permute.xlu0 %1056
    %v1060 = vsel %vm564, %v1052, 0
    %v1063 = vsel %vm564, %v1053, 0
    %v1066 = vsel %vm611, %v1057, 0
    %1068 = vmatprep.subr.bf16.mxu0 0
    %1069 = vmatpush1.bf16.msra.mxu0 %v1055
    %1070 = vmatprep.subr.bf16.mxu0 0
    %1071 = vmatpush1.bf16.msra.mxu0 %v1066
    %1072 = vmatprep.subr.bf16.mxu0 0
    %1073 = vmatpush1.bf16.msra.mxu0 0
    %1074 = vmatprep.subr.bf16.mxu0 0
    %1075 = vmatpush1.bf16.msra.mxu0 0
    %1076 = vmatprep.subr.bf16.mxu0 0
    %1077 = vmatpush1.bf16.msra.mxu0 0
    %1078 = vmatprep.subr.bf16.mxu0 0
    %1079 = vmatpush1.bf16.msra.mxu0 0
    %1080 = vmatprep.subr.bf16.mxu0 0
    %1081 = vmatpush1.bf16.msra.mxu0 0
    %1082 = vmatprep.subr.bf16.mxu0 0
    %1083 = vmatpush1.bf16.msra.mxu0 0
    %1084 = vmatprep.subr.bf16.mxu0 0
    %1085 = vmatpush1.bf16.msra.mxu0 0
    %1086 = vmatprep.subr.bf16.mxu0 0
    %1087 = vmatpush1.bf16.msra.mxu0 0
    %1088 = vmatprep.subr.bf16.mxu0 0
    %1089 = vmatpush1.bf16.msra.mxu0 0
    %1090 = vmatprep.subr.bf16.mxu0 0
    %1091 = vmatpush1.bf16.msra.mxu0 0
    %1092 = vmatprep.subr.bf16.mxu0 0
    %1093 = vmatpush1.bf16.msra.mxu0 0
    %1094 = vmatprep.subr.bf16.mxu0 0
    %1095 = vmatpush1.bf16.msra.mxu0 0
    %1096 = vmatprep.subr.bf16.mxu0 0
    %1097 = vmatpush1.bf16.msra.mxu0 0
    %1098 = vmatprep.subr.bf16.mxu0 0
    %1099 = vmatpush1.bf16.msra.mxu0 0
    %1100 = vmatprep.mubr.bf16.mxu0 0
    %1101 = vmatmul.mubr.bf16.gmra.mrb[0].mxu0 %v1060
    %v1102 = vpop.f32.mrb[0].mxu0
    %v1103 = vadd.f32 0.0, %v1102
    %v1104 = vpop.f32.mrb[0].mxu0
    %v1105 = vpop.f32.mrb[0].mxu0
    %v1106 = vadd.f32 0.0, %v1105
    %v1107 = vpop.f32.mrb[0].mxu0
    %1108 = vmatprep.mubr.bf16.mxu0 0
    %1109 = vmatmul.mubr.bf16.gmra.mrb[0].mxu0 %v1063
    %v1110 = vpop.f32.mrb[0].mxu0
    %v1111 = vadd.f32 0.0, %v1110
    %v1112 = vpop.f32.mrb[0].mxu0
    %v1113 = vpop.f32.mrb[0].mxu0
    %v1114 = vpop.f32.mrb[0].mxu0
    %1115 = vdwg.mxu0
    %v1116 = vpack.c.bf16 %v1106, %v1103
    %v1117 = vpack.c.bf16 %v1111, %v1111
    %s1118 = scalar_lea.vmem [#allocation14], 8
    %v1119 = vld [vmem:[%s1118] sm:$0xf]
    %v1121 = vsel %vm503, %v1116, 0
    %v1124 = vsel %vm503, %v1117, 0
    %v1127 = vsel %vm611, %v1119, 0
    %1129 = vmatprep.subr.bf16.mxu0 0
    %1130 = vmatpush1.bf16.msra.mxu0 %v1127
    %1131 = vmatprep.subr.bf16.mxu0 0
    %1132 = vmatpush1.bf16.msra.mxu0 0
    %1133 = vmatprep.subr.bf16.mxu0 0
    %1134 = vmatpush1.bf16.msra.mxu0 0
    %1135 = vmatprep.subr.bf16.mxu0 0
    %1136 = vmatpush1.bf16.msra.mxu0 0
    %1137 = vmatprep.subr.bf16.mxu0 0
    %1138 = vmatpush1.bf16.msra.mxu0 0
    %1139 = vmatprep.subr.bf16.mxu0 0
    %1140 = vmatpush1.bf16.msra.mxu0 0
    %1141 = vmatprep.subr.bf16.mxu0 0
    %1142 = vmatpush1.bf16.msra.mxu0 0
    %1143 = vmatprep.subr.bf16.mxu0 0
    %1144 = vmatpush1.bf16.msra.mxu0 0
    %1145 = vmatprep.subr.bf16.mxu0 0
    %1146 = vmatpush1.bf16.msra.mxu0 0
    %1147 = vmatprep.subr.bf16.mxu0 0
    %1148 = vmatpush1.bf16.msra.mxu0 0
    %1149 = vmatprep.subr.bf16.mxu0 0
    %1150 = vmatpush1.bf16.msra.mxu0 0
    %1151 = vmatprep.subr.bf16.mxu0 0
    %1152 = vmatpush1.bf16.msra.mxu0 0
    %1153 = vmatprep.subr.bf16.mxu0 0
    %1154 = vmatpush1.bf16.msra.mxu0 0
    %1155 = vmatprep.subr.bf16.mxu0 0
    %1156 = vmatpush1.bf16.msra.mxu0 0
    %1157 = vmatprep.subr.bf16.mxu0 0
    %1158 = vmatpush1.bf16.msra.mxu0 0
    %1159 = vmatprep.subr.bf16.mxu0 0
    %1160 = vmatpush1.bf16.msra.mxu0 0
    %1161 = vmatprep.mubr.bf16.mxu0 0
    %1162 = vmatmul.mubr.bf16.gmra.mrb[0].mxu0 %v1121
    %v1163 = vpop.f32.mrb[0].mxu0
    %v1164 = vadd.f32 0.0, %v1163
    %v1165 = vpop.f32.mrb[0].mxu0
    %v1166 = vpop.f32.mrb[0].mxu0
    %v1167 = vadd.f32 0.0, %v1166
    %v1168 = vpop.f32.mrb[0].mxu0
    %1169 = vmatprep.mubr.bf16.mxu0 0
    %1170 = vmatmul.mubr.bf16.gmra.mrb[0].mxu0 %v1124
    %v1171 = vpop.f32.mrb[0].mxu0
    %v1172 = vadd.f32 0.0, %v1171
    %v1173 = vpop.f32.mrb[0].mxu0
    %v1174 = vpop.f32.mrb[0].mxu0
    %v1175 = vpop.f32.mrb[0].mxu0
    %1176 = vdwg.mxu0
    %v1177 = vadd.f32 %v938, %v1164
    %v1178 = vadd.f32 %v941, %v1167
    %v1179 = vadd.f32 %v946, %v1172
    %1180 = vrot.lane.b32.xlu0 %v493, 104
    %v1181 = vpop.permute.xlu0 %1180
    %1182 = vrot.lane.b32.xlu0 %v494, 104
    %v1183 = vpop.permute.xlu0 %1182
    %1184 = vrot.lane.b32.xlu0 %v495, 72
    %v1185 = vpop.permute.xlu0 %1184
    %1186 = vrot.lane.b32.xlu0 %v496, 72
    %v1187 = vpop.permute.xlu0 %1186
    %v1189 = vsel %vm503, %v1181, 0
    %v1192 = vsel %vm503, %v1183, 0
    %v1195 = vsel %vm503, %v1185, 0
    %v1198 = vsel %vm503, %v1187, 0
    %1200 = vmatprep.subr.bf16.mxu0 0
    %1201 = vmatpush1.bf16.xpose.msra.mxu0 %v1195
    %1202 = vmatprep.subr.bf16.mxu0 0
    %1203 = vmatpush1.bf16.xpose.msra.mxu0 %v1198
    %1204 = vmatprep.subr.bf16.mxu0 0
    %1205 = vmatpush1.bf16.xpose.msra.mxu0 0
    %1206 = vmatprep.subr.bf16.mxu0 0
    %1207 = vmatpush1.bf16.xpose.msra.mxu0 0
    %1208 = vmatprep.subr.bf16.mxu0 0
    %1209 = vmatpush1.bf16.xpose.msra.mxu0 0
    %1210 = vmatprep.subr.bf16.mxu0 0
    %1211 = vmatpush1.bf16.xpose.msra.mxu0 0
    %1212 = vmatprep.subr.bf16.mxu0 0
    %1213 = vmatpush1.bf16.xpose.msra.mxu0 0
    %1214 = vmatprep.subr.bf16.mxu0 0
    %1215 = vmatpush1.bf16.xpose.msra.mxu0 0
    %1216 = vmatprep.subr.bf16.mxu0 0
    %1217 = vmatpush1.bf16.xpose.msra.mxu0 0
    %1218 = vmatprep.subr.bf16.mxu0 0
    %1219 = vmatpush1.bf16.xpose.msra.mxu0 0
    %1220 = vmatprep.subr.bf16.mxu0 0
    %1221 = vmatpush1.bf16.xpose.msra.mxu0 0
    %1222 = vmatprep.subr.bf16.mxu0 0
    %1223 = vmatpush1.bf16.xpose.msra.mxu0 0
    %1224 = vmatprep.subr.bf16.mxu0 0
    %1225 = vmatpush1.bf16.xpose.msra.mxu0 0
    %1226 = vmatprep.subr.bf16.mxu0 0
    %1227 = vmatpush1.bf16.xpose.msra.mxu0 0
    %1228 = vmatprep.subr.bf16.mxu0 0
    %1229 = vmatpush1.bf16.xpose.msra.mxu0 0
    %1230 = vmatprep.subr.bf16.mxu0 0
    %1231 = vmatpush1.bf16.xpose.msra.mxu0 0
    %1232 = vmatprep.mubr.bf16.mxu0 0
    %1233 = vmatmul.mubr.bf16.gmra.mrb[0].mxu0 %v1189
    %v1234 = vpop.f32.mrb[0].mxu0
    %v1235 = vadd.f32 %v327, %v1234
    %v1236 = vpop.f32.mrb[0].mxu0
    %v1237 = vpop.f32.mrb[0].mxu0
    %v1238 = vadd.f32 %v328, %v1237
    %v1239 = vpop.f32.mrb[0].mxu0
    %1240 = vmatprep.mubr.bf16.mxu0 0
    %1241 = vmatmul.mubr.bf16.gmra.mrb[0].mxu0 %v1192
    %v1242 = vpop.f32.mrb[0].mxu0
    %v1243 = vadd.f32 %v329, %v1242
    %v1244 = vpop.f32.mrb[0].mxu0
    %v1245 = vpop.f32.mrb[0].mxu0
    %v1246 = vpop.f32.mrb[0].mxu0
    %1247 = vdwg.mxu0
    %v1248 = vsel %vm564, %v1235, -inf
    %1249 = vmax.xlane.f32.xlu0 %v1248
    %v1250 = vpop.xlane.xlu0 %1249
    %v1251 = vsel %vm564, %v1238, -inf
    %1252 = vmax.xlane.f32.xlu0 %v1251
    %v1253 = vpop.xlane.xlu0 %1252
    %v1254 = vsel %vm564, %v1243, -inf
    %1255 = vmax.xlane.f32.xlu0 %v1254
    %v1256 = vpop.xlane.xlu0 %1255
    %v1257 = vsub.f32 %v1235, %v1250
    %v1258 = vsub.f32 %v1238, %v1253
    %v1259 = vsub.f32 %v1243, %v1256
    %v1260 = vmul.f32 %v1257, 1.442695
    %v1261 = vpow.pop %v1260
    %v1262 = vmul.f32 %v1258, 1.442695
    %v1263 = vpow.pop %v1262
    %v1264 = vmul.f32 %v1259, 1.442695
    %v1265 = vpow.pop %v1264
    %v1266 = vsel %vm564, %v1261, 0.0
    %1267 = vadd.xlane.f32.xlu0 %v1266
    %v1268 = vpop.xlane.xlu0 %1267
    %v1269 = vsel %vm564, %v1263, 0.0
    %1270 = vadd.xlane.f32.xlu0 %v1269
    %v1271 = vpop.xlane.xlu0 %1270
    %v1272 = vsel %vm564, %v1265, 0.0
    %1273 = vadd.xlane.f32.xlu0 %v1272
    %v1274 = vpop.xlane.xlu0 %1273
    %v1275 = vrcp.pop %v1268
    %v1276 = vrcp.pop %v1271
    %v1277 = vrcp.pop %v1274
    %v1278 = vmul.f32 %v1261, %v1275
    %v1279 = vmul.f32 %v1263, %v1276
    %v1280 = vmul.f32 %v1265, %v1277
    %v1281 = vpack.c.bf16 %v1279, %v1278
    %v1282 = vpack.c.bf16 %v1280, %v1280
    %1283 = vrot.lane.b32.xlu0 %v495, 40
    %v1284 = vpop.permute.xlu0 %1283
    %1285 = vrot.lane.b32.xlu0 %v496, 40
    %v1286 = vpop.permute.xlu0 %1285
    %v1289 = vsel %vm564, %v1281, 0
    %v1292 = vsel %vm564, %v1282, 0
    %v1295 = vsel %vm611, %v1286, 0
    %1297 = vmatprep.subr.bf16.mxu0 0
    %1298 = vmatpush1.bf16.msra.mxu0 %v1284
    %1299 = vmatprep.subr.bf16.mxu0 0
    %1300 = vmatpush1.bf16.msra.mxu0 %v1295
    %1301 = vmatprep.subr.bf16.mxu0 0
    %1302 = vmatpush1.bf16.msra.mxu0 0
    %1303 = vmatprep.subr.bf16.mxu0 0
    %1304 = vmatpush1.bf16.msra.mxu0 0
    %1305 = vmatprep.subr.bf16.mxu0 0
    %1306 = vmatpush1.bf16.msra.mxu0 0
    %1307 = vmatprep.subr.bf16.mxu0 0
    %1308 = vmatpush1.bf16.msra.mxu0 0
    %1309 = vmatprep.subr.bf16.mxu0 0
    %1310 = vmatpush1.bf16.msra.mxu0 0
    %1311 = vmatprep.subr.bf16.mxu0 0
    %1312 = vmatpush1.bf16.msra.mxu0 0
    %1313 = vmatprep.subr.bf16.mxu0 0
    %1314 = vmatpush1.bf16.msra.mxu0 0
    %1315 = vmatprep.subr.bf16.mxu0 0
    %1316 = vmatpush1.bf16.msra.mxu0 0
    %1317 = vmatprep.subr.bf16.mxu0 0
    %1318 = vmatpush1.bf16.msra.mxu0 0
    %1319 = vmatprep.subr.bf16.mxu0 0
    %1320 = vmatpush1.bf16.msra.mxu0 0
    %1321 = vmatprep.subr.bf16.mxu0 0
    %1322 = vmatpush1.bf16.msra.mxu0 0
    %1323 = vmatprep.subr.bf16.mxu0 0
    %1324 = vmatpush1.bf16.msra.mxu0 0
    %1325 = vmatprep.subr.bf16.mxu0 0
    %1326 = vmatpush1.bf16.msra.mxu0 0
    %1327 = vmatprep.subr.bf16.mxu0 0
    %1328 = vmatpush1.bf16.msra.mxu0 0
    %1329 = vmatprep.mubr.bf16.mxu0 0
    %1330 = vmatmul.mubr.bf16.gmra.mrb[0].mxu0 %v1289
    %v1331 = vpop.f32.mrb[0].mxu0
    %v1332 = vadd.f32 0.0, %v1331
    %v1333 = vpop.f32.mrb[0].mxu0
    %v1334 = vpop.f32.mrb[0].mxu0
    %v1335 = vadd.f32 0.0, %v1334
    %v1336 = vpop.f32.mrb[0].mxu0
    %1337 = vmatprep.mubr.bf16.mxu0 0
    %1338 = vmatmul.mubr.bf16.gmra.mrb[0].mxu0 %v1292
    %v1339 = vpop.f32.mrb[0].mxu0
    %v1340 = vadd.f32 0.0, %v1339
    %v1341 = vpop.f32.mrb[0].mxu0
    %v1342 = vpop.f32.mrb[0].mxu0
    %v1343 = vpop.f32.mrb[0].mxu0
    %1344 = vdwg.mxu0
    %v1345 = vpack.c.bf16 %v1335, %v1332
    %v1346 = vpack.c.bf16 %v1340, %v1340
    %s1347 = scalar_lea.vmem [#allocation14], 12
    %v1348 = vld [vmem:[%s1347] sm:$0xf]
    %v1350 = vsel %vm503, %v1345, 0
    %v1353 = vsel %vm503, %v1346, 0
    %v1356 = vsel %vm611, %v1348, 0
    %1358 = vmatprep.subr.bf16.mxu0 0
    %1359 = vmatpush1.bf16.msra.mxu0 %v1356
    %1360 = vmatprep.subr.bf16.mxu0 0
    %1361 = vmatpush1.bf16.msra.mxu0 0
    %1362 = vmatprep.subr.bf16.mxu0 0
    %1363 = vmatpush1.bf16.msra.mxu0 0
    %1364 = vmatprep.subr.bf16.mxu0 0
    %1365 = vmatpush1.bf16.msra.mxu0 0
    %1366 = vmatprep.subr.bf16.mxu0 0
    %1367 = vmatpush1.bf16.msra.mxu0 0
    %1368 = vmatprep.subr.bf16.mxu0 0
    %1369 = vmatpush1.bf16.msra.mxu0 0
    %1370 = vmatprep.subr.bf16.mxu0 0
    %1371 = vmatpush1.bf16.msra.mxu0 0
    %1372 = vmatprep.subr.bf16.mxu0 0
    %1373 = vmatpush1.bf16.msra.mxu0 0
    %1374 = vmatprep.subr.bf16.mxu0 0
    %1375 = vmatpush1.bf16.msra.mxu0 0
    %1376 = vmatprep.subr.bf16.mxu0 0
    %1377 = vmatpush1.bf16.msra.mxu0 0
    %1378 = vmatprep.subr.bf16.mxu0 0
    %1379 = vmatpush1.bf16.msra.mxu0 0
    %1380 = vmatprep.subr.bf16.mxu0 0
    %1381 = vmatpush1.bf16.msra.mxu0 0
    %1382 = vmatprep.subr.bf16.mxu0 0
    %1383 = vmatpush1.bf16.msra.mxu0 0
    %1384 = vmatprep.subr.bf16.mxu0 0
    %1385 = vmatpush1.bf16.msra.mxu0 0
    %1386 = vmatprep.subr.bf16.mxu0 0
    %1387 = vmatpush1.bf16.msra.mxu0 0
    %1388 = vmatprep.subr.bf16.mxu0 0
    %1389 = vmatpush1.bf16.msra.mxu0 0
    %1390 = vmatprep.mubr.bf16.mxu0 0
    %1391 = vmatmul.mubr.bf16.gmra.mrb[0].mxu0 %v1350
    %v1392 = vpop.f32.mrb[0].mxu0
    %v1393 = vadd.f32 0.0, %v1392
    %v1394 = vpop.f32.mrb[0].mxu0
    %v1395 = vpop.f32.mrb[0].mxu0
    %v1396 = vadd.f32 0.0, %v1395
    %v1397 = vpop.f32.mrb[0].mxu0
    %1398 = vmatprep.mubr.bf16.mxu0 0
    %1399 = vmatmul.mubr.bf16.gmra.mrb[0].mxu0 %v1353
    %v1400 = vpop.f32.mrb[0].mxu0
    %v1401 = vadd.f32 0.0, %v1400
    %v1402 = vpop.f32.mrb[0].mxu0
    %v1403 = vpop.f32.mrb[0].mxu0
    %v1404 = vpop.f32.mrb[0].mxu0
    %1405 = vdwg.mxu0
    %v1406 = vadd.f32 %v1177, %v1393
    %v1407 = vadd.f32 %v1178, %v1396
    %v1408 = vadd.f32 %v1179, %v1401
    %v1409 = vld [vmem:[#allocation16] sm:$0x1]
    %v1411 = vlaneseq
    %v1412 = vshrl.u32 %v1411, 7
    %v1413 = vsub.s32 0, %v1412
    %v1414 = vrot.slane %v1409, %v1413
    %v1416 = vadd.f32 %v1406, %v1414
    %v1417 = vadd.f32 %v1407, %v1414
    %v1418 = vadd.f32 %v1408, %v1414
    %v1419 = vadd.f32 %v408, %v1416
    %v1420 = vadd.f32 %v409, %v1417
    %v1421 = vadd.f32 %v410, %v1418
    %v1422 = vld [vmem:[#allocation17] sm:$0x1]
    %v1423 = vld [vmem:[#allocation19] sm:$0x1]
    %v1424 = vsel %vm353, %v1419, 0.0
    %1425 = vadd.xlane.f32.xlu0 %v1424
    %v1426 = vpop.xlane.xlu0 %1425
    %v1427 = vsel %vm353, %v1420, 0.0
    %1428 = vadd.xlane.f32.xlu0 %v1427
    %v1429 = vpop.xlane.xlu0 %1428
    %v1430 = vsel %vm353, %v1421, 0.0
    %1431 = vadd.xlane.f32.xlu0 %v1430
    %v1432 = vpop.xlane.xlu0 %1431
    %v1433 = vrcp.pop 32.0
    %v1434 = vmul.f32 %v1426, %v1433
    %v1435 = vmul.f32 %v1429, %v1433
    %v1436 = vmul.f32 %v1432, %v1433
    %v1437 = vsub.f32 %v1419, %v1434
    %v1438 = vsub.f32 %v1420, %v1435
    %v1439 = vsub.f32 %v1421, %v1436
    %v1440 = vmul.f32 %v1437, %v1437
    %v1441 = vmul.f32 %v1438, %v1438
    %v1442 = vmul.f32 %v1439, %v1439
    %v1443 = vsel %vm353, %v1440, 0.0
    %1444 = vadd.xlane.f32.xlu0 %v1443
    %v1445 = vpop.xlane.xlu0 %1444
    %v1446 = vsel %vm353, %v1441, 0.0
    %1447 = vadd.xlane.f32.xlu0 %v1446
    %v1448 = vpop.xlane.xlu0 %1447
    %v1449 = vsel %vm353, %v1442, 0.0
    %1450 = vadd.xlane.f32.xlu0 %v1449
    %v1451 = vpop.xlane.xlu0 %1450
    %v1452 = vmul.f32 %v1445, %v1433
    %v1453 = vmul.f32 %v1448, %v1433
    %v1454 = vmul.f32 %v1451, %v1433
    %v1455 = vadd.f32 %v1452, 1e-05
    %v1456 = vadd.f32 %v1453, 1e-05
    %v1457 = vadd.f32 %v1454, 1e-05
    %v1458 = vrsqrt.pop %v1455
    %v1459 = vrsqrt.pop %v1456
    %v1460 = vrsqrt.pop %v1457
    %v1461 = vmul.f32 %v1437, %v1458
    %v1462 = vmul.f32 %v1438, %v1459
    %v1463 = vmul.f32 %v1439, %v1460
    %v1465 = vlaneseq
    %v1466 = vshrl.u32 %v1465, 7
    %v1467 = vsub.s32 0, %v1466
    %v1468 = vrot.slane %v1422, %v1467
    %v1470 = vmul.f32 %v1461, %v1468
    %v1471 = vmul.f32 %v1462, %v1468
    %v1472 = vmul.f32 %v1463, %v1468
    %v1474 = vlaneseq
    %v1475 = vshrl.u32 %v1474, 7
    %v1476 = vsub.s32 0, %v1475
    %v1477 = vrot.slane %v1423, %v1476
    %v1479 = vadd.f32 %v1470, %v1477
    %v1480 = vadd.f32 %v1471, %v1477
    %v1481 = vadd.f32 %v1472, %v1477
    %v1482 = vpack.c.bf16 %v1480, %v1479
    %v1483 = vpack.c.bf16 %v1481, %v1481
    %v1484 = vld [vmem:[#allocation20] sm:$0xf]
    %v1485 = vld [vmem:[#allocation20 + $0x4] sm:$0xf]
    %v1486 = vld [vmem:[#allocation20 + $0x8] sm:$0xf]
    %v1487 = vld [vmem:[#allocation20 + $0xc] sm:$0xf]
    %v1488 = vld [vmem:[#allocation22] sm:$0x1]
    %v1490 = vlaneseq
    %v1491 = vshrl.u32 %v1490, 7
    %v1492 = vsub.s32 0, %v1491
    %v1493 = vrot.slane %v1488, %v1492
    %v1499 = vunpack.c.l.b16 %v1484
    %v1500 = vunpack.c.l.b16 %v1485
    %v1501 = vunpack.c.l.b16 %v1486
    %v1502 = vunpack.c.l.b16 %v1487
    %v1503 = vpack.c.b16 %v1500, %v1499
    %v1504 = vpack.c.b16 %v1502, %v1501
    %v1508 = vsel %vm353, %v1482, 0
    %v1511 = vsel %vm353, %v1483, 0
    %1513 = vmatprep.subr.bf16.mxu0 0
    %1514 = vmatpush1.bf16.msra.mxu0 %v1503
    %1515 = vmatprep.subr.bf16.mxu0 0
    %1516 = vmatpush1.bf16.msra.mxu0 %v1504
    %1517 = vmatprep.subr.bf16.mxu0 0
    %1518 = vmatpush1.bf16.msra.mxu0 0
    %1519 = vmatprep.subr.bf16.mxu0 0
    %1520 = vmatpush1.bf16.msra.mxu0 0
    %1521 = vmatprep.subr.bf16.mxu0 0
    %1522 = vmatpush1.bf16.msra.mxu0 0
    %1523 = vmatprep.subr.bf16.mxu0 0
    %1524 = vmatpush1.bf16.msra.mxu0 0
    %1525 = vmatprep.subr.bf16.mxu0 0
    %1526 = vmatpush1.bf16.msra.mxu0 0
    %1527 = vmatprep.subr.bf16.mxu0 0
    %1528 = vmatpush1.bf16.msra.mxu0 0
    %1529 = vmatprep.subr.bf16.mxu0 0
    %1530 = vmatpush1.bf16.msra.mxu0 0
    %1531 = vmatprep.subr.bf16.mxu0 0
    %1532 = vmatpush1.bf16.msra.mxu0 0
    %1533 = vmatprep.subr.bf16.mxu0 0
    %1534 = vmatpush1.bf16.msra.mxu0 0
    %1535 = vmatprep.subr.bf16.mxu0 0
    %1536 = vmatpush1.bf16.msra.mxu0 0
    %1537 = vmatprep.subr.bf16.mxu0 0
    %1538 = vmatpush1.bf16.msra.mxu0 0
    %1539 = vmatprep.subr.bf16.mxu0 0
    %1540 = vmatpush1.bf16.msra.mxu0 0
    %1541 = vmatprep.subr.bf16.mxu0 0
    %1542 = vmatpush1.bf16.msra.mxu0 0
    %1543 = vmatprep.subr.bf16.mxu0 0
    %1544 = vmatpush1.bf16.msra.mxu0 0
    %1545 = vmatprep.mubr.bf16.mxu0 0
    %1546 = vmatmul.mubr.bf16.gmra.mrb[0].mxu0 %v1508
    %v1547 = vpop.f32.mrb[0].mxu0
    %v1548 = vadd.f32 %v1493, %v1547
    %v1549 = vpop.f32.mrb[0].mxu0
    %v1550 = vpop.f32.mrb[0].mxu0
    %v1551 = vadd.f32 %v1493, %v1550
    %v1552 = vpop.f32.mrb[0].mxu0
    %1553 = vmatprep.mubr.bf16.mxu0 0
    %1554 = vmatmul.mubr.bf16.gmra.mrb[0].mxu0 %v1511
    %v1555 = vpop.f32.mrb[0].mxu0
    %v1556 = vadd.f32 %v1493, %v1555
    %v1557 = vpop.f32.mrb[0].mxu0
    %v1558 = vpop.f32.mrb[0].mxu0
    %v1559 = vpop.f32.mrb[0].mxu0
    %1560 = vdwg.mxu0
    %v1561 = vmax.f32 %v1548, 0.0
    %v1562 = vmax.f32 %v1551, 0.0
    %v1563 = vmax.f32 %v1556, 0.0
    %v1564 = vpack.c.bf16 %v1562, %v1561
    %v1565 = vpack.c.bf16 %v1563, %v1563
    %v1566 = vld [vmem:[#allocation23] sm:$0xf]
    %v1567 = vld [vmem:[#allocation23 + $0x4] sm:$0xf]
    %v1568 = vld [vmem:[#allocation23 + $0x8] sm:$0xf]
    %v1569 = vld [vmem:[#allocation23 + $0xc] sm:$0xf]
    %v1570 = vld [vmem:[#allocation23 + $0x10] sm:$0xf]
    %v1571 = vld [vmem:[#allocation23 + $0x14] sm:$0xf]
    %v1572 = vld [vmem:[#allocation23 + $0x18] sm:$0xf]
    %v1573 = vld [vmem:[#allocation23 + $0x1c] sm:$0xf]
    %v1574 = vld [vmem:[#allocation25] sm:$0x1]
    %v1576 = vlaneseq
    %v1577 = vshrl.u32 %v1576, 7
    %v1578 = vsub.s32 0, %v1577
    %v1579 = vrot.slane %v1574, %v1578
    %v1589 = vunpack.c.l.b16 %v1566
    %v1590 = vunpack.c.l.b16 %v1567
    %v1591 = vunpack.c.l.b16 %v1568
    %v1592 = vunpack.c.l.b16 %v1569
    %v1593 = vunpack.c.l.b16 %v1570
    %v1594 = vunpack.c.l.b16 %v1571
    %v1595 = vunpack.c.l.b16 %v1572
    %v1596 = vunpack.c.l.b16 %v1573
    %v1597 = vpack.c.b16 %v1590, %v1589
    %v1598 = vpack.c.b16 %v1592, %v1591
    %v1599 = vpack.c.b16 %v1594, %v1593
    %v1600 = vpack.c.b16 %v1596, %v1595
    %vm1605 = vcmask 523264
    %v1607 = vsel %vm1605, %v1564, 0
    %v1610 = vsel %vm1605, %v1565, 0
    %1612 = vmatprep.subr.bf16.mxu0 0
    %1613 = vmatpush1.bf16.msra.mxu0 %v1597
    %1614 = vmatprep.subr.bf16.mxu0 0
    %1615 = vmatpush1.bf16.msra.mxu0 %v1598
    %1616 = vmatprep.subr.bf16.mxu0 0
    %1617 = vmatpush1.bf16.msra.mxu0 %v1599
    %1618 = vmatprep.subr.bf16.mxu0 0
    %1619 = vmatpush1.bf16.msra.mxu0 %v1600
    %1620 = vmatprep.subr.bf16.mxu0 0
    %1621 = vmatpush1.bf16.msra.mxu0 0
    %1622 = vmatprep.subr.bf16.mxu0 0
    %1623 = vmatpush1.bf16.msra.mxu0 0
    %1624 = vmatprep.subr.bf16.mxu0 0
    %1625 = vmatpush1.bf16.msra.mxu0 0
    %1626 = vmatprep.subr.bf16.mxu0 0
    %1627 = vmatpush1.bf16.msra.mxu0 0
    %1628 = vmatprep.subr.bf16.mxu0 0
    %1629 = vmatpush1.bf16.msra.mxu0 0
    %1630 = vmatprep.subr.bf16.mxu0 0
    %1631 = vmatpush1.bf16.msra.mxu0 0
    %1632 = vmatprep.subr.bf16.mxu0 0
    %1633 = vmatpush1.bf16.msra.mxu0 0
    %1634 = vmatprep.subr.bf16.mxu0 0
    %1635 = vmatpush1.bf16.msra.mxu0 0
    %1636 = vmatprep.subr.bf16.mxu0 0
    %1637 = vmatpush1.bf16.msra.mxu0 0
    %1638 = vmatprep.subr.bf16.mxu0 0
    %1639 = vmatpush1.bf16.msra.mxu0 0
    %1640 = vmatprep.subr.bf16.mxu0 0
    %1641 = vmatpush1.bf16.msra.mxu0 0
    %1642 = vmatprep.subr.bf16.mxu0 0
    %1643 = vmatpush1.bf16.msra.mxu0 0
    %1644 = vmatprep.mubr.bf16.mxu0 0
    %1645 = vmatmul.mubr.bf16.gmra.mrb[0].mxu0 %v1607
    %v1646 = vpop.f32.mrb[0].mxu0
    %v1647 = vadd.f32 %v1579, %v1646
    %v1648 = vpop.f32.mrb[0].mxu0
    %v1649 = vpop.f32.mrb[0].mxu0
    %v1650 = vadd.f32 %v1579, %v1649
    %v1651 = vpop.f32.mrb[0].mxu0
    %1652 = vmatprep.mubr.bf16.mxu0 0
    %1653 = vmatmul.mubr.bf16.gmra.mrb[0].mxu0 %v1610
    %v1654 = vpop.f32.mrb[0].mxu0
    %v1655 = vadd.f32 %v1579, %v1654
    %v1656 = vpop.f32.mrb[0].mxu0
    %v1657 = vpop.f32.mrb[0].mxu0
    %v1658 = vpop.f32.mrb[0].mxu0
    %1659 = vdwg.mxu0
    %v1660 = vadd.f32 %v1479, %v1647
    %v1661 = vadd.f32 %v1480, %v1650
    %v1662 = vadd.f32 %v1481, %v1655
    %v1663 = vld [vmem:[#allocation26] sm:$0x1]
    %v1664 = vld [vmem:[#allocation28] sm:$0x1]
    %v1665 = vsel %vm353, %v1660, 0.0
    %1666 = vadd.xlane.f32.xlu0 %v1665
    %v1667 = vpop.xlane.xlu0 %1666
    %v1668 = vsel %vm353, %v1661, 0.0
    %1669 = vadd.xlane.f32.xlu0 %v1668
    %v1670 = vpop.xlane.xlu0 %1669
    %v1671 = vsel %vm353, %v1662, 0.0
    %1672 = vadd.xlane.f32.xlu0 %v1671
    %v1673 = vpop.xlane.xlu0 %1672
    %v1674 = vmul.f32 %v1667, %v1433
    %v1675 = vmul.f32 %v1670, %v1433
    %v1676 = vmul.f32 %v1673, %v1433
    %v1677 = vsub.f32 %v1660, %v1674
    %v1678 = vsub.f32 %v1661, %v1675
    %v1679 = vsub.f32 %v1662, %v1676
    %v1680 = vmul.f32 %v1677, %v1677
    %v1681 = vmul.f32 %v1678, %v1678
    %v1682 = vmul.f32 %v1679, %v1679
    %v1683 = vsel %vm353, %v1680, 0.0
    %1684 = vadd.xlane.f32.xlu0 %v1683
    %v1685 = vpop.xlane.xlu0 %1684
    %v1686 = vsel %vm353, %v1681, 0.0
    %1687 = vadd.xlane.f32.xlu0 %v1686
    %v1688 = vpop.xlane.xlu0 %1687
    %v1689 = vsel %vm353, %v1682, 0.0
    %1690 = vadd.xlane.f32.xlu0 %v1689
    %v1691 = vpop.xlane.xlu0 %1690
    %v1692 = vmul.f32 %v1685, %v1433
    %v1693 = vmul.f32 %v1688, %v1433
    %v1694 = vmul.f32 %v1691, %v1433
    %v1695 = vadd.f32 %v1692, 1e-05
    %v1696 = vadd.f32 %v1693, 1e-05
    %v1697 = vadd.f32 %v1694, 1e-05
    %v1698 = vrsqrt.pop %v1695
    %v1699 = vrsqrt.pop %v1696
    %v1700 = vrsqrt.pop %v1697
    %v1701 = vmul.f32 %v1677, %v1698
    %v1702 = vmul.f32 %v1678, %v1699
    %v1703 = vmul.f32 %v1679, %v1700
    %v1705 = vlaneseq
    %v1706 = vshrl.u32 %v1705, 7
    %v1707 = vsub.s32 0, %v1706
    %v1708 = vrot.slane %v1663, %v1707
    %v1710 = vmul.f32 %v1701, %v1708
    %v1711 = vmul.f32 %v1702, %v1708
    %v1712 = vmul.f32 %v1703, %v1708
    %v1714 = vlaneseq
    %v1715 = vshrl.u32 %v1714, 7
    %v1716 = vsub.s32 0, %v1715
    %v1717 = vrot.slane %v1664, %v1716
    %v1719 = vadd.f32 %v1710, %v1717
    %v1720 = vadd.f32 %v1711, %v1717
    %v1721 = vadd.f32 %v1712, %v1717
    %s1722 = scalar_lea.vmem [#allocation8], 16
    %v1723 = vld [vmem:[%s1722] sm:$0xf]
    %v1724 = vld [vmem:[%s1722 + $0x4] sm:$0xf]
    %v1725 = vld [vmem:[%s1722 + $0x8] sm:$0xf]
    %v1726 = vld [vmem:[%s1722 + $0xc] sm:$0xf]
    %s1727 = scalar_lea.vmem [#allocation10], 1
    %v1728 = vld [vmem:[%s1727] sm:$0x1]
    %v1730 = vlaneseq
    %v1731 = vshrl.u32 %v1730, 7
    %v1732 = vsub.s32 0, %v1731
    %v1733 = vrot.slane %v1728, %v1732
    %v1739 = vunpack.c.l.b16 %v1723
    %v1740 = vunpack.c.l.b16 %v1724
    %v1741 = vunpack.c.l.b16 %v1725
    %v1742 = vunpack.c.l.b16 %v1726
    %v1743 = vpack.c.b16 %v1740, %v1739
    %v1744 = vpack.c.b16 %v1742, %v1741
    %1747 = vmatprep.subr.bf16.mxu0 0
    %1748 = vmatpush1.bf16.msra.mxu0 %v1743
    %1749 = vmatprep.subr.bf16.mxu0 0
    %1750 = vmatpush1.bf16.msra.mxu0 %v1744
    %1751 = vmatprep.subr.bf16.mxu0 0
    %1752 = vmatpush1.bf16.msra.mxu0 0
    %1753 = vmatprep.subr.bf16.mxu0 0
    %1754 = vmatpush1.bf16.msra.mxu0 0
    %1755 = vmatprep.subr.bf16.mxu0 0
    %1756 = vmatpush1.bf16.msra.mxu0 0
    %1757 = vmatprep.subr.bf16.mxu0 0
    %1758 = vmatpush1.bf16.msra.mxu0 0
    %1759 = vmatprep.subr.bf16.mxu0 0
    %1760 = vmatpush1.bf16.msra.mxu0 0
    %1761 = vmatprep.subr.bf16.mxu0 0
    %1762 = vmatpush1.bf16.msra.mxu0 0
    %1763 = vmatprep.subr.bf16.mxu0 0
    %1764 = vmatpush1.bf16.msra.mxu0 0
    %1765 = vmatprep.subr.bf16.mxu0 0
    %1766 = vmatpush1.bf16.msra.mxu0 0
    %1767 = vmatprep.subr.bf16.mxu0 0
    %1768 = vmatpush1.bf16.msra.mxu0 0
    %1769 = vmatprep.subr.bf16.mxu0 0
    %1770 = vmatpush1.bf16.msra.mxu0 0
    %1771 = vmatprep.subr.bf16.mxu0 0
    %1772 = vmatpush1.bf16.msra.mxu0 0
    %1773 = vmatprep.subr.bf16.mxu0 0
    %1774 = vmatpush1.bf16.msra.mxu0 0
    %1775 = vmatprep.subr.bf16.mxu0 0
    %1776 = vmatpush1.bf16.msra.mxu0 0
    %1777 = vmatprep.subr.bf16.mxu0 0
    %1778 = vmatpush1.bf16.msra.mxu0 0
    %1779 = vmatprep.mubr.bf16.mxu0 0
    %1780 = vmatmul.mubr.bf16.gmra.mrb[0].mxu0 %v355
    %v1781 = vpop.f32.mrb[0].mxu0
    %v1782 = vadd.f32 %v1733, %v1781
    %v1783 = vpop.f32.mrb[0].mxu0
    %v1784 = vpop.f32.mrb[0].mxu0
    %v1785 = vadd.f32 %v1733, %v1784
    %v1786 = vpop.f32.mrb[0].mxu0
    %1787 = vmatprep.mubr.bf16.mxu0 0
    %1788 = vmatmul.mubr.bf16.gmra.mrb[0].mxu0 %v358
    %v1789 = vpop.f32.mrb[0].mxu0
    %v1790 = vadd.f32 %v1733, %v1789
    %v1791 = vpop.f32.mrb[0].mxu0
    %v1792 = vpop.f32.mrb[0].mxu0
    %v1793 = vpop.f32.mrb[0].mxu0
    %1794 = vdwg.mxu0
    %v1795 = vadd.f32 %v1719, %v1782
    %v1796 = vadd.f32 %v1720, %v1785
    %v1797 = vadd.f32 %v1721, %v1790
    %v1798 = vpack.c.bf16 %v1796, %v1795
    %v1799 = vpack.c.bf16 %v1797, %v1797
    %s1800 = scalar_lea.vmem [#allocation11], 16
    %v1801 = vld [vmem:[%s1800] sm:$0xf]
    %v1802 = vld [vmem:[%s1800 + $0x4] sm:$0xf]
    %v1803 = vld [vmem:[%s1800 + $0x8] sm:$0xf]
    %v1804 = vld [vmem:[%s1800 + $0xc] sm:$0xf]
    %s1805 = scalar_lea.vmem [#allocation13], 1
    %v1806 = vld [vmem:[%s1805] sm:$0x1]
    %v1808 = vlaneseq
    %v1809 = vshrl.u32 %v1808, 7
    %v1810 = vsub.s32 0, %v1809
    %v1811 = vrot.slane %v1806, %v1810
    %v1817 = vunpack.c.l.b16 %v1801
    %v1818 = vunpack.c.l.b16 %v1802
    %v1819 = vunpack.c.l.b16 %v1803
    %v1820 = vunpack.c.l.b16 %v1804
    %v1821 = vpack.c.b16 %v1818, %v1817
    %v1822 = vpack.c.b16 %v1820, %v1819
    %v1826 = vsel %vm353, %v1798, 0
    %v1829 = vsel %vm353, %v1799, 0
    %1831 = vmatprep.subr.bf16.mxu0 0
    %1832 = vmatpush1.bf16.msra.mxu0 %v1821
    %1833 = vmatprep.subr.bf16.mxu0 0
    %1834 = vmatpush1.bf16.msra.mxu0 %v1822
    %1835 = vmatprep.subr.bf16.mxu0 0
    %1836 = vmatpush1.bf16.msra.mxu0 0
    %1837 = vmatprep.subr.bf16.mxu0 0
    %1838 = vmatpush1.bf16.msra.mxu0 0
    %1839 = vmatprep.subr.bf16.mxu0 0
    %1840 = vmatpush1.bf16.msra.mxu0 0
    %1841 = vmatprep.subr.bf16.mxu0 0
    %1842 = vmatpush1.bf16.msra.mxu0 0
    %1843 = vmatprep.subr.bf16.mxu0 0
    %1844 = vmatpush1.bf16.msra.mxu0 0
    %1845 = vmatprep.subr.bf16.mxu0 0
    %1846 = vmatpush1.bf16.msra.mxu0 0
    %1847 = vmatprep.subr.bf16.mxu0 0
    %1848 = vmatpush1.bf16.msra.mxu0 0
    %1849 = vmatprep.subr.bf16.mxu0 0
    %1850 = vmatpush1.bf16.msra.mxu0 0
    %1851 = vmatprep.subr.bf16.mxu0 0
    %1852 = vmatpush1.bf16.msra.mxu0 0
    %1853 = vmatprep.subr.bf16.mxu0 0
    %1854 = vmatpush1.bf16.msra.mxu0 0
    %1855 = vmatprep.subr.bf16.mxu0 0
    %1856 = vmatpush1.bf16.msra.mxu0 0
    %1857 = vmatprep.subr.bf16.mxu0 0
    %1858 = vmatpush1.bf16.msra.mxu0 0
    %1859 = vmatprep.subr.bf16.mxu0 0
    %1860 = vmatpush1.bf16.msra.mxu0 0
    %1861 = vmatprep.subr.bf16.mxu0 0
    %1862 = vmatpush1.bf16.msra.mxu0 0
    %1863 = vmatprep.mubr.bf16.mxu0 0
    %1864 = vmatmul.mubr.bf16.gmra.mrb[0].mxu0 %v1826
    %v1865 = vpop.f32.mrb[0].mxu0
    %v1866 = vadd.f32 %v1811, %v1865
    %v1867 = vpop.f32.mrb[0].mxu0
    %v1868 = vpop.f32.mrb[0].mxu0
    %v1869 = vadd.f32 %v1811, %v1868
    %v1870 = vpop.f32.mrb[0].mxu0
    %1871 = vmatprep.mubr.bf16.mxu0 0
    %1872 = vmatmul.mubr.bf16.gmra.mrb[0].mxu0 %v1829
    %v1873 = vpop.f32.mrb[0].mxu0
    %v1874 = vadd.f32 %v1811, %v1873
    %v1875 = vpop.f32.mrb[0].mxu0
    %v1876 = vpop.f32.mrb[0].mxu0
    %v1877 = vpop.f32.mrb[0].mxu0
    %1878 = vdwg.mxu0
    %v1879 = vmul.f32 %v1866, 0.35355338
    %v1880 = vmul.f32 %v1869, 0.35355338
    %v1881 = vmul.f32 %v1874, 0.35355338
    %v1882 = vpack.c.bf16 %v1880, %v1879
    %v1883 = vpack.c.bf16 %v1881, %v1881
    %v1884 = vpack.c.bf16 %v1869, %v1866
    %v1885 = vpack.c.bf16 %v1874, %v1874
    %1888 = vrot.lane.b32.xlu0 %v1884, 96
    %v1889 = vpop.permute.xlu0 %1888
    %1890 = vrot.lane.b32.xlu0 %v1885, 96
    %v1891 = vpop.permute.xlu0 %1890
    %v1893 = vsel %vm503, %v1882, 0
    %v1896 = vsel %vm503, %v1883, 0
    %v1899 = vsel %vm503, %v1889, 0
    %v1902 = vsel %vm503, %v1891, 0
    %1904 = vmatprep.subr.bf16.mxu0 0
    %1905 = vmatpush1.bf16.xpose.msra.mxu0 %v1899
    %1906 = vmatprep.subr.bf16.mxu0 0
    %1907 = vmatpush1.bf16.xpose.msra.mxu0 %v1902
    %1908 = vmatprep.subr.bf16.mxu0 0
    %1909 = vmatpush1.bf16.xpose.msra.mxu0 0
    %1910 = vmatprep.subr.bf16.mxu0 0
    %1911 = vmatpush1.bf16.xpose.msra.mxu0 0
    %1912 = vmatprep.subr.bf16.mxu0 0
    %1913 = vmatpush1.bf16.xpose.msra.mxu0 0
    %1914 = vmatprep.subr.bf16.mxu0 0
    %1915 = vmatpush1.bf16.xpose.msra.mxu0 0
    %1916 = vmatprep.subr.bf16.mxu0 0
    %1917 = vmatpush1.bf16.xpose.msra.mxu0 0
    %1918 = vmatprep.subr.bf16.mxu0 0
    %1919 = vmatpush1.bf16.xpose.msra.mxu0 0
    %1920 = vmatprep.subr.bf16.mxu0 0
    %1921 = vmatpush1.bf16.xpose.msra.mxu0 0
    %1922 = vmatprep.subr.bf16.mxu0 0
    %1923 = vmatpush1.bf16.xpose.msra.mxu0 0
    %1924 = vmatprep.subr.bf16.mxu0 0
    %1925 = vmatpush1.bf16.xpose.msra.mxu0 0
    %1926 = vmatprep.subr.bf16.mxu0 0
    %1927 = vmatpush1.bf16.xpose.msra.mxu0 0
    %1928 = vmatprep.subr.bf16.mxu0 0
    %1929 = vmatpush1.bf16.xpose.msra.mxu0 0
    %1930 = vmatprep.subr.bf16.mxu0 0
    %1931 = vmatpush1.bf16.xpose.msra.mxu0 0
    %1932 = vmatprep.subr.bf16.mxu0 0
    %1933 = vmatpush1.bf16.xpose.msra.mxu0 0
    %1934 = vmatprep.subr.bf16.mxu0 0
    %1935 = vmatpush1.bf16.xpose.msra.mxu0 0
    %1936 = vmatprep.mubr.bf16.mxu0 0
    %1937 = vmatmul.mubr.bf16.gmra.mrb[0].mxu0 %v1893
    %v1938 = vpop.f32.mrb[0].mxu0
    %v1939 = vadd.f32 %v327, %v1938
    %v1940 = vpop.f32.mrb[0].mxu0
    %v1941 = vpop.f32.mrb[0].mxu0
    %v1942 = vadd.f32 %v328, %v1941
    %v1943 = vpop.f32.mrb[0].mxu0
    %1944 = vmatprep.mubr.bf16.mxu0 0
    %1945 = vmatmul.mubr.bf16.gmra.mrb[0].mxu0 %v1896
    %v1946 = vpop.f32.mrb[0].mxu0
    %v1947 = vadd.f32 %v329, %v1946
    %v1948 = vpop.f32.mrb[0].mxu0
    %v1949 = vpop.f32.mrb[0].mxu0
    %v1950 = vpop.f32.mrb[0].mxu0
    %1951 = vdwg.mxu0
    %v1952 = vsel %vm564, %v1939, -inf
    %1953 = vmax.xlane.f32.xlu0 %v1952
    %v1954 = vpop.xlane.xlu0 %1953
    %v1955 = vsel %vm564, %v1942, -inf
    %1956 = vmax.xlane.f32.xlu0 %v1955
    %v1957 = vpop.xlane.xlu0 %1956
    %v1958 = vsel %vm564, %v1947, -inf
    %1959 = vmax.xlane.f32.xlu0 %v1958
    %v1960 = vpop.xlane.xlu0 %1959
    %v1961 = vsub.f32 %v1939, %v1954
    %v1962 = vsub.f32 %v1942, %v1957
    %v1963 = vsub.f32 %v1947, %v1960
    %v1964 = vmul.f32 %v1961, 1.442695
    %v1965 = vpow.pop %v1964
    %v1966 = vmul.f32 %v1962, 1.442695
    %v1967 = vpow.pop %v1966
    %v1968 = vmul.f32 %v1963, 1.442695
    %v1969 = vpow.pop %v1968
    %v1970 = vsel %vm564, %v1965, 0.0
    %1971 = vadd.xlane.f32.xlu0 %v1970
    %v1972 = vpop.xlane.xlu0 %1971
    %v1973 = vsel %vm564, %v1967, 0.0
    %1974 = vadd.xlane.f32.xlu0 %v1973
    %v1975 = vpop.xlane.xlu0 %1974
    %v1976 = vsel %vm564, %v1969, 0.0
    %1977 = vadd.xlane.f32.xlu0 %v1976
    %v1978 = vpop.xlane.xlu0 %1977
    %v1979 = vrcp.pop %v1972
    %v1980 = vrcp.pop %v1975
    %v1981 = vrcp.pop %v1978
    %v1982 = vmul.f32 %v1965, %v1979
    %v1983 = vmul.f32 %v1967, %v1980
    %v1984 = vmul.f32 %v1969, %v1981
    %v1985 = vpack.c.bf16 %v1983, %v1982
    %v1986 = vpack.c.bf16 %v1984, %v1984
    %1987 = vrot.lane.b32.xlu0 %v1884, 64
    %v1988 = vpop.permute.xlu0 %1987
    %1989 = vrot.lane.b32.xlu0 %v1885, 64
    %v1990 = vpop.permute.xlu0 %1989
    %v1993 = vsel %vm564, %v1985, 0
    %v1996 = vsel %vm564, %v1986, 0
    %v1999 = vsel %vm611, %v1990, 0
    %2001 = vmatprep.subr.bf16.mxu0 0
    %2002 = vmatpush1.bf16.msra.mxu0 %v1988
    %2003 = vmatprep.subr.bf16.mxu0 0
    %2004 = vmatpush1.bf16.msra.mxu0 %v1999
    %2005 = vmatprep.subr.bf16.mxu0 0
    %2006 = vmatpush1.bf16.msra.mxu0 0
    %2007 = vmatprep.subr.bf16.mxu0 0
    %2008 = vmatpush1.bf16.msra.mxu0 0
    %2009 = vmatprep.subr.bf16.mxu0 0
    %2010 = vmatpush1.bf16.msra.mxu0 0
    %2011 = vmatprep.subr.bf16.mxu0 0
    %2012 = vmatpush1.bf16.msra.mxu0 0
    %2013 = vmatprep.subr.bf16.mxu0 0
    %2014 = vmatpush1.bf16.msra.mxu0 0
    %2015 = vmatprep.subr.bf16.mxu0 0
    %2016 = vmatpush1.bf16.msra.mxu0 0
    %2017 = vmatprep.subr.bf16.mxu0 0
    %2018 = vmatpush1.bf16.msra.mxu0 0
    %2019 = vmatprep.subr.bf16.mxu0 0
    %2020 = vmatpush1.bf16.msra.mxu0 0
    %2021 = vmatprep.subr.bf16.mxu0 0
    %2022 = vmatpush1.bf16.msra.mxu0 0
    %2023 = vmatprep.subr.bf16.mxu0 0
    %2024 = vmatpush1.bf16.msra.mxu0 0
    %2025 = vmatprep.subr.bf16.mxu0 0
    %2026 = vmatpush1.bf16.msra.mxu0 0
    %2027 = vmatprep.subr.bf16.mxu0 0
    %2028 = vmatpush1.bf16.msra.mxu0 0
    %2029 = vmatprep.subr.bf16.mxu0 0
    %2030 = vmatpush1.bf16.msra.mxu0 0
    %2031 = vmatprep.subr.bf16.mxu0 0
    %2032 = vmatpush1.bf16.msra.mxu0 0
    %2033 = vmatprep.mubr.bf16.mxu0 0
    %2034 = vmatmul.mubr.bf16.gmra.mrb[0].mxu0 %v1993
    %v2035 = vpop.f32.mrb[0].mxu0
    %v2036 = vadd.f32 0.0, %v2035
    %v2037 = vpop.f32.mrb[0].mxu0
    %v2038 = vpop.f32.mrb[0].mxu0
    %v2039 = vadd.f32 0.0, %v2038
    %v2040 = vpop.f32.mrb[0].mxu0
    %2041 = vmatprep.mubr.bf16.mxu0 0
    %2042 = vmatmul.mubr.bf16.gmra.mrb[0].mxu0 %v1996
    %v2043 = vpop.f32.mrb[0].mxu0
    %v2044 = vadd.f32 0.0, %v2043
    %v2045 = vpop.f32.mrb[0].mxu0
    %v2046 = vpop.f32.mrb[0].mxu0
    %v2047 = vpop.f32.mrb[0].mxu0
    %2048 = vdwg.mxu0
    %v2049 = vpack.c.bf16 %v2039, %v2036
    %v2050 = vpack.c.bf16 %v2044, %v2044
    %s2051 = scalar_lea.vmem [#allocation14], 16
    %v2052 = vld [vmem:[%s2051] sm:$0xf]
    %2055 = vrot.lane.b32.xlu0 %v1882, 120
    %v2056 = vpop.permute.xlu0 %2055
    %2057 = vrot.lane.b32.xlu0 %v1883, 120
    %v2058 = vpop.permute.xlu0 %2057
    %2059 = vrot.lane.b32.xlu0 %v1884, 88
    %v2060 = vpop.permute.xlu0 %2059
    %2061 = vrot.lane.b32.xlu0 %v1885, 88
    %v2062 = vpop.permute.xlu0 %2061
    %v2064 = vsel %vm503, %v2056, 0
    %v2067 = vsel %vm503, %v2058, 0
    %v2070 = vsel %vm503, %v2060, 0
    %v2073 = vsel %vm503, %v2062, 0
    %2075 = vmatprep.subr.bf16.mxu0 0
    %2076 = vmatpush1.bf16.xpose.msra.mxu0 %v2070
    %2077 = vmatprep.subr.bf16.mxu0 0
    %2078 = vmatpush1.bf16.xpose.msra.mxu0 %v2073
    %2079 = vmatprep.subr.bf16.mxu0 0
    %2080 = vmatpush1.bf16.xpose.msra.mxu0 0
    %2081 = vmatprep.subr.bf16.mxu0 0
    %2082 = vmatpush1.bf16.xpose.msra.mxu0 0
    %2083 = vmatprep.subr.bf16.mxu0 0
    %2084 = vmatpush1.bf16.xpose.msra.mxu0 0
    %2085 = vmatprep.subr.bf16.mxu0 0
    %2086 = vmatpush1.bf16.xpose.msra.mxu0 0
    %2087 = vmatprep.subr.bf16.mxu0 0
    %2088 = vmatpush1.bf16.xpose.msra.mxu0 0
    %2089 = vmatprep.subr.bf16.mxu0 0
    %2090 = vmatpush1.bf16.xpose.msra.mxu0 0
    %2091 = vmatprep.subr.bf16.mxu0 0
    %2092 = vmatpush1.bf16.xpose.msra.mxu0 0
    %2093 = vmatprep.subr.bf16.mxu0 0
    %2094 = vmatpush1.bf16.xpose.msra.mxu0 0
    %2095 = vmatprep.subr.bf16.mxu0 0
    %2096 = vmatpush1.bf16.xpose.msra.mxu0 0
    %2097 = vmatprep.subr.bf16.mxu0 0
    %2098 = vmatpush1.bf16.xpose.msra.mxu0 0
    %2099 = vmatprep.subr.bf16.mxu0 0
    %2100 = vmatpush1.bf16.xpose.msra.mxu0 0
    %2101 = vmatprep.subr.bf16.mxu0 0
    %2102 = vmatpush1.bf16.xpose.msra.mxu0 0
    %2103 = vmatprep.subr.bf16.mxu0 0
    %2104 = vmatpush1.bf16.xpose.msra.mxu0 0
    %2105 = vmatprep.subr.bf16.mxu0 0
    %2106 = vmatpush1.bf16.xpose.msra.mxu0 0
    %2107 = vmatprep.mubr.bf16.mxu0 0
    %2108 = vmatmul.mubr.bf16.gmra.mrb[0].mxu0 %v2064
    %v2109 = vpop.f32.mrb[0].mxu0
    %v2110 = vadd.f32 %v327, %v2109
    %v2111 = vpop.f32.mrb[0].mxu0
    %v2112 = vpop.f32.mrb[0].mxu0
    %v2113 = vadd.f32 %v328, %v2112
    %v2114 = vpop.f32.mrb[0].mxu0
    %2115 = vmatprep.mubr.bf16.mxu0 0
    %2116 = vmatmul.mubr.bf16.gmra.mrb[0].mxu0 %v2067
    %v2117 = vpop.f32.mrb[0].mxu0
    %v2118 = vadd.f32 %v329, %v2117
    %v2119 = vpop.f32.mrb[0].mxu0
    %v2120 = vpop.f32.mrb[0].mxu0
    %v2121 = vpop.f32.mrb[0].mxu0
    %2122 = vdwg.mxu0
    %v2123 = vsel %vm564, %v2110, -inf
    %2124 = vmax.xlane.f32.xlu0 %v2123
    %v2125 = vpop.xlane.xlu0 %2124
    %v2126 = vsel %vm564, %v2113, -inf
    %2127 = vmax.xlane.f32.xlu0 %v2126
    %v2128 = vpop.xlane.xlu0 %2127
    %v2129 = vsel %vm564, %v2118, -inf
    %2130 = vmax.xlane.f32.xlu0 %v2129
    %v2131 = vpop.xlane.xlu0 %2130
    %v2132 = vsub.f32 %v2110, %v2125
    %v2133 = vsub.f32 %v2113, %v2128
    %v2134 = vsub.f32 %v2118, %v2131
    %v2135 = vmul.f32 %v2132, 1.442695
    %v2136 = vpow.pop %v2135
    %v2137 = vmul.f32 %v2133, 1.442695
    %v2138 = vpow.pop %v2137
    %v2139 = vmul.f32 %v2134, 1.442695
    %v2140 = vpow.pop %v2139
    %v2141 = vsel %vm564, %v2136, 0.0
    %2142 = vadd.xlane.f32.xlu0 %v2141
    %v2143 = vpop.xlane.xlu0 %2142
    %v2144 = vsel %vm564, %v2138, 0.0
    %2145 = vadd.xlane.f32.xlu0 %v2144
    %v2146 = vpop.xlane.xlu0 %2145
    %v2147 = vsel %vm564, %v2140, 0.0
    %2148 = vadd.xlane.f32.xlu0 %v2147
    %v2149 = vpop.xlane.xlu0 %2148
    %v2150 = vrcp.pop %v2143
    %v2151 = vrcp.pop %v2146
    %v2152 = vrcp.pop %v2149
    %v2153 = vmul.f32 %v2136, %v2150
    %v2154 = vmul.f32 %v2138, %v2151
    %v2155 = vmul.f32 %v2140, %v2152
    %v2156 = vpack.c.bf16 %v2154, %v2153
    %v2157 = vpack.c.bf16 %v2155, %v2155
    %2158 = vrot.lane.b32.xlu0 %v1884, 56
    %v2159 = vpop.permute.xlu0 %2158
    %2160 = vrot.lane.b32.xlu0 %v1885, 56
    %v2161 = vpop.permute.xlu0 %2160
    %v2164 = vsel %vm564, %v2156, 0
    %v2167 = vsel %vm564, %v2157, 0
    %v2170 = vsel %vm611, %v2161, 0
    %2172 = vmatprep.subr.bf16.mxu0 0
    %2173 = vmatpush1.bf16.msra.mxu0 %v2159
    %2174 = vmatprep.subr.bf16.mxu0 0
    %2175 = vmatpush1.bf16.msra.mxu0 %v2170
    %2176 = vmatprep.subr.bf16.mxu0 0
    %2177 = vmatpush1.bf16.msra.mxu0 0
    %2178 = vmatprep.subr.bf16.mxu0 0
    %2179 = vmatpush1.bf16.msra.mxu0 0
    %2180 = vmatprep.subr.bf16.mxu0 0
    %2181 = vmatpush1.bf16.msra.mxu0 0
    %2182 = vmatprep.subr.bf16.mxu0 0
    %2183 = vmatpush1.bf16.msra.mxu0 0
    %2184 = vmatprep.subr.bf16.mxu0 0
    %2185 = vmatpush1.bf16.msra.mxu0 0
    %2186 = vmatprep.subr.bf16.mxu0 0
    %2187 = vmatpush1.bf16.msra.mxu0 0
    %2188 = vmatprep.subr.bf16.mxu0 0
    %2189 = vmatpush1.bf16.msra.mxu0 0
    %2190 = vmatprep.subr.bf16.mxu0 0
    %2191 = vmatpush1.bf16.msra.mxu0 0
    %2192 = vmatprep.subr.bf16.mxu0 0
    %2193 = vmatpush1.bf16.msra.mxu0 0
    %2194 = vmatprep.subr.bf16.mxu0 0
    %2195 = vmatpush1.bf16.msra.mxu0 0
    %2196 = vmatprep.subr.bf16.mxu0 0
    %2197 = vmatpush1.bf16.msra.mxu0 0
    %2198 = vmatprep.subr.bf16.mxu0 0
    %2199 = vmatpush1.bf16.msra.mxu0 0
    %2200 = vmatprep.subr.bf16.mxu0 0
    %2201 = vmatpush1.bf16.msra.mxu0 0
    %2202 = vmatprep.subr.bf16.mxu0 0
    %2203 = vmatpush1.bf16.msra.mxu0 0
    %2204 = vmatprep.mubr.bf16.mxu0 0
    %2205 = vmatmul.mubr.bf16.gmra.mrb[0].mxu0 %v2164
    %v2206 = vpop.f32.mrb[0].mxu0
    %v2207 = vadd.f32 0.0, %v2206
    %v2208 = vpop.f32.mrb[0].mxu0
    %v2209 = vpop.f32.mrb[0].mxu0
    %v2210 = vadd.f32 0.0, %v2209
    %v2211 = vpop.f32.mrb[0].mxu0
    %2212 = vmatprep.mubr.bf16.mxu0 0
    %2213 = vmatmul.mubr.bf16.gmra.mrb[0].mxu0 %v2167
    %v2214 = vpop.f32.mrb[0].mxu0
    %v2215 = vadd.f32 0.0, %v2214
    %v2216 = vpop.f32.mrb[0].mxu0
    %v2217 = vpop.f32.mrb[0].mxu0
    %v2218 = vpop.f32.mrb[0].mxu0
    %2219 = vdwg.mxu0
    %v2220 = vpack.c.bf16 %v2210, %v2207
    %v2221 = vpack.c.bf16 %v2215, %v2215
    %s2222 = scalar_lea.vmem [#allocation14], 20
    %v2223 = vld [vmem:[%s2222] sm:$0xf]
    %v2225 = vsel %vm503, %v2220, 0
    %v2228 = vsel %vm503, %v2221, 0
    %v2231 = vsel %vm611, %v2223, 0
    %2233 = vmatprep.subr.bf16.mxu0 0
    %2234 = vmatpush1.bf16.msra.mxu0 %v2231
    %2235 = vmatprep.subr.bf16.mxu0 0
    %2236 = vmatpush1.bf16.msra.mxu0 0
    %2237 = vmatprep.subr.bf16.mxu0 0
    %2238 = vmatpush1.bf16.msra.mxu0 0
    %2239 = vmatprep.subr.bf16.mxu0 0
    %2240 = vmatpush1.bf16.msra.mxu0 0
    %2241 = vmatprep.subr.bf16.mxu0 0
    %2242 = vmatpush1.bf16.msra.mxu0 0
    %2243 = vmatprep.subr.bf16.mxu0 0
    %2244 = vmatpush1.bf16.msra.mxu0 0
    %2245 = vmatprep.subr.bf16.mxu0 0
    %2246 = vmatpush1.bf16.msra.mxu0 0
    %2247 = vmatprep.subr.bf16.mxu0 0
    %2248 = vmatpush1.bf16.msra.mxu0 0
    %2249 = vmatprep.subr.bf16.mxu0 0
    %2250 = vmatpush1.bf16.msra.mxu0 0
    %2251 = vmatprep.subr.bf16.mxu0 0
    %2252 = vmatpush1.bf16.msra.mxu0 0
    %2253 = vmatprep.subr.bf16.mxu0 0
    %2254 = vmatpush1.bf16.msra.mxu0 0
    %2255 = vmatprep.subr.bf16.mxu0 0
    %2256 = vmatpush1.bf16.msra.mxu0 0
    %2257 = vmatprep.subr.bf16.mxu0 0
    %2258 = vmatpush1.bf16.msra.mxu0 0
    %2259 = vmatprep.subr.bf16.mxu0 0
    %2260 = vmatpush1.bf16.msra.mxu0 0
    %2261 = vmatprep.subr.bf16.mxu0 0
    %2262 = vmatpush1.bf16.msra.mxu0 0
    %2263 = vmatprep.subr.bf16.mxu0 0
    %2264 = vmatpush1.bf16.msra.mxu0 0
    %2265 = vmatprep.mubr.bf16.mxu0 0
    %2266 = vmatmul.mubr.bf16.gmra.mrb[0].mxu0 %v2225
    %v2267 = vpop.f32.mrb[0].mxu0
    %v2268 = vadd.f32 0.0, %v2267
    %v2269 = vpop.f32.mrb[0].mxu0
    %v2270 = vpop.f32.mrb[0].mxu0
    %v2271 = vadd.f32 0.0, %v2270
    %v2272 = vpop.f32.mrb[0].mxu0
    %2273 = vmatprep.mubr.bf16.mxu0 0
    %2274 = vmatmul.mubr.bf16.gmra.mrb[0].mxu0 %v2228
    %v2275 = vpop.f32.mrb[0].mxu0
    %v2276 = vadd.f32 0.0, %v2275
    %v2277 = vpop.f32.mrb[0].mxu0
    %v2278 = vpop.f32.mrb[0].mxu0
    %v2279 = vpop.f32.mrb[0].mxu0
    %2280 = vdwg.mxu0
    %v2282 = vsel %vm503, %v2049, 0
    %v2285 = vsel %vm503, %v2050, 0
    %v2288 = vsel %vm611, %v2052, 0
    %2290 = vmatprep.subr.bf16.mxu0 0
    %2291 = vmatpush1.bf16.msra.mxu0 %v2288
    %2292 = vmatprep.subr.bf16.mxu0 0
    %2293 = vmatpush1.bf16.msra.mxu0 0
    %2294 = vmatprep.subr.bf16.mxu0 0
    %2295 = vmatpush1.bf16.msra.mxu0 0
    %2296 = vmatprep.subr.bf16.mxu0 0
    %2297 = vmatpush1.bf16.msra.mxu0 0
    %2298 = vmatprep.subr.bf16.mxu0 0
    %2299 = vmatpush1.bf16.msra.mxu0 0
    %2300 = vmatprep.subr.bf16.mxu0 0
    %2301 = vmatpush1.bf16.msra.mxu0 0
    %2302 = vmatprep.subr.bf16.mxu0 0
    %2303 = vmatpush1.bf16.msra.mxu0 0
    %2304 = vmatprep.subr.bf16.mxu0 0
    %2305 = vmatpush1.bf16.msra.mxu0 0
    %2306 = vmatprep.subr.bf16.mxu0 0
    %2307 = vmatpush1.bf16.msra.mxu0 0
    %2308 = vmatprep.subr.bf16.mxu0 0
    %2309 = vmatpush1.bf16.msra.mxu0 0
    %2310 = vmatprep.subr.bf16.mxu0 0
    %2311 = vmatpush1.bf16.msra.mxu0 0
    %2312 = vmatprep.subr.bf16.mxu0 0
    %2313 = vmatpush1.bf16.msra.mxu0 0
    %2314 = vmatprep.subr.bf16.mxu0 0
    %2315 = vmatpush1.bf16.msra.mxu0 0
    %2316 = vmatprep.subr.bf16.mxu0 0
    %2317 = vmatpush1.bf16.msra.mxu0 0
    %2318 = vmatprep.subr.bf16.mxu0 0
    %2319 = vmatpush1.bf16.msra.mxu0 0
    %2320 = vmatprep.subr.bf16.mxu0 0
    %2321 = vmatpush1.bf16.msra.mxu0 0
    %2322 = vmatprep.mubr.bf16.mxu0 0
    %2323 = vmatmul.mubr.bf16.gmra.mrb[0].mxu0 %v2282
    %v2324 = vpop.f32.mrb[0].mxu0
    %v2325 = vadd.f32 %v2268, %v2324
    %v2326 = vpop.f32.mrb[0].mxu0
    %v2327 = vpop.f32.mrb[0].mxu0
    %v2328 = vadd.f32 %v2271, %v2327
    %v2329 = vpop.f32.mrb[0].mxu0
    %2330 = vmatprep.mubr.bf16.mxu0 0
    %2331 = vmatmul.mubr.bf16.gmra.mrb[0].mxu0 %v2285
    %v2332 = vpop.f32.mrb[0].mxu0
    %v2333 = vadd.f32 %v2276, %v2332
    %v2334 = vpop.f32.mrb[0].mxu0
    %v2335 = vpop.f32.mrb[0].mxu0
    %v2336 = vpop.f32.mrb[0].mxu0
    %2337 = vdwg.mxu0
    %2338 = vrot.lane.b32.xlu0 %v1882, 112
    %v2339 = vpop.permute.xlu0 %2338
    %2340 = vrot.lane.b32.xlu0 %v1883, 112
    %v2341 = vpop.permute.xlu0 %2340
    %2342 = vrot.lane.b32.xlu0 %v1884, 80
    %v2343 = vpop.permute.xlu0 %2342
    %2344 = vrot.lane.b32.xlu0 %v1885, 80
    %v2345 = vpop.permute.xlu0 %2344
    %v2347 = vsel %vm503, %v2339, 0
    %v2350 = vsel %vm503, %v2341, 0
    %v2353 = vsel %vm503, %v2343, 0
    %v2356 = vsel %vm503, %v2345, 0
    %2358 = vmatprep.subr.bf16.mxu0 0
    %2359 = vmatpush1.bf16.xpose.msra.mxu0 %v2353
    %2360 = vmatprep.subr.bf16.mxu0 0
    %2361 = vmatpush1.bf16.xpose.msra.mxu0 %v2356
    %2362 = vmatprep.subr.bf16.mxu0 0
    %2363 = vmatpush1.bf16.xpose.msra.mxu0 0
    %2364 = vmatprep.subr.bf16.mxu0 0
    %2365 = vmatpush1.bf16.xpose.msra.mxu0 0
    %2366 = vmatprep.subr.bf16.mxu0 0
    %2367 = vmatpush1.bf16.xpose.msra.mxu0 0
    %2368 = vmatprep.subr.bf16.mxu0 0
    %2369 = vmatpush1.bf16.xpose.msra.mxu0 0
    %2370 = vmatprep.subr.bf16.mxu0 0
    %2371 = vmatpush1.bf16.xpose.msra.mxu0 0
    %2372 = vmatprep.subr.bf16.mxu0 0
    %2373 = vmatpush1.bf16.xpose.msra.mxu0 0
    %2374 = vmatprep.subr.bf16.mxu0 0
    %2375 = vmatpush1.bf16.xpose.msra.mxu0 0
    %2376 = vmatprep.subr.bf16.mxu0 0
    %2377 = vmatpush1.bf16.xpose.msra.mxu0 0
    %2378 = vmatprep.subr.bf16.mxu0 0
    %2379 = vmatpush1.bf16.xpose.msra.mxu0 0
    %2380 = vmatprep.subr.bf16.mxu0 0
    %2381 = vmatpush1.bf16.xpose.msra.mxu0 0
    %2382 = vmatprep.subr.bf16.mxu0 0
    %2383 = vmatpush1.bf16.xpose.msra.mxu0 0
    %2384 = vmatprep.subr.bf16.mxu0 0
    %2385 = vmatpush1.bf16.xpose.msra.mxu0 0
    %2386 = vmatprep.subr.bf16.mxu0 0
    %2387 = vmatpush1.bf16.xpose.msra.mxu0 0
    %2388 = vmatprep.subr.bf16.mxu0 0
    %2389 = vmatpush1.bf16.xpose.msra.mxu0 0
    %2390 = vmatprep.mubr.bf16.mxu0 0
    %2391 = vmatmul.mubr.bf16.gmra.mrb[0].mxu0 %v2347
    %v2392 = vpop.f32.mrb[0].mxu0
    %v2393 = vadd.f32 %v327, %v2392
    %v2394 = vpop.f32.mrb[0].mxu0
    %v2395 = vpop.f32.mrb[0].mxu0
    %v2396 = vadd.f32 %v328, %v2395
    %v2397 = vpop.f32.mrb[0].mxu0
    %2398 = vmatprep.mubr.bf16.mxu0 0
    %2399 = vmatmul.mubr.bf16.gmra.mrb[0].mxu0 %v2350
    %v2400 = vpop.f32.mrb[0].mxu0
    %v2401 = vadd.f32 %v329, %v2400
    %v2402 = vpop.f32.mrb[0].mxu0
    %v2403 = vpop.f32.mrb[0].mxu0
    %v2404 = vpop.f32.mrb[0].mxu0
    %2405 = vdwg.mxu0
    %v2406 = vsel %vm564, %v2393, -inf
    %2407 = vmax.xlane.f32.xlu0 %v2406
    %v2408 = vpop.xlane.xlu0 %2407
    %v2409 = vsel %vm564, %v2396, -inf
    %2410 = vmax.xlane.f32.xlu0 %v2409
    %v2411 = vpop.xlane.xlu0 %2410
    %v2412 = vsel %vm564, %v2401, -inf
    %2413 = vmax.xlane.f32.xlu0 %v2412
    %v2414 = vpop.xlane.xlu0 %2413
    %v2415 = vsub.f32 %v2393, %v2408
    %v2416 = vsub.f32 %v2396, %v2411
    %v2417 = vsub.f32 %v2401, %v2414
    %v2418 = vmul.f32 %v2415, 1.442695
    %v2419 = vpow.pop %v2418
    %v2420 = vmul.f32 %v2416, 1.442695
    %v2421 = vpow.pop %v2420
    %v2422 = vmul.f32 %v2417, 1.442695
    %v2423 = vpow.pop %v2422
    %v2424 = vsel %vm564, %v2419, 0.0
    %2425 = vadd.xlane.f32.xlu0 %v2424
    %v2426 = vpop.xlane.xlu0 %2425
    %v2427 = vsel %vm564, %v2421, 0.0
    %2428 = vadd.xlane.f32.xlu0 %v2427
    %v2429 = vpop.xlane.xlu0 %2428
    %v2430 = vsel %vm564, %v2423, 0.0
    %2431 = vadd.xlane.f32.xlu0 %v2430
    %v2432 = vpop.xlane.xlu0 %2431
    %v2433 = vrcp.pop %v2426
    %v2434 = vrcp.pop %v2429
    %v2435 = vrcp.pop %v2432
    %v2436 = vmul.f32 %v2419, %v2433
    %v2437 = vmul.f32 %v2421, %v2434
    %v2438 = vmul.f32 %v2423, %v2435
    %v2439 = vpack.c.bf16 %v2437, %v2436
    %v2440 = vpack.c.bf16 %v2438, %v2438
    %2441 = vrot.lane.b32.xlu0 %v1884, 48
    %v2442 = vpop.permute.xlu0 %2441
    %2443 = vrot.lane.b32.xlu0 %v1885, 48
    %v2444 = vpop.permute.xlu0 %2443
    %v2447 = vsel %vm564, %v2439, 0
    %v2450 = vsel %vm564, %v2440, 0
    %v2453 = vsel %vm611, %v2444, 0
    %2455 = vmatprep.subr.bf16.mxu0 0
    %2456 = vmatpush1.bf16.msra.mxu0 %v2442
    %2457 = vmatprep.subr.bf16.mxu0 0
    %2458 = vmatpush1.bf16.msra.mxu0 %v2453
    %2459 = vmatprep.subr.bf16.mxu0 0
    %2460 = vmatpush1.bf16.msra.mxu0 0
    %2461 = vmatprep.subr.bf16.mxu0 0
    %2462 = vmatpush1.bf16.msra.mxu0 0
    %2463 = vmatprep.subr.bf16.mxu0 0
    %2464 = vmatpush1.bf16.msra.mxu0 0
    %2465 = vmatprep.subr.bf16.mxu0 0
    %2466 = vmatpush1.bf16.msra.mxu0 0
    %2467 = vmatprep.subr.bf16.mxu0 0
    %2468 = vmatpush1.bf16.msra.mxu0 0
    %2469 = vmatprep.subr.bf16.mxu0 0
    %2470 = vmatpush1.bf16.msra.mxu0 0
    %2471 = vmatprep.subr.bf16.mxu0 0
    %2472 = vmatpush1.bf16.msra.mxu0 0
    %2473 = vmatprep.subr.bf16.mxu0 0
    %2474 = vmatpush1.bf16.msra.mxu0 0
    %2475 = vmatprep.subr.bf16.mxu0 0
    %2476 = vmatpush1.bf16.msra.mxu0 0
    %2477 = vmatprep.subr.bf16.mxu0 0
    %2478 = vmatpush1.bf16.msra.mxu0 0
    %2479 = vmatprep.subr.bf16.mxu0 0
    %2480 = vmatpush1.bf16.msra.mxu0 0
    %2481 = vmatprep.subr.bf16.mxu0 0
    %2482 = vmatpush1.bf16.msra.mxu0 0
    %2483 = vmatprep.subr.bf16.mxu0 0
    %2484 = vmatpush1.bf16.msra.mxu0 0
    %2485 = vmatprep.subr.bf16.mxu0 0
    %2486 = vmatpush1.bf16.msra.mxu0 0
    %2487 = vmatprep.mubr.bf16.mxu0 0
    %2488 = vmatmul.mubr.bf16.gmra.mrb[0].mxu0 %v2447
    %v2489 = vpop.f32.mrb[0].mxu0
    %v2490 = vadd.f32 0.0, %v2489
    %v2491 = vpop.f32.mrb[0].mxu0
    %v2492 = vpop.f32.mrb[0].mxu0
    %v2493 = vadd.f32 0.0, %v2492
    %v2494 = vpop.f32.mrb[0].mxu0
    %2495 = vmatprep.mubr.bf16.mxu0 0
    %2496 = vmatmul.mubr.bf16.gmra.mrb[0].mxu0 %v2450
    %v2497 = vpop.f32.mrb[0].mxu0
    %v2498 = vadd.f32 0.0, %v2497
    %v2499 = vpop.f32.mrb[0].mxu0
    %v2500 = vpop.f32.mrb[0].mxu0
    %v2501 = vpop.f32.mrb[0].mxu0
    %2502 = vdwg.mxu0
    %v2503 = vpack.c.bf16 %v2493, %v2490
    %v2504 = vpack.c.bf16 %v2498, %v2498
    %s2505 = scalar_lea.vmem [#allocation14], 24
    %v2506 = vld [vmem:[%s2505] sm:$0xf]
    %v2508 = vsel %vm503, %v2503, 0
    %v2511 = vsel %vm503, %v2504, 0
    %v2514 = vsel %vm611, %v2506, 0
    %2516 = vmatprep.subr.bf16.mxu0 0
    %2517 = vmatpush1.bf16.msra.mxu0 %v2514
    %2518 = vmatprep.subr.bf16.mxu0 0
    %2519 = vmatpush1.bf16.msra.mxu0 0
    %2520 = vmatprep.subr.bf16.mxu0 0
    %2521 = vmatpush1.bf16.msra.mxu0 0
    %2522 = vmatprep.subr.bf16.mxu0 0
    %2523 = vmatpush1.bf16.msra.mxu0 0
    %2524 = vmatprep.subr.bf16.mxu0 0
    %2525 = vmatpush1.bf16.msra.mxu0 0
    %2526 = vmatprep.subr.bf16.mxu0 0
    %2527 = vmatpush1.bf16.msra.mxu0 0
    %2528 = vmatprep.subr.bf16.mxu0 0
    %2529 = vmatpush1.bf16.msra.mxu0 0
    %2530 = vmatprep.subr.bf16.mxu0 0
    %2531 = vmatpush1.bf16.msra.mxu0 0
    %2532 = vmatprep.subr.bf16.mxu0 0
    %2533 = vmatpush1.bf16.msra.mxu0 0
    %2534 = vmatprep.subr.bf16.mxu0 0
    %2535 = vmatpush1.bf16.msra.mxu0 0
    %2536 = vmatprep.subr.bf16.mxu0 0
    %2537 = vmatpush1.bf16.msra.mxu0 0
    %2538 = vmatprep.subr.bf16.mxu0 0
    %2539 = vmatpush1.bf16.msra.mxu0 0
    %2540 = vmatprep.subr.bf16.mxu0 0
    %2541 = vmatpush1.bf16.msra.mxu0 0
    %2542 = vmatprep.subr.bf16.mxu0 0
    %2543 = vmatpush1.bf16.msra.mxu0 0
    %2544 = vmatprep.subr.bf16.mxu0 0
    %2545 = vmatpush1.bf16.msra.mxu0 0
    %2546 = vmatprep.subr.bf16.mxu0 0
    %2547 = vmatpush1.bf16.msra.mxu0 0
    %2548 = vmatprep.mubr.bf16.mxu0 0
    %2549 = vmatmul.mubr.bf16.gmra.mrb[0].mxu0 %v2508
    %v2550 = vpop.f32.mrb[0].mxu0
    %v2551 = vadd.f32 0.0, %v2550
    %v2552 = vpop.f32.mrb[0].mxu0
    %v2553 = vpop.f32.mrb[0].mxu0
    %v2554 = vadd.f32 0.0, %v2553
    %v2555 = vpop.f32.mrb[0].mxu0
    %2556 = vmatprep.mubr.bf16.mxu0 0
    %2557 = vmatmul.mubr.bf16.gmra.mrb[0].mxu0 %v2511
    %v2558 = vpop.f32.mrb[0].mxu0
    %v2559 = vadd.f32 0.0, %v2558
    %v2560 = vpop.f32.mrb[0].mxu0
    %v2561 = vpop.f32.mrb[0].mxu0
    %v2562 = vpop.f32.mrb[0].mxu0
    %2563 = vdwg.mxu0
    %v2564 = vadd.f32 %v2325, %v2551
    %v2565 = vadd.f32 %v2328, %v2554
    %v2566 = vadd.f32 %v2333, %v2559
    %2567 = vrot.lane.b32.xlu0 %v1882, 104
    %v2568 = vpop.permute.xlu0 %2567
    %2569 = vrot.lane.b32.xlu0 %v1883, 104
    %v2570 = vpop.permute.xlu0 %2569
    %2571 = vrot.lane.b32.xlu0 %v1884, 72
    %v2572 = vpop.permute.xlu0 %2571
    %2573 = vrot.lane.b32.xlu0 %v1885, 72
    %v2574 = vpop.permute.xlu0 %2573
    %v2576 = vsel %vm503, %v2568, 0
    %v2579 = vsel %vm503, %v2570, 0
    %v2582 = vsel %vm503, %v2572, 0
    %v2585 = vsel %vm503, %v2574, 0
    %2587 = vmatprep.subr.bf16.mxu0 0
    %2588 = vmatpush1.bf16.xpose.msra.mxu0 %v2582
    %2589 = vmatprep.subr.bf16.mxu0 0
    %2590 = vmatpush1.bf16.xpose.msra.mxu0 %v2585
    %2591 = vmatprep.subr.bf16.mxu0 0
    %2592 = vmatpush1.bf16.xpose.msra.mxu0 0
    %2593 = vmatprep.subr.bf16.mxu0 0
    %2594 = vmatpush1.bf16.xpose.msra.mxu0 0
    %2595 = vmatprep.subr.bf16.mxu0 0
    %2596 = vmatpush1.bf16.xpose.msra.mxu0 0
    %2597 = vmatprep.subr.bf16.mxu0 0
    %2598 = vmatpush1.bf16.xpose.msra.mxu0 0
    %2599 = vmatprep.subr.bf16.mxu0 0
    %2600 = vmatpush1.bf16.xpose.msra.mxu0 0
    %2601 = vmatprep.subr.bf16.mxu0 0
    %2602 = vmatpush1.bf16.xpose.msra.mxu0 0
    %2603 = vmatprep.subr.bf16.mxu0 0
    %2604 = vmatpush1.bf16.xpose.msra.mxu0 0
    %2605 = vmatprep.subr.bf16.mxu0 0
    %2606 = vmatpush1.bf16.xpose.msra.mxu0 0
    %2607 = vmatprep.subr.bf16.mxu0 0
    %2608 = vmatpush1.bf16.xpose.msra.mxu0 0
    %2609 = vmatprep.subr.bf16.mxu0 0
    %2610 = vmatpush1.bf16.xpose.msra.mxu0 0
    %2611 = vmatprep.subr.bf16.mxu0 0
    %2612 = vmatpush1.bf16.xpose.msra.mxu0 0
    %2613 = vmatprep.subr.bf16.mxu0 0
    %2614 = vmatpush1.bf16.xpose.msra.mxu0 0
    %2615 = vmatprep.subr.bf16.mxu0 0
    %2616 = vmatpush1.bf16.xpose.msra.mxu0 0
    %2617 = vmatprep.subr.bf16.mxu0 0
    %2618 = vmatpush1.bf16.xpose.msra.mxu0 0
    %2619 = vmatprep.mubr.bf16.mxu0 0
    %2620 = vmatmul.mubr.bf16.gmra.mrb[0].mxu0 %v2576
    %v2621 = vpop.f32.mrb[0].mxu0
    %v2622 = vadd.f32 %v327, %v2621
    %v2623 = vpop.f32.mrb[0].mxu0
    %v2624 = vpop.f32.mrb[0].mxu0
    %v2625 = vadd.f32 %v328, %v2624
    %v2626 = vpop.f32.mrb[0].mxu0
    %2627 = vmatprep.mubr.bf16.mxu0 0
    %2628 = vmatmul.mubr.bf16.gmra.mrb[0].mxu0 %v2579
    %v2629 = vpop.f32.mrb[0].mxu0
    %v2630 = vadd.f32 %v329, %v2629
    %v2631 = vpop.f32.mrb[0].mxu0
    %v2632 = vpop.f32.mrb[0].mxu0
    %v2633 = vpop.f32.mrb[0].mxu0
    %2634 = vdwg.mxu0
    %v2635 = vsel %vm564, %v2622, -inf
    %2636 = vmax.xlane.f32.xlu0 %v2635
    %v2637 = vpop.xlane.xlu0 %2636
    %v2638 = vsel %vm564, %v2625, -inf
    %2639 = vmax.xlane.f32.xlu0 %v2638
    %v2640 = vpop.xlane.xlu0 %2639
    %v2641 = vsel %vm564, %v2630, -inf
    %2642 = vmax.xlane.f32.xlu0 %v2641
    %v2643 = vpop.xlane.xlu0 %2642
    %v2644 = vsub.f32 %v2622, %v2637
    %v2645 = vsub.f32 %v2625, %v2640
    %v2646 = vsub.f32 %v2630, %v2643
    %v2647 = vmul.f32 %v2644, 1.442695
    %v2648 = vpow.pop %v2647
    %v2649 = vmul.f32 %v2645, 1.442695
    %v2650 = vpow.pop %v2649
    %v2651 = vmul.f32 %v2646, 1.442695
    %v2652 = vpow.pop %v2651
    %v2653 = vsel %vm564, %v2648, 0.0
    %2654 = vadd.xlane.f32.xlu0 %v2653
    %v2655 = vpop.xlane.xlu0 %2654
    %v2656 = vsel %vm564, %v2650, 0.0
    %2657 = vadd.xlane.f32.xlu0 %v2656
    %v2658 = vpop.xlane.xlu0 %2657
    %v2659 = vsel %vm564, %v2652, 0.0
    %2660 = vadd.xlane.f32.xlu0 %v2659
    %v2661 = vpop.xlane.xlu0 %2660
    %v2662 = vrcp.pop %v2655
    %v2663 = vrcp.pop %v2658
    %v2664 = vrcp.pop %v2661
    %v2665 = vmul.f32 %v2648, %v2662
    %v2666 = vmul.f32 %v2650, %v2663
    %v2667 = vmul.f32 %v2652, %v2664
    %v2668 = vpack.c.bf16 %v2666, %v2665
    %v2669 = vpack.c.bf16 %v2667, %v2667
    %2670 = vrot.lane.b32.xlu0 %v1884, 40
    %v2671 = vpop.permute.xlu0 %2670
    %2672 = vrot.lane.b32.xlu0 %v1885, 40
    %v2673 = vpop.permute.xlu0 %2672
    %v2676 = vsel %vm564, %v2668, 0
    %v2679 = vsel %vm564, %v2669, 0
    %v2682 = vsel %vm611, %v2673, 0
    %2684 = vmatprep.subr.bf16.mxu0 0
    %2685 = vmatpush1.bf16.msra.mxu0 %v2671
    %2686 = vmatprep.subr.bf16.mxu0 0
    %2687 = vmatpush1.bf16.msra.mxu0 %v2682
    %2688 = vmatprep.subr.bf16.mxu0 0
    %2689 = vmatpush1.bf16.msra.mxu0 0
    %2690 = vmatprep.subr.bf16.mxu0 0
    %2691 = vmatpush1.bf16.msra.mxu0 0
    %2692 = vmatprep.subr.bf16.mxu0 0
    %2693 = vmatpush1.bf16.msra.mxu0 0
    %2694 = vmatprep.subr.bf16.mxu0 0
    %2695 = vmatpush1.bf16.msra.mxu0 0
    %2696 = vmatprep.subr.bf16.mxu0 0
    %2697 = vmatpush1.bf16.msra.mxu0 0
    %2698 = vmatprep.subr.bf16.mxu0 0
    %2699 = vmatpush1.bf16.msra.mxu0 0
    %2700 = vmatprep.subr.bf16.mxu0 0
    %2701 = vmatpush1.bf16.msra.mxu0 0
    %2702 = vmatprep.subr.bf16.mxu0 0
    %2703 = vmatpush1.bf16.msra.mxu0 0
    %2704 = vmatprep.subr.bf16.mxu0 0
    %2705 = vmatpush1.bf16.msra.mxu0 0
    %2706 = vmatprep.subr.bf16.mxu0 0
    %2707 = vmatpush1.bf16.msra.mxu0 0
    %2708 = vmatprep.subr.bf16.mxu0 0
    %2709 = vmatpush1.bf16.msra.mxu0 0
    %2710 = vmatprep.subr.bf16.mxu0 0
    %2711 = vmatpush1.bf16.msra.mxu0 0
    %2712 = vmatprep.subr.bf16.mxu0 0
    %2713 = vmatpush1.bf16.msra.mxu0 0
    %2714 = vmatprep.subr.bf16.mxu0 0
    %2715 = vmatpush1.bf16.msra.mxu0 0
    %2716 = vmatprep.mubr.bf16.mxu0 0
    %2717 = vmatmul.mubr.bf16.gmra.mrb[0].mxu0 %v2676
    %v2718 = vpop.f32.mrb[0].mxu0
    %v2719 = vadd.f32 0.0, %v2718
    %v2720 = vpop.f32.mrb[0].mxu0
    %v2721 = vpop.f32.mrb[0].mxu0
    %v2722 = vadd.f32 0.0, %v2721
    %v2723 = vpop.f32.mrb[0].mxu0
    %2724 = vmatprep.mubr.bf16.mxu0 0
    %2725 = vmatmul.mubr.bf16.gmra.mrb[0].mxu0 %v2679
    %v2726 = vpop.f32.mrb[0].mxu0
    %v2727 = vadd.f32 0.0, %v2726
    %v2728 = vpop.f32.mrb[0].mxu0
    %v2729 = vpop.f32.mrb[0].mxu0
    %v2730 = vpop.f32.mrb[0].mxu0
    %2731 = vdwg.mxu0
    %v2732 = vpack.c.bf16 %v2722, %v2719
    %v2733 = vpack.c.bf16 %v2727, %v2727
    %s2734 = scalar_lea.vmem [#allocation14], 28
    %v2735 = vld [vmem:[%s2734] sm:$0xf]
    %v2737 = vsel %vm503, %v2732, 0
    %v2740 = vsel %vm503, %v2733, 0
    %v2743 = vsel %vm611, %v2735, 0
    %2745 = vmatprep.subr.bf16.mxu0 0
    %2746 = vmatpush1.bf16.msra.mxu0 %v2743
    %2747 = vmatprep.subr.bf16.mxu0 0
    %2748 = vmatpush1.bf16.msra.mxu0 0
    %2749 = vmatprep.subr.bf16.mxu0 0
    %2750 = vmatpush1.bf16.msra.mxu0 0
    %2751 = vmatprep.subr.bf16.mxu0 0
    %2752 = vmatpush1.bf16.msra.mxu0 0
    %2753 = vmatprep.subr.bf16.mxu0 0
    %2754 = vmatpush1.bf16.msra.mxu0 0
    %2755 = vmatprep.subr.bf16.mxu0 0
    %2756 = vmatpush1.bf16.msra.mxu0 0
    %2757 = vmatprep.subr.bf16.mxu0 0
    %2758 = vmatpush1.bf16.msra.mxu0 0
    %2759 = vmatprep.subr.bf16.mxu0 0
    %2760 = vmatpush1.bf16.msra.mxu0 0
    %2761 = vmatprep.subr.bf16.mxu0 0
    %2762 = vmatpush1.bf16.msra.mxu0 0
    %2763 = vmatprep.subr.bf16.mxu0 0
    %2764 = vmatpush1.bf16.msra.mxu0 0
    %2765 = vmatprep.subr.bf16.mxu0 0
    %2766 = vmatpush1.bf16.msra.mxu0 0
    %2767 = vmatprep.subr.bf16.mxu0 0
    %2768 = vmatpush1.bf16.msra.mxu0 0
    %2769 = vmatprep.subr.bf16.mxu0 0
    %2770 = vmatpush1.bf16.msra.mxu0 0
    %2771 = vmatprep.subr.bf16.mxu0 0
    %2772 = vmatpush1.bf16.msra.mxu0 0
    %2773 = vmatprep.subr.bf16.mxu0 0
    %2774 = vmatpush1.bf16.msra.mxu0 0
    %2775 = vmatprep.subr.bf16.mxu0 0
    %2776 = vmatpush1.bf16.msra.mxu0 0
    %2777 = vmatprep.mubr.bf16.mxu0 0
    %2778 = vmatmul.mubr.bf16.gmra.mrb[0].mxu0 %v2737
    %v2779 = vpop.f32.mrb[0].mxu0
    %v2780 = vadd.f32 0.0, %v2779
    %v2781 = vpop.f32.mrb[0].mxu0
    %v2782 = vpop.f32.mrb[0].mxu0
    %v2783 = vadd.f32 0.0, %v2782
    %v2784 = vpop.f32.mrb[0].mxu0
    %2785 = vmatprep.mubr.bf16.mxu0 0
    %2786 = vmatmul.mubr.bf16.gmra.mrb[0].mxu0 %v2740
    %v2787 = vpop.f32.mrb[0].mxu0
    %v2788 = vadd.f32 0.0, %v2787
    %v2789 = vpop.f32.mrb[0].mxu0
    %v2790 = vpop.f32.mrb[0].mxu0
    %v2791 = vpop.f32.mrb[0].mxu0
    %2792 = vdwg.mxu0
    %v2793 = vadd.f32 %v2564, %v2780
    %v2794 = vadd.f32 %v2565, %v2783
    %v2795 = vadd.f32 %v2566, %v2788
    %s2796 = scalar_lea.vmem [#allocation16], 1
    %v2797 = vld [vmem:[%s2796] sm:$0x1]
    %v2799 = vlaneseq
    %v2800 = vshrl.u32 %v2799, 7
    %v2801 = vsub.s32 0, %v2800
    %v2802 = vrot.slane %v2797, %v2801
    %v2804 = vadd.f32 %v2793, %v2802
    %v2805 = vadd.f32 %v2794, %v2802
    %v2806 = vadd.f32 %v2795, %v2802
    %v2807 = vadd.f32 %v1795, %v2804
    %v2808 = vadd.f32 %v1796, %v2805
    %v2809 = vadd.f32 %v1797, %v2806
    %s2810 = scalar_lea.vmem [#allocation17], 1
    %v2811 = vld [vmem:[%s2810] sm:$0x1]
    %s2812 = scalar_lea.vmem [#allocation19], 1
    %v2813 = vld [vmem:[%s2812] sm:$0x1]
    %v2814 = vsel %vm353, %v2807, 0.0
    %2815 = vadd.xlane.f32.xlu0 %v2814
    %v2816 = vpop.xlane.xlu0 %2815
    %v2817 = vsel %vm353, %v2808, 0.0
    %2818 = vadd.xlane.f32.xlu0 %v2817
    %v2819 = vpop.xlane.xlu0 %2818
    %v2820 = vsel %vm353, %v2809, 0.0
    %2821 = vadd.xlane.f32.xlu0 %v2820
    %v2822 = vpop.xlane.xlu0 %2821
    %v2823 = vmul.f32 %v2816, %v1433
    %v2824 = vmul.f32 %v2819, %v1433
    %v2825 = vmul.f32 %v2822, %v1433
    %v2826 = vsub.f32 %v2807, %v2823
    %v2827 = vsub.f32 %v2808, %v2824
    %v2828 = vsub.f32 %v2809, %v2825
    %v2829 = vmul.f32 %v2826, %v2826
    %v2830 = vmul.f32 %v2827, %v2827
    %v2831 = vmul.f32 %v2828, %v2828
    %v2832 = vsel %vm353, %v2829, 0.0
    %2833 = vadd.xlane.f32.xlu0 %v2832
    %v2834 = vpop.xlane.xlu0 %2833
    %v2835 = vsel %vm353, %v2830, 0.0
    %2836 = vadd.xlane.f32.xlu0 %v2835
    %v2837 = vpop.xlane.xlu0 %2836
    %v2838 = vsel %vm353, %v2831, 0.0
    %2839 = vadd.xlane.f32.xlu0 %v2838
    %v2840 = vpop.xlane.xlu0 %2839
    %v2841 = vmul.f32 %v2834, %v1433
    %v2842 = vmul.f32 %v2837, %v1433
    %v2843 = vmul.f32 %v2840, %v1433
    %v2844 = vadd.f32 %v2841, 1e-05
    %v2845 = vadd.f32 %v2842, 1e-05
    %v2846 = vadd.f32 %v2843, 1e-05
    %v2847 = vrsqrt.pop %v2844
    %v2848 = vrsqrt.pop %v2845
    %v2849 = vrsqrt.pop %v2846
    %v2850 = vmul.f32 %v2826, %v2847
    %v2851 = vmul.f32 %v2827, %v2848
    %v2852 = vmul.f32 %v2828, %v2849
    %v2854 = vlaneseq
    %v2855 = vshrl.u32 %v2854, 7
    %v2856 = vsub.s32 0, %v2855
    %v2857 = vrot.slane %v2811, %v2856
    %v2859 = vmul.f32 %v2850, %v2857
    %v2860 = vmul.f32 %v2851, %v2857
    %v2861 = vmul.f32 %v2852, %v2857
    %v2863 = vlaneseq
    %v2864 = vshrl.u32 %v2863, 7
    %v2865 = vsub.s32 0, %v2864
    %v2866 = vrot.slane %v2813, %v2865
    %v2868 = vadd.f32 %v2859, %v2866
    %v2869 = vadd.f32 %v2860, %v2866
    %v2870 = vadd.f32 %v2861, %v2866
    %v2871 = vpack.c.bf16 %v2869, %v2868
    %v2872 = vpack.c.bf16 %v2870, %v2870
    %s2873 = scalar_lea.vmem [#allocation20], 16
    %v2874 = vld [vmem:[%s2873] sm:$0xf]
    %v2875 = vld [vmem:[%s2873 + $0x4] sm:$0xf]
    %v2876 = vld [vmem:[%s2873 + $0x8] sm:$0xf]
    %v2877 = vld [vmem:[%s2873 + $0xc] sm:$0xf]
    %s2878 = scalar_lea.vmem [#allocation22], 1
    %v2879 = vld [vmem:[%s2878] sm:$0x1]
    %v2881 = vlaneseq
    %v2882 = vshrl.u32 %v2881, 7
    %v2883 = vsub.s32 0, %v2882
    %v2884 = vrot.slane %v2879, %v2883
    %v2890 = vunpack.c.l.b16 %v2874
    %v2891 = vunpack.c.l.b16 %v2875
    %v2892 = vunpack.c.l.b16 %v2876
    %v2893 = vunpack.c.l.b16 %v2877
    %v2894 = vpack.c.b16 %v2891, %v2890
    %v2895 = vpack.c.b16 %v2893, %v2892
    %v2899 = vsel %vm353, %v2871, 0
    %v2902 = vsel %vm353, %v2872, 0
    %2904 = vmatprep.subr.bf16.mxu0 0
    %2905 = vmatpush1.bf16.msra.mxu0 %v2894
    %2906 = vmatprep.subr.bf16.mxu0 0
    %2907 = vmatpush1.bf16.msra.mxu0 %v2895
    %2908 = vmatprep.subr.bf16.mxu0 0
    %2909 = vmatpush1.bf16.msra.mxu0 0
    %2910 = vmatprep.subr.bf16.mxu0 0
    %2911 = vmatpush1.bf16.msra.mxu0 0
    %2912 = vmatprep.subr.bf16.mxu0 0
    %2913 = vmatpush1.bf16.msra.mxu0 0
    %2914 = vmatprep.subr.bf16.mxu0 0
    %2915 = vmatpush1.bf16.msra.mxu0 0
    %2916 = vmatprep.subr.bf16.mxu0 0
    %2917 = vmatpush1.bf16.msra.mxu0 0
    %2918 = vmatprep.subr.bf16.mxu0 0
    %2919 = vmatpush1.bf16.msra.mxu0 0
    %2920 = vmatprep.subr.bf16.mxu0 0
    %2921 = vmatpush1.bf16.msra.mxu0 0
    %2922 = vmatprep.subr.bf16.mxu0 0
    %2923 = vmatpush1.bf16.msra.mxu0 0
    %2924 = vmatprep.subr.bf16.mxu0 0
    %2925 = vmatpush1.bf16.msra.mxu0 0
    %2926 = vmatprep.subr.bf16.mxu0 0
    %2927 = vmatpush1.bf16.msra.mxu0 0
    %2928 = vmatprep.subr.bf16.mxu0 0
    %2929 = vmatpush1.bf16.msra.mxu0 0
    %2930 = vmatprep.subr.bf16.mxu0 0
    %2931 = vmatpush1.bf16.msra.mxu0 0
    %2932 = vmatprep.subr.bf16.mxu0 0
    %2933 = vmatpush1.bf16.msra.mxu0 0
    %2934 = vmatprep.subr.bf16.mxu0 0
    %2935 = vmatpush1.bf16.msra.mxu0 0
    %2936 = vmatprep.mubr.bf16.mxu0 0
    %2937 = vmatmul.mubr.bf16.gmra.mrb[0].mxu0 %v2899
    %v2938 = vpop.f32.mrb[0].mxu0
    %v2939 = vadd.f32 %v2884, %v2938
    %v2940 = vpop.f32.mrb[0].mxu0
    %v2941 = vpop.f32.mrb[0].mxu0
    %v2942 = vadd.f32 %v2884, %v2941
    %v2943 = vpop.f32.mrb[0].mxu0
    %2944 = vmatprep.mubr.bf16.mxu0 0
    %2945 = vmatmul.mubr.bf16.gmra.mrb[0].mxu0 %v2902
    %v2946 = vpop.f32.mrb[0].mxu0
    %v2947 = vadd.f32 %v2884, %v2946
    %v2948 = vpop.f32.mrb[0].mxu0
    %v2949 = vpop.f32.mrb[0].mxu0
    %v2950 = vpop.f32.mrb[0].mxu0
    %2951 = vdwg.mxu0
    %v2952 = vmax.f32 %v2939, 0.0
    %v2953 = vmax.f32 %v2942, 0.0
    %v2954 = vmax.f32 %v2947, 0.0
    %v2955 = vpack.c.bf16 %v2953, %v2952
    %v2956 = vpack.c.bf16 %v2954, %v2954
    %s2957 = scalar_lea.vmem [#allocation23], 32
    %v2958 = vld [vmem:[%s2957] sm:$0xf]
    %v2959 = vld [vmem:[%s2957 + $0x4] sm:$0xf]
    %v2960 = vld [vmem:[%s2957 + $0x8] sm:$0xf]
    %v2961 = vld [vmem:[%s2957 + $0xc] sm:$0xf]
    %v2962 = vld [vmem:[%s2957 + $0x10] sm:$0xf]
    %v2963 = vld [vmem:[%s2957 + $0x14] sm:$0xf]
    %v2964 = vld [vmem:[%s2957 + $0x18] sm:$0xf]
    %v2965 = vld [vmem:[%s2957 + $0x1c] sm:$0xf]
    %s2966 = scalar_lea.vmem [#allocation25], 1
    %v2967 = vld [vmem:[%s2966] sm:$0x1]
    %v2969 = vlaneseq
    %v2970 = vshrl.u32 %v2969, 7
    %v2971 = vsub.s32 0, %v2970
    %v2972 = vrot.slane %v2967, %v2971
    %v2982 = vunpack.c.l.b16 %v2958
    %v2983 = vunpack.c.l.b16 %v2959
    %v2984 = vunpack.c.l.b16 %v2960
    %v2985 = vunpack.c.l.b16 %v2961
    %v2986 = vunpack.c.l.b16 %v2962
    %v2987 = vunpack.c.l.b16 %v2963
    %v2988 = vunpack.c.l.b16 %v2964
    %v2989 = vunpack.c.l.b16 %v2965
    %v2990 = vpack.c.b16 %v2983, %v2982
    %v2991 = vpack.c.b16 %v2985, %v2984
    %v2992 = vpack.c.b16 %v2987, %v2986
    %v2993 = vpack.c.b16 %v2989, %v2988
    %v2999 = vsel %vm1605, %v2955, 0
    %v3002 = vsel %vm1605, %v2956, 0
    %3004 = vmatprep.subr.bf16.mxu0 0
    %3005 = vmatpush1.bf16.msra.mxu0 %v2990
    %3006 = vmatprep.subr.bf16.mxu0 0
    %3007 = vmatpush1.bf16.msra.mxu0 %v2991
    %3008 = vmatprep.subr.bf16.mxu0 0
    %3009 = vmatpush1.bf16.msra.mxu0 %v2992
    %3010 = vmatprep.subr.bf16.mxu0 0
    %3011 = vmatpush1.bf16.msra.mxu0 %v2993
    %3012 = vmatprep.subr.bf16.mxu0 0
    %3013 = vmatpush1.bf16.msra.mxu0 0
    %3014 = vmatprep.subr.bf16.mxu0 0
    %3015 = vmatpush1.bf16.msra.mxu0 0
    %3016 = vmatprep.subr.bf16.mxu0 0
    %3017 = vmatpush1.bf16.msra.mxu0 0
    %3018 = vmatprep.subr.bf16.mxu0 0
    %3019 = vmatpush1.bf16.msra.mxu0 0
    %3020 = vmatprep.subr.bf16.mxu0 0
    %3021 = vmatpush1.bf16.msra.mxu0 0
    %3022 = vmatprep.subr.bf16.mxu0 0
    %3023 = vmatpush1.bf16.msra.mxu0 0
    %3024 = vmatprep.subr.bf16.mxu0 0
    %3025 = vmatpush1.bf16.msra.mxu0 0
    %3026 = vmatprep.subr.bf16.mxu0 0
    %3027 = vmatpush1.bf16.msra.mxu0 0
    %3028 = vmatprep.subr.bf16.mxu0 0
    %3029 = vmatpush1.bf16.msra.mxu0 0
    %3030 = vmatprep.subr.bf16.mxu0 0
    %3031 = vmatpush1.bf16.msra.mxu0 0
    %3032 = vmatprep.subr.bf16.mxu0 0
    %3033 = vmatpush1.bf16.msra.mxu0 0
    %3034 = vmatprep.subr.bf16.mxu0 0
    %3035 = vmatpush1.bf16.msra.mxu0 0
    %3036 = vmatprep.mubr.bf16.mxu0 0
    %3037 = vmatmul.mubr.bf16.gmra.mrb[0].mxu0 %v2999
    %v3038 = vpop.f32.mrb[0].mxu0
    %v3039 = vadd.f32 %v2972, %v3038
    %v3040 = vpop.f32.mrb[0].mxu0
    %v3041 = vpop.f32.mrb[0].mxu0
    %v3042 = vadd.f32 %v2972, %v3041
    %v3043 = vpop.f32.mrb[0].mxu0
    %3044 = vmatprep.mubr.bf16.mxu0 0
    %3045 = vmatmul.mubr.bf16.gmra.mrb[0].mxu0 %v3002
    %v3046 = vpop.f32.mrb[0].mxu0
    %v3047 = vadd.f32 %v2972, %v3046
    %v3048 = vpop.f32.mrb[0].mxu0
    %v3049 = vpop.f32.mrb[0].mxu0
    %v3050 = vpop.f32.mrb[0].mxu0
    %3051 = vdwg.mxu0
    %v3052 = vadd.f32 %v2868, %v3039
    %v3053 = vadd.f32 %v2869, %v3042
    %v3054 = vadd.f32 %v2870, %v3047
    %s3055 = scalar_lea.vmem [#allocation26], 1
    %v3056 = vld [vmem:[%s3055] sm:$0x1]
    %s3057 = scalar_lea.vmem [#allocation28], 1
    %v3058 = vld [vmem:[%s3057] sm:$0x1]
    %v3059 = vsel %vm353, %v3052, 0.0
    %3060 = vadd.xlane.f32.xlu0 %v3059
    %v3061 = vpop.xlane.xlu0 %3060
    %v3062 = vsel %vm353, %v3053, 0.0
    %3063 = vadd.xlane.f32.xlu0 %v3062
    %v3064 = vpop.xlane.xlu0 %3063
    %v3065 = vsel %vm353, %v3054, 0.0
    %3066 = vadd.xlane.f32.xlu0 %v3065
    %v3067 = vpop.xlane.xlu0 %3066
    %v3068 = vmul.f32 %v3061, %v1433
    %v3069 = vmul.f32 %v3064, %v1433
    %v3070 = vmul.f32 %v3067, %v1433
    %v3071 = vsub.f32 %v3052, %v3068
    %v3072 = vsub.f32 %v3053, %v3069
    %v3073 = vsub.f32 %v3054, %v3070
    %v3074 = vmul.f32 %v3071, %v3071
    %v3075 = vmul.f32 %v3072, %v3072
    %v3076 = vmul.f32 %v3073, %v3073
    %v3077 = vsel %vm353, %v3074, 0.0
    %3078 = vadd.xlane.f32.xlu0 %v3077
    %v3079 = vpop.xlane.xlu0 %3078
    %v3080 = vsel %vm353, %v3075, 0.0
    %3081 = vadd.xlane.f32.xlu0 %v3080
    %v3082 = vpop.xlane.xlu0 %3081
    %v3083 = vsel %vm353, %v3076, 0.0
    %3084 = vadd.xlane.f32.xlu0 %v3083
    %v3085 = vpop.xlane.xlu0 %3084
    %v3086 = vmul.f32 %v3079, %v1433
    %v3087 = vmul.f32 %v3082, %v1433
    %v3088 = vmul.f32 %v3085, %v1433
    %v3089 = vadd.f32 %v3086, 1e-05
    %v3090 = vadd.f32 %v3087, 1e-05
    %v3091 = vadd.f32 %v3088, 1e-05
    %v3092 = vrsqrt.pop %v3089
    %v3093 = vrsqrt.pop %v3090
    %v3094 = vrsqrt.pop %v3091
    %v3095 = vmul.f32 %v3071, %v3092
    %v3096 = vmul.f32 %v3072, %v3093
    %v3097 = vmul.f32 %v3073, %v3094
    %v3099 = vlaneseq
    %v3100 = vshrl.u32 %v3099, 7
    %v3101 = vsub.s32 0, %v3100
    %v3102 = vrot.slane %v3056, %v3101
    %v3104 = vmul.f32 %v3095, %v3102
    %v3105 = vmul.f32 %v3096, %v3102
    %v3106 = vmul.f32 %v3097, %v3102
    %v3108 = vlaneseq
    %v3109 = vshrl.u32 %v3108, 7
    %v3110 = vsub.s32 0, %v3109
    %v3111 = vrot.slane %v3058, %v3110
    %v3113 = vadd.f32 %v3104, %v3111
    %v3114 = vadd.f32 %v3105, %v3111
    %v3115 = vadd.f32 %v3106, %v3111
    %v3116 = vpack.c.bf16 %v3114, %v3113
    %v3117 = vpack.c.bf16 %v3115, %v3115
    %v3118 = vld [vmem:[#allocation29] sm:$0xf]
    %v3119 = vld [vmem:[#allocation29 + $0x4] sm:$0xf]
    %v3120 = vld [vmem:[#allocation29 + $0x8] sm:$0xf]
    %v3121 = vld [vmem:[#allocation29 + $0xc] sm:$0xf]
    %v3122 = vld [vmem:[#allocation31] sm:$0x1]
    %v3124 = vlaneseq
    %v3125 = vshrl.u32 %v3124, 7
    %v3126 = vsub.s32 0, %v3125
    %v3127 = vrot.slane %v3122, %v3126
    %v3133 = vunpack.c.l.b16 %v3118
    %v3134 = vunpack.c.l.b16 %v3119
    %v3135 = vunpack.c.l.b16 %v3120
    %v3136 = vunpack.c.l.b16 %v3121
    %v3137 = vpack.c.b16 %v3134, %v3133
    %v3138 = vpack.c.b16 %v3136, %v3135
    %v3142 = vsel %vm353, %v3116, 0
    %v3145 = vsel %vm353, %v3117, 0
    %3147 = vmatprep.subr.bf16.mxu0 0
    %3148 = vmatpush1.bf16.msra.mxu0 %v3137
    %3149 = vmatprep.subr.bf16.mxu0 0
    %3150 = vmatpush1.bf16.msra.mxu0 %v3138
    %3151 = vmatprep.subr.bf16.mxu0 0
    %3152 = vmatpush1.bf16.msra.mxu0 0
    %3153 = vmatprep.subr.bf16.mxu0 0
    %3154 = vmatpush1.bf16.msra.mxu0 0
    %3155 = vmatprep.subr.bf16.mxu0 0
    %3156 = vmatpush1.bf16.msra.mxu0 0
    %3157 = vmatprep.subr.bf16.mxu0 0
    %3158 = vmatpush1.bf16.msra.mxu0 0
    %3159 = vmatprep.subr.bf16.mxu0 0
    %3160 = vmatpush1.bf16.msra.mxu0 0
    %3161 = vmatprep.subr.bf16.mxu0 0
    %3162 = vmatpush1.bf16.msra.mxu0 0
    %3163 = vmatprep.subr.bf16.mxu0 0
    %3164 = vmatpush1.bf16.msra.mxu0 0
    %3165 = vmatprep.subr.bf16.mxu0 0
    %3166 = vmatpush1.bf16.msra.mxu0 0
    %3167 = vmatprep.subr.bf16.mxu0 0
    %3168 = vmatpush1.bf16.msra.mxu0 0
    %3169 = vmatprep.subr.bf16.mxu0 0
    %3170 = vmatpush1.bf16.msra.mxu0 0
    %3171 = vmatprep.subr.bf16.mxu0 0
    %3172 = vmatpush1.bf16.msra.mxu0 0
    %3173 = vmatprep.subr.bf16.mxu0 0
    %3174 = vmatpush1.bf16.msra.mxu0 0
    %3175 = vmatprep.subr.bf16.mxu0 0
    %3176 = vmatpush1.bf16.msra.mxu0 0
    %3177 = vmatprep.subr.bf16.mxu0 0
    %3178 = vmatpush1.bf16.msra.mxu0 0
    %3179 = vmatprep.mubr.bf16.mxu0 0
    %3180 = vmatmul.mubr.bf16.gmra.mrb[0].mxu0 %v3142
    %v3181 = vpop.f32.mrb[0].mxu0
    %v3182 = vadd.f32 %v3127, %v3181
    %v3183 = vpop.f32.mrb[0].mxu0
    %v3184 = vpop.f32.mrb[0].mxu0
    %v3185 = vadd.f32 %v3127, %v3184
    %v3186 = vpop.f32.mrb[0].mxu0
    %3187 = vmatprep.mubr.bf16.mxu0 0
    %3188 = vmatmul.mubr.bf16.gmra.mrb[0].mxu0 %v3145
    %v3189 = vpop.f32.mrb[0].mxu0
    %v3190 = vadd.f32 %v3127, %v3189
    %v3191 = vpop.f32.mrb[0].mxu0
    %v3192 = vpop.f32.mrb[0].mxu0
    %v3193 = vpop.f32.mrb[0].mxu0
    %3194 = vdwg.mxu0
    %3195 = vst [vmem:[#allocation32] sm:$0xff] %v3182
    %3196 = vst [vmem:[#allocation32 + $0x8] sm:$0xff] %v3185
    %3197 = vst [vmem:[#allocation32 + $0x10] sm:$0xff] %v3190
    // Predicated region
    $region154: #{_lambda_.3} parent=1 // pred_check
      _
    $region155: #{_lambda_.3} parent=1 // pred_check_branch
      %3199 = sbr.rel (0) target = $region157
    $region156: #{_lambda_.3} parent=1 // pred_region
      %s3201 = ssub.s32 384, 384
      %3202 = vsyncadd [#allocation4], %s3201
      %s3203 = sshll.u32 [#allocation32], 4
      %s3204 = int_to_ptr.vmem [resolvable:$true] %s3203
      %3209 = dma.vmem_to_hbm [thread:$0]  %s3204, 384, %s19, [#allocation4], 128, 128, 8
    $region157: #{_lambda_.3} parent=1 // pred_fallthru
      _
    // Predicated region
    $region158: #{_lambda_.3} parent=1 // pred_check
      _
    $region159: #{_lambda_.3} parent=1 // pred_check_branch
      %3211 = sbr.rel (0) target = $region161
    $region160: #{_lambda_.3} parent=1 // pred_region
      %3212 = dma.done [#allocation4], 384
    $region161: #{_lambda_.3} parent=1 // pred_fallthru
      _
    %3213 = vsyncpa [#allocation3], 1
    %3214 = vsyncpa [#allocation6], 1
    %3215 = vsyncpa [#allocation9], 1
    %3216 = vsyncpa [#allocation12], 1
    %3217 = vsyncpa [#allocation15], 1
    %3218 = vsyncpa [#allocation18], 1
    %3219 = vsyncpa [#allocation21], 1
    %3220 = vsyncpa [#allocation24], 1
    %3221 = vsyncpa [#allocation27], 1
    %3222 = vsyncpa [#allocation30], 1
    %3223 = vsyncpa [#allocation4], 1

</llo_original>
